<compile_context>
chip_gen: v7x
topology: tpu7x:2x2x1
jax: 0.10.0
libtpu: 0.0.40
codegen_flags: <defaults>
</compile_context>

<pallas_src>
import functools

import jax
import jax.numpy as jnp
from jax import lax
from jax.experimental import pallas as pl
from jax.experimental.pallas import tpu as pltpu

LANE = 128  # TPU lane width; lane-facing dims are padded to a multiple of this.


def _round_up(n, m):
    return ((n + m - 1) // m) * m


# ------------------------------ fused Pallas kernel ------------------------------

def _downsample_fused_kernel(xp_ref, w1_ref, b1_ref, w2_ref, b2_ref, o_ref,
                             pad_ref, p2_ref, *, B, H, W, Cout):
    # xp_ref : (B*H*W, K1p)           bf16  conv1 im2col patches (built in wrapper)
    # w1_ref : (K1p, Cp)              bf16  conv1 weight, rows = (dy,dx,ci), cols = co (padded)
    # b1_ref : (1, Cp)                f32
    # w2_ref : (K2p, Cp)              bf16  conv2 weight, rows k = (dy*5+dx)*Cout + ci (padded)
    # b2_ref : (1, Cp)                f32
    # o_ref  : (B*Hp*Wp, Cp)          f32   lane-dense output
    # pad_ref: (B, Hp+4, Wp+4, Cout)  bf16  halo'd pooled map (real channels only)
    # p2_ref : (B*Hp*Wp, K2p)         bf16  stage-2 im2col operand
    Hp, Wp = H // 2, W // 2
    Cp = o_ref.shape[-1]
    M2 = B * Hp * Wp
    K2 = 25 * Cout
    K2p = w2_ref.shape[0]

    # ---- stage 1: conv3x3 (+bias, ReLU) as one lane-dense MXU matmul ----
    z1 = jnp.dot(xp_ref[...], w1_ref[...], preferred_element_type=jnp.float32)
    z1 = jnp.maximum(z1 + b1_ref[...], 0.0)                     # (B*H*W, Cp) f32

    # ---- MaxPool2d(2, 2): rows are (b, h, w)-ordered; two pairwise maxes ----
    zw = z1.reshape(B * H * (W // 2), 2, Cp)
    zw = jnp.maximum(zw[:, 0, :], zw[:, 1, :])                  # pool along W
    zh = zw.reshape(B * Hp, 2, Wp, Cp)
    y1 = jnp.maximum(zh[:, 0], zh[:, 1])                        # (B*Hp, Wp, Cp), pool along H

    # ---- stage-2 prep: halo'd pooled map, real channels only, cast to bf16 ONCE ----
    # Single kernel invocation -> the whole (tiny) halo buffer is zeroed exactly once.
    pad_ref[...] = jnp.zeros_like(pad_ref)
    pad_ref[:, 2:2 + Hp, 2:2 + Wp, :] = (
        y1[:, :, :Cout].reshape(B, Hp, Wp, Cout).astype(pad_ref.dtype))

    # ---- stage 2: conv5x5 (+bias, ReLU) as ONE matmul over K = 25*Cout (padded) ----
    # Each tap patch is extracted / realigned exactly once into the im2col operand.
    for t in range(25):
        dy, dx = divmod(t, 5)
        blk = pad_ref[:, dy:dy + Hp, dx:dx + Wp, :]             # (B, Hp, Wp, Cout) bf16
        p2_ref[:, t * Cout:(t + 1) * Cout] = blk.reshape(M2, Cout)
    if K2p > K2:
        p2_ref[:, K2:] = jnp.zeros((M2, K2p - K2), p2_ref.dtype)
    z2 = jnp.dot(p2_ref[...], w2_ref[...], preferred_element_type=jnp.float32)
    o_ref[...] = jnp.maximum(z2 + b2_ref[...], 0.0).astype(o_ref.dtype)


# ------------------------------ wrapper (NCHW-facing) ------------------------------

def downsample_forward(x_nchw, w1, b1, w2, b2):
    B, Cin, H, W = x_nchw.shape
    Cout = w1.shape[0]
    assert H % 2 == 0 and W % 2 == 0
    Hp, Wp = H // 2, W // 2
    Cp = _round_up(Cout, LANE)            # lane-dense output-channel width
    K1 = 9 * Cin
    K1p = _round_up(K1, LANE)             # stage-1 contraction, lane-padded
    K2 = 25 * Cout
    K2p = _round_up(K2, LANE)             # stage-2 contraction, real channels per tap

    # --- stage-1 im2col in XLA (tiny HBM footprint), lane-padded, bf16 ---
    x = jnp.transpose(x_nchw, (0, 2, 3, 1))                     # NHWC
    xpad = jnp.pad(x, ((0, 0), (1, 1), (1, 1), (0, 0)))         # conv1 halo (pad=1)
    taps = [xpad[:, dy:dy + H, dx:dx + W, :] for dy in range(3) for dx in range(3)]
    p1 = jnp.concatenate(taps, axis=-1).reshape(B * H * W, K1)  # k = (dy*3+dx)*Cin + ci
    p1 = jnp.pad(p1, ((0, 0), (0, K1p - K1))).astype(jnp.bfloat16)

    # --- weights: (kh, kw, ci) -> rows, co -> lanes; zero-padded; bf16 (f32 biases) ---
    w1m = jnp.transpose(w1, (2, 3, 1, 0)).reshape(K1, Cout)
    w1m = jnp.pad(w1m, ((0, K1p - K1), (0, Cp - Cout))).astype(jnp.bfloat16)
    b1m = jnp.pad(b1, (0, Cp - Cout)).reshape(1, Cp).astype(jnp.float32)
    w2m = jnp.transpose(w2, (2, 3, 1, 0)).reshape(K2, Cout)     # k = (dy*5+dx)*Cout + ci
    w2m = jnp.pad(w2m, ((0, K2p - K2), (0, Cp - Cout))).astype(jnp.bfloat16)
    b2m = jnp.pad(b2, (0, Cp - Cout)).reshape(1, Cp).astype(jnp.float32)

    kernel = functools.partial(_downsample_fused_kernel, B=B, H=H, W=W, Cout=Cout)
    vmem = pl.BlockSpec(memory_space=pltpu.MemorySpace.VMEM)    # whole-array VMEM blocks
    out = pl.pallas_call(
        kernel,
        out_shape=jax.ShapeDtypeStruct((B * Hp * Wp, Cp), jnp.float32),
        in_specs=[vmem, vmem, vmem, vmem, vmem],
        out_specs=vmem,
        scratch_shapes=[
            pltpu.VMEM((B, Hp + 4, Wp + 4, Cout), jnp.bfloat16),   # halo'd pooled map
            pltpu.VMEM((B * Hp * Wp, K2p), jnp.bfloat16),          # stage-2 im2col operand
        ],
    )(p1, w1m, b1m, w2m, b2m)

    y = out[:, :Cout].reshape(B, Hp, Wp, Cout)                  # drop lane padding
    return jnp.transpose(y, (0, 3, 1, 2)).astype(x_nchw.dtype)  # back to NCHW


# ------------------------------ reference ------------------------------------

def _reference_forward(x, w1, b1, w2, b2):
    dn = ("NCHW", "OIHW", "NCHW")
    z = lax.conv_general_dilated(x, w1, (1, 1), ((1, 1), (1, 1)),
                                 dimension_numbers=dn,
                                 precision=lax.Precision.HIGHEST)
    z = jnp.maximum(z + b1[None, :, None, None], 0.0)
    z = lax.reduce_window(z, -jnp.inf, lax.max,
                          (1, 1, 2, 2), (1, 1, 2, 2), "VALID")
    z = lax.conv_general_dilated(z, w2, (1, 1), ((2, 2), (2, 2)),
                                 dimension_numbers=dn,
                                 precision=lax.Precision.HIGHEST)
    return jnp.maximum(z + b2[None, :, None, None], 0.0)


# ------------------------------ main ------------------------------------------

if __name__ == "__main__":
    in_ch, out_ch, H, W, B = 4, 8, 16, 16, 2

    key = jax.random.PRNGKey(0)
    k1, k2, k3, k4, kx = jax.random.split(key, 5)
    w1 = jax.random.normal(k1, (out_ch, in_ch, 3, 3), jnp.float32) * 0.1
    b1 = jax.random.normal(k2, (out_ch,), jnp.float32) * 0.1
    w2 = jax.random.normal(k3, (out_ch, out_ch, 5, 5), jnp.float32) * 0.05
    b2 = jax.random.normal(k4, (out_ch,), jnp.float32) * 0.1
    x = jax.random.normal(kx, (B, in_ch, H, W), jnp.float32)

    out = jax.jit(downsample_forward)(x, w1, b1, w2, b2)
    out = jax.block_until_ready(out)

    ref = _reference_forward(x, w1, b1, w2, b2)

    assert out.shape == (B, out_ch, H // 2, W // 2), out.shape
    # bf16 MXU inputs (f32 accumulation) vs. an f32 HIGHEST reference -> loosened tolerance.
    assert jnp.allclose(out, ref, atol=5e-2, rtol=5e-2), float(
        jnp.max(jnp.abs(out - ref)))
    print("KERNEL_OK")
</pallas_src>

<mosaic_0001>
module attributes {stable_mosaic.version = 11 : i64} {
  func.func @_downsample_fused_kernel(%arg0: memref<512x128xbf16, #tpu.memory_space<vmem>>, %arg1: memref<128x128xbf16, #tpu.memory_space<vmem>>, %arg2: memref<1x128xf32, #tpu.memory_space<vmem>>, %arg3: memref<256x128xbf16, #tpu.memory_space<vmem>>, %arg4: memref<1x128xf32, #tpu.memory_space<vmem>>, %arg5: memref<128x128xf32, #tpu.memory_space<vmem>>, %arg6: memref<2x12x12x8xbf16, #tpu.memory_space<vmem>>, %arg7: memref<128x256xbf16, #tpu.memory_space<vmem>>) attributes {dimension_semantics = [], scalar_prefetch = 0 : i64, scratch_operands = 2 : i64, tpu.core_type = #tpu.core_type<tc>} {
    %c0 = arith.constant 0 : index
    %c0_0 = arith.constant 0 : index
    %0 = vector.load %arg0[%c0, %c0_0] : memref<512x128xbf16, #tpu.memory_space<vmem>>, vector<512x128xbf16>
    %c0_1 = arith.constant 0 : index
    %c0_2 = arith.constant 0 : index
    %1 = vector.load %arg1[%c0_1, %c0_2] : memref<128x128xbf16, #tpu.memory_space<vmem>>, vector<128x128xbf16>
    %cst = arith.constant dense<0.000000e+00> : vector<512x128xf32>
    %2 = tpu.matmul %0, %1, %cst {dimension_numbers = #tpu.dot_dimension_numbers<[1], [0], [0], [1], [0, 0, 1, 1], [], []>} : vector<512x128xbf16>, vector<128x128xbf16>, vector<512x128xf32> -> vector<512x128xf32>
    %c0_3 = arith.constant 0 : index
    %c0_4 = arith.constant 0 : index
    %3 = vector.load %arg2[%c0_3, %c0_4] : memref<1x128xf32, #tpu.memory_space<vmem>>, vector<1x128xf32>
    %4 = vector.broadcast %3 : vector<1x128xf32> to vector<512x128xf32>
    %5 = arith.addf %2, %4 : vector<512x128xf32>
    %cst_5 = arith.constant 0.000000e+00 : f32
    %6 = vector.broadcast %cst_5 : f32 to vector<512x128xf32>
    %7 = arith.maximumf %5, %6 : vector<512x128xf32>
    %8 = vector.shape_cast %7 : vector<512x128xf32> to vector<256x2x128xf32>
    %9 = vector.extract_strided_slice %8 {offsets = [0, 0, 0], sizes = [256, 1, 128], strides = [1, 1, 1]} : vector<256x2x128xf32> to vector<256x1x128xf32>
    %10 = vector.shape_cast %9 : vector<256x1x128xf32> to vector<256x128xf32>
    %11 = vector.extract_strided_slice %8 {offsets = [0, 1, 0], sizes = [256, 1, 128], strides = [1, 1, 1]} : vector<256x2x128xf32> to vector<256x1x128xf32>
    %12 = vector.shape_cast %11 : vector<256x1x128xf32> to vector<256x128xf32>
    %13 = arith.maximumf %10, %12 : vector<256x128xf32>
    %14 = vector.shape_cast %13 : vector<256x128xf32> to vector<16x2x8x128xf32>
    %15 = vector.extract_strided_slice %14 {offsets = [0, 0, 0, 0], sizes = [16, 1, 8, 128], strides = [1, 1, 1, 1]} : vector<16x2x8x128xf32> to vector<16x1x8x128xf32>
    %16 = vector.shape_cast %15 : vector<16x1x8x128xf32> to vector<16x8x128xf32>
    %17 = vector.extract_strided_slice %14 {offsets = [0, 1, 0, 0], sizes = [16, 1, 8, 128], strides = [1, 1, 1, 1]} : vector<16x2x8x128xf32> to vector<16x1x8x128xf32>
    %18 = vector.shape_cast %17 : vector<16x1x8x128xf32> to vector<16x8x128xf32>
    %19 = arith.maximumf %16, %18 : vector<16x8x128xf32>
    %cst_6 = arith.constant 0.000000e+00 : bf16
    %20 = vector.broadcast %cst_6 : bf16 to vector<2x12x12x8xbf16>
    %c0_7 = arith.constant 0 : index
    %c0_8 = arith.constant 0 : index
    %c0_9 = arith.constant 0 : index
    %c0_10 = arith.constant 0 : index
    %21 = vector.load %arg6[%c0_7, %c0_8, %c0_9, %c0_10] : memref<2x12x12x8xbf16, #tpu.memory_space<vmem>>, vector<2x12x12x8xbf16>
    tpu.vector_store %arg6[%c0_7, %c0_8, %c0_9, %c0_10], %20 {strides = array<i32>} : memref<2x12x12x8xbf16, #tpu.memory_space<vmem>>, vector<2x12x12x8xbf16>,
    %22 = vector.extract_strided_slice %19 {offsets = [0, 0, 0], sizes = [16, 8, 8], strides = [1, 1, 1]} : vector<16x8x128xf32> to vector<16x8x8xf32>
    %23 = vector.shape_cast %22 : vector<16x8x8xf32> to vector<2x8x8x8xf32>
    %24 = arith.truncf %23 : vector<2x8x8x8xf32> to vector<2x8x8x8xbf16>
    %c0_11 = arith.constant 0 : index
    %c2 = arith.constant 2 : index
    %c2_12 = arith.constant 2 : index
    %c0_13 = arith.constant 0 : index
    %25 = vector.load %arg6[%c0_11, %c2, %c2_12, %c0_13] : memref<2x12x12x8xbf16, #tpu.memory_space<vmem>>, vector<2x8x8x8xbf16>
    tpu.vector_store %arg6[%c0_11, %c2, %c2_12, %c0_13], %24 {strides = array<i32>} : memref<2x12x12x8xbf16, #tpu.memory_space<vmem>>, vector<2x8x8x8xbf16>,
    %c0_14 = arith.constant 0 : index
    %c0_15 = arith.constant 0 : index
    %c0_16 = arith.constant 0 : index
    %c0_17 = arith.constant 0 : index
    %26 = vector.load %arg6[%c0_14, %c0_15, %c0_16, %c0_17] : memref<2x12x12x8xbf16, #tpu.memory_space<vmem>>, vector<2x8x8x8xbf16>
    %27 = vector.shape_cast %26 : vector<2x8x8x8xbf16> to vector<128x8xbf16>
    %c0_18 = arith.constant 0 : index
    %c0_19 = arith.constant 0 : index
    %28 = vector.load %arg7[%c0_18, %c0_19] : memref<128x256xbf16, #tpu.memory_space<vmem>>, vector<128x8xbf16>
    tpu.vector_store %arg7[%c0_18, %c0_19], %27 {strides = array<i32>} : memref<128x256xbf16, #tpu.memory_space<vmem>>, vector<128x8xbf16>,
    %c0_20 = arith.constant 0 : index
    %c0_21 = arith.constant 0 : index
    %c1 = arith.constant 1 : index
    %c0_22 = arith.constant 0 : index
    %29 = vector.load %arg6[%c0_20, %c0_21, %c1, %c0_22] : memref<2x12x12x8xbf16, #tpu.memory_space<vmem>>, vector<2x8x8x8xbf16>
    %30 = vector.shape_cast %29 : vector<2x8x8x8xbf16> to vector<128x8xbf16>
    %c0_23 = arith.constant 0 : index
    %c8 = arith.constant 8 : index
    %31 = vector.load %arg7[%c0_23, %c8] : memref<128x256xbf16, #tpu.memory_space<vmem>>, vector<128x8xbf16>
    tpu.vector_store %arg7[%c0_23, %c8], %30 {strides = array<i32>} : memref<128x256xbf16, #tpu.memory_space<vmem>>, vector<128x8xbf16>,
    %c0_24 = arith.constant 0 : index
    %c0_25 = arith.constant 0 : index
    %c2_26 = arith.constant 2 : index
    %c0_27 = arith.constant 0 : index
    %32 = vector.load %arg6[%c0_24, %c0_25, %c2_26, %c0_27] : memref<2x12x12x8xbf16, #tpu.memory_space<vmem>>, vector<2x8x8x8xbf16>
    %33 = vector.shape_cast %32 : vector<2x8x8x8xbf16> to vector<128x8xbf16>
    %c0_28 = arith.constant 0 : index
    %c16 = arith.constant 16 : index
    %34 = vector.load %arg7[%c0_28, %c16] : memref<128x256xbf16, #tpu.memory_space<vmem>>, vector<128x8xbf16>
    tpu.vector_store %arg7[%c0_28, %c16], %33 {strides = array<i32>} : memref<128x256xbf16, #tpu.memory_space<vmem>>, vector<128x8xbf16>,
    %c0_29 = arith.constant 0 : index
    %c0_30 = arith.constant 0 : index
    %c3 = arith.constant 3 : index
    %c0_31 = arith.constant 0 : index
    %35 = vector.load %arg6[%c0_29, %c0_30, %c3, %c0_31] : memref<2x12x12x8xbf16, #tpu.memory_space<vmem>>, vector<2x8x8x8xbf16>
    %36 = vector.shape_cast %35 : vector<2x8x8x8xbf16> to vector<128x8xbf16>
    %c0_32 = arith.constant 0 : index
    %c24 = arith.constant 24 : index
    %37 = vector.load %arg7[%c0_32, %c24] : memref<128x256xbf16, #tpu.memory_space<vmem>>, vector<128x8xbf16>
    tpu.vector_store %arg7[%c0_32, %c24], %36 {strides = array<i32>} : memref<128x256xbf16, #tpu.memory_space<vmem>>, vector<128x8xbf16>,
    %c0_33 = arith.constant 0 : index
    %c0_34 = arith.constant 0 : index
    %c4 = arith.constant 4 : index
    %c0_35 = arith.constant 0 : index
    %38 = vector.load %arg6[%c0_33, %c0_34, %c4, %c0_35] : memref<2x12x12x8xbf16, #tpu.memory_space<vmem>>, vector<2x8x8x8xbf16>
    %39 = vector.shape_cast %38 : vector<2x8x8x8xbf16> to vector<128x8xbf16>
    %c0_36 = arith.constant 0 : index
    %c32 = arith.constant 32 : index
    %40 = vector.load %arg7[%c0_36, %c32] : memref<128x256xbf16, #tpu.memory_space<vmem>>, vector<128x8xbf16>
    tpu.vector_store %arg7[%c0_36, %c32], %39 {strides = array<i32>} : memref<128x256xbf16, #tpu.memory_space<vmem>>, vector<128x8xbf16>,
    %c0_37 = arith.constant 0 : index
    %c1_38 = arith.constant 1 : index
    %c0_39 = arith.constant 0 : index
    %c0_40 = arith.constant 0 : index
    %41 = vector.load %arg6[%c0_37, %c1_38, %c0_39, %c0_40] : memref<2x12x12x8xbf16, #tpu.memory_space<vmem>>, vector<2x8x8x8xbf16>
    %42 = vector.shape_cast %41 : vector<2x8x8x8xbf16> to vector<128x8xbf16>
    %c0_41 = arith.constant 0 : index
    %c40 = arith.constant 40 : index
    %43 = vector.load %arg7[%c0_41, %c40] : memref<128x256xbf16, #tpu.memory_space<vmem>>, vector<128x8xbf16>
    tpu.vector_store %arg7[%c0_41, %c40], %42 {strides = array<i32>} : memref<128x256xbf16, #tpu.memory_space<vmem>>, vector<128x8xbf16>,
    %c0_42 = arith.constant 0 : index
    %c1_43 = arith.constant 1 : index
    %c1_44 = arith.constant 1 : index
    %c0_45 = arith.constant 0 : index
    %44 = vector.load %arg6[%c0_42, %c1_43, %c1_44, %c0_45] : memref<2x12x12x8xbf16, #tpu.memory_space<vmem>>, vector<2x8x8x8xbf16>
    %45 = vector.shape_cast %44 : vector<2x8x8x8xbf16> to vector<128x8xbf16>
    %c0_46 = arith.constant 0 : index
    %c48 = arith.constant 48 : index
    %46 = vector.load %arg7[%c0_46, %c48] : memref<128x256xbf16, #tpu.memory_space<vmem>>, vector<128x8xbf16>
    tpu.vector_store %arg7[%c0_46, %c48], %45 {strides = array<i32>} : memref<128x256xbf16, #tpu.memory_space<vmem>>, vector<128x8xbf16>,
    %c0_47 = arith.constant 0 : index
    %c1_48 = arith.constant 1 : index
    %c2_49 = arith.constant 2 : index
    %c0_50 = arith.constant 0 : index
    %47 = vector.load %arg6[%c0_47, %c1_48, %c2_49, %c0_50] : memref<2x12x12x8xbf16, #tpu.memory_space<vmem>>, vector<2x8x8x8xbf16>
    %48 = vector.shape_cast %47 : vector<2x8x8x8xbf16> to vector<128x8xbf16>
    %c0_51 = arith.constant 0 : index
    %c56 = arith.constant 56 : index
    %49 = vector.load %arg7[%c0_51, %c56] : memref<128x256xbf16, #tpu.memory_space<vmem>>, vector<128x8xbf16>
    tpu.vector_store %arg7[%c0_51, %c56], %48 {strides = array<i32>} : memref<128x256xbf16, #tpu.memory_space<vmem>>, vector<128x8xbf16>,
    %c0_52 = arith.constant 0 : index
    %c1_53 = arith.constant 1 : index
    %c3_54 = arith.constant 3 : index
    %c0_55 = arith.constant 0 : index
    %50 = vector.load %arg6[%c0_52, %c1_53, %c3_54, %c0_55] : memref<2x12x12x8xbf16, #tpu.memory_space<vmem>>, vector<2x8x8x8xbf16>
    %51 = vector.shape_cast %50 : vector<2x8x8x8xbf16> to vector<128x8xbf16>
    %c0_56 = arith.constant 0 : index
    %c64 = arith.constant 64 : index
    %52 = vector.load %arg7[%c0_56, %c64] : memref<128x256xbf16, #tpu.memory_space<vmem>>, vector<128x8xbf16>
    tpu.vector_store %arg7[%c0_56, %c64], %51 {strides = array<i32>} : memref<128x256xbf16, #tpu.memory_space<vmem>>, vector<128x8xbf16>,
    %c0_57 = arith.constant 0 : index
    %c1_58 = arith.constant 1 : index
    %c4_59 = arith.constant 4 : index
    %c0_60 = arith.constant 0 : index
    %53 = vector.load %arg6[%c0_57, %c1_58, %c4_59, %c0_60] : memref<2x12x12x8xbf16, #tpu.memory_space<vmem>>, vector<2x8x8x8xbf16>
    %54 = vector.shape_cast %53 : vector<2x8x8x8xbf16> to vector<128x8xbf16>
    %c0_61 = arith.constant 0 : index
    %c72 = arith.constant 72 : index
    %55 = vector.load %arg7[%c0_61, %c72] : memref<128x256xbf16, #tpu.memory_space<vmem>>, vector<128x8xbf16>
    tpu.vector_store %arg7[%c0_61, %c72], %54 {strides = array<i32>} : memref<128x256xbf16, #tpu.memory_space<vmem>>, vector<128x8xbf16>,
    %c0_62 = arith.constant 0 : index
    %c2_63 = arith.constant 2 : index
    %c0_64 = arith.constant 0 : index
    %c0_65 = arith.constant 0 : index
    %56 = vector.load %arg6[%c0_62, %c2_63, %c0_64, %c0_65] : memref<2x12x12x8xbf16, #tpu.memory_space<vmem>>, vector<2x8x8x8xbf16>
    %57 = vector.shape_cast %56 : vector<2x8x8x8xbf16> to vector<128x8xbf16>
    %c0_66 = arith.constant 0 : index
    %c80 = arith.constant 80 : index
    %58 = vector.load %arg7[%c0_66, %c80] : memref<128x256xbf16, #tpu.memory_space<vmem>>, vector<128x8xbf16>
    tpu.vector_store %arg7[%c0_66, %c80], %57 {strides = array<i32>} : memref<128x256xbf16, #tpu.memory_space<vmem>>, vector<128x8xbf16>,
    %c0_67 = arith.constant 0 : index
    %c2_68 = arith.constant 2 : index
    %c1_69 = arith.constant 1 : index
    %c0_70 = arith.constant 0 : index
    %59 = vector.load %arg6[%c0_67, %c2_68, %c1_69, %c0_70] : memref<2x12x12x8xbf16, #tpu.memory_space<vmem>>, vector<2x8x8x8xbf16>
    %60 = vector.shape_cast %59 : vector<2x8x8x8xbf16> to vector<128x8xbf16>
    %c0_71 = arith.constant 0 : index
    %c88 = arith.constant 88 : index
    %61 = vector.load %arg7[%c0_71, %c88] : memref<128x256xbf16, #tpu.memory_space<vmem>>, vector<128x8xbf16>
    tpu.vector_store %arg7[%c0_71, %c88], %60 {strides = array<i32>} : memref<128x256xbf16, #tpu.memory_space<vmem>>, vector<128x8xbf16>,
    %c0_72 = arith.constant 0 : index
    %c2_73 = arith.constant 2 : index
    %c2_74 = arith.constant 2 : index
    %c0_75 = arith.constant 0 : index
    %62 = vector.load %arg6[%c0_72, %c2_73, %c2_74, %c0_75] : memref<2x12x12x8xbf16, #tpu.memory_space<vmem>>, vector<2x8x8x8xbf16>
    %63 = vector.shape_cast %62 : vector<2x8x8x8xbf16> to vector<128x8xbf16>
    %c0_76 = arith.constant 0 : index
    %c96 = arith.constant 96 : index
    %64 = vector.load %arg7[%c0_76, %c96] : memref<128x256xbf16, #tpu.memory_space<vmem>>, vector<128x8xbf16>
    tpu.vector_store %arg7[%c0_76, %c96], %63 {strides = array<i32>} : memref<128x256xbf16, #tpu.memory_space<vmem>>, vector<128x8xbf16>,
    %c0_77 = arith.constant 0 : index
    %c2_78 = arith.constant 2 : index
    %c3_79 = arith.constant 3 : index
    %c0_80 = arith.constant 0 : index
    %65 = vector.load %arg6[%c0_77, %c2_78, %c3_79, %c0_80] : memref<2x12x12x8xbf16, #tpu.memory_space<vmem>>, vector<2x8x8x8xbf16>
    %66 = vector.shape_cast %65 : vector<2x8x8x8xbf16> to vector<128x8xbf16>
    %c0_81 = arith.constant 0 : index
    %c104 = arith.constant 104 : index
    %67 = vector.load %arg7[%c0_81, %c104] : memref<128x256xbf16, #tpu.memory_space<vmem>>, vector<128x8xbf16>
    tpu.vector_store %arg7[%c0_81, %c104], %66 {strides = array<i32>} : memref<128x256xbf16, #tpu.memory_space<vmem>>, vector<128x8xbf16>,
    %c0_82 = arith.constant 0 : index
    %c2_83 = arith.constant 2 : index
    %c4_84 = arith.constant 4 : index
    %c0_85 = arith.constant 0 : index
    %68 = vector.load %arg6[%c0_82, %c2_83, %c4_84, %c0_85] : memref<2x12x12x8xbf16, #tpu.memory_space<vmem>>, vector<2x8x8x8xbf16>
    %69 = vector.shape_cast %68 : vector<2x8x8x8xbf16> to vector<128x8xbf16>
    %c0_86 = arith.constant 0 : index
    %c112 = arith.constant 112 : index
    %70 = vector.load %arg7[%c0_86, %c112] : memref<128x256xbf16, #tpu.memory_space<vmem>>, vector<128x8xbf16>
    tpu.vector_store %arg7[%c0_86, %c112], %69 {strides = array<i32>} : memref<128x256xbf16, #tpu.memory_space<vmem>>, vector<128x8xbf16>,
    %c0_87 = arith.constant 0 : index
    %c3_88 = arith.constant 3 : index
    %c0_89 = arith.constant 0 : index
    %c0_90 = arith.constant 0 : index
    %71 = vector.load %arg6[%c0_87, %c3_88, %c0_89, %c0_90] : memref<2x12x12x8xbf16, #tpu.memory_space<vmem>>, vector<2x8x8x8xbf16>
    %72 = vector.shape_cast %71 : vector<2x8x8x8xbf16> to vector<128x8xbf16>
    %c0_91 = arith.constant 0 : index
    %c120 = arith.constant 120 : index
    %73 = vector.load %arg7[%c0_91, %c120] : memref<128x256xbf16, #tpu.memory_space<vmem>>, vector<128x8xbf16>
    tpu.vector_store %arg7[%c0_91, %c120], %72 {strides = array<i32>} : memref<128x256xbf16, #tpu.memory_space<vmem>>, vector<128x8xbf16>,
    %c0_92 = arith.constant 0 : index
    %c3_93 = arith.constant 3 : index
    %c1_94 = arith.constant 1 : index
    %c0_95 = arith.constant 0 : index
    %74 = vector.load %arg6[%c0_92, %c3_93, %c1_94, %c0_95] : memref<2x12x12x8xbf16, #tpu.memory_space<vmem>>, vector<2x8x8x8xbf16>
    %75 = vector.shape_cast %74 : vector<2x8x8x8xbf16> to vector<128x8xbf16>
    %c0_96 = arith.constant 0 : index
    %c128 = arith.constant 128 : index
    %76 = vector.load %arg7[%c0_96, %c128] : memref<128x256xbf16, #tpu.memory_space<vmem>>, vector<128x8xbf16>
    tpu.vector_store %arg7[%c0_96, %c128], %75 {strides = array<i32>} : memref<128x256xbf16, #tpu.memory_space<vmem>>, vector<128x8xbf16>,
    %c0_97 = arith.constant 0 : index
    %c3_98 = arith.constant 3 : index
    %c2_99 = arith.constant 2 : index
    %c0_100 = arith.constant 0 : index
    %77 = vector.load %arg6[%c0_97, %c3_98, %c2_99, %c0_100] : memref<2x12x12x8xbf16, #tpu.memory_space<vmem>>, vector<2x8x8x8xbf16>
    %78 = vector.shape_cast %77 : vector<2x8x8x8xbf16> to vector<128x8xbf16>
    %c0_101 = arith.constant 0 : index
    %c136 = arith.constant 136 : index
    %79 = vector.load %arg7[%c0_101, %c136] : memref<128x256xbf16, #tpu.memory_space<vmem>>, vector<128x8xbf16>
    tpu.vector_store %arg7[%c0_101, %c136], %78 {strides = array<i32>} : memref<128x256xbf16, #tpu.memory_space<vmem>>, vector<128x8xbf16>,
    %c0_102 = arith.constant 0 : index
    %c3_103 = arith.constant 3 : index
    %c3_104 = arith.constant 3 : index
    %c0_105 = arith.constant 0 : index
    %80 = vector.load %arg6[%c0_102, %c3_103, %c3_104, %c0_105] : memref<2x12x12x8xbf16, #tpu.memory_space<vmem>>, vector<2x8x8x8xbf16>
    %81 = vector.shape_cast %80 : vector<2x8x8x8xbf16> to vector<128x8xbf16>
    %c0_106 = arith.constant 0 : index
    %c144 = arith.constant 144 : index
    %82 = vector.load %arg7[%c0_106, %c144] : memref<128x256xbf16, #tpu.memory_space<vmem>>, vector<128x8xbf16>
    tpu.vector_store %arg7[%c0_106, %c144], %81 {strides = array<i32>} : memref<128x256xbf16, #tpu.memory_space<vmem>>, vector<128x8xbf16>,
    %c0_107 = arith.constant 0 : index
    %c3_108 = arith.constant 3 : index
    %c4_109 = arith.constant 4 : index
    %c0_110 = arith.constant 0 : index
    %83 = vector.load %arg6[%c0_107, %c3_108, %c4_109, %c0_110] : memref<2x12x12x8xbf16, #tpu.memory_space<vmem>>, vector<2x8x8x8xbf16>
    %84 = vector.shape_cast %83 : vector<2x8x8x8xbf16> to vector<128x8xbf16>
    %c0_111 = arith.constant 0 : index
    %c152 = arith.constant 152 : index
    %85 = vector.load %arg7[%c0_111, %c152] : memref<128x256xbf16, #tpu.memory_space<vmem>>, vector<128x8xbf16>
    tpu.vector_store %arg7[%c0_111, %c152], %84 {strides = array<i32>} : memref<128x256xbf16, #tpu.memory_space<vmem>>, vector<128x8xbf16>,
    %c0_112 = arith.constant 0 : index
    %c4_113 = arith.constant 4 : index
    %c0_114 = arith.constant 0 : index
    %c0_115 = arith.constant 0 : index
    %86 = vector.load %arg6[%c0_112, %c4_113, %c0_114, %c0_115] : memref<2x12x12x8xbf16, #tpu.memory_space<vmem>>, vector<2x8x8x8xbf16>
    %87 = vector.shape_cast %86 : vector<2x8x8x8xbf16> to vector<128x8xbf16>
    %c0_116 = arith.constant 0 : index
    %c160 = arith.constant 160 : index
    %88 = vector.load %arg7[%c0_116, %c160] : memref<128x256xbf16, #tpu.memory_space<vmem>>, vector<128x8xbf16>
    tpu.vector_store %arg7[%c0_116, %c160], %87 {strides = array<i32>} : memref<128x256xbf16, #tpu.memory_space<vmem>>, vector<128x8xbf16>,
    %c0_117 = arith.constant 0 : index
    %c4_118 = arith.constant 4 : index
    %c1_119 = arith.constant 1 : index
    %c0_120 = arith.constant 0 : index
    %89 = vector.load %arg6[%c0_117, %c4_118, %c1_119, %c0_120] : memref<2x12x12x8xbf16, #tpu.memory_space<vmem>>, vector<2x8x8x8xbf16>
    %90 = vector.shape_cast %89 : vector<2x8x8x8xbf16> to vector<128x8xbf16>
    %c0_121 = arith.constant 0 : index
    %c168 = arith.constant 168 : index
    %91 = vector.load %arg7[%c0_121, %c168] : memref<128x256xbf16, #tpu.memory_space<vmem>>, vector<128x8xbf16>
    tpu.vector_store %arg7[%c0_121, %c168], %90 {strides = array<i32>} : memref<128x256xbf16, #tpu.memory_space<vmem>>, vector<128x8xbf16>,
    %c0_122 = arith.constant 0 : index
    %c4_123 = arith.constant 4 : index
    %c2_124 = arith.constant 2 : index
    %c0_125 = arith.constant 0 : index
    %92 = vector.load %arg6[%c0_122, %c4_123, %c2_124, %c0_125] : memref<2x12x12x8xbf16, #tpu.memory_space<vmem>>, vector<2x8x8x8xbf16>
    %93 = vector.shape_cast %92 : vector<2x8x8x8xbf16> to vector<128x8xbf16>
    %c0_126 = arith.constant 0 : index
    %c176 = arith.constant 176 : index
    %94 = vector.load %arg7[%c0_126, %c176] : memref<128x256xbf16, #tpu.memory_space<vmem>>, vector<128x8xbf16>
    tpu.vector_store %arg7[%c0_126, %c176], %93 {strides = array<i32>} : memref<128x256xbf16, #tpu.memory_space<vmem>>, vector<128x8xbf16>,
    %c0_127 = arith.constant 0 : index
    %c4_128 = arith.constant 4 : index
    %c3_129 = arith.constant 3 : index
    %c0_130 = arith.constant 0 : index
    %95 = vector.load %arg6[%c0_127, %c4_128, %c3_129, %c0_130] : memref<2x12x12x8xbf16, #tpu.memory_space<vmem>>, vector<2x8x8x8xbf16>
    %96 = vector.shape_cast %95 : vector<2x8x8x8xbf16> to vector<128x8xbf16>
    %c0_131 = arith.constant 0 : index
    %c184 = arith.constant 184 : index
    %97 = vector.load %arg7[%c0_131, %c184] : memref<128x256xbf16, #tpu.memory_space<vmem>>, vector<128x8xbf16>
    tpu.vector_store %arg7[%c0_131, %c184], %96 {strides = array<i32>} : memref<128x256xbf16, #tpu.memory_space<vmem>>, vector<128x8xbf16>,
    %c0_132 = arith.constant 0 : index
    %c4_133 = arith.constant 4 : index
    %c4_134 = arith.constant 4 : index
    %c0_135 = arith.constant 0 : index
    %98 = vector.load %arg6[%c0_132, %c4_133, %c4_134, %c0_135] : memref<2x12x12x8xbf16, #tpu.memory_space<vmem>>, vector<2x8x8x8xbf16>
    %99 = vector.shape_cast %98 : vector<2x8x8x8xbf16> to vector<128x8xbf16>
    %c0_136 = arith.constant 0 : index
    %c192 = arith.constant 192 : index
    %100 = vector.load %arg7[%c0_136, %c192] : memref<128x256xbf16, #tpu.memory_space<vmem>>, vector<128x8xbf16>
    tpu.vector_store %arg7[%c0_136, %c192], %99 {strides = array<i32>} : memref<128x256xbf16, #tpu.memory_space<vmem>>, vector<128x8xbf16>,
    %cst_137 = arith.constant 0.000000e+00 : bf16
    %101 = vector.broadcast %cst_137 : bf16 to vector<128x56xbf16>
    %c0_138 = arith.constant 0 : index
    %c200 = arith.constant 200 : index
    %102 = vector.load %arg7[%c0_138, %c200] : memref<128x256xbf16, #tpu.memory_space<vmem>>, vector<128x56xbf16>
    tpu.vector_store %arg7[%c0_138, %c200], %101 {strides = array<i32>} : memref<128x256xbf16, #tpu.memory_space<vmem>>, vector<128x56xbf16>,
    %c0_139 = arith.constant 0 : index
    %c0_140 = arith.constant 0 : index
    %103 = vector.load %arg7[%c0_139, %c0_140] : memref<128x256xbf16, #tpu.memory_space<vmem>>, vector<128x256xbf16>
    %c0_141 = arith.constant 0 : index
    %c0_142 = arith.constant 0 : index
    %104 = vector.load %arg3[%c0_141, %c0_142] : memref<256x128xbf16, #tpu.memory_space<vmem>>, vector<256x128xbf16>
    %cst_143 = arith.constant dense<0.000000e+00> : vector<128x128xf32>
    %105 = tpu.matmul %103, %104, %cst_143 {dimension_numbers = #tpu.dot_dimension_numbers<[1], [0], [0], [1], [0, 0, 1, 1], [], []>} : vector<128x256xbf16>, vector<256x128xbf16>, vector<128x128xf32> -> vector<128x128xf32>
    %c0_144 = arith.constant 0 : index
    %c0_145 = arith.constant 0 : index
    %106 = vector.load %arg4[%c0_144, %c0_145] : memref<1x128xf32, #tpu.memory_space<vmem>>, vector<1x128xf32>
    %107 = vector.broadcast %106 : vector<1x128xf32> to vector<128x128xf32>
    %108 = arith.addf %105, %107 : vector<128x128xf32>
    %cst_146 = arith.constant 0.000000e+00 : f32
    %109 = vector.broadcast %cst_146 : f32 to vector<128x128xf32>
    %110 = arith.maximumf %108, %109 : vector<128x128xf32>
    %c0_147 = arith.constant 0 : index
    %c0_148 = arith.constant 0 : index
    %111 = vector.load %arg5[%c0_147, %c0_148] : memref<128x128xf32, #tpu.memory_space<vmem>>, vector<128x128xf32>
    tpu.vector_store %arg5[%c0_147, %c0_148], %110 {strides = array<i32>} : memref<128x128xf32, #tpu.memory_space<vmem>>, vector<128x128xf32>,
    return
  }
}

</mosaic_0001>

<llo_original>
// kernel: downsample_forward.1
$region0: #{downsample_forward.1}
  #allocation0 [shape = 'u32[]', space=smem, size = 0x4, offset = 0x4, fixed_abs, tag = 'smem constant byte address 0x4 - core index']
  #allocation1 [shape = 'u32[144,128]{1,0:T(1,128)}', space=vmem, size = 0x12000, scoped, tag = 'internal scratch']
  #allocation2 [shape = 'bf16[2,12,12,8]{3,2,1,0:T(8,128)(2,1)}', space=vmem, size = 0x18000, scoped, tag = 'scratch operand']
  #allocation3 [shape = 'bf16[128,256]{1,0:T(16,128)(2,1)}', space=vmem, size = 0x10000, scoped, tag = 'scratch operand']
  %s0 = inlined_call_operand.vmem [shape: bf16[512,128], index: 0, kind: input, shape index: {}]
  %s1 = inlined_call_operand.vmem [shape: bf16[128,128], index: 1, kind: input, shape index: {}]
  %s2 = inlined_call_operand.vmem [shape: f32[1,128], index: 2, kind: input, shape index: {}]
  %s3 = inlined_call_operand.vmem [shape: bf16[256,128], index: 3, kind: input, shape index: {}]
  %s4 = inlined_call_operand.vmem [shape: f32[1,128], index: 4, kind: input, shape index: {}]
  %s5 = inlined_call_operand.vmem [shape: f32[128,128], index: 5, kind: output, shape index: {}]
  %s6 = sld [smem:[#allocation0]]
  $region30: #{downsample_forward.1} parent=0
    _
  %s8 = ssub.s32 1, %s6
  %s9 = scalar_select 0, %s8, %s6
  // Predicated region
  $region2: #{downsample_forward.1} parent=0 // pred_check
    _
  $region3: #{downsample_forward.1} parent=0 // pred_check_branch
    %11 = sbr.rel (0) target = $region5
  $region4: #{downsample_forward.1} parent=0 // pred_region
    _
  $region5: #{downsample_forward.1} parent=0 // pred_fallthru
    _
  // Predicated region
  $region6: #{downsample_forward.1} parent=0 // pred_check
    _
  $region7: #{downsample_forward.1} parent=0 // pred_check_branch
    %13 = sbr.rel (0) target = $region9
  $region8: #{downsample_forward.1} parent=0 // pred_region
    _
  $region9: #{downsample_forward.1} parent=0 // pred_fallthru
    _
  // Predicated region
  $region10: #{downsample_forward.1} parent=0 // pred_check
    _
  $region11: #{downsample_forward.1} parent=0 // pred_check_branch
    %15 = sbr.rel (0) target = $region13
  $region12: #{downsample_forward.1} parent=0 // pred_region
    _
  $region13: #{downsample_forward.1} parent=0 // pred_fallthru
    _
  // Predicated region
  $region14: #{downsample_forward.1} parent=0 // pred_check
    _
  $region15: #{downsample_forward.1} parent=0 // pred_check_branch
    %17 = sbr.rel (0) target = $region17
  $region16: #{downsample_forward.1} parent=0 // pred_region
    _
  $region17: #{downsample_forward.1} parent=0 // pred_fallthru
    _
  // Predicated region
  $region18: #{downsample_forward.1} parent=0 // pred_check
    _
  $region19: #{downsample_forward.1} parent=0 // pred_check_branch
    %19 = sbr.rel (0) target = $region21
  $region20: #{downsample_forward.1} parent=0 // pred_region
    _
  $region21: #{downsample_forward.1} parent=0 // pred_fallthru
    _
  %v21 = vld [vmem:[%s0] sm:$0xf]
  %v22 = vld [vmem:[%s0 + $0x4] sm:$0xf]
  %v23 = vld [vmem:[%s0 + $0x8] sm:$0xf]
  %v24 = vld [vmem:[%s0 + $0xc] sm:$0xf]
  %v25 = vld [vmem:[%s0 + $0x10] sm:$0xf]
  %v26 = vld [vmem:[%s0 + $0x14] sm:$0xf]
  %v27 = vld [vmem:[%s0 + $0x18] sm:$0xf]
  %v28 = vld [vmem:[%s0 + $0x1c] sm:$0xf]
  %v29 = vld [vmem:[%s0 + $0x20] sm:$0xf]
  %v30 = vld [vmem:[%s0 + $0x24] sm:$0xf]
  %v31 = vld [vmem:[%s0 + $0x28] sm:$0xf]
  %v32 = vld [vmem:[%s0 + $0x2c] sm:$0xf]
  %v33 = vld [vmem:[%s0 + $0x30] sm:$0xf]
  %v34 = vld [vmem:[%s0 + $0x34] sm:$0xf]
  %v35 = vld [vmem:[%s0 + $0x38] sm:$0xf]
  %v36 = vld [vmem:[%s0 + $0x3c] sm:$0xf]
  %v37 = vld [vmem:[%s0 + $0x40] sm:$0xf]
  %v38 = vld [vmem:[%s0 + $0x44] sm:$0xf]
  %v39 = vld [vmem:[%s0 + $0x48] sm:$0xf]
  %v40 = vld [vmem:[%s0 + $0x4c] sm:$0xf]
  %v41 = vld [vmem:[%s0 + $0x50] sm:$0xf]
  %v42 = vld [vmem:[%s0 + $0x54] sm:$0xf]
  %v43 = vld [vmem:[%s0 + $0x58] sm:$0xf]
  %v44 = vld [vmem:[%s0 + $0x5c] sm:$0xf]
  %v45 = vld [vmem:[%s0 + $0x60] sm:$0xf]
  %v46 = vld [vmem:[%s0 + $0x64] sm:$0xf]
  %v47 = vld [vmem:[%s0 + $0x68] sm:$0xf]
  %v48 = vld [vmem:[%s0 + $0x6c] sm:$0xf]
  %v49 = vld [vmem:[%s0 + $0x70] sm:$0xf]
  %v50 = vld [vmem:[%s0 + $0x74] sm:$0xf]
  %v51 = vld [vmem:[%s0 + $0x78] sm:$0xf]
  %v52 = vld [vmem:[%s0 + $0x7c] sm:$0xf]
  %v53 = vld [vmem:[%s0 + $0x80] sm:$0xf]
  %v54 = vld [vmem:[%s0 + $0x84] sm:$0xf]
  %v55 = vld [vmem:[%s0 + $0x88] sm:$0xf]
  %v56 = vld [vmem:[%s0 + $0x8c] sm:$0xf]
  %v57 = vld [vmem:[%s0 + $0x90] sm:$0xf]
  %v58 = vld [vmem:[%s0 + $0x94] sm:$0xf]
  %v59 = vld [vmem:[%s0 + $0x98] sm:$0xf]
  %v60 = vld [vmem:[%s0 + $0x9c] sm:$0xf]
  %v61 = vld [vmem:[%s0 + $0xa0] sm:$0xf]
  %v62 = vld [vmem:[%s0 + $0xa4] sm:$0xf]
  %v63 = vld [vmem:[%s0 + $0xa8] sm:$0xf]
  %v64 = vld [vmem:[%s0 + $0xac] sm:$0xf]
  %v65 = vld [vmem:[%s0 + $0xb0] sm:$0xf]
  %v66 = vld [vmem:[%s0 + $0xb4] sm:$0xf]
  %v67 = vld [vmem:[%s0 + $0xb8] sm:$0xf]
  %v68 = vld [vmem:[%s0 + $0xbc] sm:$0xf]
  %v69 = vld [vmem:[%s0 + $0xc0] sm:$0xf]
  %v70 = vld [vmem:[%s0 + $0xc4] sm:$0xf]
  %v71 = vld [vmem:[%s0 + $0xc8] sm:$0xf]
  %v72 = vld [vmem:[%s0 + $0xcc] sm:$0xf]
  %v73 = vld [vmem:[%s0 + $0xd0] sm:$0xf]
  %v74 = vld [vmem:[%s0 + $0xd4] sm:$0xf]
  %v75 = vld [vmem:[%s0 + $0xd8] sm:$0xf]
  %v76 = vld [vmem:[%s0 + $0xdc] sm:$0xf]
  %v77 = vld [vmem:[%s0 + $0xe0] sm:$0xf]
  %v78 = vld [vmem:[%s0 + $0xe4] sm:$0xf]
  %v79 = vld [vmem:[%s0 + $0xe8] sm:$0xf]
  %v80 = vld [vmem:[%s0 + $0xec] sm:$0xf]
  %v81 = vld [vmem:[%s0 + $0xf0] sm:$0xf]
  %v82 = vld [vmem:[%s0 + $0xf4] sm:$0xf]
  %v83 = vld [vmem:[%s0 + $0xf8] sm:$0xf]
  %v84 = vld [vmem:[%s0 + $0xfc] sm:$0xf]
  %v85 = vld [vmem:[%s1] sm:$0xf]
  %v86 = vld [vmem:[%s1 + $0x4] sm:$0xf]
  %v87 = vld [vmem:[%s1 + $0x8] sm:$0xf]
  %v88 = vld [vmem:[%s1 + $0xc] sm:$0xf]
  %v89 = vld [vmem:[%s1 + $0x10] sm:$0xf]
  %v90 = vld [vmem:[%s1 + $0x14] sm:$0xf]
  %v91 = vld [vmem:[%s1 + $0x18] sm:$0xf]
  %v92 = vld [vmem:[%s1 + $0x1c] sm:$0xf]
  %v93 = vld [vmem:[%s1 + $0x20] sm:$0xf]
  %v94 = vld [vmem:[%s1 + $0x24] sm:$0xf]
  %v95 = vld [vmem:[%s1 + $0x28] sm:$0xf]
  %v96 = vld [vmem:[%s1 + $0x2c] sm:$0xf]
  %v97 = vld [vmem:[%s1 + $0x30] sm:$0xf]
  %v98 = vld [vmem:[%s1 + $0x34] sm:$0xf]
  %v99 = vld [vmem:[%s1 + $0x38] sm:$0xf]
  %v100 = vld [vmem:[%s1 + $0x3c] sm:$0xf]
  %v101 = vld [vmem:[%s2] sm:$0x1]
  %v103 = vlaneseq
  %v104 = vshrl.u32 %v103, 7
  %v105 = vsub.s32 0, %v104
  %v106 = vrot.slane %v101, %v105
  %v172 = vunpack.c.l.b16 %v21
  %v173 = vunpack.c.l.b16 %v22
  %v174 = vunpack.c.l.b16 %v23
  %v175 = vunpack.c.l.b16 %v24
  %v176 = vunpack.c.l.b16 %v25
  %v177 = vunpack.c.l.b16 %v26
  %v178 = vunpack.c.l.b16 %v27
  %v179 = vunpack.c.l.b16 %v28
  %v180 = vunpack.c.l.b16 %v29
  %v181 = vunpack.c.l.b16 %v30
  %v182 = vunpack.c.l.b16 %v31
  %v183 = vunpack.c.l.b16 %v32
  %v184 = vunpack.c.l.b16 %v33
  %v185 = vunpack.c.l.b16 %v34
  %v186 = vunpack.c.l.b16 %v35
  %v187 = vunpack.c.l.b16 %v36
  %v188 = vunpack.c.l.b16 %v37
  %v189 = vunpack.c.l.b16 %v38
  %v190 = vunpack.c.l.b16 %v39
  %v191 = vunpack.c.l.b16 %v40
  %v192 = vunpack.c.l.b16 %v41
  %v193 = vunpack.c.l.b16 %v42
  %v194 = vunpack.c.l.b16 %v43
  %v195 = vunpack.c.l.b16 %v44
  %v196 = vunpack.c.l.b16 %v45
  %v197 = vunpack.c.l.b16 %v46
  %v198 = vunpack.c.l.b16 %v47
  %v199 = vunpack.c.l.b16 %v48
  %v200 = vunpack.c.l.b16 %v49
  %v201 = vunpack.c.l.b16 %v50
  %v202 = vunpack.c.l.b16 %v51
  %v203 = vunpack.c.l.b16 %v52
  %v204 = vunpack.c.l.b16 %v53
  %v205 = vunpack.c.l.b16 %v54
  %v206 = vunpack.c.l.b16 %v55
  %v207 = vunpack.c.l.b16 %v56
  %v208 = vunpack.c.l.b16 %v57
  %v209 = vunpack.c.l.b16 %v58
  %v210 = vunpack.c.l.b16 %v59
  %v211 = vunpack.c.l.b16 %v60
  %v212 = vunpack.c.l.b16 %v61
  %v213 = vunpack.c.l.b16 %v62
  %v214 = vunpack.c.l.b16 %v63
  %v215 = vunpack.c.l.b16 %v64
  %v216 = vunpack.c.l.b16 %v65
  %v217 = vunpack.c.l.b16 %v66
  %v218 = vunpack.c.l.b16 %v67
  %v219 = vunpack.c.l.b16 %v68
  %v220 = vunpack.c.l.b16 %v69
  %v221 = vunpack.c.l.b16 %v70
  %v222 = vunpack.c.l.b16 %v71
  %v223 = vunpack.c.l.b16 %v72
  %v224 = vunpack.c.l.b16 %v73
  %v225 = vunpack.c.l.b16 %v74
  %v226 = vunpack.c.l.b16 %v75
  %v227 = vunpack.c.l.b16 %v76
  %v228 = vunpack.c.l.b16 %v77
  %v229 = vunpack.c.l.b16 %v78
  %v230 = vunpack.c.l.b16 %v79
  %v231 = vunpack.c.l.b16 %v80
  %v232 = vunpack.c.l.b16 %v81
  %v233 = vunpack.c.l.b16 %v82
  %v234 = vunpack.c.l.b16 %v83
  %v235 = vunpack.c.l.b16 %v84
  %v236 = vpack.c.b16 %v173, %v172
  %v237 = vpack.c.b16 %v175, %v174
  %v238 = vpack.c.b16 %v177, %v176
  %v239 = vpack.c.b16 %v179, %v178
  %v240 = vpack.c.b16 %v181, %v180
  %v241 = vpack.c.b16 %v183, %v182
  %v242 = vpack.c.b16 %v185, %v184
  %v243 = vpack.c.b16 %v187, %v186
  %v244 = vpack.c.b16 %v189, %v188
  %v245 = vpack.c.b16 %v191, %v190
  %v246 = vpack.c.b16 %v193, %v192
  %v247 = vpack.c.b16 %v195, %v194
  %v248 = vpack.c.b16 %v197, %v196
  %v249 = vpack.c.b16 %v199, %v198
  %v250 = vpack.c.b16 %v201, %v200
  %v251 = vpack.c.b16 %v203, %v202
  %v252 = vpack.c.b16 %v205, %v204
  %v253 = vpack.c.b16 %v207, %v206
  %v254 = vpack.c.b16 %v209, %v208
  %v255 = vpack.c.b16 %v211, %v210
  %v256 = vpack.c.b16 %v213, %v212
  %v257 = vpack.c.b16 %v215, %v214
  %v258 = vpack.c.b16 %v217, %v216
  %v259 = vpack.c.b16 %v219, %v218
  %v260 = vpack.c.b16 %v221, %v220
  %v261 = vpack.c.b16 %v223, %v222
  %v262 = vpack.c.b16 %v225, %v224
  %v263 = vpack.c.b16 %v227, %v226
  %v264 = vpack.c.b16 %v229, %v228
  %v265 = vpack.c.b16 %v231, %v230
  %v266 = vpack.c.b16 %v233, %v232
  %v267 = vpack.c.b16 %v235, %v234
  %v316 = vunpack.c.l.b16 %v85
  %v317 = vunpack.c.l.b16 %v86
  %v318 = vunpack.c.l.b16 %v87
  %v319 = vunpack.c.l.b16 %v88
  %v320 = vunpack.c.l.b16 %v89
  %v321 = vunpack.c.l.b16 %v90
  %v322 = vunpack.c.l.b16 %v91
  %v323 = vunpack.c.l.b16 %v92
  %v324 = vunpack.c.l.b16 %v93
  %v325 = vunpack.c.l.b16 %v94
  %v326 = vunpack.c.l.b16 %v95
  %v327 = vunpack.c.l.b16 %v96
  %v328 = vunpack.c.l.b16 %v97
  %v329 = vunpack.c.l.b16 %v98
  %v330 = vunpack.c.l.b16 %v99
  %v331 = vunpack.c.l.b16 %v100
  %v332 = vpack.c.b16 %v317, %v316
  %v333 = vpack.c.b16 %v319, %v318
  %v334 = vpack.c.b16 %v321, %v320
  %v335 = vpack.c.b16 %v323, %v322
  %v336 = vpack.c.b16 %v325, %v324
  %v337 = vpack.c.b16 %v327, %v326
  %v338 = vpack.c.b16 %v329, %v328
  %v339 = vpack.c.b16 %v331, %v330
  %348 = vmatprep.subr.bf16.mxu0 0
  %349 = vmatpush1.bf16.msra.mxu0 %v332
  %350 = vmatprep.subr.bf16.mxu0 0
  %351 = vmatpush1.bf16.msra.mxu0 %v333
  %352 = vmatprep.subr.bf16.mxu0 0
  %353 = vmatpush1.bf16.msra.mxu0 %v334
  %354 = vmatprep.subr.bf16.mxu0 0
  %355 = vmatpush1.bf16.msra.mxu0 %v335
  %356 = vmatprep.subr.bf16.mxu0 0
  %357 = vmatpush1.bf16.msra.mxu0 %v336
  %358 = vmatprep.subr.bf16.mxu0 0
  %359 = vmatpush1.bf16.msra.mxu0 %v337
  %360 = vmatprep.subr.bf16.mxu0 0
  %361 = vmatpush1.bf16.msra.mxu0 %v338
  %362 = vmatprep.subr.bf16.mxu0 0
  %363 = vmatpush1.bf16.msra.mxu0 %v339
  %364 = vmatprep.subr.bf16.mxu0 0
  %365 = vmatpush1.bf16.msra.mxu0 0
  %366 = vmatprep.subr.bf16.mxu0 0
  %367 = vmatpush1.bf16.msra.mxu0 0
  %368 = vmatprep.subr.bf16.mxu0 0
  %369 = vmatpush1.bf16.msra.mxu0 0
  %370 = vmatprep.subr.bf16.mxu0 0
  %371 = vmatpush1.bf16.msra.mxu0 0
  %372 = vmatprep.subr.bf16.mxu0 0
  %373 = vmatpush1.bf16.msra.mxu0 0
  %374 = vmatprep.subr.bf16.mxu0 0
  %375 = vmatpush1.bf16.msra.mxu0 0
  %376 = vmatprep.subr.bf16.mxu0 0
  %377 = vmatpush1.bf16.msra.mxu0 0
  %378 = vmatprep.subr.bf16.mxu0 0
  %379 = vmatpush1.bf16.msra.mxu0 0
  %380 = vmatprep.mubr.bf16.mxu0 0
  %381 = vmatmul.mubr.bf16.gmra.mrb[0].mxu0 %v236
  %v382 = vpop.f32.mrb[0].mxu0
  %v383 = vadd.f32 %v106, %v382
  %v384 = vpop.f32.mrb[0].mxu0
  %v385 = vpop.f32.mrb[0].mxu0
  %v386 = vadd.f32 %v106, %v385
  %v387 = vpop.f32.mrb[0].mxu0
  %388 = vmatprep.mubr.bf16.mxu0 0
  %389 = vmatmul.mubr.bf16.gmra.mrb[0].mxu0 %v237
  %v390 = vpop.f32.mrb[0].mxu0
  %v391 = vadd.f32 %v106, %v390
  %v392 = vpop.f32.mrb[0].mxu0
  %v393 = vpop.f32.mrb[0].mxu0
  %v394 = vadd.f32 %v106, %v393
  %v395 = vpop.f32.mrb[0].mxu0
  %396 = vmatprep.mubr.bf16.mxu0 0
  %397 = vmatmul.mubr.bf16.gmra.mrb[0].mxu0 %v238
  %v398 = vpop.f32.mrb[0].mxu0
  %v399 = vadd.f32 %v106, %v398
  %v400 = vpop.f32.mrb[0].mxu0
  %v401 = vpop.f32.mrb[0].mxu0
  %v402 = vadd.f32 %v106, %v401
  %v403 = vpop.f32.mrb[0].mxu0
  %404 = vmatprep.mubr.bf16.mxu0 0
  %405 = vmatmul.mubr.bf16.gmra.mrb[0].mxu0 %v239
  %v406 = vpop.f32.mrb[0].mxu0
  %v407 = vadd.f32 %v106, %v406
  %v408 = vpop.f32.mrb[0].mxu0
  %v409 = vpop.f32.mrb[0].mxu0
  %v410 = vadd.f32 %v106, %v409
  %v411 = vpop.f32.mrb[0].mxu0
  %412 = vmatprep.mubr.bf16.mxu0 0
  %413 = vmatmul.mubr.bf16.gmra.mrb[0].mxu0 %v240
  %v414 = vpop.f32.mrb[0].mxu0
  %v415 = vadd.f32 %v106, %v414
  %v416 = vpop.f32.mrb[0].mxu0
  %v417 = vpop.f32.mrb[0].mxu0
  %v418 = vadd.f32 %v106, %v417
  %v419 = vpop.f32.mrb[0].mxu0
  %420 = vmatprep.mubr.bf16.mxu0 0
  %421 = vmatmul.mubr.bf16.gmra.mrb[0].mxu0 %v241
  %v422 = vpop.f32.mrb[0].mxu0
  %v423 = vadd.f32 %v106, %v422
  %v424 = vpop.f32.mrb[0].mxu0
  %v425 = vpop.f32.mrb[0].mxu0
  %v426 = vadd.f32 %v106, %v425
  %v427 = vpop.f32.mrb[0].mxu0
  %428 = vmatprep.mubr.bf16.mxu0 0
  %429 = vmatmul.mubr.bf16.gmra.mrb[0].mxu0 %v242
  %v430 = vpop.f32.mrb[0].mxu0
  %v431 = vadd.f32 %v106, %v430
  %v432 = vpop.f32.mrb[0].mxu0
  %v433 = vpop.f32.mrb[0].mxu0
  %v434 = vadd.f32 %v106, %v433
  %v435 = vpop.f32.mrb[0].mxu0
  %436 = vmatprep.mubr.bf16.mxu0 0
  %437 = vmatmul.mubr.bf16.gmra.mrb[0].mxu0 %v243
  %v438 = vpop.f32.mrb[0].mxu0
  %v439 = vadd.f32 %v106, %v438
  %v440 = vpop.f32.mrb[0].mxu0
  %v441 = vpop.f32.mrb[0].mxu0
  %v442 = vadd.f32 %v106, %v441
  %v443 = vpop.f32.mrb[0].mxu0
  %444 = vmatprep.mubr.bf16.mxu0 0
  %445 = vmatmul.mubr.bf16.gmra.mrb[0].mxu0 %v244
  %v446 = vpop.f32.mrb[0].mxu0
  %v447 = vadd.f32 %v106, %v446
  %v448 = vpop.f32.mrb[0].mxu0
  %v449 = vpop.f32.mrb[0].mxu0
  %v450 = vadd.f32 %v106, %v449
  %v451 = vpop.f32.mrb[0].mxu0
  %452 = vmatprep.mubr.bf16.mxu0 0
  %453 = vmatmul.mubr.bf16.gmra.mrb[0].mxu0 %v245
  %v454 = vpop.f32.mrb[0].mxu0
  %v455 = vadd.f32 %v106, %v454
  %v456 = vpop.f32.mrb[0].mxu0
  %v457 = vpop.f32.mrb[0].mxu0
  %v458 = vadd.f32 %v106, %v457
  %v459 = vpop.f32.mrb[0].mxu0
  %460 = vmatprep.mubr.bf16.mxu0 0
  %461 = vmatmul.mubr.bf16.gmra.mrb[0].mxu0 %v246
  %v462 = vpop.f32.mrb[0].mxu0
  %v463 = vadd.f32 %v106, %v462
  %v464 = vpop.f32.mrb[0].mxu0
  %v465 = vpop.f32.mrb[0].mxu0
  %v466 = vadd.f32 %v106, %v465
  %v467 = vpop.f32.mrb[0].mxu0
  %468 = vmatprep.mubr.bf16.mxu0 0
  %469 = vmatmul.mubr.bf16.gmra.mrb[0].mxu0 %v247
  %v470 = vpop.f32.mrb[0].mxu0
  %v471 = vadd.f32 %v106, %v470
  %v472 = vpop.f32.mrb[0].mxu0
  %v473 = vpop.f32.mrb[0].mxu0
  %v474 = vadd.f32 %v106, %v473
  %v475 = vpop.f32.mrb[0].mxu0
  %476 = vmatprep.mubr.bf16.mxu0 0
  %477 = vmatmul.mubr.bf16.gmra.mrb[0].mxu0 %v248
  %v478 = vpop.f32.mrb[0].mxu0
  %v479 = vadd.f32 %v106, %v478
  %v480 = vpop.f32.mrb[0].mxu0
  %v481 = vpop.f32.mrb[0].mxu0
  %v482 = vadd.f32 %v106, %v481
  %v483 = vpop.f32.mrb[0].mxu0
  %484 = vmatprep.mubr.bf16.mxu0 0
  %485 = vmatmul.mubr.bf16.gmra.mrb[0].mxu0 %v249
  %v486 = vpop.f32.mrb[0].mxu0
  %v487 = vadd.f32 %v106, %v486
  %v488 = vpop.f32.mrb[0].mxu0
  %v489 = vpop.f32.mrb[0].mxu0
  %v490 = vadd.f32 %v106, %v489
  %v491 = vpop.f32.mrb[0].mxu0
  %492 = vmatprep.mubr.bf16.mxu0 0
  %493 = vmatmul.mubr.bf16.gmra.mrb[0].mxu0 %v250
  %v494 = vpop.f32.mrb[0].mxu0
  %v495 = vadd.f32 %v106, %v494
  %v496 = vpop.f32.mrb[0].mxu0
  %v497 = vpop.f32.mrb[0].mxu0
  %v498 = vadd.f32 %v106, %v497
  %v499 = vpop.f32.mrb[0].mxu0
  %500 = vmatprep.mubr.bf16.mxu0 0
  %501 = vmatmul.mubr.bf16.gmra.mrb[0].mxu0 %v251
  %v502 = vpop.f32.mrb[0].mxu0
  %v503 = vadd.f32 %v106, %v502
  %v504 = vpop.f32.mrb[0].mxu0
  %v505 = vpop.f32.mrb[0].mxu0
  %v506 = vadd.f32 %v106, %v505
  %v507 = vpop.f32.mrb[0].mxu0
  %508 = vmatprep.mubr.bf16.mxu0 0
  %509 = vmatmul.mubr.bf16.gmra.mrb[0].mxu0 %v252
  %v510 = vpop.f32.mrb[0].mxu0
  %v511 = vadd.f32 %v106, %v510
  %v512 = vpop.f32.mrb[0].mxu0
  %v513 = vpop.f32.mrb[0].mxu0
  %v514 = vadd.f32 %v106, %v513
  %v515 = vpop.f32.mrb[0].mxu0
  %516 = vmatprep.mubr.bf16.mxu0 0
  %517 = vmatmul.mubr.bf16.gmra.mrb[0].mxu0 %v253
  %v518 = vpop.f32.mrb[0].mxu0
  %v519 = vadd.f32 %v106, %v518
  %v520 = vpop.f32.mrb[0].mxu0
  %v521 = vpop.f32.mrb[0].mxu0
  %v522 = vadd.f32 %v106, %v521
  %v523 = vpop.f32.mrb[0].mxu0
  %524 = vmatprep.mubr.bf16.mxu0 0
  %525 = vmatmul.mubr.bf16.gmra.mrb[0].mxu0 %v254
  %v526 = vpop.f32.mrb[0].mxu0
  %v527 = vadd.f32 %v106, %v526
  %v528 = vpop.f32.mrb[0].mxu0
  %v529 = vpop.f32.mrb[0].mxu0
  %v530 = vadd.f32 %v106, %v529
  %v531 = vpop.f32.mrb[0].mxu0
  %532 = vmatprep.mubr.bf16.mxu0 0
  %533 = vmatmul.mubr.bf16.gmra.mrb[0].mxu0 %v255
  %v534 = vpop.f32.mrb[0].mxu0
  %v535 = vadd.f32 %v106, %v534
  %v536 = vpop.f32.mrb[0].mxu0
  %v537 = vpop.f32.mrb[0].mxu0
  %v538 = vadd.f32 %v106, %v537
  %v539 = vpop.f32.mrb[0].mxu0
  %540 = vmatprep.mubr.bf16.mxu0 0
  %541 = vmatmul.mubr.bf16.gmra.mrb[0].mxu0 %v256
  %v542 = vpop.f32.mrb[0].mxu0
  %v543 = vadd.f32 %v106, %v542
  %v544 = vpop.f32.mrb[0].mxu0
  %v545 = vpop.f32.mrb[0].mxu0
  %v546 = vadd.f32 %v106, %v545
  %v547 = vpop.f32.mrb[0].mxu0
  %548 = vmatprep.mubr.bf16.mxu0 0
  %549 = vmatmul.mubr.bf16.gmra.mrb[0].mxu0 %v257
  %v550 = vpop.f32.mrb[0].mxu0
  %v551 = vadd.f32 %v106, %v550
  %v552 = vpop.f32.mrb[0].mxu0
  %v553 = vpop.f32.mrb[0].mxu0
  %v554 = vadd.f32 %v106, %v553
  %v555 = vpop.f32.mrb[0].mxu0
  %556 = vmatprep.mubr.bf16.mxu0 0
  %557 = vmatmul.mubr.bf16.gmra.mrb[0].mxu0 %v258
  %v558 = vpop.f32.mrb[0].mxu0
  %v559 = vadd.f32 %v106, %v558
  %v560 = vpop.f32.mrb[0].mxu0
  %v561 = vpop.f32.mrb[0].mxu0
  %v562 = vadd.f32 %v106, %v561
  %v563 = vpop.f32.mrb[0].mxu0
  %564 = vmatprep.mubr.bf16.mxu0 0
  %565 = vmatmul.mubr.bf16.gmra.mrb[0].mxu0 %v259
  %v566 = vpop.f32.mrb[0].mxu0
  %v567 = vadd.f32 %v106, %v566
  %v568 = vpop.f32.mrb[0].mxu0
  %v569 = vpop.f32.mrb[0].mxu0
  %v570 = vadd.f32 %v106, %v569
  %v571 = vpop.f32.mrb[0].mxu0
  %572 = vmatprep.mubr.bf16.mxu0 0
  %573 = vmatmul.mubr.bf16.gmra.mrb[0].mxu0 %v260
  %v574 = vpop.f32.mrb[0].mxu0
  %v575 = vadd.f32 %v106, %v574
  %v576 = vpop.f32.mrb[0].mxu0
  %v577 = vpop.f32.mrb[0].mxu0
  %v578 = vadd.f32 %v106, %v577
  %v579 = vpop.f32.mrb[0].mxu0
  %580 = vmatprep.mubr.bf16.mxu0 0
  %581 = vmatmul.mubr.bf16.gmra.mrb[0].mxu0 %v261
  %v582 = vpop.f32.mrb[0].mxu0
  %v583 = vadd.f32 %v106, %v582
  %v584 = vpop.f32.mrb[0].mxu0
  %v585 = vpop.f32.mrb[0].mxu0
  %v586 = vadd.f32 %v106, %v585
  %v587 = vpop.f32.mrb[0].mxu0
  %588 = vmatprep.mubr.bf16.mxu0 0
  %589 = vmatmul.mubr.bf16.gmra.mrb[0].mxu0 %v262
  %v590 = vpop.f32.mrb[0].mxu0
  %v591 = vadd.f32 %v106, %v590
  %v592 = vpop.f32.mrb[0].mxu0
  %v593 = vpop.f32.mrb[0].mxu0
  %v594 = vadd.f32 %v106, %v593
  %v595 = vpop.f32.mrb[0].mxu0
  %596 = vmatprep.mubr.bf16.mxu0 0
  %597 = vmatmul.mubr.bf16.gmra.mrb[0].mxu0 %v263
  %v598 = vpop.f32.mrb[0].mxu0
  %v599 = vadd.f32 %v106, %v598
  %v600 = vpop.f32.mrb[0].mxu0
  %v601 = vpop.f32.mrb[0].mxu0
  %v602 = vadd.f32 %v106, %v601
  %v603 = vpop.f32.mrb[0].mxu0
  %604 = vmatprep.mubr.bf16.mxu0 0
  %605 = vmatmul.mubr.bf16.gmra.mrb[0].mxu0 %v264
  %v606 = vpop.f32.mrb[0].mxu0
  %v607 = vadd.f32 %v106, %v606
  %v608 = vpop.f32.mrb[0].mxu0
  %v609 = vpop.f32.mrb[0].mxu0
  %v610 = vadd.f32 %v106, %v609
  %v611 = vpop.f32.mrb[0].mxu0
  %612 = vmatprep.mubr.bf16.mxu0 0
  %613 = vmatmul.mubr.bf16.gmra.mrb[0].mxu0 %v265
  %v614 = vpop.f32.mrb[0].mxu0
  %v615 = vadd.f32 %v106, %v614
  %v616 = vpop.f32.mrb[0].mxu0
  %v617 = vpop.f32.mrb[0].mxu0
  %v618 = vadd.f32 %v106, %v617
  %v619 = vpop.f32.mrb[0].mxu0
  %620 = vmatprep.mubr.bf16.mxu0 0
  %621 = vmatmul.mubr.bf16.gmra.mrb[0].mxu0 %v266
  %v622 = vpop.f32.mrb[0].mxu0
  %v623 = vadd.f32 %v106, %v622
  %v624 = vpop.f32.mrb[0].mxu0
  %v625 = vpop.f32.mrb[0].mxu0
  %v626 = vadd.f32 %v106, %v625
  %v627 = vpop.f32.mrb[0].mxu0
  %628 = vmatprep.mubr.bf16.mxu0 0
  %629 = vmatmul.mubr.bf16.gmra.mrb[0].mxu0 %v267
  %v630 = vpop.f32.mrb[0].mxu0
  %v631 = vadd.f32 %v106, %v630
  %v632 = vpop.f32.mrb[0].mxu0
  %v633 = vpop.f32.mrb[0].mxu0
  %v634 = vadd.f32 %v106, %v633
  %v635 = vpop.f32.mrb[0].mxu0
  %636 = vdwg.mxu0
  %v637 = vmax.f32 %v383, 0.0
  %v638 = vmax.f32 %v386, 0.0
  %v639 = vmax.f32 %v391, 0.0
  %v640 = vmax.f32 %v394, 0.0
  %v641 = vmax.f32 %v399, 0.0
  %v642 = vmax.f32 %v402, 0.0
  %v643 = vmax.f32 %v407, 0.0
  %v644 = vmax.f32 %v410, 0.0
  %v645 = vmax.f32 %v415, 0.0
  %v646 = vmax.f32 %v418, 0.0
  %v647 = vmax.f32 %v423, 0.0
  %v648 = vmax.f32 %v426, 0.0
  %v649 = vmax.f32 %v431, 0.0
  %v650 = vmax.f32 %v434, 0.0
  %v651 = vmax.f32 %v439, 0.0
  %v652 = vmax.f32 %v442, 0.0
  %v653 = vmax.f32 %v447, 0.0
  %v654 = vmax.f32 %v450, 0.0
  %v655 = vmax.f32 %v455, 0.0
  %v656 = vmax.f32 %v458, 0.0
  %v657 = vmax.f32 %v463, 0.0
  %v658 = vmax.f32 %v466, 0.0
  %v659 = vmax.f32 %v471, 0.0
  %v660 = vmax.f32 %v474, 0.0
  %v661 = vmax.f32 %v479, 0.0
  %v662 = vmax.f32 %v482, 0.0
  %v663 = vmax.f32 %v487, 0.0
  %v664 = vmax.f32 %v490, 0.0
  %v665 = vmax.f32 %v495, 0.0
  %v666 = vmax.f32 %v498, 0.0
  %v667 = vmax.f32 %v503, 0.0
  %v668 = vmax.f32 %v506, 0.0
  %v669 = vmax.f32 %v511, 0.0
  %v670 = vmax.f32 %v514, 0.0
  %v671 = vmax.f32 %v519, 0.0
  %v672 = vmax.f32 %v522, 0.0
  %v673 = vmax.f32 %v527, 0.0
  %v674 = vmax.f32 %v530, 0.0
  %v675 = vmax.f32 %v535, 0.0
  %v676 = vmax.f32 %v538, 0.0
  %v677 = vmax.f32 %v543, 0.0
  %v678 = vmax.f32 %v546, 0.0
  %v679 = vmax.f32 %v551, 0.0
  %v680 = vmax.f32 %v554, 0.0
  %v681 = vmax.f32 %v559, 0.0
  %v682 = vmax.f32 %v562, 0.0
  %v683 = vmax.f32 %v567, 0.0
  %v684 = vmax.f32 %v570, 0.0
  %v685 = vmax.f32 %v575, 0.0
  %v686 = vmax.f32 %v578, 0.0
  %v687 = vmax.f32 %v583, 0.0
  %v688 = vmax.f32 %v586, 0.0
  %v689 = vmax.f32 %v591, 0.0
  %v690 = vmax.f32 %v594, 0.0
  %v691 = vmax.f32 %v599, 0.0
  %v692 = vmax.f32 %v602, 0.0
  %v693 = vmax.f32 %v607, 0.0
  %v694 = vmax.f32 %v610, 0.0
  %v695 = vmax.f32 %v615, 0.0
  %v696 = vmax.f32 %v618, 0.0
  %v697 = vmax.f32 %v623, 0.0
  %v698 = vmax.f32 %v626, 0.0
  %v699 = vmax.f32 %v631, 0.0
  %v700 = vmax.f32 %v634, 0.0
  %v765 = vcombine.high %v637, %v637
  %v767 = vunpack.c.l.s4 1983009808
  %v768 = vunpack.c.0.s8 %v767
  %v769 = vlaneseq
  %v770 = vshrl.u32 %v769, 7
  %v771 = vsub.s32 %v768, %v770
  %v772 = vrot.slane %v637, %v771
  %v774 = vunpack.c.l.s4 1983009808
  %v775 = vunpack.c.0.s8 %v774
  %v776 = vlaneseq
  %v777 = vshrl.u32 %v776, 7
  %v778 = vsub.s32 %v775, %v777
  %v779 = vrot.slane %v765, %v778
  %v780 = vcombine.high %v772, %v772
  %v781 = vcombine.high %v779, %v779
  %v782 = vcombine.high %v638, %v638
  %v784 = vunpack.c.l.s4 1983009808
  %v785 = vunpack.c.0.s8 %v784
  %v786 = vlaneseq
  %v787 = vshrl.u32 %v786, 7
  %v788 = vsub.s32 %v785, %v787
  %v789 = vrot.slane %v638, %v788
  %v791 = vunpack.c.l.s4 1983009808
  %v792 = vunpack.c.0.s8 %v791
  %v793 = vlaneseq
  %v794 = vshrl.u32 %v793, 7
  %v795 = vsub.s32 %v792, %v794
  %v796 = vrot.slane %v782, %v795
  %v797 = vcombine.high %v789, %v789
  %v798 = vcombine.high %v796, %v796
  %v799 = vcombine.high %v639, %v639
  %v801 = vunpack.c.l.s4 1983009808
  %v802 = vunpack.c.0.s8 %v801
  %v803 = vlaneseq
  %v804 = vshrl.u32 %v803, 7
  %v805 = vsub.s32 %v802, %v804
  %v806 = vrot.slane %v639, %v805
  %v808 = vunpack.c.l.s4 1983009808
  %v809 = vunpack.c.0.s8 %v808
  %v810 = vlaneseq
  %v811 = vshrl.u32 %v810, 7
  %v812 = vsub.s32 %v809, %v811
  %v813 = vrot.slane %v799, %v812
  %v814 = vcombine.high %v806, %v806
  %v815 = vcombine.high %v813, %v813
  %v816 = vcombine.high %v640, %v640
  %v818 = vunpack.c.l.s4 1983009808
  %v819 = vunpack.c.0.s8 %v818
  %v820 = vlaneseq
  %v821 = vshrl.u32 %v820, 7
  %v822 = vsub.s32 %v819, %v821
  %v823 = vrot.slane %v640, %v822
  %v825 = vunpack.c.l.s4 1983009808
  %v826 = vunpack.c.0.s8 %v825
  %v827 = vlaneseq
  %v828 = vshrl.u32 %v827, 7
  %v829 = vsub.s32 %v826, %v828
  %v830 = vrot.slane %v816, %v829
  %v831 = vcombine.high %v823, %v823
  %v832 = vcombine.high %v830, %v830
  %v833 = vcombine.high %v641, %v641
  %v835 = vunpack.c.l.s4 1983009808
  %v836 = vunpack.c.0.s8 %v835
  %v837 = vlaneseq
  %v838 = vshrl.u32 %v837, 7
  %v839 = vsub.s32 %v836, %v838
  %v840 = vrot.slane %v641, %v839
  %v842 = vunpack.c.l.s4 1983009808
  %v843 = vunpack.c.0.s8 %v842
  %v844 = vlaneseq
  %v845 = vshrl.u32 %v844, 7
  %v846 = vsub.s32 %v843, %v845
  %v847 = vrot.slane %v833, %v846
  %v848 = vcombine.high %v840, %v840
  %v849 = vcombine.high %v847, %v847
  %v850 = vcombine.high %v642, %v642
  %v852 = vunpack.c.l.s4 1983009808
  %v853 = vunpack.c.0.s8 %v852
  %v854 = vlaneseq
  %v855 = vshrl.u32 %v854, 7
  %v856 = vsub.s32 %v853, %v855
  %v857 = vrot.slane %v642, %v856
  %v859 = vunpack.c.l.s4 1983009808
  %v860 = vunpack.c.0.s8 %v859
  %v861 = vlaneseq
  %v862 = vshrl.u32 %v861, 7
  %v863 = vsub.s32 %v860, %v862
  %v864 = vrot.slane %v850, %v863
  %v865 = vcombine.high %v857, %v857
  %v866 = vcombine.high %v864, %v864
  %v867 = vcombine.high %v643, %v643
  %v869 = vunpack.c.l.s4 1983009808
  %v870 = vunpack.c.0.s8 %v869
  %v871 = vlaneseq
  %v872 = vshrl.u32 %v871, 7
  %v873 = vsub.s32 %v870, %v872
  %v874 = vrot.slane %v643, %v873
  %v876 = vunpack.c.l.s4 1983009808
  %v877 = vunpack.c.0.s8 %v876
  %v878 = vlaneseq
  %v879 = vshrl.u32 %v878, 7
  %v880 = vsub.s32 %v877, %v879
  %v881 = vrot.slane %v867, %v880
  %v882 = vcombine.high %v874, %v874
  %v883 = vcombine.high %v881, %v881
  %v884 = vcombine.high %v644, %v644
  %v886 = vunpack.c.l.s4 1983009808
  %v887 = vunpack.c.0.s8 %v886
  %v888 = vlaneseq
  %v889 = vshrl.u32 %v888, 7
  %v890 = vsub.s32 %v887, %v889
  %v891 = vrot.slane %v644, %v890
  %v893 = vunpack.c.l.s4 1983009808
  %v894 = vunpack.c.0.s8 %v893
  %v895 = vlaneseq
  %v896 = vshrl.u32 %v895, 7
  %v897 = vsub.s32 %v894, %v896
  %v898 = vrot.slane %v884, %v897
  %v899 = vcombine.high %v891, %v891
  %v900 = vcombine.high %v898, %v898
  %v901 = vcombine.high %v645, %v645
  %v903 = vunpack.c.l.s4 1983009808
  %v904 = vunpack.c.0.s8 %v903
  %v905 = vlaneseq
  %v906 = vshrl.u32 %v905, 7
  %v907 = vsub.s32 %v904, %v906
  %v908 = vrot.slane %v645, %v907
  %v910 = vunpack.c.l.s4 1983009808
  %v911 = vunpack.c.0.s8 %v910
  %v912 = vlaneseq
  %v913 = vshrl.u32 %v912, 7
  %v914 = vsub.s32 %v911, %v913
  %v915 = vrot.slane %v901, %v914
  %v916 = vcombine.high %v908, %v908
  %v917 = vcombine.high %v915, %v915
  %v918 = vcombine.high %v646, %v646
  %v920 = vunpack.c.l.s4 1983009808
  %v921 = vunpack.c.0.s8 %v920
  %v922 = vlaneseq
  %v923 = vshrl.u32 %v922, 7
  %v924 = vsub.s32 %v921, %v923
  %v925 = vrot.slane %v646, %v924
  %v927 = vunpack.c.l.s4 1983009808
  %v928 = vunpack.c.0.s8 %v927
  %v929 = vlaneseq
  %v930 = vshrl.u32 %v929, 7
  %v931 = vsub.s32 %v928, %v930
  %v932 = vrot.slane %v918, %v931
  %v933 = vcombine.high %v925, %v925
  %v934 = vcombine.high %v932, %v932
  %v935 = vcombine.high %v647, %v647
  %v937 = vunpack.c.l.s4 1983009808
  %v938 = vunpack.c.0.s8 %v937
  %v939 = vlaneseq
  %v940 = vshrl.u32 %v939, 7
  %v941 = vsub.s32 %v938, %v940
  %v942 = vrot.slane %v647, %v941
  %v944 = vunpack.c.l.s4 1983009808
  %v945 = vunpack.c.0.s8 %v944
  %v946 = vlaneseq
  %v947 = vshrl.u32 %v946, 7
  %v948 = vsub.s32 %v945, %v947
  %v949 = vrot.slane %v935, %v948
  %v950 = vcombine.high %v942, %v942
  %v951 = vcombine.high %v949, %v949
  %v952 = vcombine.high %v648, %v648
  %v954 = vunpack.c.l.s4 1983009808
  %v955 = vunpack.c.0.s8 %v954
  %v956 = vlaneseq
  %v957 = vshrl.u32 %v956, 7
  %v958 = vsub.s32 %v955, %v957
  %v959 = vrot.slane %v648, %v958
  %v961 = vunpack.c.l.s4 1983009808
  %v962 = vunpack.c.0.s8 %v961
  %v963 = vlaneseq
  %v964 = vshrl.u32 %v963, 7
  %v965 = vsub.s32 %v962, %v964
  %v966 = vrot.slane %v952, %v965
  %v967 = vcombine.high %v959, %v959
  %v968 = vcombine.high %v966, %v966
  %v969 = vcombine.high %v649, %v649
  %v971 = vunpack.c.l.s4 1983009808
  %v972 = vunpack.c.0.s8 %v971
  %v973 = vlaneseq
  %v974 = vshrl.u32 %v973, 7
  %v975 = vsub.s32 %v972, %v974
  %v976 = vrot.slane %v649, %v975
  %v978 = vunpack.c.l.s4 1983009808
  %v979 = vunpack.c.0.s8 %v978
  %v980 = vlaneseq
  %v981 = vshrl.u32 %v980, 7
  %v982 = vsub.s32 %v979, %v981
  %v983 = vrot.slane %v969, %v982
  %v984 = vcombine.high %v976, %v976
  %v985 = vcombine.high %v983, %v983
  %v986 = vcombine.high %v650, %v650
  %v988 = vunpack.c.l.s4 1983009808
  %v989 = vunpack.c.0.s8 %v988
  %v990 = vlaneseq
  %v991 = vshrl.u32 %v990, 7
  %v992 = vsub.s32 %v989, %v991
  %v993 = vrot.slane %v650, %v992
  %v995 = vunpack.c.l.s4 1983009808
  %v996 = vunpack.c.0.s8 %v995
  %v997 = vlaneseq
  %v998 = vshrl.u32 %v997, 7
  %v999 = vsub.s32 %v996, %v998
  %v1000 = vrot.slane %v986, %v999
  %v1001 = vcombine.high %v993, %v993
  %v1002 = vcombine.high %v1000, %v1000
  %v1003 = vcombine.high %v651, %v651
  %v1005 = vunpack.c.l.s4 1983009808
  %v1006 = vunpack.c.0.s8 %v1005
  %v1007 = vlaneseq
  %v1008 = vshrl.u32 %v1007, 7
  %v1009 = vsub.s32 %v1006, %v1008
  %v1010 = vrot.slane %v651, %v1009
  %v1012 = vunpack.c.l.s4 1983009808
  %v1013 = vunpack.c.0.s8 %v1012
  %v1014 = vlaneseq
  %v1015 = vshrl.u32 %v1014, 7
  %v1016 = vsub.s32 %v1013, %v1015
  %v1017 = vrot.slane %v1003, %v1016
  %v1018 = vcombine.high %v1010, %v1010
  %v1019 = vcombine.high %v1017, %v1017
  %v1020 = vcombine.high %v652, %v652
  %v1022 = vunpack.c.l.s4 1983009808
  %v1023 = vunpack.c.0.s8 %v1022
  %v1024 = vlaneseq
  %v1025 = vshrl.u32 %v1024, 7
  %v1026 = vsub.s32 %v1023, %v1025
  %v1027 = vrot.slane %v652, %v1026
  %v1029 = vunpack.c.l.s4 1983009808
  %v1030 = vunpack.c.0.s8 %v1029
  %v1031 = vlaneseq
  %v1032 = vshrl.u32 %v1031, 7
  %v1033 = vsub.s32 %v1030, %v1032
  %v1034 = vrot.slane %v1020, %v1033
  %v1035 = vcombine.high %v1027, %v1027
  %v1036 = vcombine.high %v1034, %v1034
  %v1037 = vcombine.high %v653, %v653
  %v1039 = vunpack.c.l.s4 1983009808
  %v1040 = vunpack.c.0.s8 %v1039
  %v1041 = vlaneseq
  %v1042 = vshrl.u32 %v1041, 7
  %v1043 = vsub.s32 %v1040, %v1042
  %v1044 = vrot.slane %v653, %v1043
  %v1046 = vunpack.c.l.s4 1983009808
  %v1047 = vunpack.c.0.s8 %v1046
  %v1048 = vlaneseq
  %v1049 = vshrl.u32 %v1048, 7
  %v1050 = vsub.s32 %v1047, %v1049
  %v1051 = vrot.slane %v1037, %v1050
  %v1052 = vcombine.high %v1044, %v1044
  %v1053 = vcombine.high %v1051, %v1051
  %v1054 = vcombine.high %v654, %v654
  %v1056 = vunpack.c.l.s4 1983009808
  %v1057 = vunpack.c.0.s8 %v1056
  %v1058 = vlaneseq
  %v1059 = vshrl.u32 %v1058, 7
  %v1060 = vsub.s32 %v1057, %v1059
  %v1061 = vrot.slane %v654, %v1060
  %v1063 = vunpack.c.l.s4 1983009808
  %v1064 = vunpack.c.0.s8 %v1063
  %v1065 = vlaneseq
  %v1066 = vshrl.u32 %v1065, 7
  %v1067 = vsub.s32 %v1064, %v1066
  %v1068 = vrot.slane %v1054, %v1067
  %v1069 = vcombine.high %v1061, %v1061
  %v1070 = vcombine.high %v1068, %v1068
  %v1071 = vcombine.high %v655, %v655
  %v1073 = vunpack.c.l.s4 1983009808
  %v1074 = vunpack.c.0.s8 %v1073
  %v1075 = vlaneseq
  %v1076 = vshrl.u32 %v1075, 7
  %v1077 = vsub.s32 %v1074, %v1076
  %v1078 = vrot.slane %v655, %v1077
  %v1080 = vunpack.c.l.s4 1983009808
  %v1081 = vunpack.c.0.s8 %v1080
  %v1082 = vlaneseq
  %v1083 = vshrl.u32 %v1082, 7
  %v1084 = vsub.s32 %v1081, %v1083
  %v1085 = vrot.slane %v1071, %v1084
  %v1086 = vcombine.high %v1078, %v1078
  %v1087 = vcombine.high %v1085, %v1085
  %v1088 = vcombine.high %v656, %v656
  %v1090 = vunpack.c.l.s4 1983009808
  %v1091 = vunpack.c.0.s8 %v1090
  %v1092 = vlaneseq
  %v1093 = vshrl.u32 %v1092, 7
  %v1094 = vsub.s32 %v1091, %v1093
  %v1095 = vrot.slane %v656, %v1094
  %v1097 = vunpack.c.l.s4 1983009808
  %v1098 = vunpack.c.0.s8 %v1097
  %v1099 = vlaneseq
  %v1100 = vshrl.u32 %v1099, 7
  %v1101 = vsub.s32 %v1098, %v1100
  %v1102 = vrot.slane %v1088, %v1101
  %v1103 = vcombine.high %v1095, %v1095
  %v1104 = vcombine.high %v1102, %v1102
  %v1105 = vcombine.high %v657, %v657
  %v1107 = vunpack.c.l.s4 1983009808
  %v1108 = vunpack.c.0.s8 %v1107
  %v1109 = vlaneseq
  %v1110 = vshrl.u32 %v1109, 7
  %v1111 = vsub.s32 %v1108, %v1110
  %v1112 = vrot.slane %v657, %v1111
  %v1114 = vunpack.c.l.s4 1983009808
  %v1115 = vunpack.c.0.s8 %v1114
  %v1116 = vlaneseq
  %v1117 = vshrl.u32 %v1116, 7
  %v1118 = vsub.s32 %v1115, %v1117
  %v1119 = vrot.slane %v1105, %v1118
  %v1120 = vcombine.high %v1112, %v1112
  %v1121 = vcombine.high %v1119, %v1119
  %v1122 = vcombine.high %v658, %v658
  %v1124 = vunpack.c.l.s4 1983009808
  %v1125 = vunpack.c.0.s8 %v1124
  %v1126 = vlaneseq
  %v1127 = vshrl.u32 %v1126, 7
  %v1128 = vsub.s32 %v1125, %v1127
  %v1129 = vrot.slane %v658, %v1128
  %v1131 = vunpack.c.l.s4 1983009808
  %v1132 = vunpack.c.0.s8 %v1131
  %v1133 = vlaneseq
  %v1134 = vshrl.u32 %v1133, 7
  %v1135 = vsub.s32 %v1132, %v1134
  %v1136 = vrot.slane %v1122, %v1135
  %v1137 = vcombine.high %v1129, %v1129
  %v1138 = vcombine.high %v1136, %v1136
  %v1139 = vcombine.high %v659, %v659
  %v1141 = vunpack.c.l.s4 1983009808
  %v1142 = vunpack.c.0.s8 %v1141
  %v1143 = vlaneseq
  %v1144 = vshrl.u32 %v1143, 7
  %v1145 = vsub.s32 %v1142, %v1144
  %v1146 = vrot.slane %v659, %v1145
  %v1148 = vunpack.c.l.s4 1983009808
  %v1149 = vunpack.c.0.s8 %v1148
  %v1150 = vlaneseq
  %v1151 = vshrl.u32 %v1150, 7
  %v1152 = vsub.s32 %v1149, %v1151
  %v1153 = vrot.slane %v1139, %v1152
  %v1154 = vcombine.high %v1146, %v1146
  %v1155 = vcombine.high %v1153, %v1153
  %v1156 = vcombine.high %v660, %v660
  %v1158 = vunpack.c.l.s4 1983009808
  %v1159 = vunpack.c.0.s8 %v1158
  %v1160 = vlaneseq
  %v1161 = vshrl.u32 %v1160, 7
  %v1162 = vsub.s32 %v1159, %v1161
  %v1163 = vrot.slane %v660, %v1162
  %v1165 = vunpack.c.l.s4 1983009808
  %v1166 = vunpack.c.0.s8 %v1165
  %v1167 = vlaneseq
  %v1168 = vshrl.u32 %v1167, 7
  %v1169 = vsub.s32 %v1166, %v1168
  %v1170 = vrot.slane %v1156, %v1169
  %v1171 = vcombine.high %v1163, %v1163
  %v1172 = vcombine.high %v1170, %v1170
  %v1173 = vcombine.high %v661, %v661
  %v1175 = vunpack.c.l.s4 1983009808
  %v1176 = vunpack.c.0.s8 %v1175
  %v1177 = vlaneseq
  %v1178 = vshrl.u32 %v1177, 7
  %v1179 = vsub.s32 %v1176, %v1178
  %v1180 = vrot.slane %v661, %v1179
  %v1182 = vunpack.c.l.s4 1983009808
  %v1183 = vunpack.c.0.s8 %v1182
  %v1184 = vlaneseq
  %v1185 = vshrl.u32 %v1184, 7
  %v1186 = vsub.s32 %v1183, %v1185
  %v1187 = vrot.slane %v1173, %v1186
  %v1188 = vcombine.high %v1180, %v1180
  %v1189 = vcombine.high %v1187, %v1187
  %v1190 = vcombine.high %v662, %v662
  %v1192 = vunpack.c.l.s4 1983009808
  %v1193 = vunpack.c.0.s8 %v1192
  %v1194 = vlaneseq
  %v1195 = vshrl.u32 %v1194, 7
  %v1196 = vsub.s32 %v1193, %v1195
  %v1197 = vrot.slane %v662, %v1196
  %v1199 = vunpack.c.l.s4 1983009808
  %v1200 = vunpack.c.0.s8 %v1199
  %v1201 = vlaneseq
  %v1202 = vshrl.u32 %v1201, 7
  %v1203 = vsub.s32 %v1200, %v1202
  %v1204 = vrot.slane %v1190, %v1203
  %v1205 = vcombine.high %v1197, %v1197
  %v1206 = vcombine.high %v1204, %v1204
  %v1207 = vcombine.high %v663, %v663
  %v1209 = vunpack.c.l.s4 1983009808
  %v1210 = vunpack.c.0.s8 %v1209
  %v1211 = vlaneseq
  %v1212 = vshrl.u32 %v1211, 7
  %v1213 = vsub.s32 %v1210, %v1212
  %v1214 = vrot.slane %v663, %v1213
  %v1216 = vunpack.c.l.s4 1983009808
  %v1217 = vunpack.c.0.s8 %v1216
  %v1218 = vlaneseq
  %v1219 = vshrl.u32 %v1218, 7
  %v1220 = vsub.s32 %v1217, %v1219
  %v1221 = vrot.slane %v1207, %v1220
  %v1222 = vcombine.high %v1214, %v1214
  %v1223 = vcombine.high %v1221, %v1221
  %v1224 = vcombine.high %v664, %v664
  %v1226 = vunpack.c.l.s4 1983009808
  %v1227 = vunpack.c.0.s8 %v1226
  %v1228 = vlaneseq
  %v1229 = vshrl.u32 %v1228, 7
  %v1230 = vsub.s32 %v1227, %v1229
  %v1231 = vrot.slane %v664, %v1230
  %v1233 = vunpack.c.l.s4 1983009808
  %v1234 = vunpack.c.0.s8 %v1233
  %v1235 = vlaneseq
  %v1236 = vshrl.u32 %v1235, 7
  %v1237 = vsub.s32 %v1234, %v1236
  %v1238 = vrot.slane %v1224, %v1237
  %v1239 = vcombine.high %v1231, %v1231
  %v1240 = vcombine.high %v1238, %v1238
  %v1241 = vcombine.high %v665, %v665
  %v1243 = vunpack.c.l.s4 1983009808
  %v1244 = vunpack.c.0.s8 %v1243
  %v1245 = vlaneseq
  %v1246 = vshrl.u32 %v1245, 7
  %v1247 = vsub.s32 %v1244, %v1246
  %v1248 = vrot.slane %v665, %v1247
  %v1250 = vunpack.c.l.s4 1983009808
  %v1251 = vunpack.c.0.s8 %v1250
  %v1252 = vlaneseq
  %v1253 = vshrl.u32 %v1252, 7
  %v1254 = vsub.s32 %v1251, %v1253
  %v1255 = vrot.slane %v1241, %v1254
  %v1256 = vcombine.high %v1248, %v1248
  %v1257 = vcombine.high %v1255, %v1255
  %v1258 = vcombine.high %v666, %v666
  %v1260 = vunpack.c.l.s4 1983009808
  %v1261 = vunpack.c.0.s8 %v1260
  %v1262 = vlaneseq
  %v1263 = vshrl.u32 %v1262, 7
  %v1264 = vsub.s32 %v1261, %v1263
  %v1265 = vrot.slane %v666, %v1264
  %v1267 = vunpack.c.l.s4 1983009808
  %v1268 = vunpack.c.0.s8 %v1267
  %v1269 = vlaneseq
  %v1270 = vshrl.u32 %v1269, 7
  %v1271 = vsub.s32 %v1268, %v1270
  %v1272 = vrot.slane %v1258, %v1271
  %v1273 = vcombine.high %v1265, %v1265
  %v1274 = vcombine.high %v1272, %v1272
  %v1275 = vcombine.high %v667, %v667
  %v1277 = vunpack.c.l.s4 1983009808
  %v1278 = vunpack.c.0.s8 %v1277
  %v1279 = vlaneseq
  %v1280 = vshrl.u32 %v1279, 7
  %v1281 = vsub.s32 %v1278, %v1280
  %v1282 = vrot.slane %v667, %v1281
  %v1284 = vunpack.c.l.s4 1983009808
  %v1285 = vunpack.c.0.s8 %v1284
  %v1286 = vlaneseq
  %v1287 = vshrl.u32 %v1286, 7
  %v1288 = vsub.s32 %v1285, %v1287
  %v1289 = vrot.slane %v1275, %v1288
  %v1290 = vcombine.high %v1282, %v1282
  %v1291 = vcombine.high %v1289, %v1289
  %v1292 = vcombine.high %v668, %v668
  %v1294 = vunpack.c.l.s4 1983009808
  %v1295 = vunpack.c.0.s8 %v1294
  %v1296 = vlaneseq
  %v1297 = vshrl.u32 %v1296, 7
  %v1298 = vsub.s32 %v1295, %v1297
  %v1299 = vrot.slane %v668, %v1298
  %v1301 = vunpack.c.l.s4 1983009808
  %v1302 = vunpack.c.0.s8 %v1301
  %v1303 = vlaneseq
  %v1304 = vshrl.u32 %v1303, 7
  %v1305 = vsub.s32 %v1302, %v1304
  %v1306 = vrot.slane %v1292, %v1305
  %v1307 = vcombine.high %v1299, %v1299
  %v1308 = vcombine.high %v1306, %v1306
  %v1309 = vcombine.high %v669, %v669
  %v1311 = vunpack.c.l.s4 1983009808
  %v1312 = vunpack.c.0.s8 %v1311
  %v1313 = vlaneseq
  %v1314 = vshrl.u32 %v1313, 7
  %v1315 = vsub.s32 %v1312, %v1314
  %v1316 = vrot.slane %v669, %v1315
  %v1318 = vunpack.c.l.s4 1983009808
  %v1319 = vunpack.c.0.s8 %v1318
  %v1320 = vlaneseq
  %v1321 = vshrl.u32 %v1320, 7
  %v1322 = vsub.s32 %v1319, %v1321
  %v1323 = vrot.slane %v1309, %v1322
  %v1324 = vcombine.high %v1316, %v1316
  %v1325 = vcombine.high %v1323, %v1323
  %v1326 = vcombine.high %v670, %v670
  %v1328 = vunpack.c.l.s4 1983009808
  %v1329 = vunpack.c.0.s8 %v1328
  %v1330 = vlaneseq
  %v1331 = vshrl.u32 %v1330, 7
  %v1332 = vsub.s32 %v1329, %v1331
  %v1333 = vrot.slane %v670, %v1332
  %v1335 = vunpack.c.l.s4 1983009808
  %v1336 = vunpack.c.0.s8 %v1335
  %v1337 = vlaneseq
  %v1338 = vshrl.u32 %v1337, 7
  %v1339 = vsub.s32 %v1336, %v1338
  %v1340 = vrot.slane %v1326, %v1339
  %v1341 = vcombine.high %v1333, %v1333
  %v1342 = vcombine.high %v1340, %v1340
  %v1343 = vcombine.high %v671, %v671
  %v1345 = vunpack.c.l.s4 1983009808
  %v1346 = vunpack.c.0.s8 %v1345
  %v1347 = vlaneseq
  %v1348 = vshrl.u32 %v1347, 7
  %v1349 = vsub.s32 %v1346, %v1348
  %v1350 = vrot.slane %v671, %v1349
  %v1352 = vunpack.c.l.s4 1983009808
  %v1353 = vunpack.c.0.s8 %v1352
  %v1354 = vlaneseq
  %v1355 = vshrl.u32 %v1354, 7
  %v1356 = vsub.s32 %v1353, %v1355
  %v1357 = vrot.slane %v1343, %v1356
  %v1358 = vcombine.high %v1350, %v1350
  %v1359 = vcombine.high %v1357, %v1357
  %v1360 = vcombine.high %v672, %v672
  %v1362 = vunpack.c.l.s4 1983009808
  %v1363 = vunpack.c.0.s8 %v1362
  %v1364 = vlaneseq
  %v1365 = vshrl.u32 %v1364, 7
  %v1366 = vsub.s32 %v1363, %v1365
  %v1367 = vrot.slane %v672, %v1366
  %v1369 = vunpack.c.l.s4 1983009808
  %v1370 = vunpack.c.0.s8 %v1369
  %v1371 = vlaneseq
  %v1372 = vshrl.u32 %v1371, 7
  %v1373 = vsub.s32 %v1370, %v1372
  %v1374 = vrot.slane %v1360, %v1373
  %v1375 = vcombine.high %v1367, %v1367
  %v1376 = vcombine.high %v1374, %v1374
  %v1377 = vcombine.high %v673, %v673
  %v1379 = vunpack.c.l.s4 1983009808
  %v1380 = vunpack.c.0.s8 %v1379
  %v1381 = vlaneseq
  %v1382 = vshrl.u32 %v1381, 7
  %v1383 = vsub.s32 %v1380, %v1382
  %v1384 = vrot.slane %v673, %v1383
  %v1386 = vunpack.c.l.s4 1983009808
  %v1387 = vunpack.c.0.s8 %v1386
  %v1388 = vlaneseq
  %v1389 = vshrl.u32 %v1388, 7
  %v1390 = vsub.s32 %v1387, %v1389
  %v1391 = vrot.slane %v1377, %v1390
  %v1392 = vcombine.high %v1384, %v1384
  %v1393 = vcombine.high %v1391, %v1391
  %v1394 = vcombine.high %v674, %v674
  %v1396 = vunpack.c.l.s4 1983009808
  %v1397 = vunpack.c.0.s8 %v1396
  %v1398 = vlaneseq
  %v1399 = vshrl.u32 %v1398, 7
  %v1400 = vsub.s32 %v1397, %v1399
  %v1401 = vrot.slane %v674, %v1400
  %v1403 = vunpack.c.l.s4 1983009808
  %v1404 = vunpack.c.0.s8 %v1403
  %v1405 = vlaneseq
  %v1406 = vshrl.u32 %v1405, 7
  %v1407 = vsub.s32 %v1404, %v1406
  %v1408 = vrot.slane %v1394, %v1407
  %v1409 = vcombine.high %v1401, %v1401
  %v1410 = vcombine.high %v1408, %v1408
  %v1411 = vcombine.high %v675, %v675
  %v1413 = vunpack.c.l.s4 1983009808
  %v1414 = vunpack.c.0.s8 %v1413
  %v1415 = vlaneseq
  %v1416 = vshrl.u32 %v1415, 7
  %v1417 = vsub.s32 %v1414, %v1416
  %v1418 = vrot.slane %v675, %v1417
  %v1420 = vunpack.c.l.s4 1983009808
  %v1421 = vunpack.c.0.s8 %v1420
  %v1422 = vlaneseq
  %v1423 = vshrl.u32 %v1422, 7
  %v1424 = vsub.s32 %v1421, %v1423
  %v1425 = vrot.slane %v1411, %v1424
  %v1426 = vcombine.high %v1418, %v1418
  %v1427 = vcombine.high %v1425, %v1425
  %v1428 = vcombine.high %v676, %v676
  %v1430 = vunpack.c.l.s4 1983009808
  %v1431 = vunpack.c.0.s8 %v1430
  %v1432 = vlaneseq
  %v1433 = vshrl.u32 %v1432, 7
  %v1434 = vsub.s32 %v1431, %v1433
  %v1435 = vrot.slane %v676, %v1434
  %v1437 = vunpack.c.l.s4 1983009808
  %v1438 = vunpack.c.0.s8 %v1437
  %v1439 = vlaneseq
  %v1440 = vshrl.u32 %v1439, 7
  %v1441 = vsub.s32 %v1438, %v1440
  %v1442 = vrot.slane %v1428, %v1441
  %v1443 = vcombine.high %v1435, %v1435
  %v1444 = vcombine.high %v1442, %v1442
  %v1445 = vcombine.high %v677, %v677
  %v1447 = vunpack.c.l.s4 1983009808
  %v1448 = vunpack.c.0.s8 %v1447
  %v1449 = vlaneseq
  %v1450 = vshrl.u32 %v1449, 7
  %v1451 = vsub.s32 %v1448, %v1450
  %v1452 = vrot.slane %v677, %v1451
  %v1454 = vunpack.c.l.s4 1983009808
  %v1455 = vunpack.c.0.s8 %v1454
  %v1456 = vlaneseq
  %v1457 = vshrl.u32 %v1456, 7
  %v1458 = vsub.s32 %v1455, %v1457
  %v1459 = vrot.slane %v1445, %v1458
  %v1460 = vcombine.high %v1452, %v1452
  %v1461 = vcombine.high %v1459, %v1459
  %v1462 = vcombine.high %v678, %v678
  %v1464 = vunpack.c.l.s4 1983009808
  %v1465 = vunpack.c.0.s8 %v1464
  %v1466 = vlaneseq
  %v1467 = vshrl.u32 %v1466, 7
  %v1468 = vsub.s32 %v1465, %v1467
  %v1469 = vrot.slane %v678, %v1468
  %v1471 = vunpack.c.l.s4 1983009808
  %v1472 = vunpack.c.0.s8 %v1471
  %v1473 = vlaneseq
  %v1474 = vshrl.u32 %v1473, 7
  %v1475 = vsub.s32 %v1472, %v1474
  %v1476 = vrot.slane %v1462, %v1475
  %v1477 = vcombine.high %v1469, %v1469
  %v1478 = vcombine.high %v1476, %v1476
  %v1479 = vcombine.high %v679, %v679
  %v1481 = vunpack.c.l.s4 1983009808
  %v1482 = vunpack.c.0.s8 %v1481
  %v1483 = vlaneseq
  %v1484 = vshrl.u32 %v1483, 7
  %v1485 = vsub.s32 %v1482, %v1484
  %v1486 = vrot.slane %v679, %v1485
  %v1488 = vunpack.c.l.s4 1983009808
  %v1489 = vunpack.c.0.s8 %v1488
  %v1490 = vlaneseq
  %v1491 = vshrl.u32 %v1490, 7
  %v1492 = vsub.s32 %v1489, %v1491
  %v1493 = vrot.slane %v1479, %v1492
  %v1494 = vcombine.high %v1486, %v1486
  %v1495 = vcombine.high %v1493, %v1493
  %v1496 = vcombine.high %v680, %v680
  %v1498 = vunpack.c.l.s4 1983009808
  %v1499 = vunpack.c.0.s8 %v1498
  %v1500 = vlaneseq
  %v1501 = vshrl.u32 %v1500, 7
  %v1502 = vsub.s32 %v1499, %v1501
  %v1503 = vrot.slane %v680, %v1502
  %v1505 = vunpack.c.l.s4 1983009808
  %v1506 = vunpack.c.0.s8 %v1505
  %v1507 = vlaneseq
  %v1508 = vshrl.u32 %v1507, 7
  %v1509 = vsub.s32 %v1506, %v1508
  %v1510 = vrot.slane %v1496, %v1509
  %v1511 = vcombine.high %v1503, %v1503
  %v1512 = vcombine.high %v1510, %v1510
  %v1513 = vcombine.high %v681, %v681
  %v1515 = vunpack.c.l.s4 1983009808
  %v1516 = vunpack.c.0.s8 %v1515
  %v1517 = vlaneseq
  %v1518 = vshrl.u32 %v1517, 7
  %v1519 = vsub.s32 %v1516, %v1518
  %v1520 = vrot.slane %v681, %v1519
  %v1522 = vunpack.c.l.s4 1983009808
  %v1523 = vunpack.c.0.s8 %v1522
  %v1524 = vlaneseq
  %v1525 = vshrl.u32 %v1524, 7
  %v1526 = vsub.s32 %v1523, %v1525
  %v1527 = vrot.slane %v1513, %v1526
  %v1528 = vcombine.high %v1520, %v1520
  %v1529 = vcombine.high %v1527, %v1527
  %v1530 = vcombine.high %v682, %v682
  %v1532 = vunpack.c.l.s4 1983009808
  %v1533 = vunpack.c.0.s8 %v1532
  %v1534 = vlaneseq
  %v1535 = vshrl.u32 %v1534, 7
  %v1536 = vsub.s32 %v1533, %v1535
  %v1537 = vrot.slane %v682, %v1536
  %v1539 = vunpack.c.l.s4 1983009808
  %v1540 = vunpack.c.0.s8 %v1539
  %v1541 = vlaneseq
  %v1542 = vshrl.u32 %v1541, 7
  %v1543 = vsub.s32 %v1540, %v1542
  %v1544 = vrot.slane %v1530, %v1543
  %v1545 = vcombine.high %v1537, %v1537
  %v1546 = vcombine.high %v1544, %v1544
  %v1547 = vcombine.high %v683, %v683
  %v1549 = vunpack.c.l.s4 1983009808
  %v1550 = vunpack.c.0.s8 %v1549
  %v1551 = vlaneseq
  %v1552 = vshrl.u32 %v1551, 7
  %v1553 = vsub.s32 %v1550, %v1552
  %v1554 = vrot.slane %v683, %v1553
  %v1556 = vunpack.c.l.s4 1983009808
  %v1557 = vunpack.c.0.s8 %v1556
  %v1558 = vlaneseq
  %v1559 = vshrl.u32 %v1558, 7
  %v1560 = vsub.s32 %v1557, %v1559
  %v1561 = vrot.slane %v1547, %v1560
  %v1562 = vcombine.high %v1554, %v1554
  %v1563 = vcombine.high %v1561, %v1561
  %v1564 = vcombine.high %v684, %v684
  %v1566 = vunpack.c.l.s4 1983009808
  %v1567 = vunpack.c.0.s8 %v1566
  %v1568 = vlaneseq
  %v1569 = vshrl.u32 %v1568, 7
  %v1570 = vsub.s32 %v1567, %v1569
  %v1571 = vrot.slane %v684, %v1570
  %v1573 = vunpack.c.l.s4 1983009808
  %v1574 = vunpack.c.0.s8 %v1573
  %v1575 = vlaneseq
  %v1576 = vshrl.u32 %v1575, 7
  %v1577 = vsub.s32 %v1574, %v1576
  %v1578 = vrot.slane %v1564, %v1577
  %v1579 = vcombine.high %v1571, %v1571
  %v1580 = vcombine.high %v1578, %v1578
  %v1581 = vcombine.high %v685, %v685
  %v1583 = vunpack.c.l.s4 1983009808
  %v1584 = vunpack.c.0.s8 %v1583
  %v1585 = vlaneseq
  %v1586 = vshrl.u32 %v1585, 7
  %v1587 = vsub.s32 %v1584, %v1586
  %v1588 = vrot.slane %v685, %v1587
  %v1590 = vunpack.c.l.s4 1983009808
  %v1591 = vunpack.c.0.s8 %v1590
  %v1592 = vlaneseq
  %v1593 = vshrl.u32 %v1592, 7
  %v1594 = vsub.s32 %v1591, %v1593
  %v1595 = vrot.slane %v1581, %v1594
  %v1596 = vcombine.high %v1588, %v1588
  %v1597 = vcombine.high %v1595, %v1595
  %v1598 = vcombine.high %v686, %v686
  %v1600 = vunpack.c.l.s4 1983009808
  %v1601 = vunpack.c.0.s8 %v1600
  %v1602 = vlaneseq
  %v1603 = vshrl.u32 %v1602, 7
  %v1604 = vsub.s32 %v1601, %v1603
  %v1605 = vrot.slane %v686, %v1604
  %v1607 = vunpack.c.l.s4 1983009808
  %v1608 = vunpack.c.0.s8 %v1607
  %v1609 = vlaneseq
  %v1610 = vshrl.u32 %v1609, 7
  %v1611 = vsub.s32 %v1608, %v1610
  %v1612 = vrot.slane %v1598, %v1611
  %v1613 = vcombine.high %v1605, %v1605
  %v1614 = vcombine.high %v1612, %v1612
  %v1615 = vcombine.high %v687, %v687
  %v1617 = vunpack.c.l.s4 1983009808
  %v1618 = vunpack.c.0.s8 %v1617
  %v1619 = vlaneseq
  %v1620 = vshrl.u32 %v1619, 7
  %v1621 = vsub.s32 %v1618, %v1620
  %v1622 = vrot.slane %v687, %v1621
  %v1624 = vunpack.c.l.s4 1983009808
  %v1625 = vunpack.c.0.s8 %v1624
  %v1626 = vlaneseq
  %v1627 = vshrl.u32 %v1626, 7
  %v1628 = vsub.s32 %v1625, %v1627
  %v1629 = vrot.slane %v1615, %v1628
  %v1630 = vcombine.high %v1622, %v1622
  %v1631 = vcombine.high %v1629, %v1629
  %v1632 = vcombine.high %v688, %v688
  %v1634 = vunpack.c.l.s4 1983009808
  %v1635 = vunpack.c.0.s8 %v1634
  %v1636 = vlaneseq
  %v1637 = vshrl.u32 %v1636, 7
  %v1638 = vsub.s32 %v1635, %v1637
  %v1639 = vrot.slane %v688, %v1638
  %v1641 = vunpack.c.l.s4 1983009808
  %v1642 = vunpack.c.0.s8 %v1641
  %v1643 = vlaneseq
  %v1644 = vshrl.u32 %v1643, 7
  %v1645 = vsub.s32 %v1642, %v1644
  %v1646 = vrot.slane %v1632, %v1645
  %v1647 = vcombine.high %v1639, %v1639
  %v1648 = vcombine.high %v1646, %v1646
  %v1649 = vcombine.high %v689, %v689
  %v1651 = vunpack.c.l.s4 1983009808
  %v1652 = vunpack.c.0.s8 %v1651
  %v1653 = vlaneseq
  %v1654 = vshrl.u32 %v1653, 7
  %v1655 = vsub.s32 %v1652, %v1654
  %v1656 = vrot.slane %v689, %v1655
  %v1658 = vunpack.c.l.s4 1983009808
  %v1659 = vunpack.c.0.s8 %v1658
  %v1660 = vlaneseq
  %v1661 = vshrl.u32 %v1660, 7
  %v1662 = vsub.s32 %v1659, %v1661
  %v1663 = vrot.slane %v1649, %v1662
  %v1664 = vcombine.high %v1656, %v1656
  %v1665 = vcombine.high %v1663, %v1663
  %v1666 = vcombine.high %v690, %v690
  %v1668 = vunpack.c.l.s4 1983009808
  %v1669 = vunpack.c.0.s8 %v1668
  %v1670 = vlaneseq
  %v1671 = vshrl.u32 %v1670, 7
  %v1672 = vsub.s32 %v1669, %v1671
  %v1673 = vrot.slane %v690, %v1672
  %v1675 = vunpack.c.l.s4 1983009808
  %v1676 = vunpack.c.0.s8 %v1675
  %v1677 = vlaneseq
  %v1678 = vshrl.u32 %v1677, 7
  %v1679 = vsub.s32 %v1676, %v1678
  %v1680 = vrot.slane %v1666, %v1679
  %v1681 = vcombine.high %v1673, %v1673
  %v1682 = vcombine.high %v1680, %v1680
  %v1683 = vcombine.high %v691, %v691
  %v1685 = vunpack.c.l.s4 1983009808
  %v1686 = vunpack.c.0.s8 %v1685
  %v1687 = vlaneseq
  %v1688 = vshrl.u32 %v1687, 7
  %v1689 = vsub.s32 %v1686, %v1688
  %v1690 = vrot.slane %v691, %v1689
  %v1692 = vunpack.c.l.s4 1983009808
  %v1693 = vunpack.c.0.s8 %v1692
  %v1694 = vlaneseq
  %v1695 = vshrl.u32 %v1694, 7
  %v1696 = vsub.s32 %v1693, %v1695
  %v1697 = vrot.slane %v1683, %v1696
  %v1698 = vcombine.high %v1690, %v1690
  %v1699 = vcombine.high %v1697, %v1697
  %v1700 = vcombine.high %v692, %v692
  %v1702 = vunpack.c.l.s4 1983009808
  %v1703 = vunpack.c.0.s8 %v1702
  %v1704 = vlaneseq
  %v1705 = vshrl.u32 %v1704, 7
  %v1706 = vsub.s32 %v1703, %v1705
  %v1707 = vrot.slane %v692, %v1706
  %v1709 = vunpack.c.l.s4 1983009808
  %v1710 = vunpack.c.0.s8 %v1709
  %v1711 = vlaneseq
  %v1712 = vshrl.u32 %v1711, 7
  %v1713 = vsub.s32 %v1710, %v1712
  %v1714 = vrot.slane %v1700, %v1713
  %v1715 = vcombine.high %v1707, %v1707
  %v1716 = vcombine.high %v1714, %v1714
  %v1717 = vcombine.high %v693, %v693
  %v1719 = vunpack.c.l.s4 1983009808
  %v1720 = vunpack.c.0.s8 %v1719
  %v1721 = vlaneseq
  %v1722 = vshrl.u32 %v1721, 7
  %v1723 = vsub.s32 %v1720, %v1722
  %v1724 = vrot.slane %v693, %v1723
  %v1726 = vunpack.c.l.s4 1983009808
  %v1727 = vunpack.c.0.s8 %v1726
  %v1728 = vlaneseq
  %v1729 = vshrl.u32 %v1728, 7
  %v1730 = vsub.s32 %v1727, %v1729
  %v1731 = vrot.slane %v1717, %v1730
  %v1732 = vcombine.high %v1724, %v1724
  %v1733 = vcombine.high %v1731, %v1731
  %v1734 = vcombine.high %v694, %v694
  %v1736 = vunpack.c.l.s4 1983009808
  %v1737 = vunpack.c.0.s8 %v1736
  %v1738 = vlaneseq
  %v1739 = vshrl.u32 %v1738, 7
  %v1740 = vsub.s32 %v1737, %v1739
  %v1741 = vrot.slane %v694, %v1740
  %v1743 = vunpack.c.l.s4 1983009808
  %v1744 = vunpack.c.0.s8 %v1743
  %v1745 = vlaneseq
  %v1746 = vshrl.u32 %v1745, 7
  %v1747 = vsub.s32 %v1744, %v1746
  %v1748 = vrot.slane %v1734, %v1747
  %v1749 = vcombine.high %v1741, %v1741
  %v1750 = vcombine.high %v1748, %v1748
  %v1751 = vcombine.high %v695, %v695
  %v1753 = vunpack.c.l.s4 1983009808
  %v1754 = vunpack.c.0.s8 %v1753
  %v1755 = vlaneseq
  %v1756 = vshrl.u32 %v1755, 7
  %v1757 = vsub.s32 %v1754, %v1756
  %v1758 = vrot.slane %v695, %v1757
  %v1760 = vunpack.c.l.s4 1983009808
  %v1761 = vunpack.c.0.s8 %v1760
  %v1762 = vlaneseq
  %v1763 = vshrl.u32 %v1762, 7
  %v1764 = vsub.s32 %v1761, %v1763
  %v1765 = vrot.slane %v1751, %v1764
  %v1766 = vcombine.high %v1758, %v1758
  %v1767 = vcombine.high %v1765, %v1765
  %v1768 = vcombine.high %v696, %v696
  %v1770 = vunpack.c.l.s4 1983009808
  %v1771 = vunpack.c.0.s8 %v1770
  %v1772 = vlaneseq
  %v1773 = vshrl.u32 %v1772, 7
  %v1774 = vsub.s32 %v1771, %v1773
  %v1775 = vrot.slane %v696, %v1774
  %v1777 = vunpack.c.l.s4 1983009808
  %v1778 = vunpack.c.0.s8 %v1777
  %v1779 = vlaneseq
  %v1780 = vshrl.u32 %v1779, 7
  %v1781 = vsub.s32 %v1778, %v1780
  %v1782 = vrot.slane %v1768, %v1781
  %v1783 = vcombine.high %v1775, %v1775
  %v1784 = vcombine.high %v1782, %v1782
  %v1785 = vcombine.high %v697, %v697
  %v1787 = vunpack.c.l.s4 1983009808
  %v1788 = vunpack.c.0.s8 %v1787
  %v1789 = vlaneseq
  %v1790 = vshrl.u32 %v1789, 7
  %v1791 = vsub.s32 %v1788, %v1790
  %v1792 = vrot.slane %v697, %v1791
  %v1794 = vunpack.c.l.s4 1983009808
  %v1795 = vunpack.c.0.s8 %v1794
  %v1796 = vlaneseq
  %v1797 = vshrl.u32 %v1796, 7
  %v1798 = vsub.s32 %v1795, %v1797
  %v1799 = vrot.slane %v1785, %v1798
  %v1800 = vcombine.high %v1792, %v1792
  %v1801 = vcombine.high %v1799, %v1799
  %v1802 = vcombine.high %v698, %v698
  %v1804 = vunpack.c.l.s4 1983009808
  %v1805 = vunpack.c.0.s8 %v1804
  %v1806 = vlaneseq
  %v1807 = vshrl.u32 %v1806, 7
  %v1808 = vsub.s32 %v1805, %v1807
  %v1809 = vrot.slane %v698, %v1808
  %v1811 = vunpack.c.l.s4 1983009808
  %v1812 = vunpack.c.0.s8 %v1811
  %v1813 = vlaneseq
  %v1814 = vshrl.u32 %v1813, 7
  %v1815 = vsub.s32 %v1812, %v1814
  %v1816 = vrot.slane %v1802, %v1815
  %v1817 = vcombine.high %v1809, %v1809
  %v1818 = vcombine.high %v1816, %v1816
  %v1819 = vcombine.high %v699, %v699
  %v1821 = vunpack.c.l.s4 1983009808
  %v1822 = vunpack.c.0.s8 %v1821
  %v1823 = vlaneseq
  %v1824 = vshrl.u32 %v1823, 7
  %v1825 = vsub.s32 %v1822, %v1824
  %v1826 = vrot.slane %v699, %v1825
  %v1828 = vunpack.c.l.s4 1983009808
  %v1829 = vunpack.c.0.s8 %v1828
  %v1830 = vlaneseq
  %v1831 = vshrl.u32 %v1830, 7
  %v1832 = vsub.s32 %v1829, %v1831
  %v1833 = vrot.slane %v1819, %v1832
  %v1834 = vcombine.high %v1826, %v1826
  %v1835 = vcombine.high %v1833, %v1833
  %v1836 = vcombine.high %v700, %v700
  %v1838 = vunpack.c.l.s4 1983009808
  %v1839 = vunpack.c.0.s8 %v1838
  %v1840 = vlaneseq
  %v1841 = vshrl.u32 %v1840, 7
  %v1842 = vsub.s32 %v1839, %v1841
  %v1843 = vrot.slane %v700, %v1842
  %v1845 = vunpack.c.l.s4 1983009808
  %v1846 = vunpack.c.0.s8 %v1845
  %v1847 = vlaneseq
  %v1848 = vshrl.u32 %v1847, 7
  %v1849 = vsub.s32 %v1846, %v1848
  %v1850 = vrot.slane %v1836, %v1849
  %v1851 = vcombine.high %v1843, %v1843
  %v1852 = vcombine.high %v1850, %v1850
  %v2109 = vrot.slane %v772, 7
  %v2110 = vrot.slane %v2109, 2
  %v2111 = vrot.slane %v780, 7
  %v2112 = vrot.slane %v2111, 2
  %v2113 = vrot.slane %v779, 7
  %v2114 = vrot.slane %v2113, 2
  %v2115 = vrot.slane %v781, 7
  %v2116 = vrot.slane %v2115, 2
  %v2117 = vrot.slane %v789, 7
  %v2118 = vrot.slane %v2117, 2
  %v2119 = vrot.slane %v797, 7
  %v2120 = vrot.slane %v2119, 2
  %v2121 = vrot.slane %v796, 7
  %v2122 = vrot.slane %v2121, 2
  %v2123 = vrot.slane %v798, 7
  %v2124 = vrot.slane %v2123, 2
  %v2125 = vrot.slane %v806, 7
  %v2126 = vrot.slane %v2125, 2
  %v2127 = vrot.slane %v814, 7
  %v2128 = vrot.slane %v2127, 2
  %v2129 = vrot.slane %v813, 7
  %v2130 = vrot.slane %v2129, 2
  %v2131 = vrot.slane %v815, 7
  %v2132 = vrot.slane %v2131, 2
  %v2133 = vrot.slane %v823, 7
  %v2134 = vrot.slane %v2133, 2
  %v2135 = vrot.slane %v831, 7
  %v2136 = vrot.slane %v2135, 2
  %v2137 = vrot.slane %v830, 7
  %v2138 = vrot.slane %v2137, 2
  %v2139 = vrot.slane %v832, 7
  %v2140 = vrot.slane %v2139, 2
  %v2141 = vrot.slane %v840, 7
  %v2142 = vrot.slane %v2141, 2
  %v2143 = vrot.slane %v848, 7
  %v2144 = vrot.slane %v2143, 2
  %v2145 = vrot.slane %v847, 7
  %v2146 = vrot.slane %v2145, 2
  %v2147 = vrot.slane %v849, 7
  %v2148 = vrot.slane %v2147, 2
  %v2149 = vrot.slane %v857, 7
  %v2150 = vrot.slane %v2149, 2
  %v2151 = vrot.slane %v865, 7
  %v2152 = vrot.slane %v2151, 2
  %v2153 = vrot.slane %v864, 7
  %v2154 = vrot.slane %v2153, 2
  %v2155 = vrot.slane %v866, 7
  %v2156 = vrot.slane %v2155, 2
  %v2157 = vrot.slane %v874, 7
  %v2158 = vrot.slane %v2157, 2
  %v2159 = vrot.slane %v882, 7
  %v2160 = vrot.slane %v2159, 2
  %v2161 = vrot.slane %v881, 7
  %v2162 = vrot.slane %v2161, 2
  %v2163 = vrot.slane %v883, 7
  %v2164 = vrot.slane %v2163, 2
  %v2165 = vrot.slane %v891, 7
  %v2166 = vrot.slane %v2165, 2
  %v2167 = vrot.slane %v899, 7
  %v2168 = vrot.slane %v2167, 2
  %v2169 = vrot.slane %v898, 7
  %v2170 = vrot.slane %v2169, 2
  %v2171 = vrot.slane %v900, 7
  %v2172 = vrot.slane %v2171, 2
  %v2173 = vrot.slane %v908, 7
  %v2174 = vrot.slane %v2173, 2
  %v2175 = vrot.slane %v916, 7
  %v2176 = vrot.slane %v2175, 2
  %v2177 = vrot.slane %v915, 7
  %v2178 = vrot.slane %v2177, 2
  %v2179 = vrot.slane %v917, 7
  %v2180 = vrot.slane %v2179, 2
  %v2181 = vrot.slane %v925, 7
  %v2182 = vrot.slane %v2181, 2
  %v2183 = vrot.slane %v933, 7
  %v2184 = vrot.slane %v2183, 2
  %v2185 = vrot.slane %v932, 7
  %v2186 = vrot.slane %v2185, 2
  %v2187 = vrot.slane %v934, 7
  %v2188 = vrot.slane %v2187, 2
  %v2189 = vrot.slane %v942, 7
  %v2190 = vrot.slane %v2189, 2
  %v2191 = vrot.slane %v950, 7
  %v2192 = vrot.slane %v2191, 2
  %v2193 = vrot.slane %v949, 7
  %v2194 = vrot.slane %v2193, 2
  %v2195 = vrot.slane %v951, 7
  %v2196 = vrot.slane %v2195, 2
  %v2197 = vrot.slane %v959, 7
  %v2198 = vrot.slane %v2197, 2
  %v2199 = vrot.slane %v967, 7
  %v2200 = vrot.slane %v2199, 2
  %v2201 = vrot.slane %v966, 7
  %v2202 = vrot.slane %v2201, 2
  %v2203 = vrot.slane %v968, 7
  %v2204 = vrot.slane %v2203, 2
  %v2205 = vrot.slane %v976, 7
  %v2206 = vrot.slane %v2205, 2
  %v2207 = vrot.slane %v984, 7
  %v2208 = vrot.slane %v2207, 2
  %v2209 = vrot.slane %v983, 7
  %v2210 = vrot.slane %v2209, 2
  %v2211 = vrot.slane %v985, 7
  %v2212 = vrot.slane %v2211, 2
  %v2213 = vrot.slane %v993, 7
  %v2214 = vrot.slane %v2213, 2
  %v2215 = vrot.slane %v1001, 7
  %v2216 = vrot.slane %v2215, 2
  %v2217 = vrot.slane %v1000, 7
  %v2218 = vrot.slane %v2217, 2
  %v2219 = vrot.slane %v1002, 7
  %v2220 = vrot.slane %v2219, 2
  %v2221 = vrot.slane %v1010, 7
  %v2222 = vrot.slane %v2221, 2
  %v2223 = vrot.slane %v1018, 7
  %v2224 = vrot.slane %v2223, 2
  %v2225 = vrot.slane %v1017, 7
  %v2226 = vrot.slane %v2225, 2
  %v2227 = vrot.slane %v1019, 7
  %v2228 = vrot.slane %v2227, 2
  %v2229 = vrot.slane %v1027, 7
  %v2230 = vrot.slane %v2229, 2
  %v2231 = vrot.slane %v1035, 7
  %v2232 = vrot.slane %v2231, 2
  %v2233 = vrot.slane %v1034, 7
  %v2234 = vrot.slane %v2233, 2
  %v2235 = vrot.slane %v1036, 7
  %v2236 = vrot.slane %v2235, 2
  %v2237 = vrot.slane %v1044, 7
  %v2238 = vrot.slane %v2237, 2
  %v2239 = vrot.slane %v1052, 7
  %v2240 = vrot.slane %v2239, 2
  %v2241 = vrot.slane %v1051, 7
  %v2242 = vrot.slane %v2241, 2
  %v2243 = vrot.slane %v1053, 7
  %v2244 = vrot.slane %v2243, 2
  %v2245 = vrot.slane %v1061, 7
  %v2246 = vrot.slane %v2245, 2
  %v2247 = vrot.slane %v1069, 7
  %v2248 = vrot.slane %v2247, 2
  %v2249 = vrot.slane %v1068, 7
  %v2250 = vrot.slane %v2249, 2
  %v2251 = vrot.slane %v1070, 7
  %v2252 = vrot.slane %v2251, 2
  %v2253 = vrot.slane %v1078, 7
  %v2254 = vrot.slane %v2253, 2
  %v2255 = vrot.slane %v1086, 7
  %v2256 = vrot.slane %v2255, 2
  %v2257 = vrot.slane %v1085, 7
  %v2258 = vrot.slane %v2257, 2
  %v2259 = vrot.slane %v1087, 7
  %v2260 = vrot.slane %v2259, 2
  %v2261 = vrot.slane %v1095, 7
  %v2262 = vrot.slane %v2261, 2
  %v2263 = vrot.slane %v1103, 7
  %v2264 = vrot.slane %v2263, 2
  %v2265 = vrot.slane %v1102, 7
  %v2266 = vrot.slane %v2265, 2
  %v2267 = vrot.slane %v1104, 7
  %v2268 = vrot.slane %v2267, 2
  %v2269 = vrot.slane %v1112, 7
  %v2270 = vrot.slane %v2269, 2
  %v2271 = vrot.slane %v1120, 7
  %v2272 = vrot.slane %v2271, 2
  %v2273 = vrot.slane %v1119, 7
  %v2274 = vrot.slane %v2273, 2
  %v2275 = vrot.slane %v1121, 7
  %v2276 = vrot.slane %v2275, 2
  %v2277 = vrot.slane %v1129, 7
  %v2278 = vrot.slane %v2277, 2
  %v2279 = vrot.slane %v1137, 7
  %v2280 = vrot.slane %v2279, 2
  %v2281 = vrot.slane %v1136, 7
  %v2282 = vrot.slane %v2281, 2
  %v2283 = vrot.slane %v1138, 7
  %v2284 = vrot.slane %v2283, 2
  %v2285 = vrot.slane %v1146, 7
  %v2286 = vrot.slane %v2285, 2
  %v2287 = vrot.slane %v1154, 7
  %v2288 = vrot.slane %v2287, 2
  %v2289 = vrot.slane %v1153, 7
  %v2290 = vrot.slane %v2289, 2
  %v2291 = vrot.slane %v1155, 7
  %v2292 = vrot.slane %v2291, 2
  %v2293 = vrot.slane %v1163, 7
  %v2294 = vrot.slane %v2293, 2
  %v2295 = vrot.slane %v1171, 7
  %v2296 = vrot.slane %v2295, 2
  %v2297 = vrot.slane %v1170, 7
  %v2298 = vrot.slane %v2297, 2
  %v2299 = vrot.slane %v1172, 7
  %v2300 = vrot.slane %v2299, 2
  %v2301 = vrot.slane %v1180, 7
  %v2302 = vrot.slane %v2301, 2
  %v2303 = vrot.slane %v1188, 7
  %v2304 = vrot.slane %v2303, 2
  %v2305 = vrot.slane %v1187, 7
  %v2306 = vrot.slane %v2305, 2
  %v2307 = vrot.slane %v1189, 7
  %v2308 = vrot.slane %v2307, 2
  %v2309 = vrot.slane %v1197, 7
  %v2310 = vrot.slane %v2309, 2
  %v2311 = vrot.slane %v1205, 7
  %v2312 = vrot.slane %v2311, 2
  %v2313 = vrot.slane %v1204, 7
  %v2314 = vrot.slane %v2313, 2
  %v2315 = vrot.slane %v1206, 7
  %v2316 = vrot.slane %v2315, 2
  %v2317 = vrot.slane %v1214, 7
  %v2318 = vrot.slane %v2317, 2
  %v2319 = vrot.slane %v1222, 7
  %v2320 = vrot.slane %v2319, 2
  %v2321 = vrot.slane %v1221, 7
  %v2322 = vrot.slane %v2321, 2
  %v2323 = vrot.slane %v1223, 7
  %v2324 = vrot.slane %v2323, 2
  %v2325 = vrot.slane %v1231, 7
  %v2326 = vrot.slane %v2325, 2
  %v2327 = vrot.slane %v1239, 7
  %v2328 = vrot.slane %v2327, 2
  %v2329 = vrot.slane %v1238, 7
  %v2330 = vrot.slane %v2329, 2
  %v2331 = vrot.slane %v1240, 7
  %v2332 = vrot.slane %v2331, 2
  %v2333 = vrot.slane %v1248, 7
  %v2334 = vrot.slane %v2333, 2
  %v2335 = vrot.slane %v1256, 7
  %v2336 = vrot.slane %v2335, 2
  %v2337 = vrot.slane %v1255, 7
  %v2338 = vrot.slane %v2337, 2
  %v2339 = vrot.slane %v1257, 7
  %v2340 = vrot.slane %v2339, 2
  %v2341 = vrot.slane %v1265, 7
  %v2342 = vrot.slane %v2341, 2
  %v2343 = vrot.slane %v1273, 7
  %v2344 = vrot.slane %v2343, 2
  %v2345 = vrot.slane %v1272, 7
  %v2346 = vrot.slane %v2345, 2
  %v2347 = vrot.slane %v1274, 7
  %v2348 = vrot.slane %v2347, 2
  %v2349 = vrot.slane %v1282, 7
  %v2350 = vrot.slane %v2349, 2
  %v2351 = vrot.slane %v1290, 7
  %v2352 = vrot.slane %v2351, 2
  %v2353 = vrot.slane %v1289, 7
  %v2354 = vrot.slane %v2353, 2
  %v2355 = vrot.slane %v1291, 7
  %v2356 = vrot.slane %v2355, 2
  %v2357 = vrot.slane %v1299, 7
  %v2358 = vrot.slane %v2357, 2
  %v2359 = vrot.slane %v1307, 7
  %v2360 = vrot.slane %v2359, 2
  %v2361 = vrot.slane %v1306, 7
  %v2362 = vrot.slane %v2361, 2
  %v2363 = vrot.slane %v1308, 7
  %v2364 = vrot.slane %v2363, 2
  %v2365 = vrot.slane %v1316, 7
  %v2366 = vrot.slane %v2365, 2
  %v2367 = vrot.slane %v1324, 7
  %v2368 = vrot.slane %v2367, 2
  %v2369 = vrot.slane %v1323, 7
  %v2370 = vrot.slane %v2369, 2
  %v2371 = vrot.slane %v1325, 7
  %v2372 = vrot.slane %v2371, 2
  %v2373 = vrot.slane %v1333, 7
  %v2374 = vrot.slane %v2373, 2
  %v2375 = vrot.slane %v1341, 7
  %v2376 = vrot.slane %v2375, 2
  %v2377 = vrot.slane %v1340, 7
  %v2378 = vrot.slane %v2377, 2
  %v2379 = vrot.slane %v1342, 7
  %v2380 = vrot.slane %v2379, 2
  %v2381 = vrot.slane %v1350, 7
  %v2382 = vrot.slane %v2381, 2
  %v2383 = vrot.slane %v1358, 7
  %v2384 = vrot.slane %v2383, 2
  %v2385 = vrot.slane %v1357, 7
  %v2386 = vrot.slane %v2385, 2
  %v2387 = vrot.slane %v1359, 7
  %v2388 = vrot.slane %v2387, 2
  %v2389 = vrot.slane %v1367, 7
  %v2390 = vrot.slane %v2389, 2
  %v2391 = vrot.slane %v1375, 7
  %v2392 = vrot.slane %v2391, 2
  %v2393 = vrot.slane %v1374, 7
  %v2394 = vrot.slane %v2393, 2
  %v2395 = vrot.slane %v1376, 7
  %v2396 = vrot.slane %v2395, 2
  %v2397 = vrot.slane %v1384, 7
  %v2398 = vrot.slane %v2397, 2
  %v2399 = vrot.slane %v1392, 7
  %v2400 = vrot.slane %v2399, 2
  %v2401 = vrot.slane %v1391, 7
  %v2402 = vrot.slane %v2401, 2
  %v2403 = vrot.slane %v1393, 7
  %v2404 = vrot.slane %v2403, 2
  %v2405 = vrot.slane %v1401, 7
  %v2406 = vrot.slane %v2405, 2
  %v2407 = vrot.slane %v1409, 7
  %v2408 = vrot.slane %v2407, 2
  %v2409 = vrot.slane %v1408, 7
  %v2410 = vrot.slane %v2409, 2
  %v2411 = vrot.slane %v1410, 7
  %v2412 = vrot.slane %v2411, 2
  %v2413 = vrot.slane %v1418, 7
  %v2414 = vrot.slane %v2413, 2
  %v2415 = vrot.slane %v1426, 7
  %v2416 = vrot.slane %v2415, 2
  %v2417 = vrot.slane %v1425, 7
  %v2418 = vrot.slane %v2417, 2
  %v2419 = vrot.slane %v1427, 7
  %v2420 = vrot.slane %v2419, 2
  %v2421 = vrot.slane %v1435, 7
  %v2422 = vrot.slane %v2421, 2
  %v2423 = vrot.slane %v1443, 7
  %v2424 = vrot.slane %v2423, 2
  %v2425 = vrot.slane %v1442, 7
  %v2426 = vrot.slane %v2425, 2
  %v2427 = vrot.slane %v1444, 7
  %v2428 = vrot.slane %v2427, 2
  %v2429 = vrot.slane %v1452, 7
  %v2430 = vrot.slane %v2429, 2
  %v2431 = vrot.slane %v1460, 7
  %v2432 = vrot.slane %v2431, 2
  %v2433 = vrot.slane %v1459, 7
  %v2434 = vrot.slane %v2433, 2
  %v2435 = vrot.slane %v1461, 7
  %v2436 = vrot.slane %v2435, 2
  %v2437 = vrot.slane %v1469, 7
  %v2438 = vrot.slane %v2437, 2
  %v2439 = vrot.slane %v1477, 7
  %v2440 = vrot.slane %v2439, 2
  %v2441 = vrot.slane %v1476, 7
  %v2442 = vrot.slane %v2441, 2
  %v2443 = vrot.slane %v1478, 7
  %v2444 = vrot.slane %v2443, 2
  %v2445 = vrot.slane %v1486, 7
  %v2446 = vrot.slane %v2445, 2
  %v2447 = vrot.slane %v1494, 7
  %v2448 = vrot.slane %v2447, 2
  %v2449 = vrot.slane %v1493, 7
  %v2450 = vrot.slane %v2449, 2
  %v2451 = vrot.slane %v1495, 7
  %v2452 = vrot.slane %v2451, 2
  %v2453 = vrot.slane %v1503, 7
  %v2454 = vrot.slane %v2453, 2
  %v2455 = vrot.slane %v1511, 7
  %v2456 = vrot.slane %v2455, 2
  %v2457 = vrot.slane %v1510, 7
  %v2458 = vrot.slane %v2457, 2
  %v2459 = vrot.slane %v1512, 7
  %v2460 = vrot.slane %v2459, 2
  %v2461 = vrot.slane %v1520, 7
  %v2462 = vrot.slane %v2461, 2
  %v2463 = vrot.slane %v1528, 7
  %v2464 = vrot.slane %v2463, 2
  %v2465 = vrot.slane %v1527, 7
  %v2466 = vrot.slane %v2465, 2
  %v2467 = vrot.slane %v1529, 7
  %v2468 = vrot.slane %v2467, 2
  %v2469 = vrot.slane %v1537, 7
  %v2470 = vrot.slane %v2469, 2
  %v2471 = vrot.slane %v1545, 7
  %v2472 = vrot.slane %v2471, 2
  %v2473 = vrot.slane %v1544, 7
  %v2474 = vrot.slane %v2473, 2
  %v2475 = vrot.slane %v1546, 7
  %v2476 = vrot.slane %v2475, 2
  %v2477 = vrot.slane %v1554, 7
  %v2478 = vrot.slane %v2477, 2
  %v2479 = vrot.slane %v1562, 7
  %v2480 = vrot.slane %v2479, 2
  %v2481 = vrot.slane %v1561, 7
  %v2482 = vrot.slane %v2481, 2
  %v2483 = vrot.slane %v1563, 7
  %v2484 = vrot.slane %v2483, 2
  %v2485 = vrot.slane %v1571, 7
  %v2486 = vrot.slane %v2485, 2
  %v2487 = vrot.slane %v1579, 7
  %v2488 = vrot.slane %v2487, 2
  %v2489 = vrot.slane %v1578, 7
  %v2490 = vrot.slane %v2489, 2
  %v2491 = vrot.slane %v1580, 7
  %v2492 = vrot.slane %v2491, 2
  %v2493 = vrot.slane %v1588, 7
  %v2494 = vrot.slane %v2493, 2
  %v2495 = vrot.slane %v1596, 7
  %v2496 = vrot.slane %v2495, 2
  %v2497 = vrot.slane %v1595, 7
  %v2498 = vrot.slane %v2497, 2
  %v2499 = vrot.slane %v1597, 7
  %v2500 = vrot.slane %v2499, 2
  %v2501 = vrot.slane %v1605, 7
  %v2502 = vrot.slane %v2501, 2
  %v2503 = vrot.slane %v1613, 7
  %v2504 = vrot.slane %v2503, 2
  %v2505 = vrot.slane %v1612, 7
  %v2506 = vrot.slane %v2505, 2
  %v2507 = vrot.slane %v1614, 7
  %v2508 = vrot.slane %v2507, 2
  %v2509 = vrot.slane %v1622, 7
  %v2510 = vrot.slane %v2509, 2
  %v2511 = vrot.slane %v1630, 7
  %v2512 = vrot.slane %v2511, 2
  %v2513 = vrot.slane %v1629, 7
  %v2514 = vrot.slane %v2513, 2
  %v2515 = vrot.slane %v1631, 7
  %v2516 = vrot.slane %v2515, 2
  %v2517 = vrot.slane %v1639, 7
  %v2518 = vrot.slane %v2517, 2
  %v2519 = vrot.slane %v1647, 7
  %v2520 = vrot.slane %v2519, 2
  %v2521 = vrot.slane %v1646, 7
  %v2522 = vrot.slane %v2521, 2
  %v2523 = vrot.slane %v1648, 7
  %v2524 = vrot.slane %v2523, 2
  %v2525 = vrot.slane %v1656, 7
  %v2526 = vrot.slane %v2525, 2
  %v2527 = vrot.slane %v1664, 7
  %v2528 = vrot.slane %v2527, 2
  %v2529 = vrot.slane %v1663, 7
  %v2530 = vrot.slane %v2529, 2
  %v2531 = vrot.slane %v1665, 7
  %v2532 = vrot.slane %v2531, 2
  %v2533 = vrot.slane %v1673, 7
  %v2534 = vrot.slane %v2533, 2
  %v2535 = vrot.slane %v1681, 7
  %v2536 = vrot.slane %v2535, 2
  %v2537 = vrot.slane %v1680, 7
  %v2538 = vrot.slane %v2537, 2
  %v2539 = vrot.slane %v1682, 7
  %v2540 = vrot.slane %v2539, 2
  %v2541 = vrot.slane %v1690, 7
  %v2542 = vrot.slane %v2541, 2
  %v2543 = vrot.slane %v1698, 7
  %v2544 = vrot.slane %v2543, 2
  %v2545 = vrot.slane %v1697, 7
  %v2546 = vrot.slane %v2545, 2
  %v2547 = vrot.slane %v1699, 7
  %v2548 = vrot.slane %v2547, 2
  %v2549 = vrot.slane %v1707, 7
  %v2550 = vrot.slane %v2549, 2
  %v2551 = vrot.slane %v1715, 7
  %v2552 = vrot.slane %v2551, 2
  %v2553 = vrot.slane %v1714, 7
  %v2554 = vrot.slane %v2553, 2
  %v2555 = vrot.slane %v1716, 7
  %v2556 = vrot.slane %v2555, 2
  %v2557 = vrot.slane %v1724, 7
  %v2558 = vrot.slane %v2557, 2
  %v2559 = vrot.slane %v1732, 7
  %v2560 = vrot.slane %v2559, 2
  %v2561 = vrot.slane %v1731, 7
  %v2562 = vrot.slane %v2561, 2
  %v2563 = vrot.slane %v1733, 7
  %v2564 = vrot.slane %v2563, 2
  %v2565 = vrot.slane %v1741, 7
  %v2566 = vrot.slane %v2565, 2
  %v2567 = vrot.slane %v1749, 7
  %v2568 = vrot.slane %v2567, 2
  %v2569 = vrot.slane %v1748, 7
  %v2570 = vrot.slane %v2569, 2
  %v2571 = vrot.slane %v1750, 7
  %v2572 = vrot.slane %v2571, 2
  %v2573 = vrot.slane %v1758, 7
  %v2574 = vrot.slane %v2573, 2
  %v2575 = vrot.slane %v1766, 7
  %v2576 = vrot.slane %v2575, 2
  %v2577 = vrot.slane %v1765, 7
  %v2578 = vrot.slane %v2577, 2
  %v2579 = vrot.slane %v1767, 7
  %v2580 = vrot.slane %v2579, 2
  %v2581 = vrot.slane %v1775, 7
  %v2582 = vrot.slane %v2581, 2
  %v2583 = vrot.slane %v1783, 7
  %v2584 = vrot.slane %v2583, 2
  %v2585 = vrot.slane %v1782, 7
  %v2586 = vrot.slane %v2585, 2
  %v2587 = vrot.slane %v1784, 7
  %v2588 = vrot.slane %v2587, 2
  %v2589 = vrot.slane %v1792, 7
  %v2590 = vrot.slane %v2589, 2
  %v2591 = vrot.slane %v1800, 7
  %v2592 = vrot.slane %v2591, 2
  %v2593 = vrot.slane %v1799, 7
  %v2594 = vrot.slane %v2593, 2
  %v2595 = vrot.slane %v1801, 7
  %v2596 = vrot.slane %v2595, 2
  %v2597 = vrot.slane %v1809, 7
  %v2598 = vrot.slane %v2597, 2
  %v2599 = vrot.slane %v1817, 7
  %v2600 = vrot.slane %v2599, 2
  %v2601 = vrot.slane %v1816, 7
  %v2602 = vrot.slane %v2601, 2
  %v2603 = vrot.slane %v1818, 7
  %v2604 = vrot.slane %v2603, 2
  %v2605 = vrot.slane %v1826, 7
  %v2606 = vrot.slane %v2605, 2
  %v2607 = vrot.slane %v1834, 7
  %v2608 = vrot.slane %v2607, 2
  %v2609 = vrot.slane %v1833, 7
  %v2610 = vrot.slane %v2609, 2
  %v2611 = vrot.slane %v1835, 7
  %v2612 = vrot.slane %v2611, 2
  %v2613 = vrot.slane %v1843, 7
  %v2614 = vrot.slane %v2613, 2
  %v2615 = vrot.slane %v1851, 7
  %v2616 = vrot.slane %v2615, 2
  %v2617 = vrot.slane %v1850, 7
  %v2618 = vrot.slane %v2617, 2
  %v2619 = vrot.slane %v1852, 7
  %v2620 = vrot.slane %v2619, 2
  %v2877 = vmax.f32 %v772, %v2110
  %v2878 = vmax.f32 %v780, %v2112
  %v2879 = vmax.f32 %v779, %v2114
  %v2880 = vmax.f32 %v781, %v2116
  %v2881 = vmax.f32 %v789, %v2118
  %v2882 = vmax.f32 %v797, %v2120
  %v2883 = vmax.f32 %v796, %v2122
  %v2884 = vmax.f32 %v798, %v2124
  %v2885 = vmax.f32 %v806, %v2126
  %v2886 = vmax.f32 %v814, %v2128
  %v2887 = vmax.f32 %v813, %v2130
  %v2888 = vmax.f32 %v815, %v2132
  %v2889 = vmax.f32 %v823, %v2134
  %v2890 = vmax.f32 %v831, %v2136
  %v2891 = vmax.f32 %v830, %v2138
  %v2892 = vmax.f32 %v832, %v2140
  %v2893 = vmax.f32 %v840, %v2142
  %v2894 = vmax.f32 %v848, %v2144
  %v2895 = vmax.f32 %v847, %v2146
  %v2896 = vmax.f32 %v849, %v2148
  %v2897 = vmax.f32 %v857, %v2150
  %v2898 = vmax.f32 %v865, %v2152
  %v2899 = vmax.f32 %v864, %v2154
  %v2900 = vmax.f32 %v866, %v2156
  %v2901 = vmax.f32 %v874, %v2158
  %v2902 = vmax.f32 %v882, %v2160
  %v2903 = vmax.f32 %v881, %v2162
  %v2904 = vmax.f32 %v883, %v2164
  %v2905 = vmax.f32 %v891, %v2166
  %v2906 = vmax.f32 %v899, %v2168
  %v2907 = vmax.f32 %v898, %v2170
  %v2908 = vmax.f32 %v900, %v2172
  %v2909 = vmax.f32 %v908, %v2174
  %v2910 = vmax.f32 %v916, %v2176
  %v2911 = vmax.f32 %v915, %v2178
  %v2912 = vmax.f32 %v917, %v2180
  %v2913 = vmax.f32 %v925, %v2182
  %v2914 = vmax.f32 %v933, %v2184
  %v2915 = vmax.f32 %v932, %v2186
  %v2916 = vmax.f32 %v934, %v2188
  %v2917 = vmax.f32 %v942, %v2190
  %v2918 = vmax.f32 %v950, %v2192
  %v2919 = vmax.f32 %v949, %v2194
  %v2920 = vmax.f32 %v951, %v2196
  %v2921 = vmax.f32 %v959, %v2198
  %v2922 = vmax.f32 %v967, %v2200
  %v2923 = vmax.f32 %v966, %v2202
  %v2924 = vmax.f32 %v968, %v2204
  %v2925 = vmax.f32 %v976, %v2206
  %v2926 = vmax.f32 %v984, %v2208
  %v2927 = vmax.f32 %v983, %v2210
  %v2928 = vmax.f32 %v985, %v2212
  %v2929 = vmax.f32 %v993, %v2214
  %v2930 = vmax.f32 %v1001, %v2216
  %v2931 = vmax.f32 %v1000, %v2218
  %v2932 = vmax.f32 %v1002, %v2220
  %v2933 = vmax.f32 %v1010, %v2222
  %v2934 = vmax.f32 %v1018, %v2224
  %v2935 = vmax.f32 %v1017, %v2226
  %v2936 = vmax.f32 %v1019, %v2228
  %v2937 = vmax.f32 %v1027, %v2230
  %v2938 = vmax.f32 %v1035, %v2232
  %v2939 = vmax.f32 %v1034, %v2234
  %v2940 = vmax.f32 %v1036, %v2236
  %v2941 = vmax.f32 %v1044, %v2238
  %v2942 = vmax.f32 %v1052, %v2240
  %v2943 = vmax.f32 %v1051, %v2242
  %v2944 = vmax.f32 %v1053, %v2244
  %v2945 = vmax.f32 %v1061, %v2246
  %v2946 = vmax.f32 %v1069, %v2248
  %v2947 = vmax.f32 %v1068, %v2250
  %v2948 = vmax.f32 %v1070, %v2252
  %v2949 = vmax.f32 %v1078, %v2254
  %v2950 = vmax.f32 %v1086, %v2256
  %v2951 = vmax.f32 %v1085, %v2258
  %v2952 = vmax.f32 %v1087, %v2260
  %v2953 = vmax.f32 %v1095, %v2262
  %v2954 = vmax.f32 %v1103, %v2264
  %v2955 = vmax.f32 %v1102, %v2266
  %v2956 = vmax.f32 %v1104, %v2268
  %v2957 = vmax.f32 %v1112, %v2270
  %v2958 = vmax.f32 %v1120, %v2272
  %v2959 = vmax.f32 %v1119, %v2274
  %v2960 = vmax.f32 %v1121, %v2276
  %v2961 = vmax.f32 %v1129, %v2278
  %v2962 = vmax.f32 %v1137, %v2280
  %v2963 = vmax.f32 %v1136, %v2282
  %v2964 = vmax.f32 %v1138, %v2284
  %v2965 = vmax.f32 %v1146, %v2286
  %v2966 = vmax.f32 %v1154, %v2288
  %v2967 = vmax.f32 %v1153, %v2290
  %v2968 = vmax.f32 %v1155, %v2292
  %v2969 = vmax.f32 %v1163, %v2294
  %v2970 = vmax.f32 %v1171, %v2296
  %v2971 = vmax.f32 %v1170, %v2298
  %v2972 = vmax.f32 %v1172, %v2300
  %v2973 = vmax.f32 %v1180, %v2302
  %v2974 = vmax.f32 %v1188, %v2304
  %v2975 = vmax.f32 %v1187, %v2306
  %v2976 = vmax.f32 %v1189, %v2308
  %v2977 = vmax.f32 %v1197, %v2310
  %v2978 = vmax.f32 %v1205, %v2312
  %v2979 = vmax.f32 %v1204, %v2314
  %v2980 = vmax.f32 %v1206, %v2316
  %v2981 = vmax.f32 %v1214, %v2318
  %v2982 = vmax.f32 %v1222, %v2320
  %v2983 = vmax.f32 %v1221, %v2322
  %v2984 = vmax.f32 %v1223, %v2324
  %v2985 = vmax.f32 %v1231, %v2326
  %v2986 = vmax.f32 %v1239, %v2328
  %v2987 = vmax.f32 %v1238, %v2330
  %v2988 = vmax.f32 %v1240, %v2332
  %v2989 = vmax.f32 %v1248, %v2334
  %v2990 = vmax.f32 %v1256, %v2336
  %v2991 = vmax.f32 %v1255, %v2338
  %v2992 = vmax.f32 %v1257, %v2340
  %v2993 = vmax.f32 %v1265, %v2342
  %v2994 = vmax.f32 %v1273, %v2344
  %v2995 = vmax.f32 %v1272, %v2346
  %v2996 = vmax.f32 %v1274, %v2348
  %v2997 = vmax.f32 %v1282, %v2350
  %v2998 = vmax.f32 %v1290, %v2352
  %v2999 = vmax.f32 %v1289, %v2354
  %v3000 = vmax.f32 %v1291, %v2356
  %v3001 = vmax.f32 %v1299, %v2358
  %v3002 = vmax.f32 %v1307, %v2360
  %v3003 = vmax.f32 %v1306, %v2362
  %v3004 = vmax.f32 %v1308, %v2364
  %v3005 = vmax.f32 %v1316, %v2366
  %v3006 = vmax.f32 %v1324, %v2368
  %v3007 = vmax.f32 %v1323, %v2370
  %v3008 = vmax.f32 %v1325, %v2372
  %v3009 = vmax.f32 %v1333, %v2374
  %v3010 = vmax.f32 %v1341, %v2376
  %v3011 = vmax.f32 %v1340, %v2378
  %v3012 = vmax.f32 %v1342, %v2380
  %v3013 = vmax.f32 %v1350, %v2382
  %v3014 = vmax.f32 %v1358, %v2384
  %v3015 = vmax.f32 %v1357, %v2386
  %v3016 = vmax.f32 %v1359, %v2388
  %v3017 = vmax.f32 %v1367, %v2390
  %v3018 = vmax.f32 %v1375, %v2392
  %v3019 = vmax.f32 %v1374, %v2394
  %v3020 = vmax.f32 %v1376, %v2396
  %v3021 = vmax.f32 %v1384, %v2398
  %v3022 = vmax.f32 %v1392, %v2400
  %v3023 = vmax.f32 %v1391, %v2402
  %v3024 = vmax.f32 %v1393, %v2404
  %v3025 = vmax.f32 %v1401, %v2406
  %v3026 = vmax.f32 %v1409, %v2408
  %v3027 = vmax.f32 %v1408, %v2410
  %v3028 = vmax.f32 %v1410, %v2412
  %v3029 = vmax.f32 %v1418, %v2414
  %v3030 = vmax.f32 %v1426, %v2416
  %v3031 = vmax.f32 %v1425, %v2418
  %v3032 = vmax.f32 %v1427, %v2420
  %v3033 = vmax.f32 %v1435, %v2422
  %v3034 = vmax.f32 %v1443, %v2424
  %v3035 = vmax.f32 %v1442, %v2426
  %v3036 = vmax.f32 %v1444, %v2428
  %v3037 = vmax.f32 %v1452, %v2430
  %v3038 = vmax.f32 %v1460, %v2432
  %v3039 = vmax.f32 %v1459, %v2434
  %v3040 = vmax.f32 %v1461, %v2436
  %v3041 = vmax.f32 %v1469, %v2438
  %v3042 = vmax.f32 %v1477, %v2440
  %v3043 = vmax.f32 %v1476, %v2442
  %v3044 = vmax.f32 %v1478, %v2444
  %v3045 = vmax.f32 %v1486, %v2446
  %v3046 = vmax.f32 %v1494, %v2448
  %v3047 = vmax.f32 %v1493, %v2450
  %v3048 = vmax.f32 %v1495, %v2452
  %v3049 = vmax.f32 %v1503, %v2454
  %v3050 = vmax.f32 %v1511, %v2456
  %v3051 = vmax.f32 %v1510, %v2458
  %v3052 = vmax.f32 %v1512, %v2460
  %v3053 = vmax.f32 %v1520, %v2462
  %v3054 = vmax.f32 %v1528, %v2464
  %v3055 = vmax.f32 %v1527, %v2466
  %v3056 = vmax.f32 %v1529, %v2468
  %v3057 = vmax.f32 %v1537, %v2470
  %v3058 = vmax.f32 %v1545, %v2472
  %v3059 = vmax.f32 %v1544, %v2474
  %v3060 = vmax.f32 %v1546, %v2476
  %v3061 = vmax.f32 %v1554, %v2478
  %v3062 = vmax.f32 %v1562, %v2480
  %v3063 = vmax.f32 %v1561, %v2482
  %v3064 = vmax.f32 %v1563, %v2484
  %v3065 = vmax.f32 %v1571, %v2486
  %v3066 = vmax.f32 %v1579, %v2488
  %v3067 = vmax.f32 %v1578, %v2490
  %v3068 = vmax.f32 %v1580, %v2492
  %v3069 = vmax.f32 %v1588, %v2494
  %v3070 = vmax.f32 %v1596, %v2496
  %v3071 = vmax.f32 %v1595, %v2498
  %v3072 = vmax.f32 %v1597, %v2500
  %v3073 = vmax.f32 %v1605, %v2502
  %v3074 = vmax.f32 %v1613, %v2504
  %v3075 = vmax.f32 %v1612, %v2506
  %v3076 = vmax.f32 %v1614, %v2508
  %v3077 = vmax.f32 %v1622, %v2510
  %v3078 = vmax.f32 %v1630, %v2512
  %v3079 = vmax.f32 %v1629, %v2514
  %v3080 = vmax.f32 %v1631, %v2516
  %v3081 = vmax.f32 %v1639, %v2518
  %v3082 = vmax.f32 %v1647, %v2520
  %v3083 = vmax.f32 %v1646, %v2522
  %v3084 = vmax.f32 %v1648, %v2524
  %v3085 = vmax.f32 %v1656, %v2526
  %v3086 = vmax.f32 %v1664, %v2528
  %v3087 = vmax.f32 %v1663, %v2530
  %v3088 = vmax.f32 %v1665, %v2532
  %v3089 = vmax.f32 %v1673, %v2534
  %v3090 = vmax.f32 %v1681, %v2536
  %v3091 = vmax.f32 %v1680, %v2538
  %v3092 = vmax.f32 %v1682, %v2540
  %v3093 = vmax.f32 %v1690, %v2542
  %v3094 = vmax.f32 %v1698, %v2544
  %v3095 = vmax.f32 %v1697, %v2546
  %v3096 = vmax.f32 %v1699, %v2548
  %v3097 = vmax.f32 %v1707, %v2550
  %v3098 = vmax.f32 %v1715, %v2552
  %v3099 = vmax.f32 %v1714, %v2554
  %v3100 = vmax.f32 %v1716, %v2556
  %v3101 = vmax.f32 %v1724, %v2558
  %v3102 = vmax.f32 %v1732, %v2560
  %v3103 = vmax.f32 %v1731, %v2562
  %v3104 = vmax.f32 %v1733, %v2564
  %v3105 = vmax.f32 %v1741, %v2566
  %v3106 = vmax.f32 %v1749, %v2568
  %v3107 = vmax.f32 %v1748, %v2570
  %v3108 = vmax.f32 %v1750, %v2572
  %v3109 = vmax.f32 %v1758, %v2574
  %v3110 = vmax.f32 %v1766, %v2576
  %v3111 = vmax.f32 %v1765, %v2578
  %v3112 = vmax.f32 %v1767, %v2580
  %v3113 = vmax.f32 %v1775, %v2582
  %v3114 = vmax.f32 %v1783, %v2584
  %v3115 = vmax.f32 %v1782, %v2586
  %v3116 = vmax.f32 %v1784, %v2588
  %v3117 = vmax.f32 %v1792, %v2590
  %v3118 = vmax.f32 %v1800, %v2592
  %v3119 = vmax.f32 %v1799, %v2594
  %v3120 = vmax.f32 %v1801, %v2596
  %v3121 = vmax.f32 %v1809, %v2598
  %v3122 = vmax.f32 %v1817, %v2600
  %v3123 = vmax.f32 %v1816, %v2602
  %v3124 = vmax.f32 %v1818, %v2604
  %v3125 = vmax.f32 %v1826, %v2606
  %v3126 = vmax.f32 %v1834, %v2608
  %v3127 = vmax.f32 %v1833, %v2610
  %v3128 = vmax.f32 %v1835, %v2612
  %v3129 = vmax.f32 %v1843, %v2614
  %v3130 = vmax.f32 %v1851, %v2616
  %v3131 = vmax.f32 %v1850, %v2618
  %v3132 = vmax.f32 %v1852, %v2620
  %v3133 = vmax.f32 %v2877, %v2885
  %v3134 = vmax.f32 %v2878, %v2886
  %v3135 = vmax.f32 %v2879, %v2887
  %v3136 = vmax.f32 %v2880, %v2888
  %v3137 = vmax.f32 %v2881, %v2889
  %v3138 = vmax.f32 %v2882, %v2890
  %v3139 = vmax.f32 %v2883, %v2891
  %v3140 = vmax.f32 %v2884, %v2892
  %v3141 = vmax.f32 %v2893, %v2901
  %v3142 = vmax.f32 %v2894, %v2902
  %v3143 = vmax.f32 %v2895, %v2903
  %v3144 = vmax.f32 %v2896, %v2904
  %v3145 = vmax.f32 %v2897, %v2905
  %v3146 = vmax.f32 %v2898, %v2906
  %v3147 = vmax.f32 %v2899, %v2907
  %v3148 = vmax.f32 %v2900, %v2908
  %v3149 = vmax.f32 %v2909, %v2917
  %v3150 = vmax.f32 %v2910, %v2918
  %v3151 = vmax.f32 %v2911, %v2919
  %v3152 = vmax.f32 %v2912, %v2920
  %v3153 = vmax.f32 %v2913, %v2921
  %v3154 = vmax.f32 %v2914, %v2922
  %v3155 = vmax.f32 %v2915, %v2923
  %v3156 = vmax.f32 %v2916, %v2924
  %v3157 = vmax.f32 %v2925, %v2933
  %v3158 = vmax.f32 %v2926, %v2934
  %v3159 = vmax.f32 %v2927, %v2935
  %v3160 = vmax.f32 %v2928, %v2936
  %v3161 = vmax.f32 %v2929, %v2937
  %v3162 = vmax.f32 %v2930, %v2938
  %v3163 = vmax.f32 %v2931, %v2939
  %v3164 = vmax.f32 %v2932, %v2940
  %v3165 = vmax.f32 %v2941, %v2949
  %v3166 = vmax.f32 %v2942, %v2950
  %v3167 = vmax.f32 %v2943, %v2951
  %v3168 = vmax.f32 %v2944, %v2952
  %v3169 = vmax.f32 %v2945, %v2953
  %v3170 = vmax.f32 %v2946, %v2954
  %v3171 = vmax.f32 %v2947, %v2955
  %v3172 = vmax.f32 %v2948, %v2956
  %v3173 = vmax.f32 %v2957, %v2965
  %v3174 = vmax.f32 %v2958, %v2966
  %v3175 = vmax.f32 %v2959, %v2967
  %v3176 = vmax.f32 %v2960, %v2968
  %v3177 = vmax.f32 %v2961, %v2969
  %v3178 = vmax.f32 %v2962, %v2970
  %v3179 = vmax.f32 %v2963, %v2971
  %v3180 = vmax.f32 %v2964, %v2972
  %v3181 = vmax.f32 %v2973, %v2981
  %v3182 = vmax.f32 %v2974, %v2982
  %v3183 = vmax.f32 %v2975, %v2983
  %v3184 = vmax.f32 %v2976, %v2984
  %v3185 = vmax.f32 %v2977, %v2985
  %v3186 = vmax.f32 %v2978, %v2986
  %v3187 = vmax.f32 %v2979, %v2987
  %v3188 = vmax.f32 %v2980, %v2988
  %v3189 = vmax.f32 %v2989, %v2997
  %v3190 = vmax.f32 %v2990, %v2998
  %v3191 = vmax.f32 %v2991, %v2999
  %v3192 = vmax.f32 %v2992, %v3000
  %v3193 = vmax.f32 %v2993, %v3001
  %v3194 = vmax.f32 %v2994, %v3002
  %v3195 = vmax.f32 %v2995, %v3003
  %v3196 = vmax.f32 %v2996, %v3004
  %v3197 = vmax.f32 %v3005, %v3013
  %v3198 = vmax.f32 %v3006, %v3014
  %v3199 = vmax.f32 %v3007, %v3015
  %v3200 = vmax.f32 %v3008, %v3016
  %v3201 = vmax.f32 %v3009, %v3017
  %v3202 = vmax.f32 %v3010, %v3018
  %v3203 = vmax.f32 %v3011, %v3019
  %v3204 = vmax.f32 %v3012, %v3020
  %v3205 = vmax.f32 %v3021, %v3029
  %v3206 = vmax.f32 %v3022, %v3030
  %v3207 = vmax.f32 %v3023, %v3031
  %v3208 = vmax.f32 %v3024, %v3032
  %v3209 = vmax.f32 %v3025, %v3033
  %v3210 = vmax.f32 %v3026, %v3034
  %v3211 = vmax.f32 %v3027, %v3035
  %v3212 = vmax.f32 %v3028, %v3036
  %v3213 = vmax.f32 %v3037, %v3045
  %v3214 = vmax.f32 %v3038, %v3046
  %v3215 = vmax.f32 %v3039, %v3047
  %v3216 = vmax.f32 %v3040, %v3048
  %v3217 = vmax.f32 %v3041, %v3049
  %v3218 = vmax.f32 %v3042, %v3050
  %v3219 = vmax.f32 %v3043, %v3051
  %v3220 = vmax.f32 %v3044, %v3052
  %v3221 = vmax.f32 %v3053, %v3061
  %v3222 = vmax.f32 %v3054, %v3062
  %v3223 = vmax.f32 %v3055, %v3063
  %v3224 = vmax.f32 %v3056, %v3064
  %v3225 = vmax.f32 %v3057, %v3065
  %v3226 = vmax.f32 %v3058, %v3066
  %v3227 = vmax.f32 %v3059, %v3067
  %v3228 = vmax.f32 %v3060, %v3068
  %v3229 = vmax.f32 %v3069, %v3077
  %v3230 = vmax.f32 %v3070, %v3078
  %v3231 = vmax.f32 %v3071, %v3079
  %v3232 = vmax.f32 %v3072, %v3080
  %v3233 = vmax.f32 %v3073, %v3081
  %v3234 = vmax.f32 %v3074, %v3082
  %v3235 = vmax.f32 %v3075, %v3083
  %v3236 = vmax.f32 %v3076, %v3084
  %v3237 = vmax.f32 %v3085, %v3093
  %v3238 = vmax.f32 %v3086, %v3094
  %v3239 = vmax.f32 %v3087, %v3095
  %v3240 = vmax.f32 %v3088, %v3096
  %v3241 = vmax.f32 %v3089, %v3097
  %v3242 = vmax.f32 %v3090, %v3098
  %v3243 = vmax.f32 %v3091, %v3099
  %v3244 = vmax.f32 %v3092, %v3100
  %v3245 = vmax.f32 %v3101, %v3109
  %v3246 = vmax.f32 %v3102, %v3110
  %v3247 = vmax.f32 %v3103, %v3111
  %v3248 = vmax.f32 %v3104, %v3112
  %v3249 = vmax.f32 %v3105, %v3113
  %v3250 = vmax.f32 %v3106, %v3114
  %v3251 = vmax.f32 %v3107, %v3115
  %v3252 = vmax.f32 %v3108, %v3116
  %v3253 = vmax.f32 %v3117, %v3125
  %v3254 = vmax.f32 %v3118, %v3126
  %v3255 = vmax.f32 %v3119, %v3127
  %v3256 = vmax.f32 %v3120, %v3128
  %v3257 = vmax.f32 %v3121, %v3129
  %v3258 = vmax.f32 %v3122, %v3130
  %v3259 = vmax.f32 %v3123, %v3131
  %v3260 = vmax.f32 %v3124, %v3132
  %vm3261 = vcmask 60416
  %3262 = vst.msk [vmem:[#allocation2] sm:$0xf] %vm3261, 0
  %vm3263 = vcmask 58368
  %3264 = vst.msk [vmem:[#allocation2 + $0x4] sm:$0x3] %vm3263, 0
  %3265 = vst.msk [vmem:[#allocation2 + $0x8] sm:$0xf] %vm3261, 0
  %3266 = vst.msk [vmem:[#allocation2 + $0xc] sm:$0x3] %vm3263, 0
  %3267 = vst.msk [vmem:[#allocation2 + $0x10] sm:$0xf] %vm3261, 0
  %3268 = vst.msk [vmem:[#allocation2 + $0x14] sm:$0x3] %vm3263, 0
  %3269 = vst.msk [vmem:[#allocation2 + $0x18] sm:$0xf] %vm3261, 0
  %3270 = vst.msk [vmem:[#allocation2 + $0x1c] sm:$0x3] %vm3263, 0
  %3271 = vst.msk [vmem:[#allocation2 + $0x20] sm:$0xf] %vm3261, 0
  %3272 = vst.msk [vmem:[#allocation2 + $0x24] sm:$0x3] %vm3263, 0
  %3273 = vst.msk [vmem:[#allocation2 + $0x28] sm:$0xf] %vm3261, 0
  %3274 = vst.msk [vmem:[#allocation2 + $0x2c] sm:$0x3] %vm3263, 0
  %3275 = vst.msk [vmem:[#allocation2 + $0x30] sm:$0xf] %vm3261, 0
  %3276 = vst.msk [vmem:[#allocation2 + $0x34] sm:$0x3] %vm3263, 0
  %3277 = vst.msk [vmem:[#allocation2 + $0x38] sm:$0xf] %vm3261, 0
  %3278 = vst.msk [vmem:[#allocation2 + $0x3c] sm:$0x3] %vm3263, 0
  %3279 = vst.msk [vmem:[#allocation2 + $0x40] sm:$0xf] %vm3261, 0
  %3280 = vst.msk [vmem:[#allocation2 + $0x44] sm:$0x3] %vm3263, 0
  %3281 = vst.msk [vmem:[#allocation2 + $0x48] sm:$0xf] %vm3261, 0
  %3282 = vst.msk [vmem:[#allocation2 + $0x4c] sm:$0x3] %vm3263, 0
  %3283 = vst.msk [vmem:[#allocation2 + $0x50] sm:$0xf] %vm3261, 0
  %3284 = vst.msk [vmem:[#allocation2 + $0x54] sm:$0x3] %vm3263, 0
  %3285 = vst.msk [vmem:[#allocation2 + $0x58] sm:$0xf] %vm3261, 0
  %3286 = vst.msk [vmem:[#allocation2 + $0x5c] sm:$0x3] %vm3263, 0
  %3287 = vst.msk [vmem:[#allocation2 + $0x60] sm:$0xf] %vm3261, 0
  %3288 = vst.msk [vmem:[#allocation2 + $0x64] sm:$0x3] %vm3263, 0
  %3289 = vst.msk [vmem:[#allocation2 + $0x68] sm:$0xf] %vm3261, 0
  %3290 = vst.msk [vmem:[#allocation2 + $0x6c] sm:$0x3] %vm3263, 0
  %3291 = vst.msk [vmem:[#allocation2 + $0x70] sm:$0xf] %vm3261, 0
  %3292 = vst.msk [vmem:[#allocation2 + $0x74] sm:$0x3] %vm3263, 0
  %3293 = vst.msk [vmem:[#allocation2 + $0x78] sm:$0xf] %vm3261, 0
  %3294 = vst.msk [vmem:[#allocation2 + $0x7c] sm:$0x3] %vm3263, 0
  %3295 = vst.msk [vmem:[#allocation2 + $0x80] sm:$0xf] %vm3261, 0
  %3296 = vst.msk [vmem:[#allocation2 + $0x84] sm:$0x3] %vm3263, 0
  %3297 = vst.msk [vmem:[#allocation2 + $0x88] sm:$0xf] %vm3261, 0
  %3298 = vst.msk [vmem:[#allocation2 + $0x8c] sm:$0x3] %vm3263, 0
  %3299 = vst.msk [vmem:[#allocation2 + $0x90] sm:$0xf] %vm3261, 0
  %3300 = vst.msk [vmem:[#allocation2 + $0x94] sm:$0x3] %vm3263, 0
  %3301 = vst.msk [vmem:[#allocation2 + $0x98] sm:$0xf] %vm3261, 0
  %3302 = vst.msk [vmem:[#allocation2 + $0x9c] sm:$0x3] %vm3263, 0
  %3303 = vst.msk [vmem:[#allocation2 + $0xa0] sm:$0xf] %vm3261, 0
  %3304 = vst.msk [vmem:[#allocation2 + $0xa4] sm:$0x3] %vm3263, 0
  %3305 = vst.msk [vmem:[#allocation2 + $0xa8] sm:$0xf] %vm3261, 0
  %3306 = vst.msk [vmem:[#allocation2 + $0xac] sm:$0x3] %vm3263, 0
  %3307 = vst.msk [vmem:[#allocation2 + $0xb0] sm:$0xf] %vm3261, 0
  %3308 = vst.msk [vmem:[#allocation2 + $0xb4] sm:$0x3] %vm3263, 0
  %3309 = vst.msk [vmem:[#allocation2 + $0xb8] sm:$0xf] %vm3261, 0
  %3310 = vst.msk [vmem:[#allocation2 + $0xbc] sm:$0x3] %vm3263, 0
  %v3311 = vpack.c.bf16 %v3133, %v3133
  %v3312 = vpack.c.bf16 %v3134, %v3134
  %v3313 = vpack.c.bf16 %v3135, %v3135
  %v3314 = vpack.c.bf16 %v3136, %v3136
  %v3315 = vpack.c.bf16 %v3137, %v3137
  %v3316 = vpack.c.bf16 %v3138, %v3138
  %v3317 = vpack.c.bf16 %v3139, %v3139
  %v3318 = vpack.c.bf16 %v3140, %v3140
  %v3319 = vpack.c.bf16 %v3141, %v3141
  %v3320 = vpack.c.bf16 %v3142, %v3142
  %v3321 = vpack.c.bf16 %v3143, %v3143
  %v3322 = vpack.c.bf16 %v3144, %v3144
  %v3323 = vpack.c.bf16 %v3145, %v3145
  %v3324 = vpack.c.bf16 %v3146, %v3146
  %v3325 = vpack.c.bf16 %v3147, %v3147
  %v3326 = vpack.c.bf16 %v3148, %v3148
  %v3327 = vpack.c.bf16 %v3149, %v3149
  %v3328 = vpack.c.bf16 %v3150, %v3150
  %v3329 = vpack.c.bf16 %v3151, %v3151
  %v3330 = vpack.c.bf16 %v3152, %v3152
  %v3331 = vpack.c.bf16 %v3153, %v3153
  %v3332 = vpack.c.bf16 %v3154, %v3154
  %v3333 = vpack.c.bf16 %v3155, %v3155
  %v3334 = vpack.c.bf16 %v3156, %v3156
  %v3335 = vpack.c.bf16 %v3157, %v3157
  %v3336 = vpack.c.bf16 %v3158, %v3158
  %v3337 = vpack.c.bf16 %v3159, %v3159
  %v3338 = vpack.c.bf16 %v3160, %v3160
  %v3339 = vpack.c.bf16 %v3161, %v3161
  %v3340 = vpack.c.bf16 %v3162, %v3162
  %v3341 = vpack.c.bf16 %v3163, %v3163
  %v3342 = vpack.c.bf16 %v3164, %v3164
  %v3343 = vpack.c.bf16 %v3165, %v3165
  %v3344 = vpack.c.bf16 %v3166, %v3166
  %v3345 = vpack.c.bf16 %v3167, %v3167
  %v3346 = vpack.c.bf16 %v3168, %v3168
  %v3347 = vpack.c.bf16 %v3169, %v3169
  %v3348 = vpack.c.bf16 %v3170, %v3170
  %v3349 = vpack.c.bf16 %v3171, %v3171
  %v3350 = vpack.c.bf16 %v3172, %v3172
  %v3351 = vpack.c.bf16 %v3173, %v3173
  %v3352 = vpack.c.bf16 %v3174, %v3174
  %v3353 = vpack.c.bf16 %v3175, %v3175
  %v3354 = vpack.c.bf16 %v3176, %v3176
  %v3355 = vpack.c.bf16 %v3177, %v3177
  %v3356 = vpack.c.bf16 %v3178, %v3178
  %v3357 = vpack.c.bf16 %v3179, %v3179
  %v3358 = vpack.c.bf16 %v3180, %v3180
  %v3359 = vpack.c.bf16 %v3181, %v3181
  %v3360 = vpack.c.bf16 %v3182, %v3182
  %v3361 = vpack.c.bf16 %v3183, %v3183
  %v3362 = vpack.c.bf16 %v3184, %v3184
  %v3363 = vpack.c.bf16 %v3185, %v3185
  %v3364 = vpack.c.bf16 %v3186, %v3186
  %v3365 = vpack.c.bf16 %v3187, %v3187
  %v3366 = vpack.c.bf16 %v3188, %v3188
  %v3367 = vpack.c.bf16 %v3189, %v3189
  %v3368 = vpack.c.bf16 %v3190, %v3190
  %v3369 = vpack.c.bf16 %v3191, %v3191
  %v3370 = vpack.c.bf16 %v3192, %v3192
  %v3371 = vpack.c.bf16 %v3193, %v3193
  %v3372 = vpack.c.bf16 %v3194, %v3194
  %v3373 = vpack.c.bf16 %v3195, %v3195
  %v3374 = vpack.c.bf16 %v3196, %v3196
  %v3375 = vpack.c.bf16 %v3197, %v3197
  %v3376 = vpack.c.bf16 %v3198, %v3198
  %v3377 = vpack.c.bf16 %v3199, %v3199
  %v3378 = vpack.c.bf16 %v3200, %v3200
  %v3379 = vpack.c.bf16 %v3201, %v3201
  %v3380 = vpack.c.bf16 %v3202, %v3202
  %v3381 = vpack.c.bf16 %v3203, %v3203
  %v3382 = vpack.c.bf16 %v3204, %v3204
  %v3383 = vpack.c.bf16 %v3205, %v3205
  %v3384 = vpack.c.bf16 %v3206, %v3206
  %v3385 = vpack.c.bf16 %v3207, %v3207
  %v3386 = vpack.c.bf16 %v3208, %v3208
  %v3387 = vpack.c.bf16 %v3209, %v3209
  %v3388 = vpack.c.bf16 %v3210, %v3210
  %v3389 = vpack.c.bf16 %v3211, %v3211
  %v3390 = vpack.c.bf16 %v3212, %v3212
  %v3391 = vpack.c.bf16 %v3213, %v3213
  %v3392 = vpack.c.bf16 %v3214, %v3214
  %v3393 = vpack.c.bf16 %v3215, %v3215
  %v3394 = vpack.c.bf16 %v3216, %v3216
  %v3395 = vpack.c.bf16 %v3217, %v3217
  %v3396 = vpack.c.bf16 %v3218, %v3218
  %v3397 = vpack.c.bf16 %v3219, %v3219
  %v3398 = vpack.c.bf16 %v3220, %v3220
  %v3399 = vpack.c.bf16 %v3221, %v3221
  %v3400 = vpack.c.bf16 %v3222, %v3222
  %v3401 = vpack.c.bf16 %v3223, %v3223
  %v3402 = vpack.c.bf16 %v3224, %v3224
  %v3403 = vpack.c.bf16 %v3225, %v3225
  %v3404 = vpack.c.bf16 %v3226, %v3226
  %v3405 = vpack.c.bf16 %v3227, %v3227
  %v3406 = vpack.c.bf16 %v3228, %v3228
  %v3407 = vpack.c.bf16 %v3229, %v3229
  %v3408 = vpack.c.bf16 %v3230, %v3230
  %v3409 = vpack.c.bf16 %v3231, %v3231
  %v3410 = vpack.c.bf16 %v3232, %v3232
  %v3411 = vpack.c.bf16 %v3233, %v3233
  %v3412 = vpack.c.bf16 %v3234, %v3234
  %v3413 = vpack.c.bf16 %v3235, %v3235
  %v3414 = vpack.c.bf16 %v3236, %v3236
  %v3415 = vpack.c.bf16 %v3237, %v3237
  %v3416 = vpack.c.bf16 %v3238, %v3238
  %v3417 = vpack.c.bf16 %v3239, %v3239
  %v3418 = vpack.c.bf16 %v3240, %v3240
  %v3419 = vpack.c.bf16 %v3241, %v3241
  %v3420 = vpack.c.bf16 %v3242, %v3242
  %v3421 = vpack.c.bf16 %v3243, %v3243
  %v3422 = vpack.c.bf16 %v3244, %v3244
  %v3423 = vpack.c.bf16 %v3245, %v3245
  %v3424 = vpack.c.bf16 %v3246, %v3246
  %v3425 = vpack.c.bf16 %v3247, %v3247
  %v3426 = vpack.c.bf16 %v3248, %v3248
  %v3427 = vpack.c.bf16 %v3249, %v3249
  %v3428 = vpack.c.bf16 %v3250, %v3250
  %v3429 = vpack.c.bf16 %v3251, %v3251
  %v3430 = vpack.c.bf16 %v3252, %v3252
  %v3431 = vpack.c.bf16 %v3253, %v3253
  %v3432 = vpack.c.bf16 %v3254, %v3254
  %v3433 = vpack.c.bf16 %v3255, %v3255
  %v3434 = vpack.c.bf16 %v3256, %v3256
  %v3435 = vpack.c.bf16 %v3257, %v3257
  %v3436 = vpack.c.bf16 %v3258, %v3258
  %v3437 = vpack.c.bf16 %v3259, %v3259
  %v3438 = vpack.c.bf16 %v3260, %v3260
  %v3567 = vunpack.c.l.b16 %v3311
  %v3568 = vunpack.c.l.b16 %v3312
  %v3569 = vunpack.c.l.b16 %v3313
  %v3570 = vunpack.c.l.b16 %v3314
  %v3571 = vunpack.c.l.b16 %v3315
  %v3572 = vunpack.c.l.b16 %v3316
  %v3573 = vunpack.c.l.b16 %v3317
  %v3574 = vunpack.c.l.b16 %v3318
  %v3575 = vunpack.c.l.b16 %v3319
  %v3576 = vunpack.c.l.b16 %v3320
  %v3577 = vunpack.c.l.b16 %v3321
  %v3578 = vunpack.c.l.b16 %v3322
  %v3579 = vunpack.c.l.b16 %v3323
  %v3580 = vunpack.c.l.b16 %v3324
  %v3581 = vunpack.c.l.b16 %v3325
  %v3582 = vunpack.c.l.b16 %v3326
  %v3583 = vunpack.c.l.b16 %v3327
  %v3584 = vunpack.c.l.b16 %v3328
  %v3585 = vunpack.c.l.b16 %v3329
  %v3586 = vunpack.c.l.b16 %v3330
  %v3587 = vunpack.c.l.b16 %v3331
  %v3588 = vunpack.c.l.b16 %v3332
  %v3589 = vunpack.c.l.b16 %v3333
  %v3590 = vunpack.c.l.b16 %v3334
  %v3591 = vunpack.c.l.b16 %v3335
  %v3592 = vunpack.c.l.b16 %v3336
  %v3593 = vunpack.c.l.b16 %v3337
  %v3594 = vunpack.c.l.b16 %v3338
  %v3595 = vunpack.c.l.b16 %v3339
  %v3596 = vunpack.c.l.b16 %v3340
  %v3597 = vunpack.c.l.b16 %v3341
  %v3598 = vunpack.c.l.b16 %v3342
  %v3599 = vunpack.c.l.b16 %v3343
  %v3600 = vunpack.c.l.b16 %v3344
  %v3601 = vunpack.c.l.b16 %v3345
  %v3602 = vunpack.c.l.b16 %v3346
  %v3603 = vunpack.c.l.b16 %v3347
  %v3604 = vunpack.c.l.b16 %v3348
  %v3605 = vunpack.c.l.b16 %v3349
  %v3606 = vunpack.c.l.b16 %v3350
  %v3607 = vunpack.c.l.b16 %v3351
  %v3608 = vunpack.c.l.b16 %v3352
  %v3609 = vunpack.c.l.b16 %v3353
  %v3610 = vunpack.c.l.b16 %v3354
  %v3611 = vunpack.c.l.b16 %v3355
  %v3612 = vunpack.c.l.b16 %v3356
  %v3613 = vunpack.c.l.b16 %v3357
  %v3614 = vunpack.c.l.b16 %v3358
  %v3615 = vunpack.c.l.b16 %v3359
  %v3616 = vunpack.c.l.b16 %v3360
  %v3617 = vunpack.c.l.b16 %v3361
  %v3618 = vunpack.c.l.b16 %v3362
  %v3619 = vunpack.c.l.b16 %v3363
  %v3620 = vunpack.c.l.b16 %v3364
  %v3621 = vunpack.c.l.b16 %v3365
  %v3622 = vunpack.c.l.b16 %v3366
  %v3623 = vunpack.c.l.b16 %v3367
  %v3624 = vunpack.c.l.b16 %v3368
  %v3625 = vunpack.c.l.b16 %v3369
  %v3626 = vunpack.c.l.b16 %v3370
  %v3627 = vunpack.c.l.b16 %v3371
  %v3628 = vunpack.c.l.b16 %v3372
  %v3629 = vunpack.c.l.b16 %v3373
  %v3630 = vunpack.c.l.b16 %v3374
  %v3631 = vunpack.c.l.b16 %v3375
  %v3632 = vunpack.c.l.b16 %v3376
  %v3633 = vunpack.c.l.b16 %v3377
  %v3634 = vunpack.c.l.b16 %v3378
  %v3635 = vunpack.c.l.b16 %v3379
  %v3636 = vunpack.c.l.b16 %v3380
  %v3637 = vunpack.c.l.b16 %v3381
  %v3638 = vunpack.c.l.b16 %v3382
  %v3639 = vunpack.c.l.b16 %v3383
  %v3640 = vunpack.c.l.b16 %v3384
  %v3641 = vunpack.c.l.b16 %v3385
  %v3642 = vunpack.c.l.b16 %v3386
  %v3643 = vunpack.c.l.b16 %v3387
  %v3644 = vunpack.c.l.b16 %v3388
  %v3645 = vunpack.c.l.b16 %v3389
  %v3646 = vunpack.c.l.b16 %v3390
  %v3647 = vunpack.c.l.b16 %v3391
  %v3648 = vunpack.c.l.b16 %v3392
  %v3649 = vunpack.c.l.b16 %v3393
  %v3650 = vunpack.c.l.b16 %v3394
  %v3651 = vunpack.c.l.b16 %v3395
  %v3652 = vunpack.c.l.b16 %v3396
  %v3653 = vunpack.c.l.b16 %v3397
  %v3654 = vunpack.c.l.b16 %v3398
  %v3655 = vunpack.c.l.b16 %v3399
  %v3656 = vunpack.c.l.b16 %v3400
  %v3657 = vunpack.c.l.b16 %v3401
  %v3658 = vunpack.c.l.b16 %v3402
  %v3659 = vunpack.c.l.b16 %v3403
  %v3660 = vunpack.c.l.b16 %v3404
  %v3661 = vunpack.c.l.b16 %v3405
  %v3662 = vunpack.c.l.b16 %v3406
  %v3663 = vunpack.c.l.b16 %v3407
  %v3664 = vunpack.c.l.b16 %v3408
  %v3665 = vunpack.c.l.b16 %v3409
  %v3666 = vunpack.c.l.b16 %v3410
  %v3667 = vunpack.c.l.b16 %v3411
  %v3668 = vunpack.c.l.b16 %v3412
  %v3669 = vunpack.c.l.b16 %v3413
  %v3670 = vunpack.c.l.b16 %v3414
  %v3671 = vunpack.c.l.b16 %v3415
  %v3672 = vunpack.c.l.b16 %v3416
  %v3673 = vunpack.c.l.b16 %v3417
  %v3674 = vunpack.c.l.b16 %v3418
  %v3675 = vunpack.c.l.b16 %v3419
  %v3676 = vunpack.c.l.b16 %v3420
  %v3677 = vunpack.c.l.b16 %v3421
  %v3678 = vunpack.c.l.b16 %v3422
  %v3679 = vunpack.c.l.b16 %v3423
  %v3680 = vunpack.c.l.b16 %v3424
  %v3681 = vunpack.c.l.b16 %v3425
  %v3682 = vunpack.c.l.b16 %v3426
  %v3683 = vunpack.c.l.b16 %v3427
  %v3684 = vunpack.c.l.b16 %v3428
  %v3685 = vunpack.c.l.b16 %v3429
  %v3686 = vunpack.c.l.b16 %v3430
  %v3687 = vunpack.c.l.b16 %v3431
  %v3688 = vunpack.c.l.b16 %v3432
  %v3689 = vunpack.c.l.b16 %v3433
  %v3690 = vunpack.c.l.b16 %v3434
  %v3691 = vunpack.c.l.b16 %v3435
  %v3692 = vunpack.c.l.b16 %v3436
  %v3693 = vunpack.c.l.b16 %v3437
  %v3694 = vunpack.c.l.b16 %v3438
  %v3695 = vpack.c.b16 %v3567, %v3567
  %v3696 = vpack.c.b16 %v3568, %v3568
  %v3697 = vpack.c.b16 %v3569, %v3569
  %v3698 = vpack.c.b16 %v3570, %v3570
  %v3699 = vpack.c.b16 %v3571, %v3571
  %v3700 = vpack.c.b16 %v3572, %v3572
  %v3701 = vpack.c.b16 %v3573, %v3573
  %v3702 = vpack.c.b16 %v3574, %v3574
  %v3703 = vpack.c.b16 %v3575, %v3575
  %v3704 = vpack.c.b16 %v3576, %v3576
  %v3705 = vpack.c.b16 %v3577, %v3577
  %v3706 = vpack.c.b16 %v3578, %v3578
  %v3707 = vpack.c.b16 %v3579, %v3579
  %v3708 = vpack.c.b16 %v3580, %v3580
  %v3709 = vpack.c.b16 %v3581, %v3581
  %v3710 = vpack.c.b16 %v3582, %v3582
  %v3711 = vpack.c.b16 %v3583, %v3583
  %v3712 = vpack.c.b16 %v3584, %v3584
  %v3713 = vpack.c.b16 %v3585, %v3585
  %v3714 = vpack.c.b16 %v3586, %v3586
  %v3715 = vpack.c.b16 %v3587, %v3587
  %v3716 = vpack.c.b16 %v3588, %v3588
  %v3717 = vpack.c.b16 %v3589, %v3589
  %v3718 = vpack.c.b16 %v3590, %v3590
  %v3719 = vpack.c.b16 %v3591, %v3591
  %v3720 = vpack.c.b16 %v3592, %v3592
  %v3721 = vpack.c.b16 %v3593, %v3593
  %v3722 = vpack.c.b16 %v3594, %v3594
  %v3723 = vpack.c.b16 %v3595, %v3595
  %v3724 = vpack.c.b16 %v3596, %v3596
  %v3725 = vpack.c.b16 %v3597, %v3597
  %v3726 = vpack.c.b16 %v3598, %v3598
  %v3727 = vpack.c.b16 %v3599, %v3599
  %v3728 = vpack.c.b16 %v3600, %v3600
  %v3729 = vpack.c.b16 %v3601, %v3601
  %v3730 = vpack.c.b16 %v3602, %v3602
  %v3731 = vpack.c.b16 %v3603, %v3603
  %v3732 = vpack.c.b16 %v3604, %v3604
  %v3733 = vpack.c.b16 %v3605, %v3605
  %v3734 = vpack.c.b16 %v3606, %v3606
  %v3735 = vpack.c.b16 %v3607, %v3607
  %v3736 = vpack.c.b16 %v3608, %v3608
  %v3737 = vpack.c.b16 %v3609, %v3609
  %v3738 = vpack.c.b16 %v3610, %v3610
  %v3739 = vpack.c.b16 %v3611, %v3611
  %v3740 = vpack.c.b16 %v3612, %v3612
  %v3741 = vpack.c.b16 %v3613, %v3613
  %v3742 = vpack.c.b16 %v3614, %v3614
  %v3743 = vpack.c.b16 %v3615, %v3615
  %v3744 = vpack.c.b16 %v3616, %v3616
  %v3745 = vpack.c.b16 %v3617, %v3617
  %v3746 = vpack.c.b16 %v3618, %v3618
  %v3747 = vpack.c.b16 %v3619, %v3619
  %v3748 = vpack.c.b16 %v3620, %v3620
  %v3749 = vpack.c.b16 %v3621, %v3621
  %v3750 = vpack.c.b16 %v3622, %v3622
  %v3751 = vpack.c.b16 %v3623, %v3623
  %v3752 = vpack.c.b16 %v3624, %v3624
  %v3753 = vpack.c.b16 %v3625, %v3625
  %v3754 = vpack.c.b16 %v3626, %v3626
  %v3755 = vpack.c.b16 %v3627, %v3627
  %v3756 = vpack.c.b16 %v3628, %v3628
  %v3757 = vpack.c.b16 %v3629, %v3629
  %v3758 = vpack.c.b16 %v3630, %v3630
  %v3759 = vpack.c.b16 %v3631, %v3631
  %v3760 = vpack.c.b16 %v3632, %v3632
  %v3761 = vpack.c.b16 %v3633, %v3633
  %v3762 = vpack.c.b16 %v3634, %v3634
  %v3763 = vpack.c.b16 %v3635, %v3635
  %v3764 = vpack.c.b16 %v3636, %v3636
  %v3765 = vpack.c.b16 %v3637, %v3637
  %v3766 = vpack.c.b16 %v3638, %v3638
  %v3767 = vpack.c.b16 %v3639, %v3639
  %v3768 = vpack.c.b16 %v3640, %v3640
  %v3769 = vpack.c.b16 %v3641, %v3641
  %v3770 = vpack.c.b16 %v3642, %v3642
  %v3771 = vpack.c.b16 %v3643, %v3643
  %v3772 = vpack.c.b16 %v3644, %v3644
  %v3773 = vpack.c.b16 %v3645, %v3645
  %v3774 = vpack.c.b16 %v3646, %v3646
  %v3775 = vpack.c.b16 %v3647, %v3647
  %v3776 = vpack.c.b16 %v3648, %v3648
  %v3777 = vpack.c.b16 %v3649, %v3649
  %v3778 = vpack.c.b16 %v3650, %v3650
  %v3779 = vpack.c.b16 %v3651, %v3651
  %v3780 = vpack.c.b16 %v3652, %v3652
  %v3781 = vpack.c.b16 %v3653, %v3653
  %v3782 = vpack.c.b16 %v3654, %v3654
  %v3783 = vpack.c.b16 %v3655, %v3655
  %v3784 = vpack.c.b16 %v3656, %v3656
  %v3785 = vpack.c.b16 %v3657, %v3657
  %v3786 = vpack.c.b16 %v3658, %v3658
  %v3787 = vpack.c.b16 %v3659, %v3659
  %v3788 = vpack.c.b16 %v3660, %v3660
  %v3789 = vpack.c.b16 %v3661, %v3661
  %v3790 = vpack.c.b16 %v3662, %v3662
  %v3791 = vpack.c.b16 %v3663, %v3663
  %v3792 = vpack.c.b16 %v3664, %v3664
  %v3793 = vpack.c.b16 %v3665, %v3665
  %v3794 = vpack.c.b16 %v3666, %v3666
  %v3795 = vpack.c.b16 %v3667, %v3667
  %v3796 = vpack.c.b16 %v3668, %v3668
  %v3797 = vpack.c.b16 %v3669, %v3669
  %v3798 = vpack.c.b16 %v3670, %v3670
  %v3799 = vpack.c.b16 %v3671, %v3671
  %v3800 = vpack.c.b16 %v3672, %v3672
  %v3801 = vpack.c.b16 %v3673, %v3673
  %v3802 = vpack.c.b16 %v3674, %v3674
  %v3803 = vpack.c.b16 %v3675, %v3675
  %v3804 = vpack.c.b16 %v3676, %v3676
  %v3805 = vpack.c.b16 %v3677, %v3677
  %v3806 = vpack.c.b16 %v3678, %v3678
  %v3807 = vpack.c.b16 %v3679, %v3679
  %v3808 = vpack.c.b16 %v3680, %v3680
  %v3809 = vpack.c.b16 %v3681, %v3681
  %v3810 = vpack.c.b16 %v3682, %v3682
  %v3811 = vpack.c.b16 %v3683, %v3683
  %v3812 = vpack.c.b16 %v3684, %v3684
  %v3813 = vpack.c.b16 %v3685, %v3685
  %v3814 = vpack.c.b16 %v3686, %v3686
  %v3815 = vpack.c.b16 %v3687, %v3687
  %v3816 = vpack.c.b16 %v3688, %v3688
  %v3817 = vpack.c.b16 %v3689, %v3689
  %v3818 = vpack.c.b16 %v3690, %v3690
  %v3819 = vpack.c.b16 %v3691, %v3691
  %v3820 = vpack.c.b16 %v3692, %v3692
  %v3821 = vpack.c.b16 %v3693, %v3693
  %v3822 = vpack.c.b16 %v3694, %v3694
  %v3823 = vunpack.c.l.b16 %v3695
  %v3824 = vunpack.c.l.b16 %v3696
  %v3825 = vunpack.c.l.b16 %v3697
  %v3826 = vunpack.c.l.b16 %v3698
  %v3827 = vunpack.c.l.b16 %v3699
  %v3828 = vunpack.c.l.b16 %v3700
  %v3829 = vunpack.c.l.b16 %v3701
  %v3830 = vunpack.c.l.b16 %v3702
  %v3831 = vunpack.c.l.b16 %v3703
  %v3832 = vunpack.c.l.b16 %v3704
  %v3833 = vunpack.c.l.b16 %v3705
  %v3834 = vunpack.c.l.b16 %v3706
  %v3835 = vunpack.c.l.b16 %v3707
  %v3836 = vunpack.c.l.b16 %v3708
  %v3837 = vunpack.c.l.b16 %v3709
  %v3838 = vunpack.c.l.b16 %v3710
  %v3839 = vunpack.c.l.b16 %v3711
  %v3840 = vunpack.c.l.b16 %v3712
  %v3841 = vunpack.c.l.b16 %v3713
  %v3842 = vunpack.c.l.b16 %v3714
  %v3843 = vunpack.c.l.b16 %v3715
  %v3844 = vunpack.c.l.b16 %v3716
  %v3845 = vunpack.c.l.b16 %v3717
  %v3846 = vunpack.c.l.b16 %v3718
  %v3847 = vunpack.c.l.b16 %v3719
  %v3848 = vunpack.c.l.b16 %v3720
  %v3849 = vunpack.c.l.b16 %v3721
  %v3850 = vunpack.c.l.b16 %v3722
  %v3851 = vunpack.c.l.b16 %v3723
  %v3852 = vunpack.c.l.b16 %v3724
  %v3853 = vunpack.c.l.b16 %v3725
  %v3854 = vunpack.c.l.b16 %v3726
  %v3855 = vunpack.c.l.b16 %v3727
  %v3856 = vunpack.c.l.b16 %v3728
  %v3857 = vunpack.c.l.b16 %v3729
  %v3858 = vunpack.c.l.b16 %v3730
  %v3859 = vunpack.c.l.b16 %v3731
  %v3860 = vunpack.c.l.b16 %v3732
  %v3861 = vunpack.c.l.b16 %v3733
  %v3862 = vunpack.c.l.b16 %v3734
  %v3863 = vunpack.c.l.b16 %v3735
  %v3864 = vunpack.c.l.b16 %v3736
  %v3865 = vunpack.c.l.b16 %v3737
  %v3866 = vunpack.c.l.b16 %v3738
  %v3867 = vunpack.c.l.b16 %v3739
  %v3868 = vunpack.c.l.b16 %v3740
  %v3869 = vunpack.c.l.b16 %v3741
  %v3870 = vunpack.c.l.b16 %v3742
  %v3871 = vunpack.c.l.b16 %v3743
  %v3872 = vunpack.c.l.b16 %v3744
  %v3873 = vunpack.c.l.b16 %v3745
  %v3874 = vunpack.c.l.b16 %v3746
  %v3875 = vunpack.c.l.b16 %v3747
  %v3876 = vunpack.c.l.b16 %v3748
  %v3877 = vunpack.c.l.b16 %v3749
  %v3878 = vunpack.c.l.b16 %v3750
  %v3879 = vunpack.c.l.b16 %v3751
  %v3880 = vunpack.c.l.b16 %v3752
  %v3881 = vunpack.c.l.b16 %v3753
  %v3882 = vunpack.c.l.b16 %v3754
  %v3883 = vunpack.c.l.b16 %v3755
  %v3884 = vunpack.c.l.b16 %v3756
  %v3885 = vunpack.c.l.b16 %v3757
  %v3886 = vunpack.c.l.b16 %v3758
  %v3887 = vunpack.c.l.b16 %v3759
  %v3888 = vunpack.c.l.b16 %v3760
  %v3889 = vunpack.c.l.b16 %v3761
  %v3890 = vunpack.c.l.b16 %v3762
  %v3891 = vunpack.c.l.b16 %v3763
  %v3892 = vunpack.c.l.b16 %v3764
  %v3893 = vunpack.c.l.b16 %v3765
  %v3894 = vunpack.c.l.b16 %v3766
  %v3895 = vunpack.c.l.b16 %v3767
  %v3896 = vunpack.c.l.b16 %v3768
  %v3897 = vunpack.c.l.b16 %v3769
  %v3898 = vunpack.c.l.b16 %v3770
  %v3899 = vunpack.c.l.b16 %v3771
  %v3900 = vunpack.c.l.b16 %v3772
  %v3901 = vunpack.c.l.b16 %v3773
  %v3902 = vunpack.c.l.b16 %v3774
  %v3903 = vunpack.c.l.b16 %v3775
  %v3904 = vunpack.c.l.b16 %v3776
  %v3905 = vunpack.c.l.b16 %v3777
  %v3906 = vunpack.c.l.b16 %v3778
  %v3907 = vunpack.c.l.b16 %v3779
  %v3908 = vunpack.c.l.b16 %v3780
  %v3909 = vunpack.c.l.b16 %v3781
  %v3910 = vunpack.c.l.b16 %v3782
  %v3911 = vunpack.c.l.b16 %v3783
  %v3912 = vunpack.c.l.b16 %v3784
  %v3913 = vunpack.c.l.b16 %v3785
  %v3914 = vunpack.c.l.b16 %v3786
  %v3915 = vunpack.c.l.b16 %v3787
  %v3916 = vunpack.c.l.b16 %v3788
  %v3917 = vunpack.c.l.b16 %v3789
  %v3918 = vunpack.c.l.b16 %v3790
  %v3919 = vunpack.c.l.b16 %v3791
  %v3920 = vunpack.c.l.b16 %v3792
  %v3921 = vunpack.c.l.b16 %v3793
  %v3922 = vunpack.c.l.b16 %v3794
  %v3923 = vunpack.c.l.b16 %v3795
  %v3924 = vunpack.c.l.b16 %v3796
  %v3925 = vunpack.c.l.b16 %v3797
  %v3926 = vunpack.c.l.b16 %v3798
  %v3927 = vunpack.c.l.b16 %v3799
  %v3928 = vunpack.c.l.b16 %v3800
  %v3929 = vunpack.c.l.b16 %v3801
  %v3930 = vunpack.c.l.b16 %v3802
  %v3931 = vunpack.c.l.b16 %v3803
  %v3932 = vunpack.c.l.b16 %v3804
  %v3933 = vunpack.c.l.b16 %v3805
  %v3934 = vunpack.c.l.b16 %v3806
  %v3935 = vunpack.c.l.b16 %v3807
  %v3936 = vunpack.c.l.b16 %v3808
  %v3937 = vunpack.c.l.b16 %v3809
  %v3938 = vunpack.c.l.b16 %v3810
  %v3939 = vunpack.c.l.b16 %v3811
  %v3940 = vunpack.c.l.b16 %v3812
  %v3941 = vunpack.c.l.b16 %v3813
  %v3942 = vunpack.c.l.b16 %v3814
  %v3943 = vunpack.c.l.b16 %v3815
  %v3944 = vunpack.c.l.b16 %v3816
  %v3945 = vunpack.c.l.b16 %v3817
  %v3946 = vunpack.c.l.b16 %v3818
  %v3947 = vunpack.c.l.b16 %v3819
  %v3948 = vunpack.c.l.b16 %v3820
  %v3949 = vunpack.c.l.b16 %v3821
  %v3950 = vunpack.c.l.b16 %v3822
  %v3951 = vrot.slane %v3823, 6
  %v3952 = vrot.slane %v3824, 5
  %vm3953 = vcmask 1043459
  %v3954 = vsel %vm3953, %v3952, %v3951
  %v3955 = vrot.slane %v3825, 4
  %vm3956 = vcmask 1044484
  %v3957 = vsel %vm3956, %v3955, %v3954
  %v3958 = vrot.slane %v3826, 3
  %vm3959 = vcmask 1045509
  %v3960 = vsel %vm3959, %v3958, %v3957
  %v3961 = vrot.slane %v3827, 2
  %vm3962 = vcmask 1046534
  %v3963 = vsel %vm3962, %v3961, %v3960
  %v3964 = vrot.slane %v3828, 1
  %vm3965 = vcmask 1047559
  %v3966 = vsel %vm3965, %v3964, %v3963
  %v3967 = vrot.slane %v3830, 7
  %vm3968 = vcmask 1041409
  %v3969 = vsel %vm3968, %v3967, %v3829
  %v3970 = vrot.slane %v3831, 6
  %v3971 = vrot.slane %v3832, 5
  %v3972 = vsel %vm3953, %v3971, %v3970
  %v3973 = vrot.slane %v3833, 4
  %v3974 = vsel %vm3956, %v3973, %v3972
  %v3975 = vrot.slane %v3834, 3
  %v3976 = vsel %vm3959, %v3975, %v3974
  %v3977 = vrot.slane %v3835, 2
  %v3978 = vsel %vm3962, %v3977, %v3976
  %v3979 = vrot.slane %v3836, 1
  %v3980 = vsel %vm3965, %v3979, %v3978
  %v3981 = vrot.slane %v3838, 7
  %v3982 = vsel %vm3968, %v3981, %v3837
  %v3983 = vrot.slane %v3839, 6
  %v3984 = vrot.slane %v3840, 5
  %v3985 = vsel %vm3953, %v3984, %v3983
  %v3986 = vrot.slane %v3841, 4
  %v3987 = vsel %vm3956, %v3986, %v3985
  %v3988 = vrot.slane %v3842, 3
  %v3989 = vsel %vm3959, %v3988, %v3987
  %v3990 = vrot.slane %v3843, 2
  %v3991 = vsel %vm3962, %v3990, %v3989
  %v3992 = vrot.slane %v3844, 1
  %v3993 = vsel %vm3965, %v3992, %v3991
  %v3994 = vrot.slane %v3846, 7
  %v3995 = vsel %vm3968, %v3994, %v3845
  %v3996 = vrot.slane %v3847, 6
  %v3997 = vrot.slane %v3848, 5
  %v3998 = vsel %vm3953, %v3997, %v3996
  %v3999 = vrot.slane %v3849, 4
  %v4000 = vsel %vm3956, %v3999, %v3998
  %v4001 = vrot.slane %v3850, 3
  %v4002 = vsel %vm3959, %v4001, %v4000
  %v4003 = vrot.slane %v3851, 2
  %v4004 = vsel %vm3962, %v4003, %v4002
  %v4005 = vrot.slane %v3852, 1
  %v4006 = vsel %vm3965, %v4005, %v4004
  %v4007 = vrot.slane %v3854, 7
  %v4008 = vsel %vm3968, %v4007, %v3853
  %v4009 = vrot.slane %v3855, 6
  %v4010 = vrot.slane %v3856, 5
  %v4011 = vsel %vm3953, %v4010, %v4009
  %v4012 = vrot.slane %v3857, 4
  %v4013 = vsel %vm3956, %v4012, %v4011
  %v4014 = vrot.slane %v3858, 3
  %v4015 = vsel %vm3959, %v4014, %v4013
  %v4016 = vrot.slane %v3859, 2
  %v4017 = vsel %vm3962, %v4016, %v4015
  %v4018 = vrot.slane %v3860, 1
  %v4019 = vsel %vm3965, %v4018, %v4017
  %v4020 = vrot.slane %v3862, 7
  %v4021 = vsel %vm3968, %v4020, %v3861
  %v4022 = vrot.slane %v3863, 6
  %v4023 = vrot.slane %v3864, 5
  %v4024 = vsel %vm3953, %v4023, %v4022
  %v4025 = vrot.slane %v3865, 4
  %v4026 = vsel %vm3956, %v4025, %v4024
  %v4027 = vrot.slane %v3866, 3
  %v4028 = vsel %vm3959, %v4027, %v4026
  %v4029 = vrot.slane %v3867, 2
  %v4030 = vsel %vm3962, %v4029, %v4028
  %v4031 = vrot.slane %v3868, 1
  %v4032 = vsel %vm3965, %v4031, %v4030
  %v4033 = vrot.slane %v3870, 7
  %v4034 = vsel %vm3968, %v4033, %v3869
  %v4035 = vrot.slane %v3871, 6
  %v4036 = vrot.slane %v3872, 5
  %v4037 = vsel %vm3953, %v4036, %v4035
  %v4038 = vrot.slane %v3873, 4
  %v4039 = vsel %vm3956, %v4038, %v4037
  %v4040 = vrot.slane %v3874, 3
  %v4041 = vsel %vm3959, %v4040, %v4039
  %v4042 = vrot.slane %v3875, 2
  %v4043 = vsel %vm3962, %v4042, %v4041
  %v4044 = vrot.slane %v3876, 1
  %v4045 = vsel %vm3965, %v4044, %v4043
  %v4046 = vrot.slane %v3878, 7
  %v4047 = vsel %vm3968, %v4046, %v3877
  %v4048 = vrot.slane %v3879, 6
  %v4049 = vrot.slane %v3880, 5
  %v4050 = vsel %vm3953, %v4049, %v4048
  %v4051 = vrot.slane %v3881, 4
  %v4052 = vsel %vm3956, %v4051, %v4050
  %v4053 = vrot.slane %v3882, 3
  %v4054 = vsel %vm3959, %v4053, %v4052
  %v4055 = vrot.slane %v3883, 2
  %v4056 = vsel %vm3962, %v4055, %v4054
  %v4057 = vrot.slane %v3884, 1
  %v4058 = vsel %vm3965, %v4057, %v4056
  %v4059 = vrot.slane %v3886, 7
  %v4060 = vsel %vm3968, %v4059, %v3885
  %v4061 = vrot.slane %v3887, 6
  %v4062 = vrot.slane %v3888, 5
  %v4063 = vsel %vm3953, %v4062, %v4061
  %v4064 = vrot.slane %v3889, 4
  %v4065 = vsel %vm3956, %v4064, %v4063
  %v4066 = vrot.slane %v3890, 3
  %v4067 = vsel %vm3959, %v4066, %v4065
  %v4068 = vrot.slane %v3891, 2
  %v4069 = vsel %vm3962, %v4068, %v4067
  %v4070 = vrot.slane %v3892, 1
  %v4071 = vsel %vm3965, %v4070, %v4069
  %v4072 = vrot.slane %v3894, 7
  %v4073 = vsel %vm3968, %v4072, %v3893
  %v4074 = vrot.slane %v3895, 6
  %v4075 = vrot.slane %v3896, 5
  %v4076 = vsel %vm3953, %v4075, %v4074
  %v4077 = vrot.slane %v3897, 4
  %v4078 = vsel %vm3956, %v4077, %v4076
  %v4079 = vrot.slane %v3898, 3
  %v4080 = vsel %vm3959, %v4079, %v4078
  %v4081 = vrot.slane %v3899, 2
  %v4082 = vsel %vm3962, %v4081, %v4080
  %v4083 = vrot.slane %v3900, 1
  %v4084 = vsel %vm3965, %v4083, %v4082
  %v4085 = vrot.slane %v3902, 7
  %v4086 = vsel %vm3968, %v4085, %v3901
  %v4087 = vrot.slane %v3903, 6
  %v4088 = vrot.slane %v3904, 5
  %v4089 = vsel %vm3953, %v4088, %v4087
  %v4090 = vrot.slane %v3905, 4
  %v4091 = vsel %vm3956, %v4090, %v4089
  %v4092 = vrot.slane %v3906, 3
  %v4093 = vsel %vm3959, %v4092, %v4091
  %v4094 = vrot.slane %v3907, 2
  %v4095 = vsel %vm3962, %v4094, %v4093
  %v4096 = vrot.slane %v3908, 1
  %v4097 = vsel %vm3965, %v4096, %v4095
  %v4098 = vrot.slane %v3910, 7
  %v4099 = vsel %vm3968, %v4098, %v3909
  %v4100 = vrot.slane %v3911, 6
  %v4101 = vrot.slane %v3912, 5
  %v4102 = vsel %vm3953, %v4101, %v4100
  %v4103 = vrot.slane %v3913, 4
  %v4104 = vsel %vm3956, %v4103, %v4102
  %v4105 = vrot.slane %v3914, 3
  %v4106 = vsel %vm3959, %v4105, %v4104
  %v4107 = vrot.slane %v3915, 2
  %v4108 = vsel %vm3962, %v4107, %v4106
  %v4109 = vrot.slane %v3916, 1
  %v4110 = vsel %vm3965, %v4109, %v4108
  %v4111 = vrot.slane %v3918, 7
  %v4112 = vsel %vm3968, %v4111, %v3917
  %v4113 = vrot.slane %v3919, 6
  %v4114 = vrot.slane %v3920, 5
  %v4115 = vsel %vm3953, %v4114, %v4113
  %v4116 = vrot.slane %v3921, 4
  %v4117 = vsel %vm3956, %v4116, %v4115
  %v4118 = vrot.slane %v3922, 3
  %v4119 = vsel %vm3959, %v4118, %v4117
  %v4120 = vrot.slane %v3923, 2
  %v4121 = vsel %vm3962, %v4120, %v4119
  %v4122 = vrot.slane %v3924, 1
  %v4123 = vsel %vm3965, %v4122, %v4121
  %v4124 = vrot.slane %v3926, 7
  %v4125 = vsel %vm3968, %v4124, %v3925
  %v4126 = vrot.slane %v3927, 6
  %v4127 = vrot.slane %v3928, 5
  %v4128 = vsel %vm3953, %v4127, %v4126
  %v4129 = vrot.slane %v3929, 4
  %v4130 = vsel %vm3956, %v4129, %v4128
  %v4131 = vrot.slane %v3930, 3
  %v4132 = vsel %vm3959, %v4131, %v4130
  %v4133 = vrot.slane %v3931, 2
  %v4134 = vsel %vm3962, %v4133, %v4132
  %v4135 = vrot.slane %v3932, 1
  %v4136 = vsel %vm3965, %v4135, %v4134
  %v4137 = vrot.slane %v3934, 7
  %v4138 = vsel %vm3968, %v4137, %v3933
  %v4139 = vrot.slane %v3935, 6
  %v4140 = vrot.slane %v3936, 5
  %v4141 = vsel %vm3953, %v4140, %v4139
  %v4142 = vrot.slane %v3937, 4
  %v4143 = vsel %vm3956, %v4142, %v4141
  %v4144 = vrot.slane %v3938, 3
  %v4145 = vsel %vm3959, %v4144, %v4143
  %v4146 = vrot.slane %v3939, 2
  %v4147 = vsel %vm3962, %v4146, %v4145
  %v4148 = vrot.slane %v3940, 1
  %v4149 = vsel %vm3965, %v4148, %v4147
  %v4150 = vrot.slane %v3942, 7
  %v4151 = vsel %vm3968, %v4150, %v3941
  %v4152 = vrot.slane %v3943, 6
  %v4153 = vrot.slane %v3944, 5
  %v4154 = vsel %vm3953, %v4153, %v4152
  %v4155 = vrot.slane %v3945, 4
  %v4156 = vsel %vm3956, %v4155, %v4154
  %v4157 = vrot.slane %v3946, 3
  %v4158 = vsel %vm3959, %v4157, %v4156
  %v4159 = vrot.slane %v3947, 2
  %v4160 = vsel %vm3962, %v4159, %v4158
  %v4161 = vrot.slane %v3948, 1
  %v4162 = vsel %vm3965, %v4161, %v4160
  %v4163 = vrot.slane %v3950, 7
  %v4164 = vsel %vm3968, %v4163, %v3949
  %v4165 = vpack.c.b16 %v3966, %v3966
  %v4166 = vpack.c.b16 %v3969, %v3969
  %v4167 = vpack.c.b16 %v3980, %v3980
  %v4168 = vpack.c.b16 %v3982, %v3982
  %v4169 = vpack.c.b16 %v3993, %v3993
  %v4170 = vpack.c.b16 %v3995, %v3995
  %v4171 = vpack.c.b16 %v4006, %v4006
  %v4172 = vpack.c.b16 %v4008, %v4008
  %v4173 = vpack.c.b16 %v4019, %v4019
  %v4174 = vpack.c.b16 %v4021, %v4021
  %v4175 = vpack.c.b16 %v4032, %v4032
  %v4176 = vpack.c.b16 %v4034, %v4034
  %v4177 = vpack.c.b16 %v4045, %v4045
  %v4178 = vpack.c.b16 %v4047, %v4047
  %v4179 = vpack.c.b16 %v4058, %v4058
  %v4180 = vpack.c.b16 %v4060, %v4060
  %v4181 = vpack.c.b16 %v4071, %v4071
  %v4182 = vpack.c.b16 %v4073, %v4073
  %v4183 = vpack.c.b16 %v4084, %v4084
  %v4184 = vpack.c.b16 %v4086, %v4086
  %v4185 = vpack.c.b16 %v4097, %v4097
  %v4186 = vpack.c.b16 %v4099, %v4099
  %v4187 = vpack.c.b16 %v4110, %v4110
  %v4188 = vpack.c.b16 %v4112, %v4112
  %v4189 = vpack.c.b16 %v4123, %v4123
  %v4190 = vpack.c.b16 %v4125, %v4125
  %v4191 = vpack.c.b16 %v4136, %v4136
  %v4192 = vpack.c.b16 %v4138, %v4138
  %v4193 = vpack.c.b16 %v4149, %v4149
  %v4194 = vpack.c.b16 %v4151, %v4151
  %v4195 = vpack.c.b16 %v4162, %v4162
  %v4196 = vpack.c.b16 %v4164, %v4164
  %s4229 = scalar_lea.vmem [#allocation2], 16
  %vm4230 = vcmask 60417
  %4231 = vst.msk [vmem:[%s4229] sm:$0xe] %vm4230, %v4165
  %vm4232 = vcmask 57344
  %4233 = vst.msk [vmem:[%s4229 + $0x4] sm:$0x1] %vm4232, %v4166
  %4234 = vst.msk [vmem:[%s4229 + $0x8] sm:$0xe] %vm4230, %v4167
  %4235 = vst.msk [vmem:[%s4229 + $0xc] sm:$0x1] %vm4232, %v4168
  %4236 = vst.msk [vmem:[%s4229 + $0x10] sm:$0xe] %vm4230, %v4169
  %4237 = vst.msk [vmem:[%s4229 + $0x14] sm:$0x1] %vm4232, %v4170
  %4238 = vst.msk [vmem:[%s4229 + $0x18] sm:$0xe] %vm4230, %v4171
  %4239 = vst.msk [vmem:[%s4229 + $0x1c] sm:$0x1] %vm4232, %v4172
  %4240 = vst.msk [vmem:[%s4229 + $0x20] sm:$0xe] %vm4230, %v4173
  %4241 = vst.msk [vmem:[%s4229 + $0x24] sm:$0x1] %vm4232, %v4174
  %4242 = vst.msk [vmem:[%s4229 + $0x28] sm:$0xe] %vm4230, %v4175
  %4243 = vst.msk [vmem:[%s4229 + $0x2c] sm:$0x1] %vm4232, %v4176
  %4244 = vst.msk [vmem:[%s4229 + $0x30] sm:$0xe] %vm4230, %v4177
  %4245 = vst.msk [vmem:[%s4229 + $0x34] sm:$0x1] %vm4232, %v4178
  %4246 = vst.msk [vmem:[%s4229 + $0x38] sm:$0xe] %vm4230, %v4179
  %4247 = vst.msk [vmem:[%s4229 + $0x3c] sm:$0x1] %vm4232, %v4180
  %4248 = vst.msk [vmem:[%s4229 + $0x60] sm:$0xe] %vm4230, %v4181
  %4249 = vst.msk [vmem:[%s4229 + $0x64] sm:$0x1] %vm4232, %v4182
  %4250 = vst.msk [vmem:[%s4229 + $0x68] sm:$0xe] %vm4230, %v4183
  %4251 = vst.msk [vmem:[%s4229 + $0x6c] sm:$0x1] %vm4232, %v4184
  %4252 = vst.msk [vmem:[%s4229 + $0x70] sm:$0xe] %vm4230, %v4185
  %4253 = vst.msk [vmem:[%s4229 + $0x74] sm:$0x1] %vm4232, %v4186
  %4254 = vst.msk [vmem:[%s4229 + $0x78] sm:$0xe] %vm4230, %v4187
  %4255 = vst.msk [vmem:[%s4229 + $0x7c] sm:$0x1] %vm4232, %v4188
  %4256 = vst.msk [vmem:[%s4229 + $0x80] sm:$0xe] %vm4230, %v4189
  %4257 = vst.msk [vmem:[%s4229 + $0x84] sm:$0x1] %vm4232, %v4190
  %4258 = vst.msk [vmem:[%s4229 + $0x88] sm:$0xe] %vm4230, %v4191
  %4259 = vst.msk [vmem:[%s4229 + $0x8c] sm:$0x1] %vm4232, %v4192
  %4260 = vst.msk [vmem:[%s4229 + $0x90] sm:$0xe] %vm4230, %v4193
  %4261 = vst.msk [vmem:[%s4229 + $0x94] sm:$0x1] %vm4232, %v4194
  %4262 = vst.msk [vmem:[%s4229 + $0x98] sm:$0xe] %vm4230, %v4195
  %4263 = vst.msk [vmem:[%s4229 + $0x9c] sm:$0x1] %vm4232, %v4196
  %v4264 = vld [vmem:[#allocation2] sm:$0xf]
  %v4265 = vld [vmem:[#allocation2 + $0x8] sm:$0xf]
  %v4266 = vld [vmem:[#allocation2 + $0x10] sm:$0xf]
  %v4267 = vld [vmem:[#allocation2 + $0x18] sm:$0xf]
  %v4268 = vld [vmem:[#allocation2 + $0x20] sm:$0xf]
  %v4269 = vld [vmem:[#allocation2 + $0x28] sm:$0xf]
  %v4270 = vld [vmem:[#allocation2 + $0x30] sm:$0xf]
  %v4271 = vld [vmem:[#allocation2 + $0x38] sm:$0xf]
  %v4272 = vld [vmem:[#allocation2 + $0x60] sm:$0xf]
  %v4273 = vld [vmem:[#allocation2 + $0x68] sm:$0xf]
  %v4274 = vld [vmem:[#allocation2 + $0x70] sm:$0xf]
  %v4275 = vld [vmem:[#allocation2 + $0x78] sm:$0xf]
  %v4276 = vld [vmem:[#allocation2 + $0x80] sm:$0xf]
  %v4277 = vld [vmem:[#allocation2 + $0x88] sm:$0xf]
  %v4278 = vld [vmem:[#allocation2 + $0x90] sm:$0xf]
  %v4279 = vld [vmem:[#allocation2 + $0x98] sm:$0xf]
  %v4296 = vunpack.c.l.b16 %v4264
  %v4297 = vunpack.c.l.b16 %v4265
  %v4298 = vunpack.c.l.b16 %v4266
  %v4299 = vunpack.c.l.b16 %v4267
  %v4300 = vunpack.c.l.b16 %v4268
  %v4301 = vunpack.c.l.b16 %v4269
  %v4302 = vunpack.c.l.b16 %v4270
  %v4303 = vunpack.c.l.b16 %v4271
  %v4304 = vunpack.c.l.b16 %v4272
  %v4305 = vunpack.c.l.b16 %v4273
  %v4306 = vunpack.c.l.b16 %v4274
  %v4307 = vunpack.c.l.b16 %v4275
  %v4308 = vunpack.c.l.b16 %v4276
  %v4309 = vunpack.c.l.b16 %v4277
  %v4310 = vunpack.c.l.b16 %v4278
  %v4311 = vunpack.c.l.b16 %v4279
  %v4312 = vpack.c.b16 %v4297, %v4296
  %v4313 = vpack.c.b16 %v4299, %v4298
  %v4314 = vpack.c.b16 %v4301, %v4300
  %v4315 = vpack.c.b16 %v4303, %v4302
  %v4316 = vpack.c.b16 %v4305, %v4304
  %v4317 = vpack.c.b16 %v4307, %v4306
  %v4318 = vpack.c.b16 %v4309, %v4308
  %v4319 = vpack.c.b16 %v4311, %v4310
  %vm4328 = vcmask 64512
  %4329 = vst.msk [vmem:[#allocation3] sm:$0xff] %vm4328, %v4312
  %4330 = vst.msk [vmem:[#allocation3 + $0x10] sm:$0xff] %vm4328, %v4313
  %4331 = vst.msk [vmem:[#allocation3 + $0x20] sm:$0xff] %vm4328, %v4314
  %4332 = vst.msk [vmem:[#allocation3 + $0x30] sm:$0xff] %vm4328, %v4315
  %4333 = vst.msk [vmem:[#allocation3 + $0x40] sm:$0xff] %vm4328, %v4316
  %4334 = vst.msk [vmem:[#allocation3 + $0x50] sm:$0xff] %vm4328, %v4317
  %4335 = vst.msk [vmem:[#allocation3 + $0x60] sm:$0xff] %vm4328, %v4318
  %4336 = vst.msk [vmem:[#allocation3 + $0x70] sm:$0xff] %vm4328, %v4319
  %v4337 = vld [vmem:[#allocation2] sm:$0xf]
  %v4338 = vld [vmem:[#allocation2 + $0x4] sm:$0x1]
  %v4339 = vld [vmem:[#allocation2 + $0x8] sm:$0xf]
  %v4340 = vld [vmem:[#allocation2 + $0xc] sm:$0x1]
  %v4341 = vld [vmem:[#allocation2 + $0x10] sm:$0xf]
  %v4342 = vld [vmem:[#allocation2 + $0x14] sm:$0x1]
  %v4343 = vld [vmem:[#allocation2 + $0x18] sm:$0xf]
  %v4344 = vld [vmem:[#allocation2 + $0x1c] sm:$0x1]
  %v4345 = vld [vmem:[#allocation2 + $0x20] sm:$0xf]
  %v4346 = vld [vmem:[#allocation2 + $0x24] sm:$0x1]
  %v4347 = vld [vmem:[#allocation2 + $0x28] sm:$0xf]
  %v4348 = vld [vmem:[#allocation2 + $0x2c] sm:$0x1]
  %v4349 = vld [vmem:[#allocation2 + $0x30] sm:$0xf]
  %v4350 = vld [vmem:[#allocation2 + $0x34] sm:$0x1]
  %v4351 = vld [vmem:[#allocation2 + $0x38] sm:$0xf]
  %v4352 = vld [vmem:[#allocation2 + $0x3c] sm:$0x1]
  %v4353 = vld [vmem:[#allocation2 + $0x60] sm:$0xf]
  %v4354 = vld [vmem:[#allocation2 + $0x64] sm:$0x1]
  %v4355 = vld [vmem:[#allocation2 + $0x68] sm:$0xf]
  %v4356 = vld [vmem:[#allocation2 + $0x6c] sm:$0x1]
  %v4357 = vld [vmem:[#allocation2 + $0x70] sm:$0xf]
  %v4358 = vld [vmem:[#allocation2 + $0x74] sm:$0x1]
  %v4359 = vld [vmem:[#allocation2 + $0x78] sm:$0xf]
  %v4360 = vld [vmem:[#allocation2 + $0x7c] sm:$0x1]
  %v4361 = vld [vmem:[#allocation2 + $0x80] sm:$0xf]
  %v4362 = vld [vmem:[#allocation2 + $0x84] sm:$0x1]
  %v4363 = vld [vmem:[#allocation2 + $0x88] sm:$0xf]
  %v4364 = vld [vmem:[#allocation2 + $0x8c] sm:$0x1]
  %v4365 = vld [vmem:[#allocation2 + $0x90] sm:$0xf]
  %v4366 = vld [vmem:[#allocation2 + $0x94] sm:$0x1]
  %v4367 = vld [vmem:[#allocation2 + $0x98] sm:$0xf]
  %v4368 = vld [vmem:[#allocation2 + $0x9c] sm:$0x1]
  %vm4369 = vsmask.f32 3328
  %vm4370 = vsmask.f32 7440
  %vm4371 = vmor %vm4369, %vm4370
  %v4373 = vshrl.u32 %v4337, 16
  %v4375 = vrot.slane %v4373, 4
  %v4376 = vshll.u32 %v4337, 16
  %v4378 = vrot.slane %v4376, 5
  %v4379 = vor.u32 %v4375, %v4378
  %v4380 = vrot.slane %v4379, 4
  %v4382 = vshll.u32 %v4338, 16
  %v4384 = vrot.slane %v4382, 5
  %v4385 = vsel %vm4371, %v4380, %v4384
  %v4387 = vshrl.u32 %v4339, 16
  %v4389 = vrot.slane %v4387, 4
  %v4390 = vshll.u32 %v4339, 16
  %v4392 = vrot.slane %v4390, 5
  %v4393 = vor.u32 %v4389, %v4392
  %v4394 = vrot.slane %v4393, 4
  %v4396 = vshll.u32 %v4340, 16
  %v4398 = vrot.slane %v4396, 5
  %v4399 = vsel %vm4371, %v4394, %v4398
  %v4401 = vshrl.u32 %v4341, 16
  %v4403 = vrot.slane %v4401, 4
  %v4404 = vshll.u32 %v4341, 16
  %v4406 = vrot.slane %v4404, 5
  %v4407 = vor.u32 %v4403, %v4406
  %v4408 = vrot.slane %v4407, 4
  %v4410 = vshll.u32 %v4342, 16
  %v4412 = vrot.slane %v4410, 5
  %v4413 = vsel %vm4371, %v4408, %v4412
  %v4415 = vshrl.u32 %v4343, 16
  %v4417 = vrot.slane %v4415, 4
  %v4418 = vshll.u32 %v4343, 16
  %v4420 = vrot.slane %v4418, 5
  %v4421 = vor.u32 %v4417, %v4420
  %v4422 = vrot.slane %v4421, 4
  %v4424 = vshll.u32 %v4344, 16
  %v4426 = vrot.slane %v4424, 5
  %v4427 = vsel %vm4371, %v4422, %v4426
  %v4429 = vshrl.u32 %v4345, 16
  %v4431 = vrot.slane %v4429, 4
  %v4432 = vshll.u32 %v4345, 16
  %v4434 = vrot.slane %v4432, 5
  %v4435 = vor.u32 %v4431, %v4434
  %v4436 = vrot.slane %v4435, 4
  %v4438 = vshll.u32 %v4346, 16
  %v4440 = vrot.slane %v4438, 5
  %v4441 = vsel %vm4371, %v4436, %v4440
  %v4443 = vshrl.u32 %v4347, 16
  %v4445 = vrot.slane %v4443, 4
  %v4446 = vshll.u32 %v4347, 16
  %v4448 = vrot.slane %v4446, 5
  %v4449 = vor.u32 %v4445, %v4448
  %v4450 = vrot.slane %v4449, 4
  %v4452 = vshll.u32 %v4348, 16
  %v4454 = vrot.slane %v4452, 5
  %v4455 = vsel %vm4371, %v4450, %v4454
  %v4457 = vshrl.u32 %v4349, 16
  %v4459 = vrot.slane %v4457, 4
  %v4460 = vshll.u32 %v4349, 16
  %v4462 = vrot.slane %v4460, 5
  %v4463 = vor.u32 %v4459, %v4462
  %v4464 = vrot.slane %v4463, 4
  %v4466 = vshll.u32 %v4350, 16
  %v4468 = vrot.slane %v4466, 5
  %v4469 = vsel %vm4371, %v4464, %v4468
  %v4471 = vshrl.u32 %v4351, 16
  %v4473 = vrot.slane %v4471, 4
  %v4474 = vshll.u32 %v4351, 16
  %v4476 = vrot.slane %v4474, 5
  %v4477 = vor.u32 %v4473, %v4476
  %v4478 = vrot.slane %v4477, 4
  %v4480 = vshll.u32 %v4352, 16
  %v4482 = vrot.slane %v4480, 5
  %v4483 = vsel %vm4371, %v4478, %v4482
  %v4485 = vshrl.u32 %v4353, 16
  %v4487 = vrot.slane %v4485, 4
  %v4488 = vshll.u32 %v4353, 16
  %v4490 = vrot.slane %v4488, 5
  %v4491 = vor.u32 %v4487, %v4490
  %v4492 = vrot.slane %v4491, 4
  %v4494 = vshll.u32 %v4354, 16
  %v4496 = vrot.slane %v4494, 5
  %v4497 = vsel %vm4371, %v4492, %v4496
  %v4499 = vshrl.u32 %v4355, 16
  %v4501 = vrot.slane %v4499, 4
  %v4502 = vshll.u32 %v4355, 16
  %v4504 = vrot.slane %v4502, 5
  %v4505 = vor.u32 %v4501, %v4504
  %v4506 = vrot.slane %v4505, 4
  %v4508 = vshll.u32 %v4356, 16
  %v4510 = vrot.slane %v4508, 5
  %v4511 = vsel %vm4371, %v4506, %v4510
  %v4513 = vshrl.u32 %v4357, 16
  %v4515 = vrot.slane %v4513, 4
  %v4516 = vshll.u32 %v4357, 16
  %v4518 = vrot.slane %v4516, 5
  %v4519 = vor.u32 %v4515, %v4518
  %v4520 = vrot.slane %v4519, 4
  %v4522 = vshll.u32 %v4358, 16
  %v4524 = vrot.slane %v4522, 5
  %v4525 = vsel %vm4371, %v4520, %v4524
  %v4527 = vshrl.u32 %v4359, 16
  %v4529 = vrot.slane %v4527, 4
  %v4530 = vshll.u32 %v4359, 16
  %v4532 = vrot.slane %v4530, 5
  %v4533 = vor.u32 %v4529, %v4532
  %v4534 = vrot.slane %v4533, 4
  %v4536 = vshll.u32 %v4360, 16
  %v4538 = vrot.slane %v4536, 5
  %v4539 = vsel %vm4371, %v4534, %v4538
  %v4541 = vshrl.u32 %v4361, 16
  %v4543 = vrot.slane %v4541, 4
  %v4544 = vshll.u32 %v4361, 16
  %v4546 = vrot.slane %v4544, 5
  %v4547 = vor.u32 %v4543, %v4546
  %v4548 = vrot.slane %v4547, 4
  %v4550 = vshll.u32 %v4362, 16
  %v4552 = vrot.slane %v4550, 5
  %v4553 = vsel %vm4371, %v4548, %v4552
  %v4555 = vshrl.u32 %v4363, 16
  %v4557 = vrot.slane %v4555, 4
  %v4558 = vshll.u32 %v4363, 16
  %v4560 = vrot.slane %v4558, 5
  %v4561 = vor.u32 %v4557, %v4560
  %v4562 = vrot.slane %v4561, 4
  %v4564 = vshll.u32 %v4364, 16
  %v4566 = vrot.slane %v4564, 5
  %v4567 = vsel %vm4371, %v4562, %v4566
  %v4569 = vshrl.u32 %v4365, 16
  %v4571 = vrot.slane %v4569, 4
  %v4572 = vshll.u32 %v4365, 16
  %v4574 = vrot.slane %v4572, 5
  %v4575 = vor.u32 %v4571, %v4574
  %v4576 = vrot.slane %v4575, 4
  %v4578 = vshll.u32 %v4366, 16
  %v4580 = vrot.slane %v4578, 5
  %v4581 = vsel %vm4371, %v4576, %v4580
  %v4583 = vshrl.u32 %v4367, 16
  %v4585 = vrot.slane %v4583, 4
  %v4586 = vshll.u32 %v4367, 16
  %v4588 = vrot.slane %v4586, 5
  %v4589 = vor.u32 %v4585, %v4588
  %v4590 = vrot.slane %v4589, 4
  %v4592 = vshll.u32 %v4368, 16
  %v4594 = vrot.slane %v4592, 5
  %v4595 = vsel %vm4371, %v4590, %v4594
  %v4596 = vunpack.c.l.b16 %v4385
  %v4597 = vunpack.c.l.b16 %v4399
  %v4598 = vunpack.c.l.b16 %v4413
  %v4599 = vunpack.c.l.b16 %v4427
  %v4600 = vunpack.c.l.b16 %v4441
  %v4601 = vunpack.c.l.b16 %v4455
  %v4602 = vunpack.c.l.b16 %v4469
  %v4603 = vunpack.c.l.b16 %v4483
  %v4604 = vunpack.c.l.b16 %v4497
  %v4605 = vunpack.c.l.b16 %v4511
  %v4606 = vunpack.c.l.b16 %v4525
  %v4607 = vunpack.c.l.b16 %v4539
  %v4608 = vunpack.c.l.b16 %v4553
  %v4609 = vunpack.c.l.b16 %v4567
  %v4610 = vunpack.c.l.b16 %v4581
  %v4611 = vunpack.c.l.b16 %v4595
  %v4612 = vpack.c.b16 %v4597, %v4596
  %v4613 = vpack.c.b16 %v4599, %v4598
  %v4614 = vpack.c.b16 %v4601, %v4600
  %v4615 = vpack.c.b16 %v4603, %v4602
  %v4616 = vpack.c.b16 %v4605, %v4604
  %v4617 = vpack.c.b16 %v4607, %v4606
  %v4618 = vpack.c.b16 %v4609, %v4608
  %v4619 = vpack.c.b16 %v4611, %v4610
  %4620 = vrot.lane.b32.xlu0 %v4612, 8
  %v4621 = vpop.permute.xlu0 %4620
  %4622 = vrot.lane.b32.xlu0 %v4613, 8
  %v4623 = vpop.permute.xlu0 %4622
  %4624 = vrot.lane.b32.xlu0 %v4614, 8
  %v4625 = vpop.permute.xlu0 %4624
  %4626 = vrot.lane.b32.xlu0 %v4615, 8
  %v4627 = vpop.permute.xlu0 %4626
  %4628 = vrot.lane.b32.xlu0 %v4616, 8
  %v4629 = vpop.permute.xlu0 %4628
  %4630 = vrot.lane.b32.xlu0 %v4617, 8
  %v4631 = vpop.permute.xlu0 %4630
  %4632 = vrot.lane.b32.xlu0 %v4618, 8
  %v4633 = vpop.permute.xlu0 %4632
  %4634 = vrot.lane.b32.xlu0 %v4619, 8
  %v4635 = vpop.permute.xlu0 %4634
  %vm4644 = vcmask 130112
  %4645 = vst.msk [vmem:[#allocation3] sm:$0xff] %vm4644, %v4621
  %4646 = vst.msk [vmem:[#allocation3 + $0x10] sm:$0xff] %vm4644, %v4623
  %4647 = vst.msk [vmem:[#allocation3 + $0x20] sm:$0xff] %vm4644, %v4625
  %4648 = vst.msk [vmem:[#allocation3 + $0x30] sm:$0xff] %vm4644, %v4627
  %4649 = vst.msk [vmem:[#allocation3 + $0x40] sm:$0xff] %vm4644, %v4629
  %4650 = vst.msk [vmem:[#allocation3 + $0x50] sm:$0xff] %vm4644, %v4631
  %4651 = vst.msk [vmem:[#allocation3 + $0x60] sm:$0xff] %vm4644, %v4633
  %4652 = vst.msk [vmem:[#allocation3 + $0x70] sm:$0xff] %vm4644, %v4635
  %v4653 = vld [vmem:[#allocation2] sm:$0xe]
  %v4654 = vld [vmem:[#allocation2 + $0x4] sm:$0x1]
  %v4655 = vld [vmem:[#allocation2 + $0x8] sm:$0xe]
  %v4656 = vld [vmem:[#allocation2 + $0xc] sm:$0x1]
  %v4657 = vld [vmem:[#allocation2 + $0x10] sm:$0xe]
  %v4658 = vld [vmem:[#allocation2 + $0x14] sm:$0x1]
  %v4659 = vld [vmem:[#allocation2 + $0x18] sm:$0xe]
  %v4660 = vld [vmem:[#allocation2 + $0x1c] sm:$0x1]
  %v4661 = vld [vmem:[#allocation2 + $0x20] sm:$0xe]
  %v4662 = vld [vmem:[#allocation2 + $0x24] sm:$0x1]
  %v4663 = vld [vmem:[#allocation2 + $0x28] sm:$0xe]
  %v4664 = vld [vmem:[#allocation2 + $0x2c] sm:$0x1]
  %v4665 = vld [vmem:[#allocation2 + $0x30] sm:$0xe]
  %v4666 = vld [vmem:[#allocation2 + $0x34] sm:$0x1]
  %v4667 = vld [vmem:[#allocation2 + $0x38] sm:$0xe]
  %v4668 = vld [vmem:[#allocation2 + $0x3c] sm:$0x1]
  %v4669 = vld [vmem:[#allocation2 + $0x60] sm:$0xe]
  %v4670 = vld [vmem:[#allocation2 + $0x64] sm:$0x1]
  %v4671 = vld [vmem:[#allocation2 + $0x68] sm:$0xe]
  %v4672 = vld [vmem:[#allocation2 + $0x6c] sm:$0x1]
  %v4673 = vld [vmem:[#allocation2 + $0x70] sm:$0xe]
  %v4674 = vld [vmem:[#allocation2 + $0x74] sm:$0x1]
  %v4675 = vld [vmem:[#allocation2 + $0x78] sm:$0xe]
  %v4676 = vld [vmem:[#allocation2 + $0x7c] sm:$0x1]
  %v4677 = vld [vmem:[#allocation2 + $0x80] sm:$0xe]
  %v4678 = vld [vmem:[#allocation2 + $0x84] sm:$0x1]
  %v4679 = vld [vmem:[#allocation2 + $0x88] sm:$0xe]
  %v4680 = vld [vmem:[#allocation2 + $0x8c] sm:$0x1]
  %v4681 = vld [vmem:[#allocation2 + $0x90] sm:$0xe]
  %v4682 = vld [vmem:[#allocation2 + $0x94] sm:$0x1]
  %v4683 = vld [vmem:[#allocation2 + $0x98] sm:$0xe]
  %v4684 = vld [vmem:[#allocation2 + $0x9c] sm:$0x1]
  %vm4717 = vcmask 1042432
  %vm4718 = vcmask 1046532
  %vm4719 = vmor %vm4717, %vm4718
  %v4720 = vrot.slane %v4653, 5
  %v4721 = vrot.slane %v4720, 4
  %v4722 = vrot.slane %v4654, 5
  %v4723 = vsel %vm4719, %v4721, %v4722
  %v4724 = vrot.slane %v4655, 5
  %v4725 = vrot.slane %v4724, 4
  %v4726 = vrot.slane %v4656, 5
  %v4727 = vsel %vm4719, %v4725, %v4726
  %v4728 = vrot.slane %v4657, 5
  %v4729 = vrot.slane %v4728, 4
  %v4730 = vrot.slane %v4658, 5
  %v4731 = vsel %vm4719, %v4729, %v4730
  %v4732 = vrot.slane %v4659, 5
  %v4733 = vrot.slane %v4732, 4
  %v4734 = vrot.slane %v4660, 5
  %v4735 = vsel %vm4719, %v4733, %v4734
  %v4736 = vrot.slane %v4661, 5
  %v4737 = vrot.slane %v4736, 4
  %v4738 = vrot.slane %v4662, 5
  %v4739 = vsel %vm4719, %v4737, %v4738
  %v4740 = vrot.slane %v4663, 5
  %v4741 = vrot.slane %v4740, 4
  %v4742 = vrot.slane %v4664, 5
  %v4743 = vsel %vm4719, %v4741, %v4742
  %v4744 = vrot.slane %v4665, 5
  %v4745 = vrot.slane %v4744, 4
  %v4746 = vrot.slane %v4666, 5
  %v4747 = vsel %vm4719, %v4745, %v4746
  %v4748 = vrot.slane %v4667, 5
  %v4749 = vrot.slane %v4748, 4
  %v4750 = vrot.slane %v4668, 5
  %v4751 = vsel %vm4719, %v4749, %v4750
  %v4752 = vrot.slane %v4669, 5
  %v4753 = vrot.slane %v4752, 4
  %v4754 = vrot.slane %v4670, 5
  %v4755 = vsel %vm4719, %v4753, %v4754
  %v4756 = vrot.slane %v4671, 5
  %v4757 = vrot.slane %v4756, 4
  %v4758 = vrot.slane %v4672, 5
  %v4759 = vsel %vm4719, %v4757, %v4758
  %v4760 = vrot.slane %v4673, 5
  %v4761 = vrot.slane %v4760, 4
  %v4762 = vrot.slane %v4674, 5
  %v4763 = vsel %vm4719, %v4761, %v4762
  %v4764 = vrot.slane %v4675, 5
  %v4765 = vrot.slane %v4764, 4
  %v4766 = vrot.slane %v4676, 5
  %v4767 = vsel %vm4719, %v4765, %v4766
  %v4768 = vrot.slane %v4677, 5
  %v4769 = vrot.slane %v4768, 4
  %v4770 = vrot.slane %v4678, 5
  %v4771 = vsel %vm4719, %v4769, %v4770
  %v4772 = vrot.slane %v4679, 5
  %v4773 = vrot.slane %v4772, 4
  %v4774 = vrot.slane %v4680, 5
  %v4775 = vsel %vm4719, %v4773, %v4774
  %v4776 = vrot.slane %v4681, 5
  %v4777 = vrot.slane %v4776, 4
  %v4778 = vrot.slane %v4682, 5
  %v4779 = vsel %vm4719, %v4777, %v4778
  %v4780 = vrot.slane %v4683, 5
  %v4781 = vrot.slane %v4780, 4
  %v4782 = vrot.slane %v4684, 5
  %v4783 = vsel %vm4719, %v4781, %v4782
  %v4784 = vunpack.c.l.b16 %v4723
  %v4785 = vunpack.c.l.b16 %v4727
  %v4786 = vunpack.c.l.b16 %v4731
  %v4787 = vunpack.c.l.b16 %v4735
  %v4788 = vunpack.c.l.b16 %v4739
  %v4789 = vunpack.c.l.b16 %v4743
  %v4790 = vunpack.c.l.b16 %v4747
  %v4791 = vunpack.c.l.b16 %v4751
  %v4792 = vunpack.c.l.b16 %v4755
  %v4793 = vunpack.c.l.b16 %v4759
  %v4794 = vunpack.c.l.b16 %v4763
  %v4795 = vunpack.c.l.b16 %v4767
  %v4796 = vunpack.c.l.b16 %v4771
  %v4797 = vunpack.c.l.b16 %v4775
  %v4798 = vunpack.c.l.b16 %v4779
  %v4799 = vunpack.c.l.b16 %v4783
  %v4800 = vpack.c.b16 %v4785, %v4784
  %v4801 = vpack.c.b16 %v4787, %v4786
  %v4802 = vpack.c.b16 %v4789, %v4788
  %v4803 = vpack.c.b16 %v4791, %v4790
  %v4804 = vpack.c.b16 %v4793, %v4792
  %v4805 = vpack.c.b16 %v4795, %v4794
  %v4806 = vpack.c.b16 %v4797, %v4796
  %v4807 = vpack.c.b16 %v4799, %v4798
  %4808 = vrot.lane.b32.xlu0 %v4800, 16
  %v4809 = vpop.permute.xlu0 %4808
  %4810 = vrot.lane.b32.xlu0 %v4801, 16
  %v4811 = vpop.permute.xlu0 %4810
  %4812 = vrot.lane.b32.xlu0 %v4802, 16
  %v4813 = vpop.permute.xlu0 %4812
  %4814 = vrot.lane.b32.xlu0 %v4803, 16
  %v4815 = vpop.permute.xlu0 %4814
  %4816 = vrot.lane.b32.xlu0 %v4804, 16
  %v4817 = vpop.permute.xlu0 %4816
  %4818 = vrot.lane.b32.xlu0 %v4805, 16
  %v4819 = vpop.permute.xlu0 %4818
  %4820 = vrot.lane.b32.xlu0 %v4806, 16
  %v4821 = vpop.permute.xlu0 %4820
  %4822 = vrot.lane.b32.xlu0 %v4807, 16
  %v4823 = vpop.permute.xlu0 %4822
  %vm4832 = vcmask 195712
  %4833 = vst.msk [vmem:[#allocation3] sm:$0xff] %vm4832, %v4809
  %4834 = vst.msk [vmem:[#allocation3 + $0x10] sm:$0xff] %vm4832, %v4811
  %4835 = vst.msk [vmem:[#allocation3 + $0x20] sm:$0xff] %vm4832, %v4813
  %4836 = vst.msk [vmem:[#allocation3 + $0x30] sm:$0xff] %vm4832, %v4815
  %4837 = vst.msk [vmem:[#allocation3 + $0x40] sm:$0xff] %vm4832, %v4817
  %4838 = vst.msk [vmem:[#allocation3 + $0x50] sm:$0xff] %vm4832, %v4819
  %4839 = vst.msk [vmem:[#allocation3 + $0x60] sm:$0xff] %vm4832, %v4821
  %4840 = vst.msk [vmem:[#allocation3 + $0x70] sm:$0xff] %vm4832, %v4823
  %v4841 = vld [vmem:[#allocation2] sm:$0xe]
  %v4842 = vld [vmem:[#allocation2 + $0x4] sm:$0x3]
  %v4843 = vld [vmem:[#allocation2 + $0x8] sm:$0xe]
  %v4844 = vld [vmem:[#allocation2 + $0xc] sm:$0x3]
  %v4845 = vld [vmem:[#allocation2 + $0x10] sm:$0xe]
  %v4846 = vld [vmem:[#allocation2 + $0x14] sm:$0x3]
  %v4847 = vld [vmem:[#allocation2 + $0x18] sm:$0xe]
  %v4848 = vld [vmem:[#allocation2 + $0x1c] sm:$0x3]
  %v4849 = vld [vmem:[#allocation2 + $0x20] sm:$0xe]
  %v4850 = vld [vmem:[#allocation2 + $0x24] sm:$0x3]
  %v4851 = vld [vmem:[#allocation2 + $0x28] sm:$0xe]
  %v4852 = vld [vmem:[#allocation2 + $0x2c] sm:$0x3]
  %v4853 = vld [vmem:[#allocation2 + $0x30] sm:$0xe]
  %v4854 = vld [vmem:[#allocation2 + $0x34] sm:$0x3]
  %v4855 = vld [vmem:[#allocation2 + $0x38] sm:$0xe]
  %v4856 = vld [vmem:[#allocation2 + $0x3c] sm:$0x3]
  %v4857 = vld [vmem:[#allocation2 + $0x60] sm:$0xe]
  %v4858 = vld [vmem:[#allocation2 + $0x64] sm:$0x3]
  %v4859 = vld [vmem:[#allocation2 + $0x68] sm:$0xe]
  %v4860 = vld [vmem:[#allocation2 + $0x6c] sm:$0x3]
  %v4861 = vld [vmem:[#allocation2 + $0x70] sm:$0xe]
  %v4862 = vld [vmem:[#allocation2 + $0x74] sm:$0x3]
  %v4863 = vld [vmem:[#allocation2 + $0x78] sm:$0xe]
  %v4864 = vld [vmem:[#allocation2 + $0x7c] sm:$0x3]
  %v4865 = vld [vmem:[#allocation2 + $0x80] sm:$0xe]
  %v4866 = vld [vmem:[#allocation2 + $0x84] sm:$0x3]
  %v4867 = vld [vmem:[#allocation2 + $0x88] sm:$0xe]
  %v4868 = vld [vmem:[#allocation2 + $0x8c] sm:$0x3]
  %v4869 = vld [vmem:[#allocation2 + $0x90] sm:$0xe]
  %v4870 = vld [vmem:[#allocation2 + $0x94] sm:$0x3]
  %v4871 = vld [vmem:[#allocation2 + $0x98] sm:$0xe]
  %v4872 = vld [vmem:[#allocation2 + $0x9c] sm:$0x3]
  %vm4873 = vsmask.f32 2304
  %vm4874 = vsmask.f32 6416
  %vm4875 = vmor %vm4873, %vm4874
  %v4877 = vshrl.u32 %v4841, 16
  %v4879 = vrot.slane %v4877, 5
  %v4880 = vshll.u32 %v4841, 16
  %v4882 = vrot.slane %v4880, 6
  %v4883 = vor.u32 %v4879, %v4882
  %v4884 = vrot.slane %v4883, 4
  %v4886 = vshrl.u32 %v4842, 16
  %v4888 = vrot.slane %v4886, 5
  %v4889 = vshll.u32 %v4842, 16
  %v4891 = vrot.slane %v4889, 6
  %v4892 = vor.u32 %v4888, %v4891
  %v4893 = vsel %vm4875, %v4884, %v4892
  %v4895 = vshrl.u32 %v4843, 16
  %v4897 = vrot.slane %v4895, 5
  %v4898 = vshll.u32 %v4843, 16
  %v4900 = vrot.slane %v4898, 6
  %v4901 = vor.u32 %v4897, %v4900
  %v4902 = vrot.slane %v4901, 4
  %v4904 = vshrl.u32 %v4844, 16
  %v4906 = vrot.slane %v4904, 5
  %v4907 = vshll.u32 %v4844, 16
  %v4909 = vrot.slane %v4907, 6
  %v4910 = vor.u32 %v4906, %v4909
  %v4911 = vsel %vm4875, %v4902, %v4910
  %v4913 = vshrl.u32 %v4845, 16
  %v4915 = vrot.slane %v4913, 5
  %v4916 = vshll.u32 %v4845, 16
  %v4918 = vrot.slane %v4916, 6
  %v4919 = vor.u32 %v4915, %v4918
  %v4920 = vrot.slane %v4919, 4
  %v4922 = vshrl.u32 %v4846, 16
  %v4924 = vrot.slane %v4922, 5
  %v4925 = vshll.u32 %v4846, 16
  %v4927 = vrot.slane %v4925, 6
  %v4928 = vor.u32 %v4924, %v4927
  %v4929 = vsel %vm4875, %v4920, %v4928
  %v4931 = vshrl.u32 %v4847, 16
  %v4933 = vrot.slane %v4931, 5
  %v4934 = vshll.u32 %v4847, 16
  %v4936 = vrot.slane %v4934, 6
  %v4937 = vor.u32 %v4933, %v4936
  %v4938 = vrot.slane %v4937, 4
  %v4940 = vshrl.u32 %v4848, 16
  %v4942 = vrot.slane %v4940, 5
  %v4943 = vshll.u32 %v4848, 16
  %v4945 = vrot.slane %v4943, 6
  %v4946 = vor.u32 %v4942, %v4945
  %v4947 = vsel %vm4875, %v4938, %v4946
  %v4949 = vshrl.u32 %v4849, 16
  %v4951 = vrot.slane %v4949, 5
  %v4952 = vshll.u32 %v4849, 16
  %v4954 = vrot.slane %v4952, 6
  %v4955 = vor.u32 %v4951, %v4954
  %v4956 = vrot.slane %v4955, 4
  %v4958 = vshrl.u32 %v4850, 16
  %v4960 = vrot.slane %v4958, 5
  %v4961 = vshll.u32 %v4850, 16
  %v4963 = vrot.slane %v4961, 6
  %v4964 = vor.u32 %v4960, %v4963
  %v4965 = vsel %vm4875, %v4956, %v4964
  %v4967 = vshrl.u32 %v4851, 16
  %v4969 = vrot.slane %v4967, 5
  %v4970 = vshll.u32 %v4851, 16
  %v4972 = vrot.slane %v4970, 6
  %v4973 = vor.u32 %v4969, %v4972
  %v4974 = vrot.slane %v4973, 4
  %v4976 = vshrl.u32 %v4852, 16
  %v4978 = vrot.slane %v4976, 5
  %v4979 = vshll.u32 %v4852, 16
  %v4981 = vrot.slane %v4979, 6
  %v4982 = vor.u32 %v4978, %v4981
  %v4983 = vsel %vm4875, %v4974, %v4982
  %v4985 = vshrl.u32 %v4853, 16
  %v4987 = vrot.slane %v4985, 5
  %v4988 = vshll.u32 %v4853, 16
  %v4990 = vrot.slane %v4988, 6
  %v4991 = vor.u32 %v4987, %v4990
  %v4992 = vrot.slane %v4991, 4
  %v4994 = vshrl.u32 %v4854, 16
  %v4996 = vrot.slane %v4994, 5
  %v4997 = vshll.u32 %v4854, 16
  %v4999 = vrot.slane %v4997, 6
  %v5000 = vor.u32 %v4996, %v4999
  %v5001 = vsel %vm4875, %v4992, %v5000
  %v5003 = vshrl.u32 %v4855, 16
  %v5005 = vrot.slane %v5003, 5
  %v5006 = vshll.u32 %v4855, 16
  %v5008 = vrot.slane %v5006, 6
  %v5009 = vor.u32 %v5005, %v5008
  %v5010 = vrot.slane %v5009, 4
  %v5012 = vshrl.u32 %v4856, 16
  %v5014 = vrot.slane %v5012, 5
  %v5015 = vshll.u32 %v4856, 16
  %v5017 = vrot.slane %v5015, 6
  %v5018 = vor.u32 %v5014, %v5017
  %v5019 = vsel %vm4875, %v5010, %v5018
  %v5021 = vshrl.u32 %v4857, 16
  %v5023 = vrot.slane %v5021, 5
  %v5024 = vshll.u32 %v4857, 16
  %v5026 = vrot.slane %v5024, 6
  %v5027 = vor.u32 %v5023, %v5026
  %v5028 = vrot.slane %v5027, 4
  %v5030 = vshrl.u32 %v4858, 16
  %v5032 = vrot.slane %v5030, 5
  %v5033 = vshll.u32 %v4858, 16
  %v5035 = vrot.slane %v5033, 6
  %v5036 = vor.u32 %v5032, %v5035
  %v5037 = vsel %vm4875, %v5028, %v5036
  %v5039 = vshrl.u32 %v4859, 16
  %v5041 = vrot.slane %v5039, 5
  %v5042 = vshll.u32 %v4859, 16
  %v5044 = vrot.slane %v5042, 6
  %v5045 = vor.u32 %v5041, %v5044
  %v5046 = vrot.slane %v5045, 4
  %v5048 = vshrl.u32 %v4860, 16
  %v5050 = vrot.slane %v5048, 5
  %v5051 = vshll.u32 %v4860, 16
  %v5053 = vrot.slane %v5051, 6
  %v5054 = vor.u32 %v5050, %v5053
  %v5055 = vsel %vm4875, %v5046, %v5054
  %v5057 = vshrl.u32 %v4861, 16
  %v5059 = vrot.slane %v5057, 5
  %v5060 = vshll.u32 %v4861, 16
  %v5062 = vrot.slane %v5060, 6
  %v5063 = vor.u32 %v5059, %v5062
  %v5064 = vrot.slane %v5063, 4
  %v5066 = vshrl.u32 %v4862, 16
  %v5068 = vrot.slane %v5066, 5
  %v5069 = vshll.u32 %v4862, 16
  %v5071 = vrot.slane %v5069, 6
  %v5072 = vor.u32 %v5068, %v5071
  %v5073 = vsel %vm4875, %v5064, %v5072
  %v5075 = vshrl.u32 %v4863, 16
  %v5077 = vrot.slane %v5075, 5
  %v5078 = vshll.u32 %v4863, 16
  %v5080 = vrot.slane %v5078, 6
  %v5081 = vor.u32 %v5077, %v5080
  %v5082 = vrot.slane %v5081, 4
  %v5084 = vshrl.u32 %v4864, 16
  %v5086 = vrot.slane %v5084, 5
  %v5087 = vshll.u32 %v4864, 16
  %v5089 = vrot.slane %v5087, 6
  %v5090 = vor.u32 %v5086, %v5089
  %v5091 = vsel %vm4875, %v5082, %v5090
  %v5093 = vshrl.u32 %v4865, 16
  %v5095 = vrot.slane %v5093, 5
  %v5096 = vshll.u32 %v4865, 16
  %v5098 = vrot.slane %v5096, 6
  %v5099 = vor.u32 %v5095, %v5098
  %v5100 = vrot.slane %v5099, 4
  %v5102 = vshrl.u32 %v4866, 16
  %v5104 = vrot.slane %v5102, 5
  %v5105 = vshll.u32 %v4866, 16
  %v5107 = vrot.slane %v5105, 6
  %v5108 = vor.u32 %v5104, %v5107
  %v5109 = vsel %vm4875, %v5100, %v5108
  %v5111 = vshrl.u32 %v4867, 16
  %v5113 = vrot.slane %v5111, 5
  %v5114 = vshll.u32 %v4867, 16
  %v5116 = vrot.slane %v5114, 6
  %v5117 = vor.u32 %v5113, %v5116
  %v5118 = vrot.slane %v5117, 4
  %v5120 = vshrl.u32 %v4868, 16
  %v5122 = vrot.slane %v5120, 5
  %v5123 = vshll.u32 %v4868, 16
  %v5125 = vrot.slane %v5123, 6
  %v5126 = vor.u32 %v5122, %v5125
  %v5127 = vsel %vm4875, %v5118, %v5126
  %v5129 = vshrl.u32 %v4869, 16
  %v5131 = vrot.slane %v5129, 5
  %v5132 = vshll.u32 %v4869, 16
  %v5134 = vrot.slane %v5132, 6
  %v5135 = vor.u32 %v5131, %v5134
  %v5136 = vrot.slane %v5135, 4
  %v5138 = vshrl.u32 %v4870, 16
  %v5140 = vrot.slane %v5138, 5
  %v5141 = vshll.u32 %v4870, 16
  %v5143 = vrot.slane %v5141, 6
  %v5144 = vor.u32 %v5140, %v5143
  %v5145 = vsel %vm4875, %v5136, %v5144
  %v5147 = vshrl.u32 %v4871, 16
  %v5149 = vrot.slane %v5147, 5
  %v5150 = vshll.u32 %v4871, 16
  %v5152 = vrot.slane %v5150, 6
  %v5153 = vor.u32 %v5149, %v5152
  %v5154 = vrot.slane %v5153, 4
  %v5156 = vshrl.u32 %v4872, 16
  %v5158 = vrot.slane %v5156, 5
  %v5159 = vshll.u32 %v4872, 16
  %v5161 = vrot.slane %v5159, 6
  %v5162 = vor.u32 %v5158, %v5161
  %v5163 = vsel %vm4875, %v5154, %v5162
  %v5164 = vunpack.c.l.b16 %v4893
  %v5165 = vunpack.c.l.b16 %v4911
  %v5166 = vunpack.c.l.b16 %v4929
  %v5167 = vunpack.c.l.b16 %v4947
  %v5168 = vunpack.c.l.b16 %v4965
  %v5169 = vunpack.c.l.b16 %v4983
  %v5170 = vunpack.c.l.b16 %v5001
  %v5171 = vunpack.c.l.b16 %v5019
  %v5172 = vunpack.c.l.b16 %v5037
  %v5173 = vunpack.c.l.b16 %v5055
  %v5174 = vunpack.c.l.b16 %v5073
  %v5175 = vunpack.c.l.b16 %v5091
  %v5176 = vunpack.c.l.b16 %v5109
  %v5177 = vunpack.c.l.b16 %v5127
  %v5178 = vunpack.c.l.b16 %v5145
  %v5179 = vunpack.c.l.b16 %v5163
  %v5180 = vpack.c.b16 %v5165, %v5164
  %v5181 = vpack.c.b16 %v5167, %v5166
  %v5182 = vpack.c.b16 %v5169, %v5168
  %v5183 = vpack.c.b16 %v5171, %v5170
  %v5184 = vpack.c.b16 %v5173, %v5172
  %v5185 = vpack.c.b16 %v5175, %v5174
  %v5186 = vpack.c.b16 %v5177, %v5176
  %v5187 = vpack.c.b16 %v5179, %v5178
  %5188 = vrot.lane.b32.xlu0 %v5180, 24
  %v5189 = vpop.permute.xlu0 %5188
  %5190 = vrot.lane.b32.xlu0 %v5181, 24
  %v5191 = vpop.permute.xlu0 %5190
  %5192 = vrot.lane.b32.xlu0 %v5182, 24
  %v5193 = vpop.permute.xlu0 %5192
  %5194 = vrot.lane.b32.xlu0 %v5183, 24
  %v5195 = vpop.permute.xlu0 %5194
  %5196 = vrot.lane.b32.xlu0 %v5184, 24
  %v5197 = vpop.permute.xlu0 %5196
  %5198 = vrot.lane.b32.xlu0 %v5185, 24
  %v5199 = vpop.permute.xlu0 %5198
  %5200 = vrot.lane.b32.xlu0 %v5186, 24
  %v5201 = vpop.permute.xlu0 %5200
  %5202 = vrot.lane.b32.xlu0 %v5187, 24
  %v5203 = vpop.permute.xlu0 %5202
  %vm5212 = vcmask 261312
  %5213 = vst.msk [vmem:[#allocation3] sm:$0xff] %vm5212, %v5189
  %5214 = vst.msk [vmem:[#allocation3 + $0x10] sm:$0xff] %vm5212, %v5191
  %5215 = vst.msk [vmem:[#allocation3 + $0x20] sm:$0xff] %vm5212, %v5193
  %5216 = vst.msk [vmem:[#allocation3 + $0x30] sm:$0xff] %vm5212, %v5195
  %5217 = vst.msk [vmem:[#allocation3 + $0x40] sm:$0xff] %vm5212, %v5197
  %5218 = vst.msk [vmem:[#allocation3 + $0x50] sm:$0xff] %vm5212, %v5199
  %5219 = vst.msk [vmem:[#allocation3 + $0x60] sm:$0xff] %vm5212, %v5201
  %5220 = vst.msk [vmem:[#allocation3 + $0x70] sm:$0xff] %vm5212, %v5203
  %v5221 = vld [vmem:[#allocation2] sm:$0xc]
  %v5222 = vld [vmem:[#allocation2 + $0x4] sm:$0x3]
  %v5223 = vld [vmem:[#allocation2 + $0x8] sm:$0xc]
  %v5224 = vld [vmem:[#allocation2 + $0xc] sm:$0x3]
  %v5225 = vld [vmem:[#allocation2 + $0x10] sm:$0xc]
  %v5226 = vld [vmem:[#allocation2 + $0x14] sm:$0x3]
  %v5227 = vld [vmem:[#allocation2 + $0x18] sm:$0xc]
  %v5228 = vld [vmem:[#allocation2 + $0x1c] sm:$0x3]
  %v5229 = vld [vmem:[#allocation2 + $0x20] sm:$0xc]
  %v5230 = vld [vmem:[#allocation2 + $0x24] sm:$0x3]
  %v5231 = vld [vmem:[#allocation2 + $0x28] sm:$0xc]
  %v5232 = vld [vmem:[#allocation2 + $0x2c] sm:$0x3]
  %v5233 = vld [vmem:[#allocation2 + $0x30] sm:$0xc]
  %v5234 = vld [vmem:[#allocation2 + $0x34] sm:$0x3]
  %v5235 = vld [vmem:[#allocation2 + $0x38] sm:$0xc]
  %v5236 = vld [vmem:[#allocation2 + $0x3c] sm:$0x3]
  %v5237 = vld [vmem:[#allocation2 + $0x60] sm:$0xc]
  %v5238 = vld [vmem:[#allocation2 + $0x64] sm:$0x3]
  %v5239 = vld [vmem:[#allocation2 + $0x68] sm:$0xc]
  %v5240 = vld [vmem:[#allocation2 + $0x6c] sm:$0x3]
  %v5241 = vld [vmem:[#allocation2 + $0x70] sm:$0xc]
  %v5242 = vld [vmem:[#allocation2 + $0x74] sm:$0x3]
  %v5243 = vld [vmem:[#allocation2 + $0x78] sm:$0xc]
  %v5244 = vld [vmem:[#allocation2 + $0x7c] sm:$0x3]
  %v5245 = vld [vmem:[#allocation2 + $0x80] sm:$0xc]
  %v5246 = vld [vmem:[#allocation2 + $0x84] sm:$0x3]
  %v5247 = vld [vmem:[#allocation2 + $0x88] sm:$0xc]
  %v5248 = vld [vmem:[#allocation2 + $0x8c] sm:$0x3]
  %v5249 = vld [vmem:[#allocation2 + $0x90] sm:$0xc]
  %v5250 = vld [vmem:[#allocation2 + $0x94] sm:$0x3]
  %v5251 = vld [vmem:[#allocation2 + $0x98] sm:$0xc]
  %v5252 = vld [vmem:[#allocation2 + $0x9c] sm:$0x3]
  %vm5285 = vcmask 1041408
  %vm5286 = vcmask 1045508
  %vm5287 = vmor %vm5285, %vm5286
  %v5288 = vrot.slane %v5221, 6
  %v5289 = vrot.slane %v5288, 4
  %v5290 = vrot.slane %v5222, 6
  %v5291 = vsel %vm5287, %v5289, %v5290
  %v5292 = vrot.slane %v5223, 6
  %v5293 = vrot.slane %v5292, 4
  %v5294 = vrot.slane %v5224, 6
  %v5295 = vsel %vm5287, %v5293, %v5294
  %v5296 = vrot.slane %v5225, 6
  %v5297 = vrot.slane %v5296, 4
  %v5298 = vrot.slane %v5226, 6
  %v5299 = vsel %vm5287, %v5297, %v5298
  %v5300 = vrot.slane %v5227, 6
  %v5301 = vrot.slane %v5300, 4
  %v5302 = vrot.slane %v5228, 6
  %v5303 = vsel %vm5287, %v5301, %v5302
  %v5304 = vrot.slane %v5229, 6
  %v5305 = vrot.slane %v5304, 4
  %v5306 = vrot.slane %v5230, 6
  %v5307 = vsel %vm5287, %v5305, %v5306
  %v5308 = vrot.slane %v5231, 6
  %v5309 = vrot.slane %v5308, 4
  %v5310 = vrot.slane %v5232, 6
  %v5311 = vsel %vm5287, %v5309, %v5310
  %v5312 = vrot.slane %v5233, 6
  %v5313 = vrot.slane %v5312, 4
  %v5314 = vrot.slane %v5234, 6
  %v5315 = vsel %vm5287, %v5313, %v5314
  %v5316 = vrot.slane %v5235, 6
  %v5317 = vrot.slane %v5316, 4
  %v5318 = vrot.slane %v5236, 6
  %v5319 = vsel %vm5287, %v5317, %v5318
  %v5320 = vrot.slane %v5237, 6
  %v5321 = vrot.slane %v5320, 4
  %v5322 = vrot.slane %v5238, 6
  %v5323 = vsel %vm5287, %v5321, %v5322
  %v5324 = vrot.slane %v5239, 6
  %v5325 = vrot.slane %v5324, 4
  %v5326 = vrot.slane %v5240, 6
  %v5327 = vsel %vm5287, %v5325, %v5326
  %v5328 = vrot.slane %v5241, 6
  %v5329 = vrot.slane %v5328, 4
  %v5330 = vrot.slane %v5242, 6
  %v5331 = vsel %vm5287, %v5329, %v5330
  %v5332 = vrot.slane %v5243, 6
  %v5333 = vrot.slane %v5332, 4
  %v5334 = vrot.slane %v5244, 6
  %v5335 = vsel %vm5287, %v5333, %v5334
  %v5336 = vrot.slane %v5245, 6
  %v5337 = vrot.slane %v5336, 4
  %v5338 = vrot.slane %v5246, 6
  %v5339 = vsel %vm5287, %v5337, %v5338
  %v5340 = vrot.slane %v5247, 6
  %v5341 = vrot.slane %v5340, 4
  %v5342 = vrot.slane %v5248, 6
  %v5343 = vsel %vm5287, %v5341, %v5342
  %v5344 = vrot.slane %v5249, 6
  %v5345 = vrot.slane %v5344, 4
  %v5346 = vrot.slane %v5250, 6
  %v5347 = vsel %vm5287, %v5345, %v5346
  %v5348 = vrot.slane %v5251, 6
  %v5349 = vrot.slane %v5348, 4
  %v5350 = vrot.slane %v5252, 6
  %v5351 = vsel %vm5287, %v5349, %v5350
  %v5352 = vunpack.c.l.b16 %v5291
  %v5353 = vunpack.c.l.b16 %v5295
  %v5354 = vunpack.c.l.b16 %v5299
  %v5355 = vunpack.c.l.b16 %v5303
  %v5356 = vunpack.c.l.b16 %v5307
  %v5357 = vunpack.c.l.b16 %v5311
  %v5358 = vunpack.c.l.b16 %v5315
  %v5359 = vunpack.c.l.b16 %v5319
  %v5360 = vunpack.c.l.b16 %v5323
  %v5361 = vunpack.c.l.b16 %v5327
  %v5362 = vunpack.c.l.b16 %v5331
  %v5363 = vunpack.c.l.b16 %v5335
  %v5364 = vunpack.c.l.b16 %v5339
  %v5365 = vunpack.c.l.b16 %v5343
  %v5366 = vunpack.c.l.b16 %v5347
  %v5367 = vunpack.c.l.b16 %v5351
  %v5368 = vpack.c.b16 %v5353, %v5352
  %v5369 = vpack.c.b16 %v5355, %v5354
  %v5370 = vpack.c.b16 %v5357, %v5356
  %v5371 = vpack.c.b16 %v5359, %v5358
  %v5372 = vpack.c.b16 %v5361, %v5360
  %v5373 = vpack.c.b16 %v5363, %v5362
  %v5374 = vpack.c.b16 %v5365, %v5364
  %v5375 = vpack.c.b16 %v5367, %v5366
  %5376 = vrot.lane.b32.xlu0 %v5368, 32
  %v5377 = vpop.permute.xlu0 %5376
  %5378 = vrot.lane.b32.xlu0 %v5369, 32
  %v5379 = vpop.permute.xlu0 %5378
  %5380 = vrot.lane.b32.xlu0 %v5370, 32
  %v5381 = vpop.permute.xlu0 %5380
  %5382 = vrot.lane.b32.xlu0 %v5371, 32
  %v5383 = vpop.permute.xlu0 %5382
  %5384 = vrot.lane.b32.xlu0 %v5372, 32
  %v5385 = vpop.permute.xlu0 %5384
  %5386 = vrot.lane.b32.xlu0 %v5373, 32
  %v5387 = vpop.permute.xlu0 %5386
  %5388 = vrot.lane.b32.xlu0 %v5374, 32
  %v5389 = vpop.permute.xlu0 %5388
  %5390 = vrot.lane.b32.xlu0 %v5375, 32
  %v5391 = vpop.permute.xlu0 %5390
  %vm5400 = vcmask 326912
  %5401 = vst.msk [vmem:[#allocation3] sm:$0xff] %vm5400, %v5377
  %5402 = vst.msk [vmem:[#allocation3 + $0x10] sm:$0xff] %vm5400, %v5379
  %5403 = vst.msk [vmem:[#allocation3 + $0x20] sm:$0xff] %vm5400, %v5381
  %5404 = vst.msk [vmem:[#allocation3 + $0x30] sm:$0xff] %vm5400, %v5383
  %5405 = vst.msk [vmem:[#allocation3 + $0x40] sm:$0xff] %vm5400, %v5385
  %5406 = vst.msk [vmem:[#allocation3 + $0x50] sm:$0xff] %vm5400, %v5387
  %5407 = vst.msk [vmem:[#allocation3 + $0x60] sm:$0xff] %vm5400, %v5389
  %5408 = vst.msk [vmem:[#allocation3 + $0x70] sm:$0xff] %vm5400, %v5391
  %s5409 = scalar_lea.vmem [#allocation2], 8
  %v5410 = vld [vmem:[%s5409] sm:$0xf]
  %v5411 = vld [vmem:[%s5409 + $0x8] sm:$0xf]
  %v5412 = vld [vmem:[%s5409 + $0x10] sm:$0xf]
  %v5413 = vld [vmem:[%s5409 + $0x18] sm:$0xf]
  %v5414 = vld [vmem:[%s5409 + $0x20] sm:$0xf]
  %v5415 = vld [vmem:[%s5409 + $0x28] sm:$0xf]
  %v5416 = vld [vmem:[%s5409 + $0x30] sm:$0xf]
  %v5417 = vld [vmem:[%s5409 + $0x38] sm:$0xf]
  %v5418 = vld [vmem:[%s5409 + $0x60] sm:$0xf]
  %v5419 = vld [vmem:[%s5409 + $0x68] sm:$0xf]
  %v5420 = vld [vmem:[%s5409 + $0x70] sm:$0xf]
  %v5421 = vld [vmem:[%s5409 + $0x78] sm:$0xf]
  %v5422 = vld [vmem:[%s5409 + $0x80] sm:$0xf]
  %v5423 = vld [vmem:[%s5409 + $0x88] sm:$0xf]
  %v5424 = vld [vmem:[%s5409 + $0x90] sm:$0xf]
  %v5425 = vld [vmem:[%s5409 + $0x98] sm:$0xf]
  %v5442 = vunpack.c.l.b16 %v5410
  %v5443 = vunpack.c.l.b16 %v5411
  %v5444 = vunpack.c.l.b16 %v5412
  %v5445 = vunpack.c.l.b16 %v5413
  %v5446 = vunpack.c.l.b16 %v5414
  %v5447 = vunpack.c.l.b16 %v5415
  %v5448 = vunpack.c.l.b16 %v5416
  %v5449 = vunpack.c.l.b16 %v5417
  %v5450 = vunpack.c.l.b16 %v5418
  %v5451 = vunpack.c.l.b16 %v5419
  %v5452 = vunpack.c.l.b16 %v5420
  %v5453 = vunpack.c.l.b16 %v5421
  %v5454 = vunpack.c.l.b16 %v5422
  %v5455 = vunpack.c.l.b16 %v5423
  %v5456 = vunpack.c.l.b16 %v5424
  %v5457 = vunpack.c.l.b16 %v5425
  %v5458 = vpack.c.b16 %v5443, %v5442
  %v5459 = vpack.c.b16 %v5445, %v5444
  %v5460 = vpack.c.b16 %v5447, %v5446
  %v5461 = vpack.c.b16 %v5449, %v5448
  %v5462 = vpack.c.b16 %v5451, %v5450
  %v5463 = vpack.c.b16 %v5453, %v5452
  %v5464 = vpack.c.b16 %v5455, %v5454
  %v5465 = vpack.c.b16 %v5457, %v5456
  %5466 = vrot.lane.b32.xlu0 %v5458, 40
  %v5467 = vpop.permute.xlu0 %5466
  %5468 = vrot.lane.b32.xlu0 %v5459, 40
  %v5469 = vpop.permute.xlu0 %5468
  %5470 = vrot.lane.b32.xlu0 %v5460, 40
  %v5471 = vpop.permute.xlu0 %5470
  %5472 = vrot.lane.b32.xlu0 %v5461, 40
  %v5473 = vpop.permute.xlu0 %5472
  %5474 = vrot.lane.b32.xlu0 %v5462, 40
  %v5475 = vpop.permute.xlu0 %5474
  %5476 = vrot.lane.b32.xlu0 %v5463, 40
  %v5477 = vpop.permute.xlu0 %5476
  %5478 = vrot.lane.b32.xlu0 %v5464, 40
  %v5479 = vpop.permute.xlu0 %5478
  %5480 = vrot.lane.b32.xlu0 %v5465, 40
  %v5481 = vpop.permute.xlu0 %5480
  %vm5490 = vcmask 392512
  %5491 = vst.msk [vmem:[#allocation3] sm:$0xff] %vm5490, %v5467
  %5492 = vst.msk [vmem:[#allocation3 + $0x10] sm:$0xff] %vm5490, %v5469
  %5493 = vst.msk [vmem:[#allocation3 + $0x20] sm:$0xff] %vm5490, %v5471
  %5494 = vst.msk [vmem:[#allocation3 + $0x30] sm:$0xff] %vm5490, %v5473
  %5495 = vst.msk [vmem:[#allocation3 + $0x40] sm:$0xff] %vm5490, %v5475
  %5496 = vst.msk [vmem:[#allocation3 + $0x50] sm:$0xff] %vm5490, %v5477
  %5497 = vst.msk [vmem:[#allocation3 + $0x60] sm:$0xff] %vm5490, %v5479
  %5498 = vst.msk [vmem:[#allocation3 + $0x70] sm:$0xff] %vm5490, %v5481
  %v5499 = vld [vmem:[%s5409] sm:$0xf]
  %v5500 = vld [vmem:[%s5409 + $0x4] sm:$0x1]
  %v5501 = vld [vmem:[%s5409 + $0x8] sm:$0xf]
  %v5502 = vld [vmem:[%s5409 + $0xc] sm:$0x1]
  %v5503 = vld [vmem:[%s5409 + $0x10] sm:$0xf]
  %v5504 = vld [vmem:[%s5409 + $0x14] sm:$0x1]
  %v5505 = vld [vmem:[%s5409 + $0x18] sm:$0xf]
  %v5506 = vld [vmem:[%s5409 + $0x1c] sm:$0x1]
  %v5507 = vld [vmem:[%s5409 + $0x20] sm:$0xf]
  %v5508 = vld [vmem:[%s5409 + $0x24] sm:$0x1]
  %v5509 = vld [vmem:[%s5409 + $0x28] sm:$0xf]
  %v5510 = vld [vmem:[%s5409 + $0x2c] sm:$0x1]
  %v5511 = vld [vmem:[%s5409 + $0x30] sm:$0xf]
  %v5512 = vld [vmem:[%s5409 + $0x34] sm:$0x1]
  %v5513 = vld [vmem:[%s5409 + $0x38] sm:$0xf]
  %v5514 = vld [vmem:[%s5409 + $0x3c] sm:$0x1]
  %v5515 = vld [vmem:[%s5409 + $0x60] sm:$0xf]
  %v5516 = vld [vmem:[%s5409 + $0x64] sm:$0x1]
  %v5517 = vld [vmem:[%s5409 + $0x68] sm:$0xf]
  %v5518 = vld [vmem:[%s5409 + $0x6c] sm:$0x1]
  %v5519 = vld [vmem:[%s5409 + $0x70] sm:$0xf]
  %v5520 = vld [vmem:[%s5409 + $0x74] sm:$0x1]
  %v5521 = vld [vmem:[%s5409 + $0x78] sm:$0xf]
  %v5522 = vld [vmem:[%s5409 + $0x7c] sm:$0x1]
  %v5523 = vld [vmem:[%s5409 + $0x80] sm:$0xf]
  %v5524 = vld [vmem:[%s5409 + $0x84] sm:$0x1]
  %v5525 = vld [vmem:[%s5409 + $0x88] sm:$0xf]
  %v5526 = vld [vmem:[%s5409 + $0x8c] sm:$0x1]
  %v5527 = vld [vmem:[%s5409 + $0x90] sm:$0xf]
  %v5528 = vld [vmem:[%s5409 + $0x94] sm:$0x1]
  %v5529 = vld [vmem:[%s5409 + $0x98] sm:$0xf]
  %v5530 = vld [vmem:[%s5409 + $0x9c] sm:$0x1]
  %v5532 = vshrl.u32 %v5499, 16
  %v5534 = vrot.slane %v5532, 4
  %v5535 = vshll.u32 %v5499, 16
  %v5537 = vrot.slane %v5535, 5
  %v5538 = vor.u32 %v5534, %v5537
  %v5539 = vrot.slane %v5538, 4
  %v5541 = vshll.u32 %v5500, 16
  %v5543 = vrot.slane %v5541, 5
  %v5544 = vsel %vm4371, %v5539, %v5543
  %v5546 = vshrl.u32 %v5501, 16
  %v5548 = vrot.slane %v5546, 4
  %v5549 = vshll.u32 %v5501, 16
  %v5551 = vrot.slane %v5549, 5
  %v5552 = vor.u32 %v5548, %v5551
  %v5553 = vrot.slane %v5552, 4
  %v5555 = vshll.u32 %v5502, 16
  %v5557 = vrot.slane %v5555, 5
  %v5558 = vsel %vm4371, %v5553, %v5557
  %v5560 = vshrl.u32 %v5503, 16
  %v5562 = vrot.slane %v5560, 4
  %v5563 = vshll.u32 %v5503, 16
  %v5565 = vrot.slane %v5563, 5
  %v5566 = vor.u32 %v5562, %v5565
  %v5567 = vrot.slane %v5566, 4
  %v5569 = vshll.u32 %v5504, 16
  %v5571 = vrot.slane %v5569, 5
  %v5572 = vsel %vm4371, %v5567, %v5571
  %v5574 = vshrl.u32 %v5505, 16
  %v5576 = vrot.slane %v5574, 4
  %v5577 = vshll.u32 %v5505, 16
  %v5579 = vrot.slane %v5577, 5
  %v5580 = vor.u32 %v5576, %v5579
  %v5581 = vrot.slane %v5580, 4
  %v5583 = vshll.u32 %v5506, 16
  %v5585 = vrot.slane %v5583, 5
  %v5586 = vsel %vm4371, %v5581, %v5585
  %v5588 = vshrl.u32 %v5507, 16
  %v5590 = vrot.slane %v5588, 4
  %v5591 = vshll.u32 %v5507, 16
  %v5593 = vrot.slane %v5591, 5
  %v5594 = vor.u32 %v5590, %v5593
  %v5595 = vrot.slane %v5594, 4
  %v5597 = vshll.u32 %v5508, 16
  %v5599 = vrot.slane %v5597, 5
  %v5600 = vsel %vm4371, %v5595, %v5599
  %v5602 = vshrl.u32 %v5509, 16
  %v5604 = vrot.slane %v5602, 4
  %v5605 = vshll.u32 %v5509, 16
  %v5607 = vrot.slane %v5605, 5
  %v5608 = vor.u32 %v5604, %v5607
  %v5609 = vrot.slane %v5608, 4
  %v5611 = vshll.u32 %v5510, 16
  %v5613 = vrot.slane %v5611, 5
  %v5614 = vsel %vm4371, %v5609, %v5613
  %v5616 = vshrl.u32 %v5511, 16
  %v5618 = vrot.slane %v5616, 4
  %v5619 = vshll.u32 %v5511, 16
  %v5621 = vrot.slane %v5619, 5
  %v5622 = vor.u32 %v5618, %v5621
  %v5623 = vrot.slane %v5622, 4
  %v5625 = vshll.u32 %v5512, 16
  %v5627 = vrot.slane %v5625, 5
  %v5628 = vsel %vm4371, %v5623, %v5627
  %v5630 = vshrl.u32 %v5513, 16
  %v5632 = vrot.slane %v5630, 4
  %v5633 = vshll.u32 %v5513, 16
  %v5635 = vrot.slane %v5633, 5
  %v5636 = vor.u32 %v5632, %v5635
  %v5637 = vrot.slane %v5636, 4
  %v5639 = vshll.u32 %v5514, 16
  %v5641 = vrot.slane %v5639, 5
  %v5642 = vsel %vm4371, %v5637, %v5641
  %v5644 = vshrl.u32 %v5515, 16
  %v5646 = vrot.slane %v5644, 4
  %v5647 = vshll.u32 %v5515, 16
  %v5649 = vrot.slane %v5647, 5
  %v5650 = vor.u32 %v5646, %v5649
  %v5651 = vrot.slane %v5650, 4
  %v5653 = vshll.u32 %v5516, 16
  %v5655 = vrot.slane %v5653, 5
  %v5656 = vsel %vm4371, %v5651, %v5655
  %v5658 = vshrl.u32 %v5517, 16
  %v5660 = vrot.slane %v5658, 4
  %v5661 = vshll.u32 %v5517, 16
  %v5663 = vrot.slane %v5661, 5
  %v5664 = vor.u32 %v5660, %v5663
  %v5665 = vrot.slane %v5664, 4
  %v5667 = vshll.u32 %v5518, 16
  %v5669 = vrot.slane %v5667, 5
  %v5670 = vsel %vm4371, %v5665, %v5669
  %v5672 = vshrl.u32 %v5519, 16
  %v5674 = vrot.slane %v5672, 4
  %v5675 = vshll.u32 %v5519, 16
  %v5677 = vrot.slane %v5675, 5
  %v5678 = vor.u32 %v5674, %v5677
  %v5679 = vrot.slane %v5678, 4
  %v5681 = vshll.u32 %v5520, 16
  %v5683 = vrot.slane %v5681, 5
  %v5684 = vsel %vm4371, %v5679, %v5683
  %v5686 = vshrl.u32 %v5521, 16
  %v5688 = vrot.slane %v5686, 4
  %v5689 = vshll.u32 %v5521, 16
  %v5691 = vrot.slane %v5689, 5
  %v5692 = vor.u32 %v5688, %v5691
  %v5693 = vrot.slane %v5692, 4
  %v5695 = vshll.u32 %v5522, 16
  %v5697 = vrot.slane %v5695, 5
  %v5698 = vsel %vm4371, %v5693, %v5697
  %v5700 = vshrl.u32 %v5523, 16
  %v5702 = vrot.slane %v5700, 4
  %v5703 = vshll.u32 %v5523, 16
  %v5705 = vrot.slane %v5703, 5
  %v5706 = vor.u32 %v5702, %v5705
  %v5707 = vrot.slane %v5706, 4
  %v5709 = vshll.u32 %v5524, 16
  %v5711 = vrot.slane %v5709, 5
  %v5712 = vsel %vm4371, %v5707, %v5711
  %v5714 = vshrl.u32 %v5525, 16
  %v5716 = vrot.slane %v5714, 4
  %v5717 = vshll.u32 %v5525, 16
  %v5719 = vrot.slane %v5717, 5
  %v5720 = vor.u32 %v5716, %v5719
  %v5721 = vrot.slane %v5720, 4
  %v5723 = vshll.u32 %v5526, 16
  %v5725 = vrot.slane %v5723, 5
  %v5726 = vsel %vm4371, %v5721, %v5725
  %v5728 = vshrl.u32 %v5527, 16
  %v5730 = vrot.slane %v5728, 4
  %v5731 = vshll.u32 %v5527, 16
  %v5733 = vrot.slane %v5731, 5
  %v5734 = vor.u32 %v5730, %v5733
  %v5735 = vrot.slane %v5734, 4
  %v5737 = vshll.u32 %v5528, 16
  %v5739 = vrot.slane %v5737, 5
  %v5740 = vsel %vm4371, %v5735, %v5739
  %v5742 = vshrl.u32 %v5529, 16
  %v5744 = vrot.slane %v5742, 4
  %v5745 = vshll.u32 %v5529, 16
  %v5747 = vrot.slane %v5745, 5
  %v5748 = vor.u32 %v5744, %v5747
  %v5749 = vrot.slane %v5748, 4
  %v5751 = vshll.u32 %v5530, 16
  %v5753 = vrot.slane %v5751, 5
  %v5754 = vsel %vm4371, %v5749, %v5753
  %v5755 = vunpack.c.l.b16 %v5544
  %v5756 = vunpack.c.l.b16 %v5558
  %v5757 = vunpack.c.l.b16 %v5572
  %v5758 = vunpack.c.l.b16 %v5586
  %v5759 = vunpack.c.l.b16 %v5600
  %v5760 = vunpack.c.l.b16 %v5614
  %v5761 = vunpack.c.l.b16 %v5628
  %v5762 = vunpack.c.l.b16 %v5642
  %v5763 = vunpack.c.l.b16 %v5656
  %v5764 = vunpack.c.l.b16 %v5670
  %v5765 = vunpack.c.l.b16 %v5684
  %v5766 = vunpack.c.l.b16 %v5698
  %v5767 = vunpack.c.l.b16 %v5712
  %v5768 = vunpack.c.l.b16 %v5726
  %v5769 = vunpack.c.l.b16 %v5740
  %v5770 = vunpack.c.l.b16 %v5754
  %v5771 = vpack.c.b16 %v5756, %v5755
  %v5772 = vpack.c.b16 %v5758, %v5757
  %v5773 = vpack.c.b16 %v5760, %v5759
  %v5774 = vpack.c.b16 %v5762, %v5761
  %v5775 = vpack.c.b16 %v5764, %v5763
  %v5776 = vpack.c.b16 %v5766, %v5765
  %v5777 = vpack.c.b16 %v5768, %v5767
  %v5778 = vpack.c.b16 %v5770, %v5769
  %5779 = vrot.lane.b32.xlu0 %v5771, 48
  %v5780 = vpop.permute.xlu0 %5779
  %5781 = vrot.lane.b32.xlu0 %v5772, 48
  %v5782 = vpop.permute.xlu0 %5781
  %5783 = vrot.lane.b32.xlu0 %v5773, 48
  %v5784 = vpop.permute.xlu0 %5783
  %5785 = vrot.lane.b32.xlu0 %v5774, 48
  %v5786 = vpop.permute.xlu0 %5785
  %5787 = vrot.lane.b32.xlu0 %v5775, 48
  %v5788 = vpop.permute.xlu0 %5787
  %5789 = vrot.lane.b32.xlu0 %v5776, 48
  %v5790 = vpop.permute.xlu0 %5789
  %5791 = vrot.lane.b32.xlu0 %v5777, 48
  %v5792 = vpop.permute.xlu0 %5791
  %5793 = vrot.lane.b32.xlu0 %v5778, 48
  %v5794 = vpop.permute.xlu0 %5793
  %vm5803 = vcmask 458112
  %5804 = vst.msk [vmem:[#allocation3] sm:$0xff] %vm5803, %v5780
  %5805 = vst.msk [vmem:[#allocation3 + $0x10] sm:$0xff] %vm5803, %v5782
  %5806 = vst.msk [vmem:[#allocation3 + $0x20] sm:$0xff] %vm5803, %v5784
  %5807 = vst.msk [vmem:[#allocation3 + $0x30] sm:$0xff] %vm5803, %v5786
  %5808 = vst.msk [vmem:[#allocation3 + $0x40] sm:$0xff] %vm5803, %v5788
  %5809 = vst.msk [vmem:[#allocation3 + $0x50] sm:$0xff] %vm5803, %v5790
  %5810 = vst.msk [vmem:[#allocation3 + $0x60] sm:$0xff] %vm5803, %v5792
  %5811 = vst.msk [vmem:[#allocation3 + $0x70] sm:$0xff] %vm5803, %v5794
  %v5812 = vld [vmem:[%s5409] sm:$0xe]
  %v5813 = vld [vmem:[%s5409 + $0x4] sm:$0x1]
  %v5814 = vld [vmem:[%s5409 + $0x8] sm:$0xe]
  %v5815 = vld [vmem:[%s5409 + $0xc] sm:$0x1]
  %v5816 = vld [vmem:[%s5409 + $0x10] sm:$0xe]
  %v5817 = vld [vmem:[%s5409 + $0x14] sm:$0x1]
  %v5818 = vld [vmem:[%s5409 + $0x18] sm:$0xe]
  %v5819 = vld [vmem:[%s5409 + $0x1c] sm:$0x1]
  %v5820 = vld [vmem:[%s5409 + $0x20] sm:$0xe]
  %v5821 = vld [vmem:[%s5409 + $0x24] sm:$0x1]
  %v5822 = vld [vmem:[%s5409 + $0x28] sm:$0xe]
  %v5823 = vld [vmem:[%s5409 + $0x2c] sm:$0x1]
  %v5824 = vld [vmem:[%s5409 + $0x30] sm:$0xe]
  %v5825 = vld [vmem:[%s5409 + $0x34] sm:$0x1]
  %v5826 = vld [vmem:[%s5409 + $0x38] sm:$0xe]
  %v5827 = vld [vmem:[%s5409 + $0x3c] sm:$0x1]
  %v5828 = vld [vmem:[%s5409 + $0x60] sm:$0xe]
  %v5829 = vld [vmem:[%s5409 + $0x64] sm:$0x1]
  %v5830 = vld [vmem:[%s5409 + $0x68] sm:$0xe]
  %v5831 = vld [vmem:[%s5409 + $0x6c] sm:$0x1]
  %v5832 = vld [vmem:[%s5409 + $0x70] sm:$0xe]
  %v5833 = vld [vmem:[%s5409 + $0x74] sm:$0x1]
  %v5834 = vld [vmem:[%s5409 + $0x78] sm:$0xe]
  %v5835 = vld [vmem:[%s5409 + $0x7c] sm:$0x1]
  %v5836 = vld [vmem:[%s5409 + $0x80] sm:$0xe]
  %v5837 = vld [vmem:[%s5409 + $0x84] sm:$0x1]
  %v5838 = vld [vmem:[%s5409 + $0x88] sm:$0xe]
  %v5839 = vld [vmem:[%s5409 + $0x8c] sm:$0x1]
  %v5840 = vld [vmem:[%s5409 + $0x90] sm:$0xe]
  %v5841 = vld [vmem:[%s5409 + $0x94] sm:$0x1]
  %v5842 = vld [vmem:[%s5409 + $0x98] sm:$0xe]
  %v5843 = vld [vmem:[%s5409 + $0x9c] sm:$0x1]
  %v5876 = vrot.slane %v5812, 5
  %v5877 = vrot.slane %v5876, 4
  %v5878 = vrot.slane %v5813, 5
  %v5879 = vsel %vm4719, %v5877, %v5878
  %v5880 = vrot.slane %v5814, 5
  %v5881 = vrot.slane %v5880, 4
  %v5882 = vrot.slane %v5815, 5
  %v5883 = vsel %vm4719, %v5881, %v5882
  %v5884 = vrot.slane %v5816, 5
  %v5885 = vrot.slane %v5884, 4
  %v5886 = vrot.slane %v5817, 5
  %v5887 = vsel %vm4719, %v5885, %v5886
  %v5888 = vrot.slane %v5818, 5
  %v5889 = vrot.slane %v5888, 4
  %v5890 = vrot.slane %v5819, 5
  %v5891 = vsel %vm4719, %v5889, %v5890
  %v5892 = vrot.slane %v5820, 5
  %v5893 = vrot.slane %v5892, 4
  %v5894 = vrot.slane %v5821, 5
  %v5895 = vsel %vm4719, %v5893, %v5894
  %v5896 = vrot.slane %v5822, 5
  %v5897 = vrot.slane %v5896, 4
  %v5898 = vrot.slane %v5823, 5
  %v5899 = vsel %vm4719, %v5897, %v5898
  %v5900 = vrot.slane %v5824, 5
  %v5901 = vrot.slane %v5900, 4
  %v5902 = vrot.slane %v5825, 5
  %v5903 = vsel %vm4719, %v5901, %v5902
  %v5904 = vrot.slane %v5826, 5
  %v5905 = vrot.slane %v5904, 4
  %v5906 = vrot.slane %v5827, 5
  %v5907 = vsel %vm4719, %v5905, %v5906
  %v5908 = vrot.slane %v5828, 5
  %v5909 = vrot.slane %v5908, 4
  %v5910 = vrot.slane %v5829, 5
  %v5911 = vsel %vm4719, %v5909, %v5910
  %v5912 = vrot.slane %v5830, 5
  %v5913 = vrot.slane %v5912, 4
  %v5914 = vrot.slane %v5831, 5
  %v5915 = vsel %vm4719, %v5913, %v5914
  %v5916 = vrot.slane %v5832, 5
  %v5917 = vrot.slane %v5916, 4
  %v5918 = vrot.slane %v5833, 5
  %v5919 = vsel %vm4719, %v5917, %v5918
  %v5920 = vrot.slane %v5834, 5
  %v5921 = vrot.slane %v5920, 4
  %v5922 = vrot.slane %v5835, 5
  %v5923 = vsel %vm4719, %v5921, %v5922
  %v5924 = vrot.slane %v5836, 5
  %v5925 = vrot.slane %v5924, 4
  %v5926 = vrot.slane %v5837, 5
  %v5927 = vsel %vm4719, %v5925, %v5926
  %v5928 = vrot.slane %v5838, 5
  %v5929 = vrot.slane %v5928, 4
  %v5930 = vrot.slane %v5839, 5
  %v5931 = vsel %vm4719, %v5929, %v5930
  %v5932 = vrot.slane %v5840, 5
  %v5933 = vrot.slane %v5932, 4
  %v5934 = vrot.slane %v5841, 5
  %v5935 = vsel %vm4719, %v5933, %v5934
  %v5936 = vrot.slane %v5842, 5
  %v5937 = vrot.slane %v5936, 4
  %v5938 = vrot.slane %v5843, 5
  %v5939 = vsel %vm4719, %v5937, %v5938
  %v5940 = vunpack.c.l.b16 %v5879
  %v5941 = vunpack.c.l.b16 %v5883
  %v5942 = vunpack.c.l.b16 %v5887
  %v5943 = vunpack.c.l.b16 %v5891
  %v5944 = vunpack.c.l.b16 %v5895
  %v5945 = vunpack.c.l.b16 %v5899
  %v5946 = vunpack.c.l.b16 %v5903
  %v5947 = vunpack.c.l.b16 %v5907
  %v5948 = vunpack.c.l.b16 %v5911
  %v5949 = vunpack.c.l.b16 %v5915
  %v5950 = vunpack.c.l.b16 %v5919
  %v5951 = vunpack.c.l.b16 %v5923
  %v5952 = vunpack.c.l.b16 %v5927
  %v5953 = vunpack.c.l.b16 %v5931
  %v5954 = vunpack.c.l.b16 %v5935
  %v5955 = vunpack.c.l.b16 %v5939
  %v5956 = vpack.c.b16 %v5941, %v5940
  %v5957 = vpack.c.b16 %v5943, %v5942
  %v5958 = vpack.c.b16 %v5945, %v5944
  %v5959 = vpack.c.b16 %v5947, %v5946
  %v5960 = vpack.c.b16 %v5949, %v5948
  %v5961 = vpack.c.b16 %v5951, %v5950
  %v5962 = vpack.c.b16 %v5953, %v5952
  %v5963 = vpack.c.b16 %v5955, %v5954
  %5964 = vrot.lane.b32.xlu0 %v5956, 56
  %v5965 = vpop.permute.xlu0 %5964
  %5966 = vrot.lane.b32.xlu0 %v5957, 56
  %v5967 = vpop.permute.xlu0 %5966
  %5968 = vrot.lane.b32.xlu0 %v5958, 56
  %v5969 = vpop.permute.xlu0 %5968
  %5970 = vrot.lane.b32.xlu0 %v5959, 56
  %v5971 = vpop.permute.xlu0 %5970
  %5972 = vrot.lane.b32.xlu0 %v5960, 56
  %v5973 = vpop.permute.xlu0 %5972
  %5974 = vrot.lane.b32.xlu0 %v5961, 56
  %v5975 = vpop.permute.xlu0 %5974
  %5976 = vrot.lane.b32.xlu0 %v5962, 56
  %v5977 = vpop.permute.xlu0 %5976
  %5978 = vrot.lane.b32.xlu0 %v5963, 56
  %v5979 = vpop.permute.xlu0 %5978
  %vm5988 = vcmask 523712
  %5989 = vst.msk [vmem:[#allocation3] sm:$0xff] %vm5988, %v5965
  %5990 = vst.msk [vmem:[#allocation3 + $0x10] sm:$0xff] %vm5988, %v5967
  %5991 = vst.msk [vmem:[#allocation3 + $0x20] sm:$0xff] %vm5988, %v5969
  %5992 = vst.msk [vmem:[#allocation3 + $0x30] sm:$0xff] %vm5988, %v5971
  %5993 = vst.msk [vmem:[#allocation3 + $0x40] sm:$0xff] %vm5988, %v5973
  %5994 = vst.msk [vmem:[#allocation3 + $0x50] sm:$0xff] %vm5988, %v5975
  %5995 = vst.msk [vmem:[#allocation3 + $0x60] sm:$0xff] %vm5988, %v5977
  %5996 = vst.msk [vmem:[#allocation3 + $0x70] sm:$0xff] %vm5988, %v5979
  %v5997 = vld [vmem:[%s5409] sm:$0xe]
  %v5998 = vld [vmem:[%s5409 + $0x4] sm:$0x3]
  %v5999 = vld [vmem:[%s5409 + $0x8] sm:$0xe]
  %v6000 = vld [vmem:[%s5409 + $0xc] sm:$0x3]
  %v6001 = vld [vmem:[%s5409 + $0x10] sm:$0xe]
  %v6002 = vld [vmem:[%s5409 + $0x14] sm:$0x3]
  %v6003 = vld [vmem:[%s5409 + $0x18] sm:$0xe]
  %v6004 = vld [vmem:[%s5409 + $0x1c] sm:$0x3]
  %v6005 = vld [vmem:[%s5409 + $0x20] sm:$0xe]
  %v6006 = vld [vmem:[%s5409 + $0x24] sm:$0x3]
  %v6007 = vld [vmem:[%s5409 + $0x28] sm:$0xe]
  %v6008 = vld [vmem:[%s5409 + $0x2c] sm:$0x3]
  %v6009 = vld [vmem:[%s5409 + $0x30] sm:$0xe]
  %v6010 = vld [vmem:[%s5409 + $0x34] sm:$0x3]
  %v6011 = vld [vmem:[%s5409 + $0x38] sm:$0xe]
  %v6012 = vld [vmem:[%s5409 + $0x3c] sm:$0x3]
  %v6013 = vld [vmem:[%s5409 + $0x60] sm:$0xe]
  %v6014 = vld [vmem:[%s5409 + $0x64] sm:$0x3]
  %v6015 = vld [vmem:[%s5409 + $0x68] sm:$0xe]
  %v6016 = vld [vmem:[%s5409 + $0x6c] sm:$0x3]
  %v6017 = vld [vmem:[%s5409 + $0x70] sm:$0xe]
  %v6018 = vld [vmem:[%s5409 + $0x74] sm:$0x3]
  %v6019 = vld [vmem:[%s5409 + $0x78] sm:$0xe]
  %v6020 = vld [vmem:[%s5409 + $0x7c] sm:$0x3]
  %v6021 = vld [vmem:[%s5409 + $0x80] sm:$0xe]
  %v6022 = vld [vmem:[%s5409 + $0x84] sm:$0x3]
  %v6023 = vld [vmem:[%s5409 + $0x88] sm:$0xe]
  %v6024 = vld [vmem:[%s5409 + $0x8c] sm:$0x3]
  %v6025 = vld [vmem:[%s5409 + $0x90] sm:$0xe]
  %v6026 = vld [vmem:[%s5409 + $0x94] sm:$0x3]
  %v6027 = vld [vmem:[%s5409 + $0x98] sm:$0xe]
  %v6028 = vld [vmem:[%s5409 + $0x9c] sm:$0x3]
  %v6030 = vshrl.u32 %v5997, 16
  %v6032 = vrot.slane %v6030, 5
  %v6033 = vshll.u32 %v5997, 16
  %v6035 = vrot.slane %v6033, 6
  %v6036 = vor.u32 %v6032, %v6035
  %v6037 = vrot.slane %v6036, 4
  %v6039 = vshrl.u32 %v5998, 16
  %v6041 = vrot.slane %v6039, 5
  %v6042 = vshll.u32 %v5998, 16
  %v6044 = vrot.slane %v6042, 6
  %v6045 = vor.u32 %v6041, %v6044
  %v6046 = vsel %vm4875, %v6037, %v6045
  %v6048 = vshrl.u32 %v5999, 16
  %v6050 = vrot.slane %v6048, 5
  %v6051 = vshll.u32 %v5999, 16
  %v6053 = vrot.slane %v6051, 6
  %v6054 = vor.u32 %v6050, %v6053
  %v6055 = vrot.slane %v6054, 4
  %v6057 = vshrl.u32 %v6000, 16
  %v6059 = vrot.slane %v6057, 5
  %v6060 = vshll.u32 %v6000, 16
  %v6062 = vrot.slane %v6060, 6
  %v6063 = vor.u32 %v6059, %v6062
  %v6064 = vsel %vm4875, %v6055, %v6063
  %v6066 = vshrl.u32 %v6001, 16
  %v6068 = vrot.slane %v6066, 5
  %v6069 = vshll.u32 %v6001, 16
  %v6071 = vrot.slane %v6069, 6
  %v6072 = vor.u32 %v6068, %v6071
  %v6073 = vrot.slane %v6072, 4
  %v6075 = vshrl.u32 %v6002, 16
  %v6077 = vrot.slane %v6075, 5
  %v6078 = vshll.u32 %v6002, 16
  %v6080 = vrot.slane %v6078, 6
  %v6081 = vor.u32 %v6077, %v6080
  %v6082 = vsel %vm4875, %v6073, %v6081
  %v6084 = vshrl.u32 %v6003, 16
  %v6086 = vrot.slane %v6084, 5
  %v6087 = vshll.u32 %v6003, 16
  %v6089 = vrot.slane %v6087, 6
  %v6090 = vor.u32 %v6086, %v6089
  %v6091 = vrot.slane %v6090, 4
  %v6093 = vshrl.u32 %v6004, 16
  %v6095 = vrot.slane %v6093, 5
  %v6096 = vshll.u32 %v6004, 16
  %v6098 = vrot.slane %v6096, 6
  %v6099 = vor.u32 %v6095, %v6098
  %v6100 = vsel %vm4875, %v6091, %v6099
  %v6102 = vshrl.u32 %v6005, 16
  %v6104 = vrot.slane %v6102, 5
  %v6105 = vshll.u32 %v6005, 16
  %v6107 = vrot.slane %v6105, 6
  %v6108 = vor.u32 %v6104, %v6107
  %v6109 = vrot.slane %v6108, 4
  %v6111 = vshrl.u32 %v6006, 16
  %v6113 = vrot.slane %v6111, 5
  %v6114 = vshll.u32 %v6006, 16
  %v6116 = vrot.slane %v6114, 6
  %v6117 = vor.u32 %v6113, %v6116
  %v6118 = vsel %vm4875, %v6109, %v6117
  %v6120 = vshrl.u32 %v6007, 16
  %v6122 = vrot.slane %v6120, 5
  %v6123 = vshll.u32 %v6007, 16
  %v6125 = vrot.slane %v6123, 6
  %v6126 = vor.u32 %v6122, %v6125
  %v6127 = vrot.slane %v6126, 4
  %v6129 = vshrl.u32 %v6008, 16
  %v6131 = vrot.slane %v6129, 5
  %v6132 = vshll.u32 %v6008, 16
  %v6134 = vrot.slane %v6132, 6
  %v6135 = vor.u32 %v6131, %v6134
  %v6136 = vsel %vm4875, %v6127, %v6135
  %v6138 = vshrl.u32 %v6009, 16
  %v6140 = vrot.slane %v6138, 5
  %v6141 = vshll.u32 %v6009, 16
  %v6143 = vrot.slane %v6141, 6
  %v6144 = vor.u32 %v6140, %v6143
  %v6145 = vrot.slane %v6144, 4
  %v6147 = vshrl.u32 %v6010, 16
  %v6149 = vrot.slane %v6147, 5
  %v6150 = vshll.u32 %v6010, 16
  %v6152 = vrot.slane %v6150, 6
  %v6153 = vor.u32 %v6149, %v6152
  %v6154 = vsel %vm4875, %v6145, %v6153
  %v6156 = vshrl.u32 %v6011, 16
  %v6158 = vrot.slane %v6156, 5
  %v6159 = vshll.u32 %v6011, 16
  %v6161 = vrot.slane %v6159, 6
  %v6162 = vor.u32 %v6158, %v6161
  %v6163 = vrot.slane %v6162, 4
  %v6165 = vshrl.u32 %v6012, 16
  %v6167 = vrot.slane %v6165, 5
  %v6168 = vshll.u32 %v6012, 16
  %v6170 = vrot.slane %v6168, 6
  %v6171 = vor.u32 %v6167, %v6170
  %v6172 = vsel %vm4875, %v6163, %v6171
  %v6174 = vshrl.u32 %v6013, 16
  %v6176 = vrot.slane %v6174, 5
  %v6177 = vshll.u32 %v6013, 16
  %v6179 = vrot.slane %v6177, 6
  %v6180 = vor.u32 %v6176, %v6179
  %v6181 = vrot.slane %v6180, 4
  %v6183 = vshrl.u32 %v6014, 16
  %v6185 = vrot.slane %v6183, 5
  %v6186 = vshll.u32 %v6014, 16
  %v6188 = vrot.slane %v6186, 6
  %v6189 = vor.u32 %v6185, %v6188
  %v6190 = vsel %vm4875, %v6181, %v6189
  %v6192 = vshrl.u32 %v6015, 16
  %v6194 = vrot.slane %v6192, 5
  %v6195 = vshll.u32 %v6015, 16
  %v6197 = vrot.slane %v6195, 6
  %v6198 = vor.u32 %v6194, %v6197
  %v6199 = vrot.slane %v6198, 4
  %v6201 = vshrl.u32 %v6016, 16
  %v6203 = vrot.slane %v6201, 5
  %v6204 = vshll.u32 %v6016, 16
  %v6206 = vrot.slane %v6204, 6
  %v6207 = vor.u32 %v6203, %v6206
  %v6208 = vsel %vm4875, %v6199, %v6207
  %v6210 = vshrl.u32 %v6017, 16
  %v6212 = vrot.slane %v6210, 5
  %v6213 = vshll.u32 %v6017, 16
  %v6215 = vrot.slane %v6213, 6
  %v6216 = vor.u32 %v6212, %v6215
  %v6217 = vrot.slane %v6216, 4
  %v6219 = vshrl.u32 %v6018, 16
  %v6221 = vrot.slane %v6219, 5
  %v6222 = vshll.u32 %v6018, 16
  %v6224 = vrot.slane %v6222, 6
  %v6225 = vor.u32 %v6221, %v6224
  %v6226 = vsel %vm4875, %v6217, %v6225
  %v6228 = vshrl.u32 %v6019, 16
  %v6230 = vrot.slane %v6228, 5
  %v6231 = vshll.u32 %v6019, 16
  %v6233 = vrot.slane %v6231, 6
  %v6234 = vor.u32 %v6230, %v6233
  %v6235 = vrot.slane %v6234, 4
  %v6237 = vshrl.u32 %v6020, 16
  %v6239 = vrot.slane %v6237, 5
  %v6240 = vshll.u32 %v6020, 16
  %v6242 = vrot.slane %v6240, 6
  %v6243 = vor.u32 %v6239, %v6242
  %v6244 = vsel %vm4875, %v6235, %v6243
  %v6246 = vshrl.u32 %v6021, 16
  %v6248 = vrot.slane %v6246, 5
  %v6249 = vshll.u32 %v6021, 16
  %v6251 = vrot.slane %v6249, 6
  %v6252 = vor.u32 %v6248, %v6251
  %v6253 = vrot.slane %v6252, 4
  %v6255 = vshrl.u32 %v6022, 16
  %v6257 = vrot.slane %v6255, 5
  %v6258 = vshll.u32 %v6022, 16
  %v6260 = vrot.slane %v6258, 6
  %v6261 = vor.u32 %v6257, %v6260
  %v6262 = vsel %vm4875, %v6253, %v6261
  %v6264 = vshrl.u32 %v6023, 16
  %v6266 = vrot.slane %v6264, 5
  %v6267 = vshll.u32 %v6023, 16
  %v6269 = vrot.slane %v6267, 6
  %v6270 = vor.u32 %v6266, %v6269
  %v6271 = vrot.slane %v6270, 4
  %v6273 = vshrl.u32 %v6024, 16
  %v6275 = vrot.slane %v6273, 5
  %v6276 = vshll.u32 %v6024, 16
  %v6278 = vrot.slane %v6276, 6
  %v6279 = vor.u32 %v6275, %v6278
  %v6280 = vsel %vm4875, %v6271, %v6279
  %v6282 = vshrl.u32 %v6025, 16
  %v6284 = vrot.slane %v6282, 5
  %v6285 = vshll.u32 %v6025, 16
  %v6287 = vrot.slane %v6285, 6
  %v6288 = vor.u32 %v6284, %v6287
  %v6289 = vrot.slane %v6288, 4
  %v6291 = vshrl.u32 %v6026, 16
  %v6293 = vrot.slane %v6291, 5
  %v6294 = vshll.u32 %v6026, 16
  %v6296 = vrot.slane %v6294, 6
  %v6297 = vor.u32 %v6293, %v6296
  %v6298 = vsel %vm4875, %v6289, %v6297
  %v6300 = vshrl.u32 %v6027, 16
  %v6302 = vrot.slane %v6300, 5
  %v6303 = vshll.u32 %v6027, 16
  %v6305 = vrot.slane %v6303, 6
  %v6306 = vor.u32 %v6302, %v6305
  %v6307 = vrot.slane %v6306, 4
  %v6309 = vshrl.u32 %v6028, 16
  %v6311 = vrot.slane %v6309, 5
  %v6312 = vshll.u32 %v6028, 16
  %v6314 = vrot.slane %v6312, 6
  %v6315 = vor.u32 %v6311, %v6314
  %v6316 = vsel %vm4875, %v6307, %v6315
  %v6317 = vunpack.c.l.b16 %v6046
  %v6318 = vunpack.c.l.b16 %v6064
  %v6319 = vunpack.c.l.b16 %v6082
  %v6320 = vunpack.c.l.b16 %v6100
  %v6321 = vunpack.c.l.b16 %v6118
  %v6322 = vunpack.c.l.b16 %v6136
  %v6323 = vunpack.c.l.b16 %v6154
  %v6324 = vunpack.c.l.b16 %v6172
  %v6325 = vunpack.c.l.b16 %v6190
  %v6326 = vunpack.c.l.b16 %v6208
  %v6327 = vunpack.c.l.b16 %v6226
  %v6328 = vunpack.c.l.b16 %v6244
  %v6329 = vunpack.c.l.b16 %v6262
  %v6330 = vunpack.c.l.b16 %v6280
  %v6331 = vunpack.c.l.b16 %v6298
  %v6332 = vunpack.c.l.b16 %v6316
  %v6333 = vpack.c.b16 %v6318, %v6317
  %v6334 = vpack.c.b16 %v6320, %v6319
  %v6335 = vpack.c.b16 %v6322, %v6321
  %v6336 = vpack.c.b16 %v6324, %v6323
  %v6337 = vpack.c.b16 %v6326, %v6325
  %v6338 = vpack.c.b16 %v6328, %v6327
  %v6339 = vpack.c.b16 %v6330, %v6329
  %v6340 = vpack.c.b16 %v6332, %v6331
  %6341 = vrot.lane.b32.xlu0 %v6333, 64
  %v6342 = vpop.permute.xlu0 %6341
  %6343 = vrot.lane.b32.xlu0 %v6334, 64
  %v6344 = vpop.permute.xlu0 %6343
  %6345 = vrot.lane.b32.xlu0 %v6335, 64
  %v6346 = vpop.permute.xlu0 %6345
  %6347 = vrot.lane.b32.xlu0 %v6336, 64
  %v6348 = vpop.permute.xlu0 %6347
  %6349 = vrot.lane.b32.xlu0 %v6337, 64
  %v6350 = vpop.permute.xlu0 %6349
  %6351 = vrot.lane.b32.xlu0 %v6338, 64
  %v6352 = vpop.permute.xlu0 %6351
  %6353 = vrot.lane.b32.xlu0 %v6339, 64
  %v6354 = vpop.permute.xlu0 %6353
  %6355 = vrot.lane.b32.xlu0 %v6340, 64
  %v6356 = vpop.permute.xlu0 %6355
  %vm6365 = vcmask 589312
  %6366 = vst.msk [vmem:[#allocation3] sm:$0xff] %vm6365, %v6342
  %6367 = vst.msk [vmem:[#allocation3 + $0x10] sm:$0xff] %vm6365, %v6344
  %6368 = vst.msk [vmem:[#allocation3 + $0x20] sm:$0xff] %vm6365, %v6346
  %6369 = vst.msk [vmem:[#allocation3 + $0x30] sm:$0xff] %vm6365, %v6348
  %6370 = vst.msk [vmem:[#allocation3 + $0x40] sm:$0xff] %vm6365, %v6350
  %6371 = vst.msk [vmem:[#allocation3 + $0x50] sm:$0xff] %vm6365, %v6352
  %6372 = vst.msk [vmem:[#allocation3 + $0x60] sm:$0xff] %vm6365, %v6354
  %6373 = vst.msk [vmem:[#allocation3 + $0x70] sm:$0xff] %vm6365, %v6356
  %v6374 = vld [vmem:[%s5409] sm:$0xc]
  %v6375 = vld [vmem:[%s5409 + $0x4] sm:$0x3]
  %v6376 = vld [vmem:[%s5409 + $0x8] sm:$0xc]
  %v6377 = vld [vmem:[%s5409 + $0xc] sm:$0x3]
  %v6378 = vld [vmem:[%s5409 + $0x10] sm:$0xc]
  %v6379 = vld [vmem:[%s5409 + $0x14] sm:$0x3]
  %v6380 = vld [vmem:[%s5409 + $0x18] sm:$0xc]
  %v6381 = vld [vmem:[%s5409 + $0x1c] sm:$0x3]
  %v6382 = vld [vmem:[%s5409 + $0x20] sm:$0xc]
  %v6383 = vld [vmem:[%s5409 + $0x24] sm:$0x3]
  %v6384 = vld [vmem:[%s5409 + $0x28] sm:$0xc]
  %v6385 = vld [vmem:[%s5409 + $0x2c] sm:$0x3]
  %v6386 = vld [vmem:[%s5409 + $0x30] sm:$0xc]
  %v6387 = vld [vmem:[%s5409 + $0x34] sm:$0x3]
  %v6388 = vld [vmem:[%s5409 + $0x38] sm:$0xc]
  %v6389 = vld [vmem:[%s5409 + $0x3c] sm:$0x3]
  %v6390 = vld [vmem:[%s5409 + $0x60] sm:$0xc]
  %v6391 = vld [vmem:[%s5409 + $0x64] sm:$0x3]
  %v6392 = vld [vmem:[%s5409 + $0x68] sm:$0xc]
  %v6393 = vld [vmem:[%s5409 + $0x6c] sm:$0x3]
  %v6394 = vld [vmem:[%s5409 + $0x70] sm:$0xc]
  %v6395 = vld [vmem:[%s5409 + $0x74] sm:$0x3]
  %v6396 = vld [vmem:[%s5409 + $0x78] sm:$0xc]
  %v6397 = vld [vmem:[%s5409 + $0x7c] sm:$0x3]
  %v6398 = vld [vmem:[%s5409 + $0x80] sm:$0xc]
  %v6399 = vld [vmem:[%s5409 + $0x84] sm:$0x3]
  %v6400 = vld [vmem:[%s5409 + $0x88] sm:$0xc]
  %v6401 = vld [vmem:[%s5409 + $0x8c] sm:$0x3]
  %v6402 = vld [vmem:[%s5409 + $0x90] sm:$0xc]
  %v6403 = vld [vmem:[%s5409 + $0x94] sm:$0x3]
  %v6404 = vld [vmem:[%s5409 + $0x98] sm:$0xc]
  %v6405 = vld [vmem:[%s5409 + $0x9c] sm:$0x3]
  %v6438 = vrot.slane %v6374, 6
  %v6439 = vrot.slane %v6438, 4
  %v6440 = vrot.slane %v6375, 6
  %v6441 = vsel %vm5287, %v6439, %v6440
  %v6442 = vrot.slane %v6376, 6
  %v6443 = vrot.slane %v6442, 4
  %v6444 = vrot.slane %v6377, 6
  %v6445 = vsel %vm5287, %v6443, %v6444
  %v6446 = vrot.slane %v6378, 6
  %v6447 = vrot.slane %v6446, 4
  %v6448 = vrot.slane %v6379, 6
  %v6449 = vsel %vm5287, %v6447, %v6448
  %v6450 = vrot.slane %v6380, 6
  %v6451 = vrot.slane %v6450, 4
  %v6452 = vrot.slane %v6381, 6
  %v6453 = vsel %vm5287, %v6451, %v6452
  %v6454 = vrot.slane %v6382, 6
  %v6455 = vrot.slane %v6454, 4
  %v6456 = vrot.slane %v6383, 6
  %v6457 = vsel %vm5287, %v6455, %v6456
  %v6458 = vrot.slane %v6384, 6
  %v6459 = vrot.slane %v6458, 4
  %v6460 = vrot.slane %v6385, 6
  %v6461 = vsel %vm5287, %v6459, %v6460
  %v6462 = vrot.slane %v6386, 6
  %v6463 = vrot.slane %v6462, 4
  %v6464 = vrot.slane %v6387, 6
  %v6465 = vsel %vm5287, %v6463, %v6464
  %v6466 = vrot.slane %v6388, 6
  %v6467 = vrot.slane %v6466, 4
  %v6468 = vrot.slane %v6389, 6
  %v6469 = vsel %vm5287, %v6467, %v6468
  %v6470 = vrot.slane %v6390, 6
  %v6471 = vrot.slane %v6470, 4
  %v6472 = vrot.slane %v6391, 6
  %v6473 = vsel %vm5287, %v6471, %v6472
  %v6474 = vrot.slane %v6392, 6
  %v6475 = vrot.slane %v6474, 4
  %v6476 = vrot.slane %v6393, 6
  %v6477 = vsel %vm5287, %v6475, %v6476
  %v6478 = vrot.slane %v6394, 6
  %v6479 = vrot.slane %v6478, 4
  %v6480 = vrot.slane %v6395, 6
  %v6481 = vsel %vm5287, %v6479, %v6480
  %v6482 = vrot.slane %v6396, 6
  %v6483 = vrot.slane %v6482, 4
  %v6484 = vrot.slane %v6397, 6
  %v6485 = vsel %vm5287, %v6483, %v6484
  %v6486 = vrot.slane %v6398, 6
  %v6487 = vrot.slane %v6486, 4
  %v6488 = vrot.slane %v6399, 6
  %v6489 = vsel %vm5287, %v6487, %v6488
  %v6490 = vrot.slane %v6400, 6
  %v6491 = vrot.slane %v6490, 4
  %v6492 = vrot.slane %v6401, 6
  %v6493 = vsel %vm5287, %v6491, %v6492
  %v6494 = vrot.slane %v6402, 6
  %v6495 = vrot.slane %v6494, 4
  %v6496 = vrot.slane %v6403, 6
  %v6497 = vsel %vm5287, %v6495, %v6496
  %v6498 = vrot.slane %v6404, 6
  %v6499 = vrot.slane %v6498, 4
  %v6500 = vrot.slane %v6405, 6
  %v6501 = vsel %vm5287, %v6499, %v6500
  %v6502 = vunpack.c.l.b16 %v6441
  %v6503 = vunpack.c.l.b16 %v6445
  %v6504 = vunpack.c.l.b16 %v6449
  %v6505 = vunpack.c.l.b16 %v6453
  %v6506 = vunpack.c.l.b16 %v6457
  %v6507 = vunpack.c.l.b16 %v6461
  %v6508 = vunpack.c.l.b16 %v6465
  %v6509 = vunpack.c.l.b16 %v6469
  %v6510 = vunpack.c.l.b16 %v6473
  %v6511 = vunpack.c.l.b16 %v6477
  %v6512 = vunpack.c.l.b16 %v6481
  %v6513 = vunpack.c.l.b16 %v6485
  %v6514 = vunpack.c.l.b16 %v6489
  %v6515 = vunpack.c.l.b16 %v6493
  %v6516 = vunpack.c.l.b16 %v6497
  %v6517 = vunpack.c.l.b16 %v6501
  %v6518 = vpack.c.b16 %v6503, %v6502
  %v6519 = vpack.c.b16 %v6505, %v6504
  %v6520 = vpack.c.b16 %v6507, %v6506
  %v6521 = vpack.c.b16 %v6509, %v6508
  %v6522 = vpack.c.b16 %v6511, %v6510
  %v6523 = vpack.c.b16 %v6513, %v6512
  %v6524 = vpack.c.b16 %v6515, %v6514
  %v6525 = vpack.c.b16 %v6517, %v6516
  %6526 = vrot.lane.b32.xlu0 %v6518, 72
  %v6527 = vpop.permute.xlu0 %6526
  %6528 = vrot.lane.b32.xlu0 %v6519, 72
  %v6529 = vpop.permute.xlu0 %6528
  %6530 = vrot.lane.b32.xlu0 %v6520, 72
  %v6531 = vpop.permute.xlu0 %6530
  %6532 = vrot.lane.b32.xlu0 %v6521, 72
  %v6533 = vpop.permute.xlu0 %6532
  %6534 = vrot.lane.b32.xlu0 %v6522, 72
  %v6535 = vpop.permute.xlu0 %6534
  %6536 = vrot.lane.b32.xlu0 %v6523, 72
  %v6537 = vpop.permute.xlu0 %6536
  %6538 = vrot.lane.b32.xlu0 %v6524, 72
  %v6539 = vpop.permute.xlu0 %6538
  %6540 = vrot.lane.b32.xlu0 %v6525, 72
  %v6541 = vpop.permute.xlu0 %6540
  %vm6550 = vcmask 654912
  %6551 = vst.msk [vmem:[#allocation3] sm:$0xff] %vm6550, %v6527
  %6552 = vst.msk [vmem:[#allocation3 + $0x10] sm:$0xff] %vm6550, %v6529
  %6553 = vst.msk [vmem:[#allocation3 + $0x20] sm:$0xff] %vm6550, %v6531
  %6554 = vst.msk [vmem:[#allocation3 + $0x30] sm:$0xff] %vm6550, %v6533
  %6555 = vst.msk [vmem:[#allocation3 + $0x40] sm:$0xff] %vm6550, %v6535
  %6556 = vst.msk [vmem:[#allocation3 + $0x50] sm:$0xff] %vm6550, %v6537
  %6557 = vst.msk [vmem:[#allocation3 + $0x60] sm:$0xff] %vm6550, %v6539
  %6558 = vst.msk [vmem:[#allocation3 + $0x70] sm:$0xff] %vm6550, %v6541
  %v6559 = vld [vmem:[%s4229] sm:$0xf]
  %v6560 = vld [vmem:[%s4229 + $0x8] sm:$0xf]
  %v6561 = vld [vmem:[%s4229 + $0x10] sm:$0xf]
  %v6562 = vld [vmem:[%s4229 + $0x18] sm:$0xf]
  %v6563 = vld [vmem:[%s4229 + $0x20] sm:$0xf]
  %v6564 = vld [vmem:[%s4229 + $0x28] sm:$0xf]
  %v6565 = vld [vmem:[%s4229 + $0x30] sm:$0xf]
  %v6566 = vld [vmem:[%s4229 + $0x38] sm:$0xf]
  %v6567 = vld [vmem:[%s4229 + $0x60] sm:$0xf]
  %v6568 = vld [vmem:[%s4229 + $0x68] sm:$0xf]
  %v6569 = vld [vmem:[%s4229 + $0x70] sm:$0xf]
  %v6570 = vld [vmem:[%s4229 + $0x78] sm:$0xf]
  %v6571 = vld [vmem:[%s4229 + $0x80] sm:$0xf]
  %v6572 = vld [vmem:[%s4229 + $0x88] sm:$0xf]
  %v6573 = vld [vmem:[%s4229 + $0x90] sm:$0xf]
  %v6574 = vld [vmem:[%s4229 + $0x98] sm:$0xf]
  %v6591 = vunpack.c.l.b16 %v6559
  %v6592 = vunpack.c.l.b16 %v6560
  %v6593 = vunpack.c.l.b16 %v6561
  %v6594 = vunpack.c.l.b16 %v6562
  %v6595 = vunpack.c.l.b16 %v6563
  %v6596 = vunpack.c.l.b16 %v6564
  %v6597 = vunpack.c.l.b16 %v6565
  %v6598 = vunpack.c.l.b16 %v6566
  %v6599 = vunpack.c.l.b16 %v6567
  %v6600 = vunpack.c.l.b16 %v6568
  %v6601 = vunpack.c.l.b16 %v6569
  %v6602 = vunpack.c.l.b16 %v6570
  %v6603 = vunpack.c.l.b16 %v6571
  %v6604 = vunpack.c.l.b16 %v6572
  %v6605 = vunpack.c.l.b16 %v6573
  %v6606 = vunpack.c.l.b16 %v6574
  %v6607 = vpack.c.b16 %v6592, %v6591
  %v6608 = vpack.c.b16 %v6594, %v6593
  %v6609 = vpack.c.b16 %v6596, %v6595
  %v6610 = vpack.c.b16 %v6598, %v6597
  %v6611 = vpack.c.b16 %v6600, %v6599
  %v6612 = vpack.c.b16 %v6602, %v6601
  %v6613 = vpack.c.b16 %v6604, %v6603
  %v6614 = vpack.c.b16 %v6606, %v6605
  %6615 = vrot.lane.b32.xlu0 %v6607, 80
  %v6616 = vpop.permute.xlu0 %6615
  %6617 = vrot.lane.b32.xlu0 %v6608, 80
  %v6618 = vpop.permute.xlu0 %6617
  %6619 = vrot.lane.b32.xlu0 %v6609, 80
  %v6620 = vpop.permute.xlu0 %6619
  %6621 = vrot.lane.b32.xlu0 %v6610, 80
  %v6622 = vpop.permute.xlu0 %6621
  %6623 = vrot.lane.b32.xlu0 %v6611, 80
  %v6624 = vpop.permute.xlu0 %6623
  %6625 = vrot.lane.b32.xlu0 %v6612, 80
  %v6626 = vpop.permute.xlu0 %6625
  %6627 = vrot.lane.b32.xlu0 %v6613, 80
  %v6628 = vpop.permute.xlu0 %6627
  %6629 = vrot.lane.b32.xlu0 %v6614, 80
  %v6630 = vpop.permute.xlu0 %6629
  %vm6639 = vcmask 720512
  %6640 = vst.msk [vmem:[#allocation3] sm:$0xff] %vm6639, %v6616
  %6641 = vst.msk [vmem:[#allocation3 + $0x10] sm:$0xff] %vm6639, %v6618
  %6642 = vst.msk [vmem:[#allocation3 + $0x20] sm:$0xff] %vm6639, %v6620
  %6643 = vst.msk [vmem:[#allocation3 + $0x30] sm:$0xff] %vm6639, %v6622
  %6644 = vst.msk [vmem:[#allocation3 + $0x40] sm:$0xff] %vm6639, %v6624
  %6645 = vst.msk [vmem:[#allocation3 + $0x50] sm:$0xff] %vm6639, %v6626
  %6646 = vst.msk [vmem:[#allocation3 + $0x60] sm:$0xff] %vm6639, %v6628
  %6647 = vst.msk [vmem:[#allocation3 + $0x70] sm:$0xff] %vm6639, %v6630
  %v6648 = vld [vmem:[%s4229] sm:$0xf]
  %v6649 = vld [vmem:[%s4229 + $0x4] sm:$0x1]
  %v6650 = vld [vmem:[%s4229 + $0x8] sm:$0xf]
  %v6651 = vld [vmem:[%s4229 + $0xc] sm:$0x1]
  %v6652 = vld [vmem:[%s4229 + $0x10] sm:$0xf]
  %v6653 = vld [vmem:[%s4229 + $0x14] sm:$0x1]
  %v6654 = vld [vmem:[%s4229 + $0x18] sm:$0xf]
  %v6655 = vld [vmem:[%s4229 + $0x1c] sm:$0x1]
  %v6656 = vld [vmem:[%s4229 + $0x20] sm:$0xf]
  %v6657 = vld [vmem:[%s4229 + $0x24] sm:$0x1]
  %v6658 = vld [vmem:[%s4229 + $0x28] sm:$0xf]
  %v6659 = vld [vmem:[%s4229 + $0x2c] sm:$0x1]
  %v6660 = vld [vmem:[%s4229 + $0x30] sm:$0xf]
  %v6661 = vld [vmem:[%s4229 + $0x34] sm:$0x1]
  %v6662 = vld [vmem:[%s4229 + $0x38] sm:$0xf]
  %v6663 = vld [vmem:[%s4229 + $0x3c] sm:$0x1]
  %v6664 = vld [vmem:[%s4229 + $0x60] sm:$0xf]
  %v6665 = vld [vmem:[%s4229 + $0x64] sm:$0x1]
  %v6666 = vld [vmem:[%s4229 + $0x68] sm:$0xf]
  %v6667 = vld [vmem:[%s4229 + $0x6c] sm:$0x1]
  %v6668 = vld [vmem:[%s4229 + $0x70] sm:$0xf]
  %v6669 = vld [vmem:[%s4229 + $0x74] sm:$0x1]
  %v6670 = vld [vmem:[%s4229 + $0x78] sm:$0xf]
  %v6671 = vld [vmem:[%s4229 + $0x7c] sm:$0x1]
  %v6672 = vld [vmem:[%s4229 + $0x80] sm:$0xf]
  %v6673 = vld [vmem:[%s4229 + $0x84] sm:$0x1]
  %v6674 = vld [vmem:[%s4229 + $0x88] sm:$0xf]
  %v6675 = vld [vmem:[%s4229 + $0x8c] sm:$0x1]
  %v6676 = vld [vmem:[%s4229 + $0x90] sm:$0xf]
  %v6677 = vld [vmem:[%s4229 + $0x94] sm:$0x1]
  %v6678 = vld [vmem:[%s4229 + $0x98] sm:$0xf]
  %v6679 = vld [vmem:[%s4229 + $0x9c] sm:$0x1]
  %v6681 = vshrl.u32 %v6648, 16
  %v6683 = vrot.slane %v6681, 4
  %v6684 = vshll.u32 %v6648, 16
  %v6686 = vrot.slane %v6684, 5
  %v6687 = vor.u32 %v6683, %v6686
  %v6688 = vrot.slane %v6687, 4
  %v6690 = vshll.u32 %v6649, 16
  %v6692 = vrot.slane %v6690, 5
  %v6693 = vsel %vm4371, %v6688, %v6692
  %v6695 = vshrl.u32 %v6650, 16
  %v6697 = vrot.slane %v6695, 4
  %v6698 = vshll.u32 %v6650, 16
  %v6700 = vrot.slane %v6698, 5
  %v6701 = vor.u32 %v6697, %v6700
  %v6702 = vrot.slane %v6701, 4
  %v6704 = vshll.u32 %v6651, 16
  %v6706 = vrot.slane %v6704, 5
  %v6707 = vsel %vm4371, %v6702, %v6706
  %v6709 = vshrl.u32 %v6652, 16
  %v6711 = vrot.slane %v6709, 4
  %v6712 = vshll.u32 %v6652, 16
  %v6714 = vrot.slane %v6712, 5
  %v6715 = vor.u32 %v6711, %v6714
  %v6716 = vrot.slane %v6715, 4
  %v6718 = vshll.u32 %v6653, 16
  %v6720 = vrot.slane %v6718, 5
  %v6721 = vsel %vm4371, %v6716, %v6720
  %v6723 = vshrl.u32 %v6654, 16
  %v6725 = vrot.slane %v6723, 4
  %v6726 = vshll.u32 %v6654, 16
  %v6728 = vrot.slane %v6726, 5
  %v6729 = vor.u32 %v6725, %v6728
  %v6730 = vrot.slane %v6729, 4
  %v6732 = vshll.u32 %v6655, 16
  %v6734 = vrot.slane %v6732, 5
  %v6735 = vsel %vm4371, %v6730, %v6734
  %v6737 = vshrl.u32 %v6656, 16
  %v6739 = vrot.slane %v6737, 4
  %v6740 = vshll.u32 %v6656, 16
  %v6742 = vrot.slane %v6740, 5
  %v6743 = vor.u32 %v6739, %v6742
  %v6744 = vrot.slane %v6743, 4
  %v6746 = vshll.u32 %v6657, 16
  %v6748 = vrot.slane %v6746, 5
  %v6749 = vsel %vm4371, %v6744, %v6748
  %v6751 = vshrl.u32 %v6658, 16
  %v6753 = vrot.slane %v6751, 4
  %v6754 = vshll.u32 %v6658, 16
  %v6756 = vrot.slane %v6754, 5
  %v6757 = vor.u32 %v6753, %v6756
  %v6758 = vrot.slane %v6757, 4
  %v6760 = vshll.u32 %v6659, 16
  %v6762 = vrot.slane %v6760, 5
  %v6763 = vsel %vm4371, %v6758, %v6762
  %v6765 = vshrl.u32 %v6660, 16
  %v6767 = vrot.slane %v6765, 4
  %v6768 = vshll.u32 %v6660, 16
  %v6770 = vrot.slane %v6768, 5
  %v6771 = vor.u32 %v6767, %v6770
  %v6772 = vrot.slane %v6771, 4
  %v6774 = vshll.u32 %v6661, 16
  %v6776 = vrot.slane %v6774, 5
  %v6777 = vsel %vm4371, %v6772, %v6776
  %v6779 = vshrl.u32 %v6662, 16
  %v6781 = vrot.slane %v6779, 4
  %v6782 = vshll.u32 %v6662, 16
  %v6784 = vrot.slane %v6782, 5
  %v6785 = vor.u32 %v6781, %v6784
  %v6786 = vrot.slane %v6785, 4
  %v6788 = vshll.u32 %v6663, 16
  %v6790 = vrot.slane %v6788, 5
  %v6791 = vsel %vm4371, %v6786, %v6790
  %v6793 = vshrl.u32 %v6664, 16
  %v6795 = vrot.slane %v6793, 4
  %v6796 = vshll.u32 %v6664, 16
  %v6798 = vrot.slane %v6796, 5
  %v6799 = vor.u32 %v6795, %v6798
  %v6800 = vrot.slane %v6799, 4
  %v6802 = vshll.u32 %v6665, 16
  %v6804 = vrot.slane %v6802, 5
  %v6805 = vsel %vm4371, %v6800, %v6804
  %v6807 = vshrl.u32 %v6666, 16
  %v6809 = vrot.slane %v6807, 4
  %v6810 = vshll.u32 %v6666, 16
  %v6812 = vrot.slane %v6810, 5
  %v6813 = vor.u32 %v6809, %v6812
  %v6814 = vrot.slane %v6813, 4
  %v6816 = vshll.u32 %v6667, 16
  %v6818 = vrot.slane %v6816, 5
  %v6819 = vsel %vm4371, %v6814, %v6818
  %v6821 = vshrl.u32 %v6668, 16
  %v6823 = vrot.slane %v6821, 4
  %v6824 = vshll.u32 %v6668, 16
  %v6826 = vrot.slane %v6824, 5
  %v6827 = vor.u32 %v6823, %v6826
  %v6828 = vrot.slane %v6827, 4
  %v6830 = vshll.u32 %v6669, 16
  %v6832 = vrot.slane %v6830, 5
  %v6833 = vsel %vm4371, %v6828, %v6832
  %v6835 = vshrl.u32 %v6670, 16
  %v6837 = vrot.slane %v6835, 4
  %v6838 = vshll.u32 %v6670, 16
  %v6840 = vrot.slane %v6838, 5
  %v6841 = vor.u32 %v6837, %v6840
  %v6842 = vrot.slane %v6841, 4
  %v6844 = vshll.u32 %v6671, 16
  %v6846 = vrot.slane %v6844, 5
  %v6847 = vsel %vm4371, %v6842, %v6846
  %v6849 = vshrl.u32 %v6672, 16
  %v6851 = vrot.slane %v6849, 4
  %v6852 = vshll.u32 %v6672, 16
  %v6854 = vrot.slane %v6852, 5
  %v6855 = vor.u32 %v6851, %v6854
  %v6856 = vrot.slane %v6855, 4
  %v6858 = vshll.u32 %v6673, 16
  %v6860 = vrot.slane %v6858, 5
  %v6861 = vsel %vm4371, %v6856, %v6860
  %v6863 = vshrl.u32 %v6674, 16
  %v6865 = vrot.slane %v6863, 4
  %v6866 = vshll.u32 %v6674, 16
  %v6868 = vrot.slane %v6866, 5
  %v6869 = vor.u32 %v6865, %v6868
  %v6870 = vrot.slane %v6869, 4
  %v6872 = vshll.u32 %v6675, 16
  %v6874 = vrot.slane %v6872, 5
  %v6875 = vsel %vm4371, %v6870, %v6874
  %v6877 = vshrl.u32 %v6676, 16
  %v6879 = vrot.slane %v6877, 4
  %v6880 = vshll.u32 %v6676, 16
  %v6882 = vrot.slane %v6880, 5
  %v6883 = vor.u32 %v6879, %v6882
  %v6884 = vrot.slane %v6883, 4
  %v6886 = vshll.u32 %v6677, 16
  %v6888 = vrot.slane %v6886, 5
  %v6889 = vsel %vm4371, %v6884, %v6888
  %v6891 = vshrl.u32 %v6678, 16
  %v6893 = vrot.slane %v6891, 4
  %v6894 = vshll.u32 %v6678, 16
  %v6896 = vrot.slane %v6894, 5
  %v6897 = vor.u32 %v6893, %v6896
  %v6898 = vrot.slane %v6897, 4
  %v6900 = vshll.u32 %v6679, 16
  %v6902 = vrot.slane %v6900, 5
  %v6903 = vsel %vm4371, %v6898, %v6902
  %v6904 = vunpack.c.l.b16 %v6693
  %v6905 = vunpack.c.l.b16 %v6707
  %v6906 = vunpack.c.l.b16 %v6721
  %v6907 = vunpack.c.l.b16 %v6735
  %v6908 = vunpack.c.l.b16 %v6749
  %v6909 = vunpack.c.l.b16 %v6763
  %v6910 = vunpack.c.l.b16 %v6777
  %v6911 = vunpack.c.l.b16 %v6791
  %v6912 = vunpack.c.l.b16 %v6805
  %v6913 = vunpack.c.l.b16 %v6819
  %v6914 = vunpack.c.l.b16 %v6833
  %v6915 = vunpack.c.l.b16 %v6847
  %v6916 = vunpack.c.l.b16 %v6861
  %v6917 = vunpack.c.l.b16 %v6875
  %v6918 = vunpack.c.l.b16 %v6889
  %v6919 = vunpack.c.l.b16 %v6903
  %v6920 = vpack.c.b16 %v6905, %v6904
  %v6921 = vpack.c.b16 %v6907, %v6906
  %v6922 = vpack.c.b16 %v6909, %v6908
  %v6923 = vpack.c.b16 %v6911, %v6910
  %v6924 = vpack.c.b16 %v6913, %v6912
  %v6925 = vpack.c.b16 %v6915, %v6914
  %v6926 = vpack.c.b16 %v6917, %v6916
  %v6927 = vpack.c.b16 %v6919, %v6918
  %6928 = vrot.lane.b32.xlu0 %v6920, 88
  %v6929 = vpop.permute.xlu0 %6928
  %6930 = vrot.lane.b32.xlu0 %v6921, 88
  %v6931 = vpop.permute.xlu0 %6930
  %6932 = vrot.lane.b32.xlu0 %v6922, 88
  %v6933 = vpop.permute.xlu0 %6932
  %6934 = vrot.lane.b32.xlu0 %v6923, 88
  %v6935 = vpop.permute.xlu0 %6934
  %6936 = vrot.lane.b32.xlu0 %v6924, 88
  %v6937 = vpop.permute.xlu0 %6936
  %6938 = vrot.lane.b32.xlu0 %v6925, 88
  %v6939 = vpop.permute.xlu0 %6938
  %6940 = vrot.lane.b32.xlu0 %v6926, 88
  %v6941 = vpop.permute.xlu0 %6940
  %6942 = vrot.lane.b32.xlu0 %v6927, 88
  %v6943 = vpop.permute.xlu0 %6942
  %vm6952 = vcmask 786112
  %6953 = vst.msk [vmem:[#allocation3] sm:$0xff] %vm6952, %v6929
  %6954 = vst.msk [vmem:[#allocation3 + $0x10] sm:$0xff] %vm6952, %v6931
  %6955 = vst.msk [vmem:[#allocation3 + $0x20] sm:$0xff] %vm6952, %v6933
  %6956 = vst.msk [vmem:[#allocation3 + $0x30] sm:$0xff] %vm6952, %v6935
  %6957 = vst.msk [vmem:[#allocation3 + $0x40] sm:$0xff] %vm6952, %v6937
  %6958 = vst.msk [vmem:[#allocation3 + $0x50] sm:$0xff] %vm6952, %v6939
  %6959 = vst.msk [vmem:[#allocation3 + $0x60] sm:$0xff] %vm6952, %v6941
  %6960 = vst.msk [vmem:[#allocation3 + $0x70] sm:$0xff] %vm6952, %v6943
  %v6961 = vld [vmem:[%s4229] sm:$0xe]
  %v6962 = vld [vmem:[%s4229 + $0x4] sm:$0x1]
  %v6963 = vld [vmem:[%s4229 + $0x8] sm:$0xe]
  %v6964 = vld [vmem:[%s4229 + $0xc] sm:$0x1]
  %v6965 = vld [vmem:[%s4229 + $0x10] sm:$0xe]
  %v6966 = vld [vmem:[%s4229 + $0x14] sm:$0x1]
  %v6967 = vld [vmem:[%s4229 + $0x18] sm:$0xe]
  %v6968 = vld [vmem:[%s4229 + $0x1c] sm:$0x1]
  %v6969 = vld [vmem:[%s4229 + $0x20] sm:$0xe]
  %v6970 = vld [vmem:[%s4229 + $0x24] sm:$0x1]
  %v6971 = vld [vmem:[%s4229 + $0x28] sm:$0xe]
  %v6972 = vld [vmem:[%s4229 + $0x2c] sm:$0x1]
  %v6973 = vld [vmem:[%s4229 + $0x30] sm:$0xe]
  %v6974 = vld [vmem:[%s4229 + $0x34] sm:$0x1]
  %v6975 = vld [vmem:[%s4229 + $0x38] sm:$0xe]
  %v6976 = vld [vmem:[%s4229 + $0x3c] sm:$0x1]
  %v6977 = vld [vmem:[%s4229 + $0x60] sm:$0xe]
  %v6978 = vld [vmem:[%s4229 + $0x64] sm:$0x1]
  %v6979 = vld [vmem:[%s4229 + $0x68] sm:$0xe]
  %v6980 = vld [vmem:[%s4229 + $0x6c] sm:$0x1]
  %v6981 = vld [vmem:[%s4229 + $0x70] sm:$0xe]
  %v6982 = vld [vmem:[%s4229 + $0x74] sm:$0x1]
  %v6983 = vld [vmem:[%s4229 + $0x78] sm:$0xe]
  %v6984 = vld [vmem:[%s4229 + $0x7c] sm:$0x1]
  %v6985 = vld [vmem:[%s4229 + $0x80] sm:$0xe]
  %v6986 = vld [vmem:[%s4229 + $0x84] sm:$0x1]
  %v6987 = vld [vmem:[%s4229 + $0x88] sm:$0xe]
  %v6988 = vld [vmem:[%s4229 + $0x8c] sm:$0x1]
  %v6989 = vld [vmem:[%s4229 + $0x90] sm:$0xe]
  %v6990 = vld [vmem:[%s4229 + $0x94] sm:$0x1]
  %v6991 = vld [vmem:[%s4229 + $0x98] sm:$0xe]
  %v6992 = vld [vmem:[%s4229 + $0x9c] sm:$0x1]
  %v7025 = vrot.slane %v6961, 5
  %v7026 = vrot.slane %v7025, 4
  %v7027 = vrot.slane %v6962, 5
  %v7028 = vsel %vm4719, %v7026, %v7027
  %v7029 = vrot.slane %v6963, 5
  %v7030 = vrot.slane %v7029, 4
  %v7031 = vrot.slane %v6964, 5
  %v7032 = vsel %vm4719, %v7030, %v7031
  %v7033 = vrot.slane %v6965, 5
  %v7034 = vrot.slane %v7033, 4
  %v7035 = vrot.slane %v6966, 5
  %v7036 = vsel %vm4719, %v7034, %v7035
  %v7037 = vrot.slane %v6967, 5
  %v7038 = vrot.slane %v7037, 4
  %v7039 = vrot.slane %v6968, 5
  %v7040 = vsel %vm4719, %v7038, %v7039
  %v7041 = vrot.slane %v6969, 5
  %v7042 = vrot.slane %v7041, 4
  %v7043 = vrot.slane %v6970, 5
  %v7044 = vsel %vm4719, %v7042, %v7043
  %v7045 = vrot.slane %v6971, 5
  %v7046 = vrot.slane %v7045, 4
  %v7047 = vrot.slane %v6972, 5
  %v7048 = vsel %vm4719, %v7046, %v7047
  %v7049 = vrot.slane %v6973, 5
  %v7050 = vrot.slane %v7049, 4
  %v7051 = vrot.slane %v6974, 5
  %v7052 = vsel %vm4719, %v7050, %v7051
  %v7053 = vrot.slane %v6975, 5
  %v7054 = vrot.slane %v7053, 4
  %v7055 = vrot.slane %v6976, 5
  %v7056 = vsel %vm4719, %v7054, %v7055
  %v7057 = vrot.slane %v6977, 5
  %v7058 = vrot.slane %v7057, 4
  %v7059 = vrot.slane %v6978, 5
  %v7060 = vsel %vm4719, %v7058, %v7059
  %v7061 = vrot.slane %v6979, 5
  %v7062 = vrot.slane %v7061, 4
  %v7063 = vrot.slane %v6980, 5
  %v7064 = vsel %vm4719, %v7062, %v7063
  %v7065 = vrot.slane %v6981, 5
  %v7066 = vrot.slane %v7065, 4
  %v7067 = vrot.slane %v6982, 5
  %v7068 = vsel %vm4719, %v7066, %v7067
  %v7069 = vrot.slane %v6983, 5
  %v7070 = vrot.slane %v7069, 4
  %v7071 = vrot.slane %v6984, 5
  %v7072 = vsel %vm4719, %v7070, %v7071
  %v7073 = vrot.slane %v6985, 5
  %v7074 = vrot.slane %v7073, 4
  %v7075 = vrot.slane %v6986, 5
  %v7076 = vsel %vm4719, %v7074, %v7075
  %v7077 = vrot.slane %v6987, 5
  %v7078 = vrot.slane %v7077, 4
  %v7079 = vrot.slane %v6988, 5
  %v7080 = vsel %vm4719, %v7078, %v7079
  %v7081 = vrot.slane %v6989, 5
  %v7082 = vrot.slane %v7081, 4
  %v7083 = vrot.slane %v6990, 5
  %v7084 = vsel %vm4719, %v7082, %v7083
  %v7085 = vrot.slane %v6991, 5
  %v7086 = vrot.slane %v7085, 4
  %v7087 = vrot.slane %v6992, 5
  %v7088 = vsel %vm4719, %v7086, %v7087
  %v7089 = vunpack.c.l.b16 %v7028
  %v7090 = vunpack.c.l.b16 %v7032
  %v7091 = vunpack.c.l.b16 %v7036
  %v7092 = vunpack.c.l.b16 %v7040
  %v7093 = vunpack.c.l.b16 %v7044
  %v7094 = vunpack.c.l.b16 %v7048
  %v7095 = vunpack.c.l.b16 %v7052
  %v7096 = vunpack.c.l.b16 %v7056
  %v7097 = vunpack.c.l.b16 %v7060
  %v7098 = vunpack.c.l.b16 %v7064
  %v7099 = vunpack.c.l.b16 %v7068
  %v7100 = vunpack.c.l.b16 %v7072
  %v7101 = vunpack.c.l.b16 %v7076
  %v7102 = vunpack.c.l.b16 %v7080
  %v7103 = vunpack.c.l.b16 %v7084
  %v7104 = vunpack.c.l.b16 %v7088
  %v7105 = vpack.c.b16 %v7090, %v7089
  %v7106 = vpack.c.b16 %v7092, %v7091
  %v7107 = vpack.c.b16 %v7094, %v7093
  %v7108 = vpack.c.b16 %v7096, %v7095
  %v7109 = vpack.c.b16 %v7098, %v7097
  %v7110 = vpack.c.b16 %v7100, %v7099
  %v7111 = vpack.c.b16 %v7102, %v7101
  %v7112 = vpack.c.b16 %v7104, %v7103
  %7113 = vrot.lane.b32.xlu0 %v7105, 96
  %v7114 = vpop.permute.xlu0 %7113
  %7115 = vrot.lane.b32.xlu0 %v7106, 96
  %v7116 = vpop.permute.xlu0 %7115
  %7117 = vrot.lane.b32.xlu0 %v7107, 96
  %v7118 = vpop.permute.xlu0 %7117
  %7119 = vrot.lane.b32.xlu0 %v7108, 96
  %v7120 = vpop.permute.xlu0 %7119
  %7121 = vrot.lane.b32.xlu0 %v7109, 96
  %v7122 = vpop.permute.xlu0 %7121
  %7123 = vrot.lane.b32.xlu0 %v7110, 96
  %v7124 = vpop.permute.xlu0 %7123
  %7125 = vrot.lane.b32.xlu0 %v7111, 96
  %v7126 = vpop.permute.xlu0 %7125
  %7127 = vrot.lane.b32.xlu0 %v7112, 96
  %v7128 = vpop.permute.xlu0 %7127
  %vm7137 = vcmask 851712
  %7138 = vst.msk [vmem:[#allocation3] sm:$0xff] %vm7137, %v7114
  %7139 = vst.msk [vmem:[#allocation3 + $0x10] sm:$0xff] %vm7137, %v7116
  %7140 = vst.msk [vmem:[#allocation3 + $0x20] sm:$0xff] %vm7137, %v7118
  %7141 = vst.msk [vmem:[#allocation3 + $0x30] sm:$0xff] %vm7137, %v7120
  %7142 = vst.msk [vmem:[#allocation3 + $0x40] sm:$0xff] %vm7137, %v7122
  %7143 = vst.msk [vmem:[#allocation3 + $0x50] sm:$0xff] %vm7137, %v7124
  %7144 = vst.msk [vmem:[#allocation3 + $0x60] sm:$0xff] %vm7137, %v7126
  %7145 = vst.msk [vmem:[#allocation3 + $0x70] sm:$0xff] %vm7137, %v7128
  %v7146 = vld [vmem:[%s4229] sm:$0xe]
  %v7147 = vld [vmem:[%s4229 + $0x4] sm:$0x3]
  %v7148 = vld [vmem:[%s4229 + $0x8] sm:$0xe]
  %v7149 = vld [vmem:[%s4229 + $0xc] sm:$0x3]
  %v7150 = vld [vmem:[%s4229 + $0x10] sm:$0xe]
  %v7151 = vld [vmem:[%s4229 + $0x14] sm:$0x3]
  %v7152 = vld [vmem:[%s4229 + $0x18] sm:$0xe]
  %v7153 = vld [vmem:[%s4229 + $0x1c] sm:$0x3]
  %v7154 = vld [vmem:[%s4229 + $0x20] sm:$0xe]
  %v7155 = vld [vmem:[%s4229 + $0x24] sm:$0x3]
  %v7156 = vld [vmem:[%s4229 + $0x28] sm:$0xe]
  %v7157 = vld [vmem:[%s4229 + $0x2c] sm:$0x3]
  %v7158 = vld [vmem:[%s4229 + $0x30] sm:$0xe]
  %v7159 = vld [vmem:[%s4229 + $0x34] sm:$0x3]
  %v7160 = vld [vmem:[%s4229 + $0x38] sm:$0xe]
  %v7161 = vld [vmem:[%s4229 + $0x3c] sm:$0x3]
  %v7162 = vld [vmem:[%s4229 + $0x60] sm:$0xe]
  %v7163 = vld [vmem:[%s4229 + $0x64] sm:$0x3]
  %v7164 = vld [vmem:[%s4229 + $0x68] sm:$0xe]
  %v7165 = vld [vmem:[%s4229 + $0x6c] sm:$0x3]
  %v7166 = vld [vmem:[%s4229 + $0x70] sm:$0xe]
  %v7167 = vld [vmem:[%s4229 + $0x74] sm:$0x3]
  %v7168 = vld [vmem:[%s4229 + $0x78] sm:$0xe]
  %v7169 = vld [vmem:[%s4229 + $0x7c] sm:$0x3]
  %v7170 = vld [vmem:[%s4229 + $0x80] sm:$0xe]
  %v7171 = vld [vmem:[%s4229 + $0x84] sm:$0x3]
  %v7172 = vld [vmem:[%s4229 + $0x88] sm:$0xe]
  %v7173 = vld [vmem:[%s4229 + $0x8c] sm:$0x3]
  %v7174 = vld [vmem:[%s4229 + $0x90] sm:$0xe]
  %v7175 = vld [vmem:[%s4229 + $0x94] sm:$0x3]
  %v7176 = vld [vmem:[%s4229 + $0x98] sm:$0xe]
  %v7177 = vld [vmem:[%s4229 + $0x9c] sm:$0x3]
  %v7179 = vshrl.u32 %v7146, 16
  %v7181 = vrot.slane %v7179, 5
  %v7182 = vshll.u32 %v7146, 16
  %v7184 = vrot.slane %v7182, 6
  %v7185 = vor.u32 %v7181, %v7184
  %v7186 = vrot.slane %v7185, 4
  %v7188 = vshrl.u32 %v7147, 16
  %v7190 = vrot.slane %v7188, 5
  %v7191 = vshll.u32 %v7147, 16
  %v7193 = vrot.slane %v7191, 6
  %v7194 = vor.u32 %v7190, %v7193
  %v7195 = vsel %vm4875, %v7186, %v7194
  %v7197 = vshrl.u32 %v7148, 16
  %v7199 = vrot.slane %v7197, 5
  %v7200 = vshll.u32 %v7148, 16
  %v7202 = vrot.slane %v7200, 6
  %v7203 = vor.u32 %v7199, %v7202
  %v7204 = vrot.slane %v7203, 4
  %v7206 = vshrl.u32 %v7149, 16
  %v7208 = vrot.slane %v7206, 5
  %v7209 = vshll.u32 %v7149, 16
  %v7211 = vrot.slane %v7209, 6
  %v7212 = vor.u32 %v7208, %v7211
  %v7213 = vsel %vm4875, %v7204, %v7212
  %v7215 = vshrl.u32 %v7150, 16
  %v7217 = vrot.slane %v7215, 5
  %v7218 = vshll.u32 %v7150, 16
  %v7220 = vrot.slane %v7218, 6
  %v7221 = vor.u32 %v7217, %v7220
  %v7222 = vrot.slane %v7221, 4
  %v7224 = vshrl.u32 %v7151, 16
  %v7226 = vrot.slane %v7224, 5
  %v7227 = vshll.u32 %v7151, 16
  %v7229 = vrot.slane %v7227, 6
  %v7230 = vor.u32 %v7226, %v7229
  %v7231 = vsel %vm4875, %v7222, %v7230
  %v7233 = vshrl.u32 %v7152, 16
  %v7235 = vrot.slane %v7233, 5
  %v7236 = vshll.u32 %v7152, 16
  %v7238 = vrot.slane %v7236, 6
  %v7239 = vor.u32 %v7235, %v7238
  %v7240 = vrot.slane %v7239, 4
  %v7242 = vshrl.u32 %v7153, 16
  %v7244 = vrot.slane %v7242, 5
  %v7245 = vshll.u32 %v7153, 16
  %v7247 = vrot.slane %v7245, 6
  %v7248 = vor.u32 %v7244, %v7247
  %v7249 = vsel %vm4875, %v7240, %v7248
  %v7251 = vshrl.u32 %v7154, 16
  %v7253 = vrot.slane %v7251, 5
  %v7254 = vshll.u32 %v7154, 16
  %v7256 = vrot.slane %v7254, 6
  %v7257 = vor.u32 %v7253, %v7256
  %v7258 = vrot.slane %v7257, 4
  %v7260 = vshrl.u32 %v7155, 16
  %v7262 = vrot.slane %v7260, 5
  %v7263 = vshll.u32 %v7155, 16
  %v7265 = vrot.slane %v7263, 6
  %v7266 = vor.u32 %v7262, %v7265
  %v7267 = vsel %vm4875, %v7258, %v7266
  %v7269 = vshrl.u32 %v7156, 16
  %v7271 = vrot.slane %v7269, 5
  %v7272 = vshll.u32 %v7156, 16
  %v7274 = vrot.slane %v7272, 6
  %v7275 = vor.u32 %v7271, %v7274
  %v7276 = vrot.slane %v7275, 4
  %v7278 = vshrl.u32 %v7157, 16
  %v7280 = vrot.slane %v7278, 5
  %v7281 = vshll.u32 %v7157, 16
  %v7283 = vrot.slane %v7281, 6
  %v7284 = vor.u32 %v7280, %v7283
  %v7285 = vsel %vm4875, %v7276, %v7284
  %v7287 = vshrl.u32 %v7158, 16
  %v7289 = vrot.slane %v7287, 5
  %v7290 = vshll.u32 %v7158, 16
  %v7292 = vrot.slane %v7290, 6
  %v7293 = vor.u32 %v7289, %v7292
  %v7294 = vrot.slane %v7293, 4
  %v7296 = vshrl.u32 %v7159, 16
  %v7298 = vrot.slane %v7296, 5
  %v7299 = vshll.u32 %v7159, 16
  %v7301 = vrot.slane %v7299, 6
  %v7302 = vor.u32 %v7298, %v7301
  %v7303 = vsel %vm4875, %v7294, %v7302
  %v7305 = vshrl.u32 %v7160, 16
  %v7307 = vrot.slane %v7305, 5
  %v7308 = vshll.u32 %v7160, 16
  %v7310 = vrot.slane %v7308, 6
  %v7311 = vor.u32 %v7307, %v7310
  %v7312 = vrot.slane %v7311, 4
  %v7314 = vshrl.u32 %v7161, 16
  %v7316 = vrot.slane %v7314, 5
  %v7317 = vshll.u32 %v7161, 16
  %v7319 = vrot.slane %v7317, 6
  %v7320 = vor.u32 %v7316, %v7319
  %v7321 = vsel %vm4875, %v7312, %v7320
  %v7323 = vshrl.u32 %v7162, 16
  %v7325 = vrot.slane %v7323, 5
  %v7326 = vshll.u32 %v7162, 16
  %v7328 = vrot.slane %v7326, 6
  %v7329 = vor.u32 %v7325, %v7328
  %v7330 = vrot.slane %v7329, 4
  %v7332 = vshrl.u32 %v7163, 16
  %v7334 = vrot.slane %v7332, 5
  %v7335 = vshll.u32 %v7163, 16
  %v7337 = vrot.slane %v7335, 6
  %v7338 = vor.u32 %v7334, %v7337
  %v7339 = vsel %vm4875, %v7330, %v7338
  %v7341 = vshrl.u32 %v7164, 16
  %v7343 = vrot.slane %v7341, 5
  %v7344 = vshll.u32 %v7164, 16
  %v7346 = vrot.slane %v7344, 6
  %v7347 = vor.u32 %v7343, %v7346
  %v7348 = vrot.slane %v7347, 4
  %v7350 = vshrl.u32 %v7165, 16
  %v7352 = vrot.slane %v7350, 5
  %v7353 = vshll.u32 %v7165, 16
  %v7355 = vrot.slane %v7353, 6
  %v7356 = vor.u32 %v7352, %v7355
  %v7357 = vsel %vm4875, %v7348, %v7356
  %v7359 = vshrl.u32 %v7166, 16
  %v7361 = vrot.slane %v7359, 5
  %v7362 = vshll.u32 %v7166, 16
  %v7364 = vrot.slane %v7362, 6
  %v7365 = vor.u32 %v7361, %v7364
  %v7366 = vrot.slane %v7365, 4
  %v7368 = vshrl.u32 %v7167, 16
  %v7370 = vrot.slane %v7368, 5
  %v7371 = vshll.u32 %v7167, 16
  %v7373 = vrot.slane %v7371, 6
  %v7374 = vor.u32 %v7370, %v7373
  %v7375 = vsel %vm4875, %v7366, %v7374
  %v7377 = vshrl.u32 %v7168, 16
  %v7379 = vrot.slane %v7377, 5
  %v7380 = vshll.u32 %v7168, 16
  %v7382 = vrot.slane %v7380, 6
  %v7383 = vor.u32 %v7379, %v7382
  %v7384 = vrot.slane %v7383, 4
  %v7386 = vshrl.u32 %v7169, 16
  %v7388 = vrot.slane %v7386, 5
  %v7389 = vshll.u32 %v7169, 16
  %v7391 = vrot.slane %v7389, 6
  %v7392 = vor.u32 %v7388, %v7391
  %v7393 = vsel %vm4875, %v7384, %v7392
  %v7395 = vshrl.u32 %v7170, 16
  %v7397 = vrot.slane %v7395, 5
  %v7398 = vshll.u32 %v7170, 16
  %v7400 = vrot.slane %v7398, 6
  %v7401 = vor.u32 %v7397, %v7400
  %v7402 = vrot.slane %v7401, 4
  %v7404 = vshrl.u32 %v7171, 16
  %v7406 = vrot.slane %v7404, 5
  %v7407 = vshll.u32 %v7171, 16
  %v7409 = vrot.slane %v7407, 6
  %v7410 = vor.u32 %v7406, %v7409
  %v7411 = vsel %vm4875, %v7402, %v7410
  %v7413 = vshrl.u32 %v7172, 16
  %v7415 = vrot.slane %v7413, 5
  %v7416 = vshll.u32 %v7172, 16
  %v7418 = vrot.slane %v7416, 6
  %v7419 = vor.u32 %v7415, %v7418
  %v7420 = vrot.slane %v7419, 4
  %v7422 = vshrl.u32 %v7173, 16
  %v7424 = vrot.slane %v7422, 5
  %v7425 = vshll.u32 %v7173, 16
  %v7427 = vrot.slane %v7425, 6
  %v7428 = vor.u32 %v7424, %v7427
  %v7429 = vsel %vm4875, %v7420, %v7428
  %v7431 = vshrl.u32 %v7174, 16
  %v7433 = vrot.slane %v7431, 5
  %v7434 = vshll.u32 %v7174, 16
  %v7436 = vrot.slane %v7434, 6
  %v7437 = vor.u32 %v7433, %v7436
  %v7438 = vrot.slane %v7437, 4
  %v7440 = vshrl.u32 %v7175, 16
  %v7442 = vrot.slane %v7440, 5
  %v7443 = vshll.u32 %v7175, 16
  %v7445 = vrot.slane %v7443, 6
  %v7446 = vor.u32 %v7442, %v7445
  %v7447 = vsel %vm4875, %v7438, %v7446
  %v7449 = vshrl.u32 %v7176, 16
  %v7451 = vrot.slane %v7449, 5
  %v7452 = vshll.u32 %v7176, 16
  %v7454 = vrot.slane %v7452, 6
  %v7455 = vor.u32 %v7451, %v7454
  %v7456 = vrot.slane %v7455, 4
  %v7458 = vshrl.u32 %v7177, 16
  %v7460 = vrot.slane %v7458, 5
  %v7461 = vshll.u32 %v7177, 16
  %v7463 = vrot.slane %v7461, 6
  %v7464 = vor.u32 %v7460, %v7463
  %v7465 = vsel %vm4875, %v7456, %v7464
  %v7466 = vunpack.c.l.b16 %v7195
  %v7467 = vunpack.c.l.b16 %v7213
  %v7468 = vunpack.c.l.b16 %v7231
  %v7469 = vunpack.c.l.b16 %v7249
  %v7470 = vunpack.c.l.b16 %v7267
  %v7471 = vunpack.c.l.b16 %v7285
  %v7472 = vunpack.c.l.b16 %v7303
  %v7473 = vunpack.c.l.b16 %v7321
  %v7474 = vunpack.c.l.b16 %v7339
  %v7475 = vunpack.c.l.b16 %v7357
  %v7476 = vunpack.c.l.b16 %v7375
  %v7477 = vunpack.c.l.b16 %v7393
  %v7478 = vunpack.c.l.b16 %v7411
  %v7479 = vunpack.c.l.b16 %v7429
  %v7480 = vunpack.c.l.b16 %v7447
  %v7481 = vunpack.c.l.b16 %v7465
  %v7482 = vpack.c.b16 %v7467, %v7466
  %v7483 = vpack.c.b16 %v7469, %v7468
  %v7484 = vpack.c.b16 %v7471, %v7470
  %v7485 = vpack.c.b16 %v7473, %v7472
  %v7486 = vpack.c.b16 %v7475, %v7474
  %v7487 = vpack.c.b16 %v7477, %v7476
  %v7488 = vpack.c.b16 %v7479, %v7478
  %v7489 = vpack.c.b16 %v7481, %v7480
  %7490 = vrot.lane.b32.xlu0 %v7482, 104
  %v7491 = vpop.permute.xlu0 %7490
  %7492 = vrot.lane.b32.xlu0 %v7483, 104
  %v7493 = vpop.permute.xlu0 %7492
  %7494 = vrot.lane.b32.xlu0 %v7484, 104
  %v7495 = vpop.permute.xlu0 %7494
  %7496 = vrot.lane.b32.xlu0 %v7485, 104
  %v7497 = vpop.permute.xlu0 %7496
  %7498 = vrot.lane.b32.xlu0 %v7486, 104
  %v7499 = vpop.permute.xlu0 %7498
  %7500 = vrot.lane.b32.xlu0 %v7487, 104
  %v7501 = vpop.permute.xlu0 %7500
  %7502 = vrot.lane.b32.xlu0 %v7488, 104
  %v7503 = vpop.permute.xlu0 %7502
  %7504 = vrot.lane.b32.xlu0 %v7489, 104
  %v7505 = vpop.permute.xlu0 %7504
  %vm7514 = vcmask 917312
  %7515 = vst.msk [vmem:[#allocation3] sm:$0xff] %vm7514, %v7491
  %7516 = vst.msk [vmem:[#allocation3 + $0x10] sm:$0xff] %vm7514, %v7493
  %7517 = vst.msk [vmem:[#allocation3 + $0x20] sm:$0xff] %vm7514, %v7495
  %7518 = vst.msk [vmem:[#allocation3 + $0x30] sm:$0xff] %vm7514, %v7497
  %7519 = vst.msk [vmem:[#allocation3 + $0x40] sm:$0xff] %vm7514, %v7499
  %7520 = vst.msk [vmem:[#allocation3 + $0x50] sm:$0xff] %vm7514, %v7501
  %7521 = vst.msk [vmem:[#allocation3 + $0x60] sm:$0xff] %vm7514, %v7503
  %7522 = vst.msk [vmem:[#allocation3 + $0x70] sm:$0xff] %vm7514, %v7505
  %v7523 = vld [vmem:[%s4229] sm:$0xc]
  %v7524 = vld [vmem:[%s4229 + $0x4] sm:$0x3]
  %v7525 = vld [vmem:[%s4229 + $0x8] sm:$0xc]
  %v7526 = vld [vmem:[%s4229 + $0xc] sm:$0x3]
  %v7527 = vld [vmem:[%s4229 + $0x10] sm:$0xc]
  %v7528 = vld [vmem:[%s4229 + $0x14] sm:$0x3]
  %v7529 = vld [vmem:[%s4229 + $0x18] sm:$0xc]
  %v7530 = vld [vmem:[%s4229 + $0x1c] sm:$0x3]
  %v7531 = vld [vmem:[%s4229 + $0x20] sm:$0xc]
  %v7532 = vld [vmem:[%s4229 + $0x24] sm:$0x3]
  %v7533 = vld [vmem:[%s4229 + $0x28] sm:$0xc]
  %v7534 = vld [vmem:[%s4229 + $0x2c] sm:$0x3]
  %v7535 = vld [vmem:[%s4229 + $0x30] sm:$0xc]
  %v7536 = vld [vmem:[%s4229 + $0x34] sm:$0x3]
  %v7537 = vld [vmem:[%s4229 + $0x38] sm:$0xc]
  %v7538 = vld [vmem:[%s4229 + $0x3c] sm:$0x3]
  %v7539 = vld [vmem:[%s4229 + $0x60] sm:$0xc]
  %v7540 = vld [vmem:[%s4229 + $0x64] sm:$0x3]
  %v7541 = vld [vmem:[%s4229 + $0x68] sm:$0xc]
  %v7542 = vld [vmem:[%s4229 + $0x6c] sm:$0x3]
  %v7543 = vld [vmem:[%s4229 + $0x70] sm:$0xc]
  %v7544 = vld [vmem:[%s4229 + $0x74] sm:$0x3]
  %v7545 = vld [vmem:[%s4229 + $0x78] sm:$0xc]
  %v7546 = vld [vmem:[%s4229 + $0x7c] sm:$0x3]
  %v7547 = vld [vmem:[%s4229 + $0x80] sm:$0xc]
  %v7548 = vld [vmem:[%s4229 + $0x84] sm:$0x3]
  %v7549 = vld [vmem:[%s4229 + $0x88] sm:$0xc]
  %v7550 = vld [vmem:[%s4229 + $0x8c] sm:$0x3]
  %v7551 = vld [vmem:[%s4229 + $0x90] sm:$0xc]
  %v7552 = vld [vmem:[%s4229 + $0x94] sm:$0x3]
  %v7553 = vld [vmem:[%s4229 + $0x98] sm:$0xc]
  %v7554 = vld [vmem:[%s4229 + $0x9c] sm:$0x3]
  %v7587 = vrot.slane %v7523, 6
  %v7588 = vrot.slane %v7587, 4
  %v7589 = vrot.slane %v7524, 6
  %v7590 = vsel %vm5287, %v7588, %v7589
  %v7591 = vrot.slane %v7525, 6
  %v7592 = vrot.slane %v7591, 4
  %v7593 = vrot.slane %v7526, 6
  %v7594 = vsel %vm5287, %v7592, %v7593
  %v7595 = vrot.slane %v7527, 6
  %v7596 = vrot.slane %v7595, 4
  %v7597 = vrot.slane %v7528, 6
  %v7598 = vsel %vm5287, %v7596, %v7597
  %v7599 = vrot.slane %v7529, 6
  %v7600 = vrot.slane %v7599, 4
  %v7601 = vrot.slane %v7530, 6
  %v7602 = vsel %vm5287, %v7600, %v7601
  %v7603 = vrot.slane %v7531, 6
  %v7604 = vrot.slane %v7603, 4
  %v7605 = vrot.slane %v7532, 6
  %v7606 = vsel %vm5287, %v7604, %v7605
  %v7607 = vrot.slane %v7533, 6
  %v7608 = vrot.slane %v7607, 4
  %v7609 = vrot.slane %v7534, 6
  %v7610 = vsel %vm5287, %v7608, %v7609
  %v7611 = vrot.slane %v7535, 6
  %v7612 = vrot.slane %v7611, 4
  %v7613 = vrot.slane %v7536, 6
  %v7614 = vsel %vm5287, %v7612, %v7613
  %v7615 = vrot.slane %v7537, 6
  %v7616 = vrot.slane %v7615, 4
  %v7617 = vrot.slane %v7538, 6
  %v7618 = vsel %vm5287, %v7616, %v7617
  %v7619 = vrot.slane %v7539, 6
  %v7620 = vrot.slane %v7619, 4
  %v7621 = vrot.slane %v7540, 6
  %v7622 = vsel %vm5287, %v7620, %v7621
  %v7623 = vrot.slane %v7541, 6
  %v7624 = vrot.slane %v7623, 4
  %v7625 = vrot.slane %v7542, 6
  %v7626 = vsel %vm5287, %v7624, %v7625
  %v7627 = vrot.slane %v7543, 6
  %v7628 = vrot.slane %v7627, 4
  %v7629 = vrot.slane %v7544, 6
  %v7630 = vsel %vm5287, %v7628, %v7629
  %v7631 = vrot.slane %v7545, 6
  %v7632 = vrot.slane %v7631, 4
  %v7633 = vrot.slane %v7546, 6
  %v7634 = vsel %vm5287, %v7632, %v7633
  %v7635 = vrot.slane %v7547, 6
  %v7636 = vrot.slane %v7635, 4
  %v7637 = vrot.slane %v7548, 6
  %v7638 = vsel %vm5287, %v7636, %v7637
  %v7639 = vrot.slane %v7549, 6
  %v7640 = vrot.slane %v7639, 4
  %v7641 = vrot.slane %v7550, 6
  %v7642 = vsel %vm5287, %v7640, %v7641
  %v7643 = vrot.slane %v7551, 6
  %v7644 = vrot.slane %v7643, 4
  %v7645 = vrot.slane %v7552, 6
  %v7646 = vsel %vm5287, %v7644, %v7645
  %v7647 = vrot.slane %v7553, 6
  %v7648 = vrot.slane %v7647, 4
  %v7649 = vrot.slane %v7554, 6
  %v7650 = vsel %vm5287, %v7648, %v7649
  %v7651 = vunpack.c.l.b16 %v7590
  %v7652 = vunpack.c.l.b16 %v7594
  %v7653 = vunpack.c.l.b16 %v7598
  %v7654 = vunpack.c.l.b16 %v7602
  %v7655 = vunpack.c.l.b16 %v7606
  %v7656 = vunpack.c.l.b16 %v7610
  %v7657 = vunpack.c.l.b16 %v7614
  %v7658 = vunpack.c.l.b16 %v7618
  %v7659 = vunpack.c.l.b16 %v7622
  %v7660 = vunpack.c.l.b16 %v7626
  %v7661 = vunpack.c.l.b16 %v7630
  %v7662 = vunpack.c.l.b16 %v7634
  %v7663 = vunpack.c.l.b16 %v7638
  %v7664 = vunpack.c.l.b16 %v7642
  %v7665 = vunpack.c.l.b16 %v7646
  %v7666 = vunpack.c.l.b16 %v7650
  %v7667 = vpack.c.b16 %v7652, %v7651
  %v7668 = vpack.c.b16 %v7654, %v7653
  %v7669 = vpack.c.b16 %v7656, %v7655
  %v7670 = vpack.c.b16 %v7658, %v7657
  %v7671 = vpack.c.b16 %v7660, %v7659
  %v7672 = vpack.c.b16 %v7662, %v7661
  %v7673 = vpack.c.b16 %v7664, %v7663
  %v7674 = vpack.c.b16 %v7666, %v7665
  %7675 = vrot.lane.b32.xlu0 %v7667, 112
  %v7676 = vpop.permute.xlu0 %7675
  %7677 = vrot.lane.b32.xlu0 %v7668, 112
  %v7678 = vpop.permute.xlu0 %7677
  %7679 = vrot.lane.b32.xlu0 %v7669, 112
  %v7680 = vpop.permute.xlu0 %7679
  %7681 = vrot.lane.b32.xlu0 %v7670, 112
  %v7682 = vpop.permute.xlu0 %7681
  %7683 = vrot.lane.b32.xlu0 %v7671, 112
  %v7684 = vpop.permute.xlu0 %7683
  %7685 = vrot.lane.b32.xlu0 %v7672, 112
  %v7686 = vpop.permute.xlu0 %7685
  %7687 = vrot.lane.b32.xlu0 %v7673, 112
  %v7688 = vpop.permute.xlu0 %7687
  %7689 = vrot.lane.b32.xlu0 %v7674, 112
  %v7690 = vpop.permute.xlu0 %7689
  %vm7699 = vcmask 982912
  %7700 = vst.msk [vmem:[#allocation3] sm:$0xff] %vm7699, %v7676
  %7701 = vst.msk [vmem:[#allocation3 + $0x10] sm:$0xff] %vm7699, %v7678
  %7702 = vst.msk [vmem:[#allocation3 + $0x20] sm:$0xff] %vm7699, %v7680
  %7703 = vst.msk [vmem:[#allocation3 + $0x30] sm:$0xff] %vm7699, %v7682
  %7704 = vst.msk [vmem:[#allocation3 + $0x40] sm:$0xff] %vm7699, %v7684
  %7705 = vst.msk [vmem:[#allocation3 + $0x50] sm:$0xff] %vm7699, %v7686
  %7706 = vst.msk [vmem:[#allocation3 + $0x60] sm:$0xff] %vm7699, %v7688
  %7707 = vst.msk [vmem:[#allocation3 + $0x70] sm:$0xff] %vm7699, %v7690
  %s7708 = scalar_lea.vmem [#allocation2], 24
  %v7709 = vld [vmem:[%s7708] sm:$0xf]
  %v7710 = vld [vmem:[%s7708 + $0x8] sm:$0xf]
  %v7711 = vld [vmem:[%s7708 + $0x10] sm:$0xf]
  %v7712 = vld [vmem:[%s7708 + $0x18] sm:$0xf]
  %v7713 = vld [vmem:[%s7708 + $0x20] sm:$0xf]
  %v7714 = vld [vmem:[%s7708 + $0x28] sm:$0xf]
  %v7715 = vld [vmem:[%s7708 + $0x30] sm:$0xf]
  %v7716 = vld [vmem:[%s7708 + $0x38] sm:$0xf]
  %v7717 = vld [vmem:[%s7708 + $0x60] sm:$0xf]
  %v7718 = vld [vmem:[%s7708 + $0x68] sm:$0xf]
  %v7719 = vld [vmem:[%s7708 + $0x70] sm:$0xf]
  %v7720 = vld [vmem:[%s7708 + $0x78] sm:$0xf]
  %v7721 = vld [vmem:[%s7708 + $0x80] sm:$0xf]
  %v7722 = vld [vmem:[%s7708 + $0x88] sm:$0xf]
  %v7723 = vld [vmem:[%s7708 + $0x90] sm:$0xf]
  %v7724 = vld [vmem:[%s7708 + $0x98] sm:$0xf]
  %v7741 = vunpack.c.l.b16 %v7709
  %v7742 = vunpack.c.l.b16 %v7710
  %v7743 = vunpack.c.l.b16 %v7711
  %v7744 = vunpack.c.l.b16 %v7712
  %v7745 = vunpack.c.l.b16 %v7713
  %v7746 = vunpack.c.l.b16 %v7714
  %v7747 = vunpack.c.l.b16 %v7715
  %v7748 = vunpack.c.l.b16 %v7716
  %v7749 = vunpack.c.l.b16 %v7717
  %v7750 = vunpack.c.l.b16 %v7718
  %v7751 = vunpack.c.l.b16 %v7719
  %v7752 = vunpack.c.l.b16 %v7720
  %v7753 = vunpack.c.l.b16 %v7721
  %v7754 = vunpack.c.l.b16 %v7722
  %v7755 = vunpack.c.l.b16 %v7723
  %v7756 = vunpack.c.l.b16 %v7724
  %v7757 = vpack.c.b16 %v7742, %v7741
  %v7758 = vpack.c.b16 %v7744, %v7743
  %v7759 = vpack.c.b16 %v7746, %v7745
  %v7760 = vpack.c.b16 %v7748, %v7747
  %v7761 = vpack.c.b16 %v7750, %v7749
  %v7762 = vpack.c.b16 %v7752, %v7751
  %v7763 = vpack.c.b16 %v7754, %v7753
  %v7764 = vpack.c.b16 %v7756, %v7755
  %7765 = vrot.lane.b32.xlu0 %v7757, 120
  %v7766 = vpop.permute.xlu0 %7765
  %7767 = vrot.lane.b32.xlu0 %v7758, 120
  %v7768 = vpop.permute.xlu0 %7767
  %7769 = vrot.lane.b32.xlu0 %v7759, 120
  %v7770 = vpop.permute.xlu0 %7769
  %7771 = vrot.lane.b32.xlu0 %v7760, 120
  %v7772 = vpop.permute.xlu0 %7771
  %7773 = vrot.lane.b32.xlu0 %v7761, 120
  %v7774 = vpop.permute.xlu0 %7773
  %7775 = vrot.lane.b32.xlu0 %v7762, 120
  %v7776 = vpop.permute.xlu0 %7775
  %7777 = vrot.lane.b32.xlu0 %v7763, 120
  %v7778 = vpop.permute.xlu0 %7777
  %7779 = vrot.lane.b32.xlu0 %v7764, 120
  %v7780 = vpop.permute.xlu0 %7779
  %vm7789 = vcmask 1048512
  %7790 = vst.msk [vmem:[#allocation3] sm:$0xff] %vm7789, %v7766
  %7791 = vst.msk [vmem:[#allocation3 + $0x10] sm:$0xff] %vm7789, %v7768
  %7792 = vst.msk [vmem:[#allocation3 + $0x20] sm:$0xff] %vm7789, %v7770
  %7793 = vst.msk [vmem:[#allocation3 + $0x30] sm:$0xff] %vm7789, %v7772
  %7794 = vst.msk [vmem:[#allocation3 + $0x40] sm:$0xff] %vm7789, %v7774
  %7795 = vst.msk [vmem:[#allocation3 + $0x50] sm:$0xff] %vm7789, %v7776
  %7796 = vst.msk [vmem:[#allocation3 + $0x60] sm:$0xff] %vm7789, %v7778
  %7797 = vst.msk [vmem:[#allocation3 + $0x70] sm:$0xff] %vm7789, %v7780
  %v7798 = vld [vmem:[%s7708] sm:$0xf]
  %v7799 = vld [vmem:[%s7708 + $0x4] sm:$0x1]
  %v7800 = vld [vmem:[%s7708 + $0x8] sm:$0xf]
  %v7801 = vld [vmem:[%s7708 + $0xc] sm:$0x1]
  %v7802 = vld [vmem:[%s7708 + $0x10] sm:$0xf]
  %v7803 = vld [vmem:[%s7708 + $0x14] sm:$0x1]
  %v7804 = vld [vmem:[%s7708 + $0x18] sm:$0xf]
  %v7805 = vld [vmem:[%s7708 + $0x1c] sm:$0x1]
  %v7806 = vld [vmem:[%s7708 + $0x20] sm:$0xf]
  %v7807 = vld [vmem:[%s7708 + $0x24] sm:$0x1]
  %v7808 = vld [vmem:[%s7708 + $0x28] sm:$0xf]
  %v7809 = vld [vmem:[%s7708 + $0x2c] sm:$0x1]
  %v7810 = vld [vmem:[%s7708 + $0x30] sm:$0xf]
  %v7811 = vld [vmem:[%s7708 + $0x34] sm:$0x1]
  %v7812 = vld [vmem:[%s7708 + $0x38] sm:$0xf]
  %v7813 = vld [vmem:[%s7708 + $0x3c] sm:$0x1]
  %v7814 = vld [vmem:[%s7708 + $0x60] sm:$0xf]
  %v7815 = vld [vmem:[%s7708 + $0x64] sm:$0x1]
  %v7816 = vld [vmem:[%s7708 + $0x68] sm:$0xf]
  %v7817 = vld [vmem:[%s7708 + $0x6c] sm:$0x1]
  %v7818 = vld [vmem:[%s7708 + $0x70] sm:$0xf]
  %v7819 = vld [vmem:[%s7708 + $0x74] sm:$0x1]
  %v7820 = vld [vmem:[%s7708 + $0x78] sm:$0xf]
  %v7821 = vld [vmem:[%s7708 + $0x7c] sm:$0x1]
  %v7822 = vld [vmem:[%s7708 + $0x80] sm:$0xf]
  %v7823 = vld [vmem:[%s7708 + $0x84] sm:$0x1]
  %v7824 = vld [vmem:[%s7708 + $0x88] sm:$0xf]
  %v7825 = vld [vmem:[%s7708 + $0x8c] sm:$0x1]
  %v7826 = vld [vmem:[%s7708 + $0x90] sm:$0xf]
  %v7827 = vld [vmem:[%s7708 + $0x94] sm:$0x1]
  %v7828 = vld [vmem:[%s7708 + $0x98] sm:$0xf]
  %v7829 = vld [vmem:[%s7708 + $0x9c] sm:$0x1]
  %v7831 = vshrl.u32 %v7798, 16
  %v7833 = vrot.slane %v7831, 4
  %v7834 = vshll.u32 %v7798, 16
  %v7836 = vrot.slane %v7834, 5
  %v7837 = vor.u32 %v7833, %v7836
  %v7838 = vrot.slane %v7837, 4
  %v7840 = vshll.u32 %v7799, 16
  %v7842 = vrot.slane %v7840, 5
  %v7843 = vsel %vm4371, %v7838, %v7842
  %v7845 = vshrl.u32 %v7800, 16
  %v7847 = vrot.slane %v7845, 4
  %v7848 = vshll.u32 %v7800, 16
  %v7850 = vrot.slane %v7848, 5
  %v7851 = vor.u32 %v7847, %v7850
  %v7852 = vrot.slane %v7851, 4
  %v7854 = vshll.u32 %v7801, 16
  %v7856 = vrot.slane %v7854, 5
  %v7857 = vsel %vm4371, %v7852, %v7856
  %v7859 = vshrl.u32 %v7802, 16
  %v7861 = vrot.slane %v7859, 4
  %v7862 = vshll.u32 %v7802, 16
  %v7864 = vrot.slane %v7862, 5
  %v7865 = vor.u32 %v7861, %v7864
  %v7866 = vrot.slane %v7865, 4
  %v7868 = vshll.u32 %v7803, 16
  %v7870 = vrot.slane %v7868, 5
  %v7871 = vsel %vm4371, %v7866, %v7870
  %v7873 = vshrl.u32 %v7804, 16
  %v7875 = vrot.slane %v7873, 4
  %v7876 = vshll.u32 %v7804, 16
  %v7878 = vrot.slane %v7876, 5
  %v7879 = vor.u32 %v7875, %v7878
  %v7880 = vrot.slane %v7879, 4
  %v7882 = vshll.u32 %v7805, 16
  %v7884 = vrot.slane %v7882, 5
  %v7885 = vsel %vm4371, %v7880, %v7884
  %v7887 = vshrl.u32 %v7806, 16
  %v7889 = vrot.slane %v7887, 4
  %v7890 = vshll.u32 %v7806, 16
  %v7892 = vrot.slane %v7890, 5
  %v7893 = vor.u32 %v7889, %v7892
  %v7894 = vrot.slane %v7893, 4
  %v7896 = vshll.u32 %v7807, 16
  %v7898 = vrot.slane %v7896, 5
  %v7899 = vsel %vm4371, %v7894, %v7898
  %v7901 = vshrl.u32 %v7808, 16
  %v7903 = vrot.slane %v7901, 4
  %v7904 = vshll.u32 %v7808, 16
  %v7906 = vrot.slane %v7904, 5
  %v7907 = vor.u32 %v7903, %v7906
  %v7908 = vrot.slane %v7907, 4
  %v7910 = vshll.u32 %v7809, 16
  %v7912 = vrot.slane %v7910, 5
  %v7913 = vsel %vm4371, %v7908, %v7912
  %v7915 = vshrl.u32 %v7810, 16
  %v7917 = vrot.slane %v7915, 4
  %v7918 = vshll.u32 %v7810, 16
  %v7920 = vrot.slane %v7918, 5
  %v7921 = vor.u32 %v7917, %v7920
  %v7922 = vrot.slane %v7921, 4
  %v7924 = vshll.u32 %v7811, 16
  %v7926 = vrot.slane %v7924, 5
  %v7927 = vsel %vm4371, %v7922, %v7926
  %v7929 = vshrl.u32 %v7812, 16
  %v7931 = vrot.slane %v7929, 4
  %v7932 = vshll.u32 %v7812, 16
  %v7934 = vrot.slane %v7932, 5
  %v7935 = vor.u32 %v7931, %v7934
  %v7936 = vrot.slane %v7935, 4
  %v7938 = vshll.u32 %v7813, 16
  %v7940 = vrot.slane %v7938, 5
  %v7941 = vsel %vm4371, %v7936, %v7940
  %v7943 = vshrl.u32 %v7814, 16
  %v7945 = vrot.slane %v7943, 4
  %v7946 = vshll.u32 %v7814, 16
  %v7948 = vrot.slane %v7946, 5
  %v7949 = vor.u32 %v7945, %v7948
  %v7950 = vrot.slane %v7949, 4
  %v7952 = vshll.u32 %v7815, 16
  %v7954 = vrot.slane %v7952, 5
  %v7955 = vsel %vm4371, %v7950, %v7954
  %v7957 = vshrl.u32 %v7816, 16
  %v7959 = vrot.slane %v7957, 4
  %v7960 = vshll.u32 %v7816, 16
  %v7962 = vrot.slane %v7960, 5
  %v7963 = vor.u32 %v7959, %v7962
  %v7964 = vrot.slane %v7963, 4
  %v7966 = vshll.u32 %v7817, 16
  %v7968 = vrot.slane %v7966, 5
  %v7969 = vsel %vm4371, %v7964, %v7968
  %v7971 = vshrl.u32 %v7818, 16
  %v7973 = vrot.slane %v7971, 4
  %v7974 = vshll.u32 %v7818, 16
  %v7976 = vrot.slane %v7974, 5
  %v7977 = vor.u32 %v7973, %v7976
  %v7978 = vrot.slane %v7977, 4
  %v7980 = vshll.u32 %v7819, 16
  %v7982 = vrot.slane %v7980, 5
  %v7983 = vsel %vm4371, %v7978, %v7982
  %v7985 = vshrl.u32 %v7820, 16
  %v7987 = vrot.slane %v7985, 4
  %v7988 = vshll.u32 %v7820, 16
  %v7990 = vrot.slane %v7988, 5
  %v7991 = vor.u32 %v7987, %v7990
  %v7992 = vrot.slane %v7991, 4
  %v7994 = vshll.u32 %v7821, 16
  %v7996 = vrot.slane %v7994, 5
  %v7997 = vsel %vm4371, %v7992, %v7996
  %v7999 = vshrl.u32 %v7822, 16
  %v8001 = vrot.slane %v7999, 4
  %v8002 = vshll.u32 %v7822, 16
  %v8004 = vrot.slane %v8002, 5
  %v8005 = vor.u32 %v8001, %v8004
  %v8006 = vrot.slane %v8005, 4
  %v8008 = vshll.u32 %v7823, 16
  %v8010 = vrot.slane %v8008, 5
  %v8011 = vsel %vm4371, %v8006, %v8010
  %v8013 = vshrl.u32 %v7824, 16
  %v8015 = vrot.slane %v8013, 4
  %v8016 = vshll.u32 %v7824, 16
  %v8018 = vrot.slane %v8016, 5
  %v8019 = vor.u32 %v8015, %v8018
  %v8020 = vrot.slane %v8019, 4
  %v8022 = vshll.u32 %v7825, 16
  %v8024 = vrot.slane %v8022, 5
  %v8025 = vsel %vm4371, %v8020, %v8024
  %v8027 = vshrl.u32 %v7826, 16
  %v8029 = vrot.slane %v8027, 4
  %v8030 = vshll.u32 %v7826, 16
  %v8032 = vrot.slane %v8030, 5
  %v8033 = vor.u32 %v8029, %v8032
  %v8034 = vrot.slane %v8033, 4
  %v8036 = vshll.u32 %v7827, 16
  %v8038 = vrot.slane %v8036, 5
  %v8039 = vsel %vm4371, %v8034, %v8038
  %v8041 = vshrl.u32 %v7828, 16
  %v8043 = vrot.slane %v8041, 4
  %v8044 = vshll.u32 %v7828, 16
  %v8046 = vrot.slane %v8044, 5
  %v8047 = vor.u32 %v8043, %v8046
  %v8048 = vrot.slane %v8047, 4
  %v8050 = vshll.u32 %v7829, 16
  %v8052 = vrot.slane %v8050, 5
  %v8053 = vsel %vm4371, %v8048, %v8052
  %v8054 = vunpack.c.l.b16 %v7843
  %v8055 = vunpack.c.l.b16 %v7857
  %v8056 = vunpack.c.l.b16 %v7871
  %v8057 = vunpack.c.l.b16 %v7885
  %v8058 = vunpack.c.l.b16 %v7899
  %v8059 = vunpack.c.l.b16 %v7913
  %v8060 = vunpack.c.l.b16 %v7927
  %v8061 = vunpack.c.l.b16 %v7941
  %v8062 = vunpack.c.l.b16 %v7955
  %v8063 = vunpack.c.l.b16 %v7969
  %v8064 = vunpack.c.l.b16 %v7983
  %v8065 = vunpack.c.l.b16 %v7997
  %v8066 = vunpack.c.l.b16 %v8011
  %v8067 = vunpack.c.l.b16 %v8025
  %v8068 = vunpack.c.l.b16 %v8039
  %v8069 = vunpack.c.l.b16 %v8053
  %v8070 = vpack.c.b16 %v8055, %v8054
  %v8071 = vpack.c.b16 %v8057, %v8056
  %v8072 = vpack.c.b16 %v8059, %v8058
  %v8073 = vpack.c.b16 %v8061, %v8060
  %v8074 = vpack.c.b16 %v8063, %v8062
  %v8075 = vpack.c.b16 %v8065, %v8064
  %v8076 = vpack.c.b16 %v8067, %v8066
  %v8077 = vpack.c.b16 %v8069, %v8068
  %8086 = vst.msk [vmem:[#allocation3 + $0x8] sm:$0xff] %vm4328, %v8070
  %8087 = vst.msk [vmem:[#allocation3 + $0x18] sm:$0xff] %vm4328, %v8071
  %8088 = vst.msk [vmem:[#allocation3 + $0x28] sm:$0xff] %vm4328, %v8072
  %8089 = vst.msk [vmem:[#allocation3 + $0x38] sm:$0xff] %vm4328, %v8073
  %8090 = vst.msk [vmem:[#allocation3 + $0x48] sm:$0xff] %vm4328, %v8074
  %8091 = vst.msk [vmem:[#allocation3 + $0x58] sm:$0xff] %vm4328, %v8075
  %8092 = vst.msk [vmem:[#allocation3 + $0x68] sm:$0xff] %vm4328, %v8076
  %8093 = vst.msk [vmem:[#allocation3 + $0x78] sm:$0xff] %vm4328, %v8077
  %v8094 = vld [vmem:[%s7708] sm:$0xe]
  %v8095 = vld [vmem:[%s7708 + $0x4] sm:$0x1]
  %v8096 = vld [vmem:[%s7708 + $0x8] sm:$0xe]
  %v8097 = vld [vmem:[%s7708 + $0xc] sm:$0x1]
  %v8098 = vld [vmem:[%s7708 + $0x10] sm:$0xe]
  %v8099 = vld [vmem:[%s7708 + $0x14] sm:$0x1]
  %v8100 = vld [vmem:[%s7708 + $0x18] sm:$0xe]
  %v8101 = vld [vmem:[%s7708 + $0x1c] sm:$0x1]
  %v8102 = vld [vmem:[%s7708 + $0x20] sm:$0xe]
  %v8103 = vld [vmem:[%s7708 + $0x24] sm:$0x1]
  %v8104 = vld [vmem:[%s7708 + $0x28] sm:$0xe]
  %v8105 = vld [vmem:[%s7708 + $0x2c] sm:$0x1]
  %v8106 = vld [vmem:[%s7708 + $0x30] sm:$0xe]
  %v8107 = vld [vmem:[%s7708 + $0x34] sm:$0x1]
  %v8108 = vld [vmem:[%s7708 + $0x38] sm:$0xe]
  %v8109 = vld [vmem:[%s7708 + $0x3c] sm:$0x1]
  %v8110 = vld [vmem:[%s7708 + $0x60] sm:$0xe]
  %v8111 = vld [vmem:[%s7708 + $0x64] sm:$0x1]
  %v8112 = vld [vmem:[%s7708 + $0x68] sm:$0xe]
  %v8113 = vld [vmem:[%s7708 + $0x6c] sm:$0x1]
  %v8114 = vld [vmem:[%s7708 + $0x70] sm:$0xe]
  %v8115 = vld [vmem:[%s7708 + $0x74] sm:$0x1]
  %v8116 = vld [vmem:[%s7708 + $0x78] sm:$0xe]
  %v8117 = vld [vmem:[%s7708 + $0x7c] sm:$0x1]
  %v8118 = vld [vmem:[%s7708 + $0x80] sm:$0xe]
  %v8119 = vld [vmem:[%s7708 + $0x84] sm:$0x1]
  %v8120 = vld [vmem:[%s7708 + $0x88] sm:$0xe]
  %v8121 = vld [vmem:[%s7708 + $0x8c] sm:$0x1]
  %v8122 = vld [vmem:[%s7708 + $0x90] sm:$0xe]
  %v8123 = vld [vmem:[%s7708 + $0x94] sm:$0x1]
  %v8124 = vld [vmem:[%s7708 + $0x98] sm:$0xe]
  %v8125 = vld [vmem:[%s7708 + $0x9c] sm:$0x1]
  %v8158 = vrot.slane %v8094, 5
  %v8159 = vrot.slane %v8158, 4
  %v8160 = vrot.slane %v8095, 5
  %v8161 = vsel %vm4719, %v8159, %v8160
  %v8162 = vrot.slane %v8096, 5
  %v8163 = vrot.slane %v8162, 4
  %v8164 = vrot.slane %v8097, 5
  %v8165 = vsel %vm4719, %v8163, %v8164
  %v8166 = vrot.slane %v8098, 5
  %v8167 = vrot.slane %v8166, 4
  %v8168 = vrot.slane %v8099, 5
  %v8169 = vsel %vm4719, %v8167, %v8168
  %v8170 = vrot.slane %v8100, 5
  %v8171 = vrot.slane %v8170, 4
  %v8172 = vrot.slane %v8101, 5
  %v8173 = vsel %vm4719, %v8171, %v8172
  %v8174 = vrot.slane %v8102, 5
  %v8175 = vrot.slane %v8174, 4
  %v8176 = vrot.slane %v8103, 5
  %v8177 = vsel %vm4719, %v8175, %v8176
  %v8178 = vrot.slane %v8104, 5
  %v8179 = vrot.slane %v8178, 4
  %v8180 = vrot.slane %v8105, 5
  %v8181 = vsel %vm4719, %v8179, %v8180
  %v8182 = vrot.slane %v8106, 5
  %v8183 = vrot.slane %v8182, 4
  %v8184 = vrot.slane %v8107, 5
  %v8185 = vsel %vm4719, %v8183, %v8184
  %v8186 = vrot.slane %v8108, 5
  %v8187 = vrot.slane %v8186, 4
  %v8188 = vrot.slane %v8109, 5
  %v8189 = vsel %vm4719, %v8187, %v8188
  %v8190 = vrot.slane %v8110, 5
  %v8191 = vrot.slane %v8190, 4
  %v8192 = vrot.slane %v8111, 5
  %v8193 = vsel %vm4719, %v8191, %v8192
  %v8194 = vrot.slane %v8112, 5
  %v8195 = vrot.slane %v8194, 4
  %v8196 = vrot.slane %v8113, 5
  %v8197 = vsel %vm4719, %v8195, %v8196
  %v8198 = vrot.slane %v8114, 5
  %v8199 = vrot.slane %v8198, 4
  %v8200 = vrot.slane %v8115, 5
  %v8201 = vsel %vm4719, %v8199, %v8200
  %v8202 = vrot.slane %v8116, 5
  %v8203 = vrot.slane %v8202, 4
  %v8204 = vrot.slane %v8117, 5
  %v8205 = vsel %vm4719, %v8203, %v8204
  %v8206 = vrot.slane %v8118, 5
  %v8207 = vrot.slane %v8206, 4
  %v8208 = vrot.slane %v8119, 5
  %v8209 = vsel %vm4719, %v8207, %v8208
  %v8210 = vrot.slane %v8120, 5
  %v8211 = vrot.slane %v8210, 4
  %v8212 = vrot.slane %v8121, 5
  %v8213 = vsel %vm4719, %v8211, %v8212
  %v8214 = vrot.slane %v8122, 5
  %v8215 = vrot.slane %v8214, 4
  %v8216 = vrot.slane %v8123, 5
  %v8217 = vsel %vm4719, %v8215, %v8216
  %v8218 = vrot.slane %v8124, 5
  %v8219 = vrot.slane %v8218, 4
  %v8220 = vrot.slane %v8125, 5
  %v8221 = vsel %vm4719, %v8219, %v8220
  %v8222 = vunpack.c.l.b16 %v8161
  %v8223 = vunpack.c.l.b16 %v8165
  %v8224 = vunpack.c.l.b16 %v8169
  %v8225 = vunpack.c.l.b16 %v8173
  %v8226 = vunpack.c.l.b16 %v8177
  %v8227 = vunpack.c.l.b16 %v8181
  %v8228 = vunpack.c.l.b16 %v8185
  %v8229 = vunpack.c.l.b16 %v8189
  %v8230 = vunpack.c.l.b16 %v8193
  %v8231 = vunpack.c.l.b16 %v8197
  %v8232 = vunpack.c.l.b16 %v8201
  %v8233 = vunpack.c.l.b16 %v8205
  %v8234 = vunpack.c.l.b16 %v8209
  %v8235 = vunpack.c.l.b16 %v8213
  %v8236 = vunpack.c.l.b16 %v8217
  %v8237 = vunpack.c.l.b16 %v8221
  %v8238 = vpack.c.b16 %v8223, %v8222
  %v8239 = vpack.c.b16 %v8225, %v8224
  %v8240 = vpack.c.b16 %v8227, %v8226
  %v8241 = vpack.c.b16 %v8229, %v8228
  %v8242 = vpack.c.b16 %v8231, %v8230
  %v8243 = vpack.c.b16 %v8233, %v8232
  %v8244 = vpack.c.b16 %v8235, %v8234
  %v8245 = vpack.c.b16 %v8237, %v8236
  %8246 = vrot.lane.b32.xlu0 %v8238, 8
  %v8247 = vpop.permute.xlu0 %8246
  %8248 = vrot.lane.b32.xlu0 %v8239, 8
  %v8249 = vpop.permute.xlu0 %8248
  %8250 = vrot.lane.b32.xlu0 %v8240, 8
  %v8251 = vpop.permute.xlu0 %8250
  %8252 = vrot.lane.b32.xlu0 %v8241, 8
  %v8253 = vpop.permute.xlu0 %8252
  %8254 = vrot.lane.b32.xlu0 %v8242, 8
  %v8255 = vpop.permute.xlu0 %8254
  %8256 = vrot.lane.b32.xlu0 %v8243, 8
  %v8257 = vpop.permute.xlu0 %8256
  %8258 = vrot.lane.b32.xlu0 %v8244, 8
  %v8259 = vpop.permute.xlu0 %8258
  %8260 = vrot.lane.b32.xlu0 %v8245, 8
  %v8261 = vpop.permute.xlu0 %8260
  %8270 = vst.msk [vmem:[#allocation3 + $0x8] sm:$0xff] %vm4644, %v8247
  %8271 = vst.msk [vmem:[#allocation3 + $0x18] sm:$0xff] %vm4644, %v8249
  %8272 = vst.msk [vmem:[#allocation3 + $0x28] sm:$0xff] %vm4644, %v8251
  %8273 = vst.msk [vmem:[#allocation3 + $0x38] sm:$0xff] %vm4644, %v8253
  %8274 = vst.msk [vmem:[#allocation3 + $0x48] sm:$0xff] %vm4644, %v8255
  %8275 = vst.msk [vmem:[#allocation3 + $0x58] sm:$0xff] %vm4644, %v8257
  %8276 = vst.msk [vmem:[#allocation3 + $0x68] sm:$0xff] %vm4644, %v8259
  %8277 = vst.msk [vmem:[#allocation3 + $0x78] sm:$0xff] %vm4644, %v8261
  %v8278 = vld [vmem:[%s7708] sm:$0xe]
  %v8279 = vld [vmem:[%s7708 + $0x4] sm:$0x3]
  %v8280 = vld [vmem:[%s7708 + $0x8] sm:$0xe]
  %v8281 = vld [vmem:[%s7708 + $0xc] sm:$0x3]
  %v8282 = vld [vmem:[%s7708 + $0x10] sm:$0xe]
  %v8283 = vld [vmem:[%s7708 + $0x14] sm:$0x3]
  %v8284 = vld [vmem:[%s7708 + $0x18] sm:$0xe]
  %v8285 = vld [vmem:[%s7708 + $0x1c] sm:$0x3]
  %v8286 = vld [vmem:[%s7708 + $0x20] sm:$0xe]
  %v8287 = vld [vmem:[%s7708 + $0x24] sm:$0x3]
  %v8288 = vld [vmem:[%s7708 + $0x28] sm:$0xe]
  %v8289 = vld [vmem:[%s7708 + $0x2c] sm:$0x3]
  %v8290 = vld [vmem:[%s7708 + $0x30] sm:$0xe]
  %v8291 = vld [vmem:[%s7708 + $0x34] sm:$0x3]
  %v8292 = vld [vmem:[%s7708 + $0x38] sm:$0xe]
  %v8293 = vld [vmem:[%s7708 + $0x3c] sm:$0x3]
  %v8294 = vld [vmem:[%s7708 + $0x60] sm:$0xe]
  %v8295 = vld [vmem:[%s7708 + $0x64] sm:$0x3]
  %v8296 = vld [vmem:[%s7708 + $0x68] sm:$0xe]
  %v8297 = vld [vmem:[%s7708 + $0x6c] sm:$0x3]
  %v8298 = vld [vmem:[%s7708 + $0x70] sm:$0xe]
  %v8299 = vld [vmem:[%s7708 + $0x74] sm:$0x3]
  %v8300 = vld [vmem:[%s7708 + $0x78] sm:$0xe]
  %v8301 = vld [vmem:[%s7708 + $0x7c] sm:$0x3]
  %v8302 = vld [vmem:[%s7708 + $0x80] sm:$0xe]
  %v8303 = vld [vmem:[%s7708 + $0x84] sm:$0x3]
  %v8304 = vld [vmem:[%s7708 + $0x88] sm:$0xe]
  %v8305 = vld [vmem:[%s7708 + $0x8c] sm:$0x3]
  %v8306 = vld [vmem:[%s7708 + $0x90] sm:$0xe]
  %v8307 = vld [vmem:[%s7708 + $0x94] sm:$0x3]
  %v8308 = vld [vmem:[%s7708 + $0x98] sm:$0xe]
  %v8309 = vld [vmem:[%s7708 + $0x9c] sm:$0x3]
  %v8311 = vshrl.u32 %v8278, 16
  %v8313 = vrot.slane %v8311, 5
  %v8314 = vshll.u32 %v8278, 16
  %v8316 = vrot.slane %v8314, 6
  %v8317 = vor.u32 %v8313, %v8316
  %v8318 = vrot.slane %v8317, 4
  %v8320 = vshrl.u32 %v8279, 16
  %v8322 = vrot.slane %v8320, 5
  %v8323 = vshll.u32 %v8279, 16
  %v8325 = vrot.slane %v8323, 6
  %v8326 = vor.u32 %v8322, %v8325
  %v8327 = vsel %vm4875, %v8318, %v8326
  %v8329 = vshrl.u32 %v8280, 16
  %v8331 = vrot.slane %v8329, 5
  %v8332 = vshll.u32 %v8280, 16
  %v8334 = vrot.slane %v8332, 6
  %v8335 = vor.u32 %v8331, %v8334
  %v8336 = vrot.slane %v8335, 4
  %v8338 = vshrl.u32 %v8281, 16
  %v8340 = vrot.slane %v8338, 5
  %v8341 = vshll.u32 %v8281, 16
  %v8343 = vrot.slane %v8341, 6
  %v8344 = vor.u32 %v8340, %v8343
  %v8345 = vsel %vm4875, %v8336, %v8344
  %v8347 = vshrl.u32 %v8282, 16
  %v8349 = vrot.slane %v8347, 5
  %v8350 = vshll.u32 %v8282, 16
  %v8352 = vrot.slane %v8350, 6
  %v8353 = vor.u32 %v8349, %v8352
  %v8354 = vrot.slane %v8353, 4
  %v8356 = vshrl.u32 %v8283, 16
  %v8358 = vrot.slane %v8356, 5
  %v8359 = vshll.u32 %v8283, 16
  %v8361 = vrot.slane %v8359, 6
  %v8362 = vor.u32 %v8358, %v8361
  %v8363 = vsel %vm4875, %v8354, %v8362
  %v8365 = vshrl.u32 %v8284, 16
  %v8367 = vrot.slane %v8365, 5
  %v8368 = vshll.u32 %v8284, 16
  %v8370 = vrot.slane %v8368, 6
  %v8371 = vor.u32 %v8367, %v8370
  %v8372 = vrot.slane %v8371, 4
  %v8374 = vshrl.u32 %v8285, 16
  %v8376 = vrot.slane %v8374, 5
  %v8377 = vshll.u32 %v8285, 16
  %v8379 = vrot.slane %v8377, 6
  %v8380 = vor.u32 %v8376, %v8379
  %v8381 = vsel %vm4875, %v8372, %v8380
  %v8383 = vshrl.u32 %v8286, 16
  %v8385 = vrot.slane %v8383, 5
  %v8386 = vshll.u32 %v8286, 16
  %v8388 = vrot.slane %v8386, 6
  %v8389 = vor.u32 %v8385, %v8388
  %v8390 = vrot.slane %v8389, 4
  %v8392 = vshrl.u32 %v8287, 16
  %v8394 = vrot.slane %v8392, 5
  %v8395 = vshll.u32 %v8287, 16
  %v8397 = vrot.slane %v8395, 6
  %v8398 = vor.u32 %v8394, %v8397
  %v8399 = vsel %vm4875, %v8390, %v8398
  %v8401 = vshrl.u32 %v8288, 16
  %v8403 = vrot.slane %v8401, 5
  %v8404 = vshll.u32 %v8288, 16
  %v8406 = vrot.slane %v8404, 6
  %v8407 = vor.u32 %v8403, %v8406
  %v8408 = vrot.slane %v8407, 4
  %v8410 = vshrl.u32 %v8289, 16
  %v8412 = vrot.slane %v8410, 5
  %v8413 = vshll.u32 %v8289, 16
  %v8415 = vrot.slane %v8413, 6
  %v8416 = vor.u32 %v8412, %v8415
  %v8417 = vsel %vm4875, %v8408, %v8416
  %v8419 = vshrl.u32 %v8290, 16
  %v8421 = vrot.slane %v8419, 5
  %v8422 = vshll.u32 %v8290, 16
  %v8424 = vrot.slane %v8422, 6
  %v8425 = vor.u32 %v8421, %v8424
  %v8426 = vrot.slane %v8425, 4
  %v8428 = vshrl.u32 %v8291, 16
  %v8430 = vrot.slane %v8428, 5
  %v8431 = vshll.u32 %v8291, 16
  %v8433 = vrot.slane %v8431, 6
  %v8434 = vor.u32 %v8430, %v8433
  %v8435 = vsel %vm4875, %v8426, %v8434
  %v8437 = vshrl.u32 %v8292, 16
  %v8439 = vrot.slane %v8437, 5
  %v8440 = vshll.u32 %v8292, 16
  %v8442 = vrot.slane %v8440, 6
  %v8443 = vor.u32 %v8439, %v8442
  %v8444 = vrot.slane %v8443, 4
  %v8446 = vshrl.u32 %v8293, 16
  %v8448 = vrot.slane %v8446, 5
  %v8449 = vshll.u32 %v8293, 16
  %v8451 = vrot.slane %v8449, 6
  %v8452 = vor.u32 %v8448, %v8451
  %v8453 = vsel %vm4875, %v8444, %v8452
  %v8455 = vshrl.u32 %v8294, 16
  %v8457 = vrot.slane %v8455, 5
  %v8458 = vshll.u32 %v8294, 16
  %v8460 = vrot.slane %v8458, 6
  %v8461 = vor.u32 %v8457, %v8460
  %v8462 = vrot.slane %v8461, 4
  %v8464 = vshrl.u32 %v8295, 16
  %v8466 = vrot.slane %v8464, 5
  %v8467 = vshll.u32 %v8295, 16
  %v8469 = vrot.slane %v8467, 6
  %v8470 = vor.u32 %v8466, %v8469
  %v8471 = vsel %vm4875, %v8462, %v8470
  %v8473 = vshrl.u32 %v8296, 16
  %v8475 = vrot.slane %v8473, 5
  %v8476 = vshll.u32 %v8296, 16
  %v8478 = vrot.slane %v8476, 6
  %v8479 = vor.u32 %v8475, %v8478
  %v8480 = vrot.slane %v8479, 4
  %v8482 = vshrl.u32 %v8297, 16
  %v8484 = vrot.slane %v8482, 5
  %v8485 = vshll.u32 %v8297, 16
  %v8487 = vrot.slane %v8485, 6
  %v8488 = vor.u32 %v8484, %v8487
  %v8489 = vsel %vm4875, %v8480, %v8488
  %v8491 = vshrl.u32 %v8298, 16
  %v8493 = vrot.slane %v8491, 5
  %v8494 = vshll.u32 %v8298, 16
  %v8496 = vrot.slane %v8494, 6
  %v8497 = vor.u32 %v8493, %v8496
  %v8498 = vrot.slane %v8497, 4
  %v8500 = vshrl.u32 %v8299, 16
  %v8502 = vrot.slane %v8500, 5
  %v8503 = vshll.u32 %v8299, 16
  %v8505 = vrot.slane %v8503, 6
  %v8506 = vor.u32 %v8502, %v8505
  %v8507 = vsel %vm4875, %v8498, %v8506
  %v8509 = vshrl.u32 %v8300, 16
  %v8511 = vrot.slane %v8509, 5
  %v8512 = vshll.u32 %v8300, 16
  %v8514 = vrot.slane %v8512, 6
  %v8515 = vor.u32 %v8511, %v8514
  %v8516 = vrot.slane %v8515, 4
  %v8518 = vshrl.u32 %v8301, 16
  %v8520 = vrot.slane %v8518, 5
  %v8521 = vshll.u32 %v8301, 16
  %v8523 = vrot.slane %v8521, 6
  %v8524 = vor.u32 %v8520, %v8523
  %v8525 = vsel %vm4875, %v8516, %v8524
  %v8527 = vshrl.u32 %v8302, 16
  %v8529 = vrot.slane %v8527, 5
  %v8530 = vshll.u32 %v8302, 16
  %v8532 = vrot.slane %v8530, 6
  %v8533 = vor.u32 %v8529, %v8532
  %v8534 = vrot.slane %v8533, 4
  %v8536 = vshrl.u32 %v8303, 16
  %v8538 = vrot.slane %v8536, 5
  %v8539 = vshll.u32 %v8303, 16
  %v8541 = vrot.slane %v8539, 6
  %v8542 = vor.u32 %v8538, %v8541
  %v8543 = vsel %vm4875, %v8534, %v8542
  %v8545 = vshrl.u32 %v8304, 16
  %v8547 = vrot.slane %v8545, 5
  %v8548 = vshll.u32 %v8304, 16
  %v8550 = vrot.slane %v8548, 6
  %v8551 = vor.u32 %v8547, %v8550
  %v8552 = vrot.slane %v8551, 4
  %v8554 = vshrl.u32 %v8305, 16
  %v8556 = vrot.slane %v8554, 5
  %v8557 = vshll.u32 %v8305, 16
  %v8559 = vrot.slane %v8557, 6
  %v8560 = vor.u32 %v8556, %v8559
  %v8561 = vsel %vm4875, %v8552, %v8560
  %v8563 = vshrl.u32 %v8306, 16
  %v8565 = vrot.slane %v8563, 5
  %v8566 = vshll.u32 %v8306, 16
  %v8568 = vrot.slane %v8566, 6
  %v8569 = vor.u32 %v8565, %v8568
  %v8570 = vrot.slane %v8569, 4
  %v8572 = vshrl.u32 %v8307, 16
  %v8574 = vrot.slane %v8572, 5
  %v8575 = vshll.u32 %v8307, 16
  %v8577 = vrot.slane %v8575, 6
  %v8578 = vor.u32 %v8574, %v8577
  %v8579 = vsel %vm4875, %v8570, %v8578
  %v8581 = vshrl.u32 %v8308, 16
  %v8583 = vrot.slane %v8581, 5
  %v8584 = vshll.u32 %v8308, 16
  %v8586 = vrot.slane %v8584, 6
  %v8587 = vor.u32 %v8583, %v8586
  %v8588 = vrot.slane %v8587, 4
  %v8590 = vshrl.u32 %v8309, 16
  %v8592 = vrot.slane %v8590, 5
  %v8593 = vshll.u32 %v8309, 16
  %v8595 = vrot.slane %v8593, 6
  %v8596 = vor.u32 %v8592, %v8595
  %v8597 = vsel %vm4875, %v8588, %v8596
  %v8598 = vunpack.c.l.b16 %v8327
  %v8599 = vunpack.c.l.b16 %v8345
  %v8600 = vunpack.c.l.b16 %v8363
  %v8601 = vunpack.c.l.b16 %v8381
  %v8602 = vunpack.c.l.b16 %v8399
  %v8603 = vunpack.c.l.b16 %v8417
  %v8604 = vunpack.c.l.b16 %v8435
  %v8605 = vunpack.c.l.b16 %v8453
  %v8606 = vunpack.c.l.b16 %v8471
  %v8607 = vunpack.c.l.b16 %v8489
  %v8608 = vunpack.c.l.b16 %v8507
  %v8609 = vunpack.c.l.b16 %v8525
  %v8610 = vunpack.c.l.b16 %v8543
  %v8611 = vunpack.c.l.b16 %v8561
  %v8612 = vunpack.c.l.b16 %v8579
  %v8613 = vunpack.c.l.b16 %v8597
  %v8614 = vpack.c.b16 %v8599, %v8598
  %v8615 = vpack.c.b16 %v8601, %v8600
  %v8616 = vpack.c.b16 %v8603, %v8602
  %v8617 = vpack.c.b16 %v8605, %v8604
  %v8618 = vpack.c.b16 %v8607, %v8606
  %v8619 = vpack.c.b16 %v8609, %v8608
  %v8620 = vpack.c.b16 %v8611, %v8610
  %v8621 = vpack.c.b16 %v8613, %v8612
  %8622 = vrot.lane.b32.xlu0 %v8614, 16
  %v8623 = vpop.permute.xlu0 %8622
  %8624 = vrot.lane.b32.xlu0 %v8615, 16
  %v8625 = vpop.permute.xlu0 %8624
  %8626 = vrot.lane.b32.xlu0 %v8616, 16
  %v8627 = vpop.permute.xlu0 %8626
  %8628 = vrot.lane.b32.xlu0 %v8617, 16
  %v8629 = vpop.permute.xlu0 %8628
  %8630 = vrot.lane.b32.xlu0 %v8618, 16
  %v8631 = vpop.permute.xlu0 %8630
  %8632 = vrot.lane.b32.xlu0 %v8619, 16
  %v8633 = vpop.permute.xlu0 %8632
  %8634 = vrot.lane.b32.xlu0 %v8620, 16
  %v8635 = vpop.permute.xlu0 %8634
  %8636 = vrot.lane.b32.xlu0 %v8621, 16
  %v8637 = vpop.permute.xlu0 %8636
  %8646 = vst.msk [vmem:[#allocation3 + $0x8] sm:$0xff] %vm4832, %v8623
  %8647 = vst.msk [vmem:[#allocation3 + $0x18] sm:$0xff] %vm4832, %v8625
  %8648 = vst.msk [vmem:[#allocation3 + $0x28] sm:$0xff] %vm4832, %v8627
  %8649 = vst.msk [vmem:[#allocation3 + $0x38] sm:$0xff] %vm4832, %v8629
  %8650 = vst.msk [vmem:[#allocation3 + $0x48] sm:$0xff] %vm4832, %v8631
  %8651 = vst.msk [vmem:[#allocation3 + $0x58] sm:$0xff] %vm4832, %v8633
  %8652 = vst.msk [vmem:[#allocation3 + $0x68] sm:$0xff] %vm4832, %v8635
  %8653 = vst.msk [vmem:[#allocation3 + $0x78] sm:$0xff] %vm4832, %v8637
  %v8654 = vld [vmem:[%s7708] sm:$0xc]
  %v8655 = vld [vmem:[%s7708 + $0x4] sm:$0x3]
  %v8656 = vld [vmem:[%s7708 + $0x8] sm:$0xc]
  %v8657 = vld [vmem:[%s7708 + $0xc] sm:$0x3]
  %v8658 = vld [vmem:[%s7708 + $0x10] sm:$0xc]
  %v8659 = vld [vmem:[%s7708 + $0x14] sm:$0x3]
  %v8660 = vld [vmem:[%s7708 + $0x18] sm:$0xc]
  %v8661 = vld [vmem:[%s7708 + $0x1c] sm:$0x3]
  %v8662 = vld [vmem:[%s7708 + $0x20] sm:$0xc]
  %v8663 = vld [vmem:[%s7708 + $0x24] sm:$0x3]
  %v8664 = vld [vmem:[%s7708 + $0x28] sm:$0xc]
  %v8665 = vld [vmem:[%s7708 + $0x2c] sm:$0x3]
  %v8666 = vld [vmem:[%s7708 + $0x30] sm:$0xc]
  %v8667 = vld [vmem:[%s7708 + $0x34] sm:$0x3]
  %v8668 = vld [vmem:[%s7708 + $0x38] sm:$0xc]
  %v8669 = vld [vmem:[%s7708 + $0x3c] sm:$0x3]
  %v8670 = vld [vmem:[%s7708 + $0x60] sm:$0xc]
  %v8671 = vld [vmem:[%s7708 + $0x64] sm:$0x3]
  %v8672 = vld [vmem:[%s7708 + $0x68] sm:$0xc]
  %v8673 = vld [vmem:[%s7708 + $0x6c] sm:$0x3]
  %v8674 = vld [vmem:[%s7708 + $0x70] sm:$0xc]
  %v8675 = vld [vmem:[%s7708 + $0x74] sm:$0x3]
  %v8676 = vld [vmem:[%s7708 + $0x78] sm:$0xc]
  %v8677 = vld [vmem:[%s7708 + $0x7c] sm:$0x3]
  %v8678 = vld [vmem:[%s7708 + $0x80] sm:$0xc]
  %v8679 = vld [vmem:[%s7708 + $0x84] sm:$0x3]
  %v8680 = vld [vmem:[%s7708 + $0x88] sm:$0xc]
  %v8681 = vld [vmem:[%s7708 + $0x8c] sm:$0x3]
  %v8682 = vld [vmem:[%s7708 + $0x90] sm:$0xc]
  %v8683 = vld [vmem:[%s7708 + $0x94] sm:$0x3]
  %v8684 = vld [vmem:[%s7708 + $0x98] sm:$0xc]
  %v8685 = vld [vmem:[%s7708 + $0x9c] sm:$0x3]
  %v8718 = vrot.slane %v8654, 6
  %v8719 = vrot.slane %v8718, 4
  %v8720 = vrot.slane %v8655, 6
  %v8721 = vsel %vm5287, %v8719, %v8720
  %v8722 = vrot.slane %v8656, 6
  %v8723 = vrot.slane %v8722, 4
  %v8724 = vrot.slane %v8657, 6
  %v8725 = vsel %vm5287, %v8723, %v8724
  %v8726 = vrot.slane %v8658, 6
  %v8727 = vrot.slane %v8726, 4
  %v8728 = vrot.slane %v8659, 6
  %v8729 = vsel %vm5287, %v8727, %v8728
  %v8730 = vrot.slane %v8660, 6
  %v8731 = vrot.slane %v8730, 4
  %v8732 = vrot.slane %v8661, 6
  %v8733 = vsel %vm5287, %v8731, %v8732
  %v8734 = vrot.slane %v8662, 6
  %v8735 = vrot.slane %v8734, 4
  %v8736 = vrot.slane %v8663, 6
  %v8737 = vsel %vm5287, %v8735, %v8736
  %v8738 = vrot.slane %v8664, 6
  %v8739 = vrot.slane %v8738, 4
  %v8740 = vrot.slane %v8665, 6
  %v8741 = vsel %vm5287, %v8739, %v8740
  %v8742 = vrot.slane %v8666, 6
  %v8743 = vrot.slane %v8742, 4
  %v8744 = vrot.slane %v8667, 6
  %v8745 = vsel %vm5287, %v8743, %v8744
  %v8746 = vrot.slane %v8668, 6
  %v8747 = vrot.slane %v8746, 4
  %v8748 = vrot.slane %v8669, 6
  %v8749 = vsel %vm5287, %v8747, %v8748
  %v8750 = vrot.slane %v8670, 6
  %v8751 = vrot.slane %v8750, 4
  %v8752 = vrot.slane %v8671, 6
  %v8753 = vsel %vm5287, %v8751, %v8752
  %v8754 = vrot.slane %v8672, 6
  %v8755 = vrot.slane %v8754, 4
  %v8756 = vrot.slane %v8673, 6
  %v8757 = vsel %vm5287, %v8755, %v8756
  %v8758 = vrot.slane %v8674, 6
  %v8759 = vrot.slane %v8758, 4
  %v8760 = vrot.slane %v8675, 6
  %v8761 = vsel %vm5287, %v8759, %v8760
  %v8762 = vrot.slane %v8676, 6
  %v8763 = vrot.slane %v8762, 4
  %v8764 = vrot.slane %v8677, 6
  %v8765 = vsel %vm5287, %v8763, %v8764
  %v8766 = vrot.slane %v8678, 6
  %v8767 = vrot.slane %v8766, 4
  %v8768 = vrot.slane %v8679, 6
  %v8769 = vsel %vm5287, %v8767, %v8768
  %v8770 = vrot.slane %v8680, 6
  %v8771 = vrot.slane %v8770, 4
  %v8772 = vrot.slane %v8681, 6
  %v8773 = vsel %vm5287, %v8771, %v8772
  %v8774 = vrot.slane %v8682, 6
  %v8775 = vrot.slane %v8774, 4
  %v8776 = vrot.slane %v8683, 6
  %v8777 = vsel %vm5287, %v8775, %v8776
  %v8778 = vrot.slane %v8684, 6
  %v8779 = vrot.slane %v8778, 4
  %v8780 = vrot.slane %v8685, 6
  %v8781 = vsel %vm5287, %v8779, %v8780
  %v8782 = vunpack.c.l.b16 %v8721
  %v8783 = vunpack.c.l.b16 %v8725
  %v8784 = vunpack.c.l.b16 %v8729
  %v8785 = vunpack.c.l.b16 %v8733
  %v8786 = vunpack.c.l.b16 %v8737
  %v8787 = vunpack.c.l.b16 %v8741
  %v8788 = vunpack.c.l.b16 %v8745
  %v8789 = vunpack.c.l.b16 %v8749
  %v8790 = vunpack.c.l.b16 %v8753
  %v8791 = vunpack.c.l.b16 %v8757
  %v8792 = vunpack.c.l.b16 %v8761
  %v8793 = vunpack.c.l.b16 %v8765
  %v8794 = vunpack.c.l.b16 %v8769
  %v8795 = vunpack.c.l.b16 %v8773
  %v8796 = vunpack.c.l.b16 %v8777
  %v8797 = vunpack.c.l.b16 %v8781
  %v8798 = vpack.c.b16 %v8783, %v8782
  %v8799 = vpack.c.b16 %v8785, %v8784
  %v8800 = vpack.c.b16 %v8787, %v8786
  %v8801 = vpack.c.b16 %v8789, %v8788
  %v8802 = vpack.c.b16 %v8791, %v8790
  %v8803 = vpack.c.b16 %v8793, %v8792
  %v8804 = vpack.c.b16 %v8795, %v8794
  %v8805 = vpack.c.b16 %v8797, %v8796
  %8806 = vrot.lane.b32.xlu0 %v8798, 24
  %v8807 = vpop.permute.xlu0 %8806
  %8808 = vrot.lane.b32.xlu0 %v8799, 24
  %v8809 = vpop.permute.xlu0 %8808
  %8810 = vrot.lane.b32.xlu0 %v8800, 24
  %v8811 = vpop.permute.xlu0 %8810
  %8812 = vrot.lane.b32.xlu0 %v8801, 24
  %v8813 = vpop.permute.xlu0 %8812
  %8814 = vrot.lane.b32.xlu0 %v8802, 24
  %v8815 = vpop.permute.xlu0 %8814
  %8816 = vrot.lane.b32.xlu0 %v8803, 24
  %v8817 = vpop.permute.xlu0 %8816
  %8818 = vrot.lane.b32.xlu0 %v8804, 24
  %v8819 = vpop.permute.xlu0 %8818
  %8820 = vrot.lane.b32.xlu0 %v8805, 24
  %v8821 = vpop.permute.xlu0 %8820
  %8830 = vst.msk [vmem:[#allocation3 + $0x8] sm:$0xff] %vm5212, %v8807
  %8831 = vst.msk [vmem:[#allocation3 + $0x18] sm:$0xff] %vm5212, %v8809
  %8832 = vst.msk [vmem:[#allocation3 + $0x28] sm:$0xff] %vm5212, %v8811
  %8833 = vst.msk [vmem:[#allocation3 + $0x38] sm:$0xff] %vm5212, %v8813
  %8834 = vst.msk [vmem:[#allocation3 + $0x48] sm:$0xff] %vm5212, %v8815
  %8835 = vst.msk [vmem:[#allocation3 + $0x58] sm:$0xff] %vm5212, %v8817
  %8836 = vst.msk [vmem:[#allocation3 + $0x68] sm:$0xff] %vm5212, %v8819
  %8837 = vst.msk [vmem:[#allocation3 + $0x78] sm:$0xff] %vm5212, %v8821
  %s8838 = scalar_lea.vmem [#allocation2], 32
  %v8839 = vld [vmem:[%s8838] sm:$0xf]
  %v8840 = vld [vmem:[%s8838 + $0x8] sm:$0xf]
  %v8841 = vld [vmem:[%s8838 + $0x10] sm:$0xf]
  %v8842 = vld [vmem:[%s8838 + $0x18] sm:$0xf]
  %v8843 = vld [vmem:[%s8838 + $0x20] sm:$0xf]
  %v8844 = vld [vmem:[%s8838 + $0x28] sm:$0xf]
  %v8845 = vld [vmem:[%s8838 + $0x30] sm:$0xf]
  %v8846 = vld [vmem:[%s8838 + $0x38] sm:$0xf]
  %v8847 = vld [vmem:[%s8838 + $0x60] sm:$0xf]
  %v8848 = vld [vmem:[%s8838 + $0x68] sm:$0xf]
  %v8849 = vld [vmem:[%s8838 + $0x70] sm:$0xf]
  %v8850 = vld [vmem:[%s8838 + $0x78] sm:$0xf]
  %v8851 = vld [vmem:[%s8838 + $0x80] sm:$0xf]
  %v8852 = vld [vmem:[%s8838 + $0x88] sm:$0xf]
  %v8853 = vld [vmem:[%s8838 + $0x90] sm:$0xf]
  %v8854 = vld [vmem:[%s8838 + $0x98] sm:$0xf]
  %v8871 = vunpack.c.l.b16 %v8839
  %v8872 = vunpack.c.l.b16 %v8840
  %v8873 = vunpack.c.l.b16 %v8841
  %v8874 = vunpack.c.l.b16 %v8842
  %v8875 = vunpack.c.l.b16 %v8843
  %v8876 = vunpack.c.l.b16 %v8844
  %v8877 = vunpack.c.l.b16 %v8845
  %v8878 = vunpack.c.l.b16 %v8846
  %v8879 = vunpack.c.l.b16 %v8847
  %v8880 = vunpack.c.l.b16 %v8848
  %v8881 = vunpack.c.l.b16 %v8849
  %v8882 = vunpack.c.l.b16 %v8850
  %v8883 = vunpack.c.l.b16 %v8851
  %v8884 = vunpack.c.l.b16 %v8852
  %v8885 = vunpack.c.l.b16 %v8853
  %v8886 = vunpack.c.l.b16 %v8854
  %v8887 = vpack.c.b16 %v8872, %v8871
  %v8888 = vpack.c.b16 %v8874, %v8873
  %v8889 = vpack.c.b16 %v8876, %v8875
  %v8890 = vpack.c.b16 %v8878, %v8877
  %v8891 = vpack.c.b16 %v8880, %v8879
  %v8892 = vpack.c.b16 %v8882, %v8881
  %v8893 = vpack.c.b16 %v8884, %v8883
  %v8894 = vpack.c.b16 %v8886, %v8885
  %8895 = vrot.lane.b32.xlu0 %v8887, 32
  %v8896 = vpop.permute.xlu0 %8895
  %8897 = vrot.lane.b32.xlu0 %v8888, 32
  %v8898 = vpop.permute.xlu0 %8897
  %8899 = vrot.lane.b32.xlu0 %v8889, 32
  %v8900 = vpop.permute.xlu0 %8899
  %8901 = vrot.lane.b32.xlu0 %v8890, 32
  %v8902 = vpop.permute.xlu0 %8901
  %8903 = vrot.lane.b32.xlu0 %v8891, 32
  %v8904 = vpop.permute.xlu0 %8903
  %8905 = vrot.lane.b32.xlu0 %v8892, 32
  %v8906 = vpop.permute.xlu0 %8905
  %8907 = vrot.lane.b32.xlu0 %v8893, 32
  %v8908 = vpop.permute.xlu0 %8907
  %8909 = vrot.lane.b32.xlu0 %v8894, 32
  %v8910 = vpop.permute.xlu0 %8909
  %8919 = vst.msk [vmem:[#allocation3 + $0x8] sm:$0xff] %vm5400, %v8896
  %8920 = vst.msk [vmem:[#allocation3 + $0x18] sm:$0xff] %vm5400, %v8898
  %8921 = vst.msk [vmem:[#allocation3 + $0x28] sm:$0xff] %vm5400, %v8900
  %8922 = vst.msk [vmem:[#allocation3 + $0x38] sm:$0xff] %vm5400, %v8902
  %8923 = vst.msk [vmem:[#allocation3 + $0x48] sm:$0xff] %vm5400, %v8904
  %8924 = vst.msk [vmem:[#allocation3 + $0x58] sm:$0xff] %vm5400, %v8906
  %8925 = vst.msk [vmem:[#allocation3 + $0x68] sm:$0xff] %vm5400, %v8908
  %8926 = vst.msk [vmem:[#allocation3 + $0x78] sm:$0xff] %vm5400, %v8910
  %v8927 = vld [vmem:[%s8838] sm:$0xf]
  %v8928 = vld [vmem:[%s8838 + $0x4] sm:$0x1]
  %v8929 = vld [vmem:[%s8838 + $0x8] sm:$0xf]
  %v8930 = vld [vmem:[%s8838 + $0xc] sm:$0x1]
  %v8931 = vld [vmem:[%s8838 + $0x10] sm:$0xf]
  %v8932 = vld [vmem:[%s8838 + $0x14] sm:$0x1]
  %v8933 = vld [vmem:[%s8838 + $0x18] sm:$0xf]
  %v8934 = vld [vmem:[%s8838 + $0x1c] sm:$0x1]
  %v8935 = vld [vmem:[%s8838 + $0x20] sm:$0xf]
  %v8936 = vld [vmem:[%s8838 + $0x24] sm:$0x1]
  %v8937 = vld [vmem:[%s8838 + $0x28] sm:$0xf]
  %v8938 = vld [vmem:[%s8838 + $0x2c] sm:$0x1]
  %v8939 = vld [vmem:[%s8838 + $0x30] sm:$0xf]
  %v8940 = vld [vmem:[%s8838 + $0x34] sm:$0x1]
  %v8941 = vld [vmem:[%s8838 + $0x38] sm:$0xf]
  %v8942 = vld [vmem:[%s8838 + $0x3c] sm:$0x1]
  %v8943 = vld [vmem:[%s8838 + $0x60] sm:$0xf]
  %v8944 = vld [vmem:[%s8838 + $0x64] sm:$0x1]
  %v8945 = vld [vmem:[%s8838 + $0x68] sm:$0xf]
  %v8946 = vld [vmem:[%s8838 + $0x6c] sm:$0x1]
  %v8947 = vld [vmem:[%s8838 + $0x70] sm:$0xf]
  %v8948 = vld [vmem:[%s8838 + $0x74] sm:$0x1]
  %v8949 = vld [vmem:[%s8838 + $0x78] sm:$0xf]
  %v8950 = vld [vmem:[%s8838 + $0x7c] sm:$0x1]
  %v8951 = vld [vmem:[%s8838 + $0x80] sm:$0xf]
  %v8952 = vld [vmem:[%s8838 + $0x84] sm:$0x1]
  %v8953 = vld [vmem:[%s8838 + $0x88] sm:$0xf]
  %v8954 = vld [vmem:[%s8838 + $0x8c] sm:$0x1]
  %v8955 = vld [vmem:[%s8838 + $0x90] sm:$0xf]
  %v8956 = vld [vmem:[%s8838 + $0x94] sm:$0x1]
  %v8957 = vld [vmem:[%s8838 + $0x98] sm:$0xf]
  %v8958 = vld [vmem:[%s8838 + $0x9c] sm:$0x1]
  %v8960 = vshrl.u32 %v8927, 16
  %v8962 = vrot.slane %v8960, 4
  %v8963 = vshll.u32 %v8927, 16
  %v8965 = vrot.slane %v8963, 5
  %v8966 = vor.u32 %v8962, %v8965
  %v8967 = vrot.slane %v8966, 4
  %v8969 = vshll.u32 %v8928, 16
  %v8971 = vrot.slane %v8969, 5
  %v8972 = vsel %vm4371, %v8967, %v8971
  %v8974 = vshrl.u32 %v8929, 16
  %v8976 = vrot.slane %v8974, 4
  %v8977 = vshll.u32 %v8929, 16
  %v8979 = vrot.slane %v8977, 5
  %v8980 = vor.u32 %v8976, %v8979
  %v8981 = vrot.slane %v8980, 4
  %v8983 = vshll.u32 %v8930, 16
  %v8985 = vrot.slane %v8983, 5
  %v8986 = vsel %vm4371, %v8981, %v8985
  %v8988 = vshrl.u32 %v8931, 16
  %v8990 = vrot.slane %v8988, 4
  %v8991 = vshll.u32 %v8931, 16
  %v8993 = vrot.slane %v8991, 5
  %v8994 = vor.u32 %v8990, %v8993
  %v8995 = vrot.slane %v8994, 4
  %v8997 = vshll.u32 %v8932, 16
  %v8999 = vrot.slane %v8997, 5
  %v9000 = vsel %vm4371, %v8995, %v8999
  %v9002 = vshrl.u32 %v8933, 16
  %v9004 = vrot.slane %v9002, 4
  %v9005 = vshll.u32 %v8933, 16
  %v9007 = vrot.slane %v9005, 5
  %v9008 = vor.u32 %v9004, %v9007
  %v9009 = vrot.slane %v9008, 4
  %v9011 = vshll.u32 %v8934, 16
  %v9013 = vrot.slane %v9011, 5
  %v9014 = vsel %vm4371, %v9009, %v9013
  %v9016 = vshrl.u32 %v8935, 16
  %v9018 = vrot.slane %v9016, 4
  %v9019 = vshll.u32 %v8935, 16
  %v9021 = vrot.slane %v9019, 5
  %v9022 = vor.u32 %v9018, %v9021
  %v9023 = vrot.slane %v9022, 4
  %v9025 = vshll.u32 %v8936, 16
  %v9027 = vrot.slane %v9025, 5
  %v9028 = vsel %vm4371, %v9023, %v9027
  %v9030 = vshrl.u32 %v8937, 16
  %v9032 = vrot.slane %v9030, 4
  %v9033 = vshll.u32 %v8937, 16
  %v9035 = vrot.slane %v9033, 5
  %v9036 = vor.u32 %v9032, %v9035
  %v9037 = vrot.slane %v9036, 4
  %v9039 = vshll.u32 %v8938, 16
  %v9041 = vrot.slane %v9039, 5
  %v9042 = vsel %vm4371, %v9037, %v9041
  %v9044 = vshrl.u32 %v8939, 16
  %v9046 = vrot.slane %v9044, 4
  %v9047 = vshll.u32 %v8939, 16
  %v9049 = vrot.slane %v9047, 5
  %v9050 = vor.u32 %v9046, %v9049
  %v9051 = vrot.slane %v9050, 4
  %v9053 = vshll.u32 %v8940, 16
  %v9055 = vrot.slane %v9053, 5
  %v9056 = vsel %vm4371, %v9051, %v9055
  %v9058 = vshrl.u32 %v8941, 16
  %v9060 = vrot.slane %v9058, 4
  %v9061 = vshll.u32 %v8941, 16
  %v9063 = vrot.slane %v9061, 5
  %v9064 = vor.u32 %v9060, %v9063
  %v9065 = vrot.slane %v9064, 4
  %v9067 = vshll.u32 %v8942, 16
  %v9069 = vrot.slane %v9067, 5
  %v9070 = vsel %vm4371, %v9065, %v9069
  %v9072 = vshrl.u32 %v8943, 16
  %v9074 = vrot.slane %v9072, 4
  %v9075 = vshll.u32 %v8943, 16
  %v9077 = vrot.slane %v9075, 5
  %v9078 = vor.u32 %v9074, %v9077
  %v9079 = vrot.slane %v9078, 4
  %v9081 = vshll.u32 %v8944, 16
  %v9083 = vrot.slane %v9081, 5
  %v9084 = vsel %vm4371, %v9079, %v9083
  %v9086 = vshrl.u32 %v8945, 16
  %v9088 = vrot.slane %v9086, 4
  %v9089 = vshll.u32 %v8945, 16
  %v9091 = vrot.slane %v9089, 5
  %v9092 = vor.u32 %v9088, %v9091
  %v9093 = vrot.slane %v9092, 4
  %v9095 = vshll.u32 %v8946, 16
  %v9097 = vrot.slane %v9095, 5
  %v9098 = vsel %vm4371, %v9093, %v9097
  %v9100 = vshrl.u32 %v8947, 16
  %v9102 = vrot.slane %v9100, 4
  %v9103 = vshll.u32 %v8947, 16
  %v9105 = vrot.slane %v9103, 5
  %v9106 = vor.u32 %v9102, %v9105
  %v9107 = vrot.slane %v9106, 4
  %v9109 = vshll.u32 %v8948, 16
  %v9111 = vrot.slane %v9109, 5
  %v9112 = vsel %vm4371, %v9107, %v9111
  %v9114 = vshrl.u32 %v8949, 16
  %v9116 = vrot.slane %v9114, 4
  %v9117 = vshll.u32 %v8949, 16
  %v9119 = vrot.slane %v9117, 5
  %v9120 = vor.u32 %v9116, %v9119
  %v9121 = vrot.slane %v9120, 4
  %v9123 = vshll.u32 %v8950, 16
  %v9125 = vrot.slane %v9123, 5
  %v9126 = vsel %vm4371, %v9121, %v9125
  %v9128 = vshrl.u32 %v8951, 16
  %v9130 = vrot.slane %v9128, 4
  %v9131 = vshll.u32 %v8951, 16
  %v9133 = vrot.slane %v9131, 5
  %v9134 = vor.u32 %v9130, %v9133
  %v9135 = vrot.slane %v9134, 4
  %v9137 = vshll.u32 %v8952, 16
  %v9139 = vrot.slane %v9137, 5
  %v9140 = vsel %vm4371, %v9135, %v9139
  %v9142 = vshrl.u32 %v8953, 16
  %v9144 = vrot.slane %v9142, 4
  %v9145 = vshll.u32 %v8953, 16
  %v9147 = vrot.slane %v9145, 5
  %v9148 = vor.u32 %v9144, %v9147
  %v9149 = vrot.slane %v9148, 4
  %v9151 = vshll.u32 %v8954, 16
  %v9153 = vrot.slane %v9151, 5
  %v9154 = vsel %vm4371, %v9149, %v9153
  %v9156 = vshrl.u32 %v8955, 16
  %v9158 = vrot.slane %v9156, 4
  %v9159 = vshll.u32 %v8955, 16
  %v9161 = vrot.slane %v9159, 5
  %v9162 = vor.u32 %v9158, %v9161
  %v9163 = vrot.slane %v9162, 4
  %v9165 = vshll.u32 %v8956, 16
  %v9167 = vrot.slane %v9165, 5
  %v9168 = vsel %vm4371, %v9163, %v9167
  %v9170 = vshrl.u32 %v8957, 16
  %v9172 = vrot.slane %v9170, 4
  %v9173 = vshll.u32 %v8957, 16
  %v9175 = vrot.slane %v9173, 5
  %v9176 = vor.u32 %v9172, %v9175
  %v9177 = vrot.slane %v9176, 4
  %v9179 = vshll.u32 %v8958, 16
  %v9181 = vrot.slane %v9179, 5
  %v9182 = vsel %vm4371, %v9177, %v9181
  %v9183 = vunpack.c.l.b16 %v8972
  %v9184 = vunpack.c.l.b16 %v8986
  %v9185 = vunpack.c.l.b16 %v9000
  %v9186 = vunpack.c.l.b16 %v9014
  %v9187 = vunpack.c.l.b16 %v9028
  %v9188 = vunpack.c.l.b16 %v9042
  %v9189 = vunpack.c.l.b16 %v9056
  %v9190 = vunpack.c.l.b16 %v9070
  %v9191 = vunpack.c.l.b16 %v9084
  %v9192 = vunpack.c.l.b16 %v9098
  %v9193 = vunpack.c.l.b16 %v9112
  %v9194 = vunpack.c.l.b16 %v9126
  %v9195 = vunpack.c.l.b16 %v9140
  %v9196 = vunpack.c.l.b16 %v9154
  %v9197 = vunpack.c.l.b16 %v9168
  %v9198 = vunpack.c.l.b16 %v9182
  %v9199 = vpack.c.b16 %v9184, %v9183
  %v9200 = vpack.c.b16 %v9186, %v9185
  %v9201 = vpack.c.b16 %v9188, %v9187
  %v9202 = vpack.c.b16 %v9190, %v9189
  %v9203 = vpack.c.b16 %v9192, %v9191
  %v9204 = vpack.c.b16 %v9194, %v9193
  %v9205 = vpack.c.b16 %v9196, %v9195
  %v9206 = vpack.c.b16 %v9198, %v9197
  %9207 = vrot.lane.b32.xlu0 %v9199, 40
  %v9208 = vpop.permute.xlu0 %9207
  %9209 = vrot.lane.b32.xlu0 %v9200, 40
  %v9210 = vpop.permute.xlu0 %9209
  %9211 = vrot.lane.b32.xlu0 %v9201, 40
  %v9212 = vpop.permute.xlu0 %9211
  %9213 = vrot.lane.b32.xlu0 %v9202, 40
  %v9214 = vpop.permute.xlu0 %9213
  %9215 = vrot.lane.b32.xlu0 %v9203, 40
  %v9216 = vpop.permute.xlu0 %9215
  %9217 = vrot.lane.b32.xlu0 %v9204, 40
  %v9218 = vpop.permute.xlu0 %9217
  %9219 = vrot.lane.b32.xlu0 %v9205, 40
  %v9220 = vpop.permute.xlu0 %9219
  %9221 = vrot.lane.b32.xlu0 %v9206, 40
  %v9222 = vpop.permute.xlu0 %9221
  %9231 = vst.msk [vmem:[#allocation3 + $0x8] sm:$0xff] %vm5490, %v9208
  %9232 = vst.msk [vmem:[#allocation3 + $0x18] sm:$0xff] %vm5490, %v9210
  %9233 = vst.msk [vmem:[#allocation3 + $0x28] sm:$0xff] %vm5490, %v9212
  %9234 = vst.msk [vmem:[#allocation3 + $0x38] sm:$0xff] %vm5490, %v9214
  %9235 = vst.msk [vmem:[#allocation3 + $0x48] sm:$0xff] %vm5490, %v9216
  %9236 = vst.msk [vmem:[#allocation3 + $0x58] sm:$0xff] %vm5490, %v9218
  %9237 = vst.msk [vmem:[#allocation3 + $0x68] sm:$0xff] %vm5490, %v9220
  %9238 = vst.msk [vmem:[#allocation3 + $0x78] sm:$0xff] %vm5490, %v9222
  %v9239 = vld [vmem:[%s8838] sm:$0xe]
  %v9240 = vld [vmem:[%s8838 + $0x4] sm:$0x1]
  %v9241 = vld [vmem:[%s8838 + $0x8] sm:$0xe]
  %v9242 = vld [vmem:[%s8838 + $0xc] sm:$0x1]
  %v9243 = vld [vmem:[%s8838 + $0x10] sm:$0xe]
  %v9244 = vld [vmem:[%s8838 + $0x14] sm:$0x1]
  %v9245 = vld [vmem:[%s8838 + $0x18] sm:$0xe]
  %v9246 = vld [vmem:[%s8838 + $0x1c] sm:$0x1]
  %v9247 = vld [vmem:[%s8838 + $0x20] sm:$0xe]
  %v9248 = vld [vmem:[%s8838 + $0x24] sm:$0x1]
  %v9249 = vld [vmem:[%s8838 + $0x28] sm:$0xe]
  %v9250 = vld [vmem:[%s8838 + $0x2c] sm:$0x1]
  %v9251 = vld [vmem:[%s8838 + $0x30] sm:$0xe]
  %v9252 = vld [vmem:[%s8838 + $0x34] sm:$0x1]
  %v9253 = vld [vmem:[%s8838 + $0x38] sm:$0xe]
  %v9254 = vld [vmem:[%s8838 + $0x3c] sm:$0x1]
  %v9255 = vld [vmem:[%s8838 + $0x60] sm:$0xe]
  %v9256 = vld [vmem:[%s8838 + $0x64] sm:$0x1]
  %v9257 = vld [vmem:[%s8838 + $0x68] sm:$0xe]
  %v9258 = vld [vmem:[%s8838 + $0x6c] sm:$0x1]
  %v9259 = vld [vmem:[%s8838 + $0x70] sm:$0xe]
  %v9260 = vld [vmem:[%s8838 + $0x74] sm:$0x1]
  %v9261 = vld [vmem:[%s8838 + $0x78] sm:$0xe]
  %v9262 = vld [vmem:[%s8838 + $0x7c] sm:$0x1]
  %v9263 = vld [vmem:[%s8838 + $0x80] sm:$0xe]
  %v9264 = vld [vmem:[%s8838 + $0x84] sm:$0x1]
  %v9265 = vld [vmem:[%s8838 + $0x88] sm:$0xe]
  %v9266 = vld [vmem:[%s8838 + $0x8c] sm:$0x1]
  %v9267 = vld [vmem:[%s8838 + $0x90] sm:$0xe]
  %v9268 = vld [vmem:[%s8838 + $0x94] sm:$0x1]
  %v9269 = vld [vmem:[%s8838 + $0x98] sm:$0xe]
  %v9270 = vld [vmem:[%s8838 + $0x9c] sm:$0x1]
  %v9303 = vrot.slane %v9239, 5
  %v9304 = vrot.slane %v9303, 4
  %v9305 = vrot.slane %v9240, 5
  %v9306 = vsel %vm4719, %v9304, %v9305
  %v9307 = vrot.slane %v9241, 5
  %v9308 = vrot.slane %v9307, 4
  %v9309 = vrot.slane %v9242, 5
  %v9310 = vsel %vm4719, %v9308, %v9309
  %v9311 = vrot.slane %v9243, 5
  %v9312 = vrot.slane %v9311, 4
  %v9313 = vrot.slane %v9244, 5
  %v9314 = vsel %vm4719, %v9312, %v9313
  %v9315 = vrot.slane %v9245, 5
  %v9316 = vrot.slane %v9315, 4
  %v9317 = vrot.slane %v9246, 5
  %v9318 = vsel %vm4719, %v9316, %v9317
  %v9319 = vrot.slane %v9247, 5
  %v9320 = vrot.slane %v9319, 4
  %v9321 = vrot.slane %v9248, 5
  %v9322 = vsel %vm4719, %v9320, %v9321
  %v9323 = vrot.slane %v9249, 5
  %v9324 = vrot.slane %v9323, 4
  %v9325 = vrot.slane %v9250, 5
  %v9326 = vsel %vm4719, %v9324, %v9325
  %v9327 = vrot.slane %v9251, 5
  %v9328 = vrot.slane %v9327, 4
  %v9329 = vrot.slane %v9252, 5
  %v9330 = vsel %vm4719, %v9328, %v9329
  %v9331 = vrot.slane %v9253, 5
  %v9332 = vrot.slane %v9331, 4
  %v9333 = vrot.slane %v9254, 5
  %v9334 = vsel %vm4719, %v9332, %v9333
  %v9335 = vrot.slane %v9255, 5
  %v9336 = vrot.slane %v9335, 4
  %v9337 = vrot.slane %v9256, 5
  %v9338 = vsel %vm4719, %v9336, %v9337
  %v9339 = vrot.slane %v9257, 5
  %v9340 = vrot.slane %v9339, 4
  %v9341 = vrot.slane %v9258, 5
  %v9342 = vsel %vm4719, %v9340, %v9341
  %v9343 = vrot.slane %v9259, 5
  %v9344 = vrot.slane %v9343, 4
  %v9345 = vrot.slane %v9260, 5
  %v9346 = vsel %vm4719, %v9344, %v9345
  %v9347 = vrot.slane %v9261, 5
  %v9348 = vrot.slane %v9347, 4
  %v9349 = vrot.slane %v9262, 5
  %v9350 = vsel %vm4719, %v9348, %v9349
  %v9351 = vrot.slane %v9263, 5
  %v9352 = vrot.slane %v9351, 4
  %v9353 = vrot.slane %v9264, 5
  %v9354 = vsel %vm4719, %v9352, %v9353
  %v9355 = vrot.slane %v9265, 5
  %v9356 = vrot.slane %v9355, 4
  %v9357 = vrot.slane %v9266, 5
  %v9358 = vsel %vm4719, %v9356, %v9357
  %v9359 = vrot.slane %v9267, 5
  %v9360 = vrot.slane %v9359, 4
  %v9361 = vrot.slane %v9268, 5
  %v9362 = vsel %vm4719, %v9360, %v9361
  %v9363 = vrot.slane %v9269, 5
  %v9364 = vrot.slane %v9363, 4
  %v9365 = vrot.slane %v9270, 5
  %v9366 = vsel %vm4719, %v9364, %v9365
  %v9367 = vunpack.c.l.b16 %v9306
  %v9368 = vunpack.c.l.b16 %v9310
  %v9369 = vunpack.c.l.b16 %v9314
  %v9370 = vunpack.c.l.b16 %v9318
  %v9371 = vunpack.c.l.b16 %v9322
  %v9372 = vunpack.c.l.b16 %v9326
  %v9373 = vunpack.c.l.b16 %v9330
  %v9374 = vunpack.c.l.b16 %v9334
  %v9375 = vunpack.c.l.b16 %v9338
  %v9376 = vunpack.c.l.b16 %v9342
  %v9377 = vunpack.c.l.b16 %v9346
  %v9378 = vunpack.c.l.b16 %v9350
  %v9379 = vunpack.c.l.b16 %v9354
  %v9380 = vunpack.c.l.b16 %v9358
  %v9381 = vunpack.c.l.b16 %v9362
  %v9382 = vunpack.c.l.b16 %v9366
  %v9383 = vpack.c.b16 %v9368, %v9367
  %v9384 = vpack.c.b16 %v9370, %v9369
  %v9385 = vpack.c.b16 %v9372, %v9371
  %v9386 = vpack.c.b16 %v9374, %v9373
  %v9387 = vpack.c.b16 %v9376, %v9375
  %v9388 = vpack.c.b16 %v9378, %v9377
  %v9389 = vpack.c.b16 %v9380, %v9379
  %v9390 = vpack.c.b16 %v9382, %v9381
  %9391 = vrot.lane.b32.xlu0 %v9383, 48
  %v9392 = vpop.permute.xlu0 %9391
  %9393 = vrot.lane.b32.xlu0 %v9384, 48
  %v9394 = vpop.permute.xlu0 %9393
  %9395 = vrot.lane.b32.xlu0 %v9385, 48
  %v9396 = vpop.permute.xlu0 %9395
  %9397 = vrot.lane.b32.xlu0 %v9386, 48
  %v9398 = vpop.permute.xlu0 %9397
  %9399 = vrot.lane.b32.xlu0 %v9387, 48
  %v9400 = vpop.permute.xlu0 %9399
  %9401 = vrot.lane.b32.xlu0 %v9388, 48
  %v9402 = vpop.permute.xlu0 %9401
  %9403 = vrot.lane.b32.xlu0 %v9389, 48
  %v9404 = vpop.permute.xlu0 %9403
  %9405 = vrot.lane.b32.xlu0 %v9390, 48
  %v9406 = vpop.permute.xlu0 %9405
  %9415 = vst.msk [vmem:[#allocation3 + $0x8] sm:$0xff] %vm5803, %v9392
  %9416 = vst.msk [vmem:[#allocation3 + $0x18] sm:$0xff] %vm5803, %v9394
  %9417 = vst.msk [vmem:[#allocation3 + $0x28] sm:$0xff] %vm5803, %v9396
  %9418 = vst.msk [vmem:[#allocation3 + $0x38] sm:$0xff] %vm5803, %v9398
  %9419 = vst.msk [vmem:[#allocation3 + $0x48] sm:$0xff] %vm5803, %v9400
  %9420 = vst.msk [vmem:[#allocation3 + $0x58] sm:$0xff] %vm5803, %v9402
  %9421 = vst.msk [vmem:[#allocation3 + $0x68] sm:$0xff] %vm5803, %v9404
  %9422 = vst.msk [vmem:[#allocation3 + $0x78] sm:$0xff] %vm5803, %v9406
  %v9423 = vld [vmem:[%s8838] sm:$0xe]
  %v9424 = vld [vmem:[%s8838 + $0x4] sm:$0x3]
  %v9425 = vld [vmem:[%s8838 + $0x8] sm:$0xe]
  %v9426 = vld [vmem:[%s8838 + $0xc] sm:$0x3]
  %v9427 = vld [vmem:[%s8838 + $0x10] sm:$0xe]
  %v9428 = vld [vmem:[%s8838 + $0x14] sm:$0x3]
  %v9429 = vld [vmem:[%s8838 + $0x18] sm:$0xe]
  %v9430 = vld [vmem:[%s8838 + $0x1c] sm:$0x3]
  %v9431 = vld [vmem:[%s8838 + $0x20] sm:$0xe]
  %v9432 = vld [vmem:[%s8838 + $0x24] sm:$0x3]
  %v9433 = vld [vmem:[%s8838 + $0x28] sm:$0xe]
  %v9434 = vld [vmem:[%s8838 + $0x2c] sm:$0x3]
  %v9435 = vld [vmem:[%s8838 + $0x30] sm:$0xe]
  %v9436 = vld [vmem:[%s8838 + $0x34] sm:$0x3]
  %v9437 = vld [vmem:[%s8838 + $0x38] sm:$0xe]
  %v9438 = vld [vmem:[%s8838 + $0x3c] sm:$0x3]
  %v9439 = vld [vmem:[%s8838 + $0x60] sm:$0xe]
  %v9440 = vld [vmem:[%s8838 + $0x64] sm:$0x3]
  %v9441 = vld [vmem:[%s8838 + $0x68] sm:$0xe]
  %v9442 = vld [vmem:[%s8838 + $0x6c] sm:$0x3]
  %v9443 = vld [vmem:[%s8838 + $0x70] sm:$0xe]
  %v9444 = vld [vmem:[%s8838 + $0x74] sm:$0x3]
  %v9445 = vld [vmem:[%s8838 + $0x78] sm:$0xe]
  %v9446 = vld [vmem:[%s8838 + $0x7c] sm:$0x3]
  %v9447 = vld [vmem:[%s8838 + $0x80] sm:$0xe]
  %v9448 = vld [vmem:[%s8838 + $0x84] sm:$0x3]
  %v9449 = vld [vmem:[%s8838 + $0x88] sm:$0xe]
  %v9450 = vld [vmem:[%s8838 + $0x8c] sm:$0x3]
  %v9451 = vld [vmem:[%s8838 + $0x90] sm:$0xe]
  %v9452 = vld [vmem:[%s8838 + $0x94] sm:$0x3]
  %v9453 = vld [vmem:[%s8838 + $0x98] sm:$0xe]
  %v9454 = vld [vmem:[%s8838 + $0x9c] sm:$0x3]
  %v9456 = vshrl.u32 %v9423, 16
  %v9458 = vrot.slane %v9456, 5
  %v9459 = vshll.u32 %v9423, 16
  %v9461 = vrot.slane %v9459, 6
  %v9462 = vor.u32 %v9458, %v9461
  %v9463 = vrot.slane %v9462, 4
  %v9465 = vshrl.u32 %v9424, 16
  %v9467 = vrot.slane %v9465, 5
  %v9468 = vshll.u32 %v9424, 16
  %v9470 = vrot.slane %v9468, 6
  %v9471 = vor.u32 %v9467, %v9470
  %v9472 = vsel %vm4875, %v9463, %v9471
  %v9474 = vshrl.u32 %v9425, 16
  %v9476 = vrot.slane %v9474, 5
  %v9477 = vshll.u32 %v9425, 16
  %v9479 = vrot.slane %v9477, 6
  %v9480 = vor.u32 %v9476, %v9479
  %v9481 = vrot.slane %v9480, 4
  %v9483 = vshrl.u32 %v9426, 16
  %v9485 = vrot.slane %v9483, 5
  %v9486 = vshll.u32 %v9426, 16
  %v9488 = vrot.slane %v9486, 6
  %v9489 = vor.u32 %v9485, %v9488
  %v9490 = vsel %vm4875, %v9481, %v9489
  %v9492 = vshrl.u32 %v9427, 16
  %v9494 = vrot.slane %v9492, 5
  %v9495 = vshll.u32 %v9427, 16
  %v9497 = vrot.slane %v9495, 6
  %v9498 = vor.u32 %v9494, %v9497
  %v9499 = vrot.slane %v9498, 4
  %v9501 = vshrl.u32 %v9428, 16
  %v9503 = vrot.slane %v9501, 5
  %v9504 = vshll.u32 %v9428, 16
  %v9506 = vrot.slane %v9504, 6
  %v9507 = vor.u32 %v9503, %v9506
  %v9508 = vsel %vm4875, %v9499, %v9507
  %v9510 = vshrl.u32 %v9429, 16
  %v9512 = vrot.slane %v9510, 5
  %v9513 = vshll.u32 %v9429, 16
  %v9515 = vrot.slane %v9513, 6
  %v9516 = vor.u32 %v9512, %v9515
  %v9517 = vrot.slane %v9516, 4
  %v9519 = vshrl.u32 %v9430, 16
  %v9521 = vrot.slane %v9519, 5
  %v9522 = vshll.u32 %v9430, 16
  %v9524 = vrot.slane %v9522, 6
  %v9525 = vor.u32 %v9521, %v9524
  %v9526 = vsel %vm4875, %v9517, %v9525
  %v9528 = vshrl.u32 %v9431, 16
  %v9530 = vrot.slane %v9528, 5
  %v9531 = vshll.u32 %v9431, 16
  %v9533 = vrot.slane %v9531, 6
  %v9534 = vor.u32 %v9530, %v9533
  %v9535 = vrot.slane %v9534, 4
  %v9537 = vshrl.u32 %v9432, 16
  %v9539 = vrot.slane %v9537, 5
  %v9540 = vshll.u32 %v9432, 16
  %v9542 = vrot.slane %v9540, 6
  %v9543 = vor.u32 %v9539, %v9542
  %v9544 = vsel %vm4875, %v9535, %v9543
  %v9546 = vshrl.u32 %v9433, 16
  %v9548 = vrot.slane %v9546, 5
  %v9549 = vshll.u32 %v9433, 16
  %v9551 = vrot.slane %v9549, 6
  %v9552 = vor.u32 %v9548, %v9551
  %v9553 = vrot.slane %v9552, 4
  %v9555 = vshrl.u32 %v9434, 16
  %v9557 = vrot.slane %v9555, 5
  %v9558 = vshll.u32 %v9434, 16
  %v9560 = vrot.slane %v9558, 6
  %v9561 = vor.u32 %v9557, %v9560
  %v9562 = vsel %vm4875, %v9553, %v9561
  %v9564 = vshrl.u32 %v9435, 16
  %v9566 = vrot.slane %v9564, 5
  %v9567 = vshll.u32 %v9435, 16
  %v9569 = vrot.slane %v9567, 6
  %v9570 = vor.u32 %v9566, %v9569
  %v9571 = vrot.slane %v9570, 4
  %v9573 = vshrl.u32 %v9436, 16
  %v9575 = vrot.slane %v9573, 5
  %v9576 = vshll.u32 %v9436, 16
  %v9578 = vrot.slane %v9576, 6
  %v9579 = vor.u32 %v9575, %v9578
  %v9580 = vsel %vm4875, %v9571, %v9579
  %v9582 = vshrl.u32 %v9437, 16
  %v9584 = vrot.slane %v9582, 5
  %v9585 = vshll.u32 %v9437, 16
  %v9587 = vrot.slane %v9585, 6
  %v9588 = vor.u32 %v9584, %v9587
  %v9589 = vrot.slane %v9588, 4
  %v9591 = vshrl.u32 %v9438, 16
  %v9593 = vrot.slane %v9591, 5
  %v9594 = vshll.u32 %v9438, 16
  %v9596 = vrot.slane %v9594, 6
  %v9597 = vor.u32 %v9593, %v9596
  %v9598 = vsel %vm4875, %v9589, %v9597
  %v9600 = vshrl.u32 %v9439, 16
  %v9602 = vrot.slane %v9600, 5
  %v9603 = vshll.u32 %v9439, 16
  %v9605 = vrot.slane %v9603, 6
  %v9606 = vor.u32 %v9602, %v9605
  %v9607 = vrot.slane %v9606, 4
  %v9609 = vshrl.u32 %v9440, 16
  %v9611 = vrot.slane %v9609, 5
  %v9612 = vshll.u32 %v9440, 16
  %v9614 = vrot.slane %v9612, 6
  %v9615 = vor.u32 %v9611, %v9614
  %v9616 = vsel %vm4875, %v9607, %v9615
  %v9618 = vshrl.u32 %v9441, 16
  %v9620 = vrot.slane %v9618, 5
  %v9621 = vshll.u32 %v9441, 16
  %v9623 = vrot.slane %v9621, 6
  %v9624 = vor.u32 %v9620, %v9623
  %v9625 = vrot.slane %v9624, 4
  %v9627 = vshrl.u32 %v9442, 16
  %v9629 = vrot.slane %v9627, 5
  %v9630 = vshll.u32 %v9442, 16
  %v9632 = vrot.slane %v9630, 6
  %v9633 = vor.u32 %v9629, %v9632
  %v9634 = vsel %vm4875, %v9625, %v9633
  %v9636 = vshrl.u32 %v9443, 16
  %v9638 = vrot.slane %v9636, 5
  %v9639 = vshll.u32 %v9443, 16
  %v9641 = vrot.slane %v9639, 6
  %v9642 = vor.u32 %v9638, %v9641
  %v9643 = vrot.slane %v9642, 4
  %v9645 = vshrl.u32 %v9444, 16
  %v9647 = vrot.slane %v9645, 5
  %v9648 = vshll.u32 %v9444, 16
  %v9650 = vrot.slane %v9648, 6
  %v9651 = vor.u32 %v9647, %v9650
  %v9652 = vsel %vm4875, %v9643, %v9651
  %v9654 = vshrl.u32 %v9445, 16
  %v9656 = vrot.slane %v9654, 5
  %v9657 = vshll.u32 %v9445, 16
  %v9659 = vrot.slane %v9657, 6
  %v9660 = vor.u32 %v9656, %v9659
  %v9661 = vrot.slane %v9660, 4
  %v9663 = vshrl.u32 %v9446, 16
  %v9665 = vrot.slane %v9663, 5
  %v9666 = vshll.u32 %v9446, 16
  %v9668 = vrot.slane %v9666, 6
  %v9669 = vor.u32 %v9665, %v9668
  %v9670 = vsel %vm4875, %v9661, %v9669
  %v9672 = vshrl.u32 %v9447, 16
  %v9674 = vrot.slane %v9672, 5
  %v9675 = vshll.u32 %v9447, 16
  %v9677 = vrot.slane %v9675, 6
  %v9678 = vor.u32 %v9674, %v9677
  %v9679 = vrot.slane %v9678, 4
  %v9681 = vshrl.u32 %v9448, 16
  %v9683 = vrot.slane %v9681, 5
  %v9684 = vshll.u32 %v9448, 16
  %v9686 = vrot.slane %v9684, 6
  %v9687 = vor.u32 %v9683, %v9686
  %v9688 = vsel %vm4875, %v9679, %v9687
  %v9690 = vshrl.u32 %v9449, 16
  %v9692 = vrot.slane %v9690, 5
  %v9693 = vshll.u32 %v9449, 16
  %v9695 = vrot.slane %v9693, 6
  %v9696 = vor.u32 %v9692, %v9695
  %v9697 = vrot.slane %v9696, 4
  %v9699 = vshrl.u32 %v9450, 16
  %v9701 = vrot.slane %v9699, 5
  %v9702 = vshll.u32 %v9450, 16
  %v9704 = vrot.slane %v9702, 6
  %v9705 = vor.u32 %v9701, %v9704
  %v9706 = vsel %vm4875, %v9697, %v9705
  %v9708 = vshrl.u32 %v9451, 16
  %v9710 = vrot.slane %v9708, 5
  %v9711 = vshll.u32 %v9451, 16
  %v9713 = vrot.slane %v9711, 6
  %v9714 = vor.u32 %v9710, %v9713
  %v9715 = vrot.slane %v9714, 4
  %v9717 = vshrl.u32 %v9452, 16
  %v9719 = vrot.slane %v9717, 5
  %v9720 = vshll.u32 %v9452, 16
  %v9722 = vrot.slane %v9720, 6
  %v9723 = vor.u32 %v9719, %v9722
  %v9724 = vsel %vm4875, %v9715, %v9723
  %v9726 = vshrl.u32 %v9453, 16
  %v9728 = vrot.slane %v9726, 5
  %v9729 = vshll.u32 %v9453, 16
  %v9731 = vrot.slane %v9729, 6
  %v9732 = vor.u32 %v9728, %v9731
  %v9733 = vrot.slane %v9732, 4
  %v9735 = vshrl.u32 %v9454, 16
  %v9737 = vrot.slane %v9735, 5
  %v9738 = vshll.u32 %v9454, 16
  %v9740 = vrot.slane %v9738, 6
  %v9741 = vor.u32 %v9737, %v9740
  %v9742 = vsel %vm4875, %v9733, %v9741
  %v9743 = vunpack.c.l.b16 %v9472
  %v9744 = vunpack.c.l.b16 %v9490
  %v9745 = vunpack.c.l.b16 %v9508
  %v9746 = vunpack.c.l.b16 %v9526
  %v9747 = vunpack.c.l.b16 %v9544
  %v9748 = vunpack.c.l.b16 %v9562
  %v9749 = vunpack.c.l.b16 %v9580
  %v9750 = vunpack.c.l.b16 %v9598
  %v9751 = vunpack.c.l.b16 %v9616
  %v9752 = vunpack.c.l.b16 %v9634
  %v9753 = vunpack.c.l.b16 %v9652
  %v9754 = vunpack.c.l.b16 %v9670
  %v9755 = vunpack.c.l.b16 %v9688
  %v9756 = vunpack.c.l.b16 %v9706
  %v9757 = vunpack.c.l.b16 %v9724
  %v9758 = vunpack.c.l.b16 %v9742
  %v9759 = vpack.c.b16 %v9744, %v9743
  %v9760 = vpack.c.b16 %v9746, %v9745
  %v9761 = vpack.c.b16 %v9748, %v9747
  %v9762 = vpack.c.b16 %v9750, %v9749
  %v9763 = vpack.c.b16 %v9752, %v9751
  %v9764 = vpack.c.b16 %v9754, %v9753
  %v9765 = vpack.c.b16 %v9756, %v9755
  %v9766 = vpack.c.b16 %v9758, %v9757
  %9767 = vrot.lane.b32.xlu0 %v9759, 56
  %v9768 = vpop.permute.xlu0 %9767
  %9769 = vrot.lane.b32.xlu0 %v9760, 56
  %v9770 = vpop.permute.xlu0 %9769
  %9771 = vrot.lane.b32.xlu0 %v9761, 56
  %v9772 = vpop.permute.xlu0 %9771
  %9773 = vrot.lane.b32.xlu0 %v9762, 56
  %v9774 = vpop.permute.xlu0 %9773
  %9775 = vrot.lane.b32.xlu0 %v9763, 56
  %v9776 = vpop.permute.xlu0 %9775
  %9777 = vrot.lane.b32.xlu0 %v9764, 56
  %v9778 = vpop.permute.xlu0 %9777
  %9779 = vrot.lane.b32.xlu0 %v9765, 56
  %v9780 = vpop.permute.xlu0 %9779
  %9781 = vrot.lane.b32.xlu0 %v9766, 56
  %v9782 = vpop.permute.xlu0 %9781
  %9791 = vst.msk [vmem:[#allocation3 + $0x8] sm:$0xff] %vm5988, %v9768
  %9792 = vst.msk [vmem:[#allocation3 + $0x18] sm:$0xff] %vm5988, %v9770
  %9793 = vst.msk [vmem:[#allocation3 + $0x28] sm:$0xff] %vm5988, %v9772
  %9794 = vst.msk [vmem:[#allocation3 + $0x38] sm:$0xff] %vm5988, %v9774
  %9795 = vst.msk [vmem:[#allocation3 + $0x48] sm:$0xff] %vm5988, %v9776
  %9796 = vst.msk [vmem:[#allocation3 + $0x58] sm:$0xff] %vm5988, %v9778
  %9797 = vst.msk [vmem:[#allocation3 + $0x68] sm:$0xff] %vm5988, %v9780
  %9798 = vst.msk [vmem:[#allocation3 + $0x78] sm:$0xff] %vm5988, %v9782
  %v9799 = vld [vmem:[%s8838] sm:$0xc]
  %v9800 = vld [vmem:[%s8838 + $0x4] sm:$0x3]
  %v9801 = vld [vmem:[%s8838 + $0x8] sm:$0xc]
  %v9802 = vld [vmem:[%s8838 + $0xc] sm:$0x3]
  %v9803 = vld [vmem:[%s8838 + $0x10] sm:$0xc]
  %v9804 = vld [vmem:[%s8838 + $0x14] sm:$0x3]
  %v9805 = vld [vmem:[%s8838 + $0x18] sm:$0xc]
  %v9806 = vld [vmem:[%s8838 + $0x1c] sm:$0x3]
  %v9807 = vld [vmem:[%s8838 + $0x20] sm:$0xc]
  %v9808 = vld [vmem:[%s8838 + $0x24] sm:$0x3]
  %v9809 = vld [vmem:[%s8838 + $0x28] sm:$0xc]
  %v9810 = vld [vmem:[%s8838 + $0x2c] sm:$0x3]
  %v9811 = vld [vmem:[%s8838 + $0x30] sm:$0xc]
  %v9812 = vld [vmem:[%s8838 + $0x34] sm:$0x3]
  %v9813 = vld [vmem:[%s8838 + $0x38] sm:$0xc]
  %v9814 = vld [vmem:[%s8838 + $0x3c] sm:$0x3]
  %v9815 = vld [vmem:[%s8838 + $0x60] sm:$0xc]
  %v9816 = vld [vmem:[%s8838 + $0x64] sm:$0x3]
  %v9817 = vld [vmem:[%s8838 + $0x68] sm:$0xc]
  %v9818 = vld [vmem:[%s8838 + $0x6c] sm:$0x3]
  %v9819 = vld [vmem:[%s8838 + $0x70] sm:$0xc]
  %v9820 = vld [vmem:[%s8838 + $0x74] sm:$0x3]
  %v9821 = vld [vmem:[%s8838 + $0x78] sm:$0xc]
  %v9822 = vld [vmem:[%s8838 + $0x7c] sm:$0x3]
  %v9823 = vld [vmem:[%s8838 + $0x80] sm:$0xc]
  %v9824 = vld [vmem:[%s8838 + $0x84] sm:$0x3]
  %v9825 = vld [vmem:[%s8838 + $0x88] sm:$0xc]
  %v9826 = vld [vmem:[%s8838 + $0x8c] sm:$0x3]
  %v9827 = vld [vmem:[%s8838 + $0x90] sm:$0xc]
  %v9828 = vld [vmem:[%s8838 + $0x94] sm:$0x3]
  %v9829 = vld [vmem:[%s8838 + $0x98] sm:$0xc]
  %v9830 = vld [vmem:[%s8838 + $0x9c] sm:$0x3]
  %v9863 = vrot.slane %v9799, 6
  %v9864 = vrot.slane %v9863, 4
  %v9865 = vrot.slane %v9800, 6
  %v9866 = vsel %vm5287, %v9864, %v9865
  %v9867 = vrot.slane %v9801, 6
  %v9868 = vrot.slane %v9867, 4
  %v9869 = vrot.slane %v9802, 6
  %v9870 = vsel %vm5287, %v9868, %v9869
  %v9871 = vrot.slane %v9803, 6
  %v9872 = vrot.slane %v9871, 4
  %v9873 = vrot.slane %v9804, 6
  %v9874 = vsel %vm5287, %v9872, %v9873
  %v9875 = vrot.slane %v9805, 6
  %v9876 = vrot.slane %v9875, 4
  %v9877 = vrot.slane %v9806, 6
  %v9878 = vsel %vm5287, %v9876, %v9877
  %v9879 = vrot.slane %v9807, 6
  %v9880 = vrot.slane %v9879, 4
  %v9881 = vrot.slane %v9808, 6
  %v9882 = vsel %vm5287, %v9880, %v9881
  %v9883 = vrot.slane %v9809, 6
  %v9884 = vrot.slane %v9883, 4
  %v9885 = vrot.slane %v9810, 6
  %v9886 = vsel %vm5287, %v9884, %v9885
  %v9887 = vrot.slane %v9811, 6
  %v9888 = vrot.slane %v9887, 4
  %v9889 = vrot.slane %v9812, 6
  %v9890 = vsel %vm5287, %v9888, %v9889
  %v9891 = vrot.slane %v9813, 6
  %v9892 = vrot.slane %v9891, 4
  %v9893 = vrot.slane %v9814, 6
  %v9894 = vsel %vm5287, %v9892, %v9893
  %v9895 = vrot.slane %v9815, 6
  %v9896 = vrot.slane %v9895, 4
  %v9897 = vrot.slane %v9816, 6
  %v9898 = vsel %vm5287, %v9896, %v9897
  %v9899 = vrot.slane %v9817, 6
  %v9900 = vrot.slane %v9899, 4
  %v9901 = vrot.slane %v9818, 6
  %v9902 = vsel %vm5287, %v9900, %v9901
  %v9903 = vrot.slane %v9819, 6
  %v9904 = vrot.slane %v9903, 4
  %v9905 = vrot.slane %v9820, 6
  %v9906 = vsel %vm5287, %v9904, %v9905
  %v9907 = vrot.slane %v9821, 6
  %v9908 = vrot.slane %v9907, 4
  %v9909 = vrot.slane %v9822, 6
  %v9910 = vsel %vm5287, %v9908, %v9909
  %v9911 = vrot.slane %v9823, 6
  %v9912 = vrot.slane %v9911, 4
  %v9913 = vrot.slane %v9824, 6
  %v9914 = vsel %vm5287, %v9912, %v9913
  %v9915 = vrot.slane %v9825, 6
  %v9916 = vrot.slane %v9915, 4
  %v9917 = vrot.slane %v9826, 6
  %v9918 = vsel %vm5287, %v9916, %v9917
  %v9919 = vrot.slane %v9827, 6
  %v9920 = vrot.slane %v9919, 4
  %v9921 = vrot.slane %v9828, 6
  %v9922 = vsel %vm5287, %v9920, %v9921
  %v9923 = vrot.slane %v9829, 6
  %v9924 = vrot.slane %v9923, 4
  %v9925 = vrot.slane %v9830, 6
  %v9926 = vsel %vm5287, %v9924, %v9925
  %v9927 = vunpack.c.l.b16 %v9866
  %v9928 = vunpack.c.l.b16 %v9870
  %v9929 = vunpack.c.l.b16 %v9874
  %v9930 = vunpack.c.l.b16 %v9878
  %v9931 = vunpack.c.l.b16 %v9882
  %v9932 = vunpack.c.l.b16 %v9886
  %v9933 = vunpack.c.l.b16 %v9890
  %v9934 = vunpack.c.l.b16 %v9894
  %v9935 = vunpack.c.l.b16 %v9898
  %v9936 = vunpack.c.l.b16 %v9902
  %v9937 = vunpack.c.l.b16 %v9906
  %v9938 = vunpack.c.l.b16 %v9910
  %v9939 = vunpack.c.l.b16 %v9914
  %v9940 = vunpack.c.l.b16 %v9918
  %v9941 = vunpack.c.l.b16 %v9922
  %v9942 = vunpack.c.l.b16 %v9926
  %v9943 = vpack.c.b16 %v9928, %v9927
  %v9944 = vpack.c.b16 %v9930, %v9929
  %v9945 = vpack.c.b16 %v9932, %v9931
  %v9946 = vpack.c.b16 %v9934, %v9933
  %v9947 = vpack.c.b16 %v9936, %v9935
  %v9948 = vpack.c.b16 %v9938, %v9937
  %v9949 = vpack.c.b16 %v9940, %v9939
  %v9950 = vpack.c.b16 %v9942, %v9941
  %9951 = vrot.lane.b32.xlu0 %v9943, 64
  %v9952 = vpop.permute.xlu0 %9951
  %9953 = vrot.lane.b32.xlu0 %v9944, 64
  %v9954 = vpop.permute.xlu0 %9953
  %9955 = vrot.lane.b32.xlu0 %v9945, 64
  %v9956 = vpop.permute.xlu0 %9955
  %9957 = vrot.lane.b32.xlu0 %v9946, 64
  %v9958 = vpop.permute.xlu0 %9957
  %9959 = vrot.lane.b32.xlu0 %v9947, 64
  %v9960 = vpop.permute.xlu0 %9959
  %9961 = vrot.lane.b32.xlu0 %v9948, 64
  %v9962 = vpop.permute.xlu0 %9961
  %9963 = vrot.lane.b32.xlu0 %v9949, 64
  %v9964 = vpop.permute.xlu0 %9963
  %9965 = vrot.lane.b32.xlu0 %v9950, 64
  %v9966 = vpop.permute.xlu0 %9965
  %9975 = vst.msk [vmem:[#allocation3 + $0x8] sm:$0xff] %vm6365, %v9952
  %9976 = vst.msk [vmem:[#allocation3 + $0x18] sm:$0xff] %vm6365, %v9954
  %9977 = vst.msk [vmem:[#allocation3 + $0x28] sm:$0xff] %vm6365, %v9956
  %9978 = vst.msk [vmem:[#allocation3 + $0x38] sm:$0xff] %vm6365, %v9958
  %9979 = vst.msk [vmem:[#allocation3 + $0x48] sm:$0xff] %vm6365, %v9960
  %9980 = vst.msk [vmem:[#allocation3 + $0x58] sm:$0xff] %vm6365, %v9962
  %9981 = vst.msk [vmem:[#allocation3 + $0x68] sm:$0xff] %vm6365, %v9964
  %9982 = vst.msk [vmem:[#allocation3 + $0x78] sm:$0xff] %vm6365, %v9966
  %vm9983 = vcmask 1048128
  %9984 = vst.msk [vmem:[#allocation3 + $0x8] sm:$0xff] %vm9983, 0
  %9985 = vst.msk [vmem:[#allocation3 + $0x18] sm:$0xff] %vm9983, 0
  %9986 = vst.msk [vmem:[#allocation3 + $0x28] sm:$0xff] %vm9983, 0
  %9987 = vst.msk [vmem:[#allocation3 + $0x38] sm:$0xff] %vm9983, 0
  %9988 = vst.msk [vmem:[#allocation3 + $0x48] sm:$0xff] %vm9983, 0
  %9989 = vst.msk [vmem:[#allocation3 + $0x58] sm:$0xff] %vm9983, 0
  %9990 = vst.msk [vmem:[#allocation3 + $0x68] sm:$0xff] %vm9983, 0
  %9991 = vst.msk [vmem:[#allocation3 + $0x78] sm:$0xff] %vm9983, 0
  %v9992 = vld [vmem:[#allocation3] sm:$0xff]
  %v9993 = vld [vmem:[#allocation3 + $0x8] sm:$0xff]
  %v9994 = vld [vmem:[#allocation3 + $0x10] sm:$0xff]
  %v9995 = vld [vmem:[#allocation3 + $0x18] sm:$0xff]
  %v9996 = vld [vmem:[#allocation3 + $0x20] sm:$0xff]
  %v9997 = vld [vmem:[#allocation3 + $0x28] sm:$0xff]
  %v9998 = vld [vmem:[#allocation3 + $0x30] sm:$0xff]
  %v9999 = vld [vmem:[#allocation3 + $0x38] sm:$0xff]
  %v10000 = vld [vmem:[#allocation3 + $0x40] sm:$0xff]
  %v10001 = vld [vmem:[#allocation3 + $0x48] sm:$0xff]
  %v10002 = vld [vmem:[#allocation3 + $0x50] sm:$0xff]
  %v10003 = vld [vmem:[#allocation3 + $0x58] sm:$0xff]
  %v10004 = vld [vmem:[#allocation3 + $0x60] sm:$0xff]
  %v10005 = vld [vmem:[#allocation3 + $0x68] sm:$0xff]
  %v10006 = vld [vmem:[#allocation3 + $0x70] sm:$0xff]
  %v10007 = vld [vmem:[#allocation3 + $0x78] sm:$0xff]
  %v10008 = vld [vmem:[%s3] sm:$0xf]
  %v10009 = vld [vmem:[%s3 + $0x4] sm:$0xf]
  %v10010 = vld [vmem:[%s3 + $0x8] sm:$0xf]
  %v10011 = vld [vmem:[%s3 + $0xc] sm:$0xf]
  %v10012 = vld [vmem:[%s3 + $0x10] sm:$0xf]
  %v10013 = vld [vmem:[%s3 + $0x14] sm:$0xf]
  %v10014 = vld [vmem:[%s3 + $0x18] sm:$0xf]
  %v10015 = vld [vmem:[%s3 + $0x1c] sm:$0xf]
  %v10016 = vld [vmem:[%s3 + $0x20] sm:$0xf]
  %v10017 = vld [vmem:[%s3 + $0x24] sm:$0xf]
  %v10018 = vld [vmem:[%s3 + $0x28] sm:$0xf]
  %v10019 = vld [vmem:[%s3 + $0x2c] sm:$0xf]
  %v10020 = vld [vmem:[%s3 + $0x30] sm:$0xf]
  %v10021 = vld [vmem:[%s3 + $0x34] sm:$0xf]
  %v10022 = vld [vmem:[%s3 + $0x38] sm:$0xf]
  %v10023 = vld [vmem:[%s3 + $0x3c] sm:$0xf]
  %v10024 = vld [vmem:[%s3 + $0x40] sm:$0xf]
  %v10025 = vld [vmem:[%s3 + $0x44] sm:$0xf]
  %v10026 = vld [vmem:[%s3 + $0x48] sm:$0xf]
  %v10027 = vld [vmem:[%s3 + $0x4c] sm:$0xf]
  %v10028 = vld [vmem:[%s3 + $0x50] sm:$0xf]
  %v10029 = vld [vmem:[%s3 + $0x54] sm:$0xf]
  %v10030 = vld [vmem:[%s3 + $0x58] sm:$0xf]
  %v10031 = vld [vmem:[%s3 + $0x5c] sm:$0xf]
  %v10032 = vld [vmem:[%s3 + $0x60] sm:$0xf]
  %v10033 = vld [vmem:[%s3 + $0x64] sm:$0xf]
  %v10034 = vld [vmem:[%s3 + $0x68] sm:$0xf]
  %v10035 = vld [vmem:[%s3 + $0x6c] sm:$0xf]
  %v10036 = vld [vmem:[%s3 + $0x70] sm:$0xf]
  %v10037 = vld [vmem:[%s3 + $0x74] sm:$0xf]
  %v10038 = vld [vmem:[%s3 + $0x78] sm:$0xf]
  %v10039 = vld [vmem:[%s3 + $0x7c] sm:$0xf]
  %v10040 = vld [vmem:[%s4] sm:$0x1]
  %v10042 = vlaneseq
  %v10043 = vshrl.u32 %v10042, 7
  %v10044 = vsub.s32 0, %v10043
  %v10045 = vrot.slane %v10040, %v10044
  %v10079 = vunpack.c.l.b16 %v10008
  %v10080 = vunpack.c.l.b16 %v10009
  %v10081 = vunpack.c.l.b16 %v10010
  %v10082 = vunpack.c.l.b16 %v10011
  %v10083 = vunpack.c.l.b16 %v10012
  %v10084 = vunpack.c.l.b16 %v10013
  %v10085 = vunpack.c.l.b16 %v10014
  %v10086 = vunpack.c.l.b16 %v10015
  %v10087 = vunpack.c.l.b16 %v10016
  %v10088 = vunpack.c.l.b16 %v10017
  %v10089 = vunpack.c.l.b16 %v10018
  %v10090 = vunpack.c.l.b16 %v10019
  %v10091 = vunpack.c.l.b16 %v10020
  %v10092 = vunpack.c.l.b16 %v10021
  %v10093 = vunpack.c.l.b16 %v10022
  %v10094 = vunpack.c.l.b16 %v10023
  %v10095 = vunpack.c.l.b16 %v10024
  %v10096 = vunpack.c.l.b16 %v10025
  %v10097 = vunpack.c.l.b16 %v10026
  %v10098 = vunpack.c.l.b16 %v10027
  %v10099 = vunpack.c.l.b16 %v10028
  %v10100 = vunpack.c.l.b16 %v10029
  %v10101 = vunpack.c.l.b16 %v10030
  %v10102 = vunpack.c.l.b16 %v10031
  %v10103 = vunpack.c.l.b16 %v10032
  %v10104 = vunpack.c.l.b16 %v10033
  %v10105 = vunpack.c.l.b16 %v10034
  %v10106 = vunpack.c.l.b16 %v10035
  %v10107 = vunpack.c.l.b16 %v10036
  %v10108 = vunpack.c.l.b16 %v10037
  %v10109 = vunpack.c.l.b16 %v10038
  %v10110 = vunpack.c.l.b16 %v10039
  %v10111 = vpack.c.b16 %v10080, %v10079
  %v10112 = vpack.c.b16 %v10082, %v10081
  %v10113 = vpack.c.b16 %v10084, %v10083
  %v10114 = vpack.c.b16 %v10086, %v10085
  %v10115 = vpack.c.b16 %v10088, %v10087
  %v10116 = vpack.c.b16 %v10090, %v10089
  %v10117 = vpack.c.b16 %v10092, %v10091
  %v10118 = vpack.c.b16 %v10094, %v10093
  %v10119 = vpack.c.b16 %v10096, %v10095
  %v10120 = vpack.c.b16 %v10098, %v10097
  %v10121 = vpack.c.b16 %v10100, %v10099
  %v10122 = vpack.c.b16 %v10102, %v10101
  %v10123 = vpack.c.b16 %v10104, %v10103
  %v10124 = vpack.c.b16 %v10106, %v10105
  %v10125 = vpack.c.b16 %v10108, %v10107
  %v10126 = vpack.c.b16 %v10110, %v10109
  %10143 = vmatprep.subr.bf16.mxu0 0
  %10144 = vmatpush1.bf16.msra.mxu0 %v10111
  %10145 = vmatprep.subr.bf16.mxu0 0
  %10146 = vmatpush1.bf16.msra.mxu0 %v10112
  %10147 = vmatprep.subr.bf16.mxu0 0
  %10148 = vmatpush1.bf16.msra.mxu0 %v10113
  %10149 = vmatprep.subr.bf16.mxu0 0
  %10150 = vmatpush1.bf16.msra.mxu0 %v10114
  %10151 = vmatprep.subr.bf16.mxu0 0
  %10152 = vmatpush1.bf16.msra.mxu0 %v10115
  %10153 = vmatprep.subr.bf16.mxu0 0
  %10154 = vmatpush1.bf16.msra.mxu0 %v10116
  %10155 = vmatprep.subr.bf16.mxu0 0
  %10156 = vmatpush1.bf16.msra.mxu0 %v10117
  %10157 = vmatprep.subr.bf16.mxu0 0
  %10158 = vmatpush1.bf16.msra.mxu0 %v10118
  %10159 = vmatprep.subr.bf16.mxu0 0
  %10160 = vmatpush1.bf16.msra.mxu0 %v10119
  %10161 = vmatprep.subr.bf16.mxu0 0
  %10162 = vmatpush1.bf16.msra.mxu0 %v10120
  %10163 = vmatprep.subr.bf16.mxu0 0
  %10164 = vmatpush1.bf16.msra.mxu0 %v10121
  %10165 = vmatprep.subr.bf16.mxu0 0
  %10166 = vmatpush1.bf16.msra.mxu0 %v10122
  %10167 = vmatprep.subr.bf16.mxu0 0
  %10168 = vmatpush1.bf16.msra.mxu0 %v10123
  %10169 = vmatprep.subr.bf16.mxu0 0
  %10170 = vmatpush1.bf16.msra.mxu0 %v10124
  %10171 = vmatprep.subr.bf16.mxu0 0
  %10172 = vmatpush1.bf16.msra.mxu0 %v10125
  %10173 = vmatprep.subr.bf16.mxu0 0
  %10174 = vmatpush1.bf16.msra.mxu0 %v10126
  %10175 = vmatprep.mubr.bf16.mxu0 %v9993
  %10176 = vmatmul.mubr.bf16.gmra.mrb[0].mxu0 %v9992
  %v10177 = vpop.f32.mrb[0].mxu0
  %v10178 = vadd.f32 %v10045, %v10177
  %v10179 = vpop.f32.mrb[0].mxu0
  %v10180 = vpop.f32.mrb[0].mxu0
  %v10181 = vadd.f32 %v10045, %v10180
  %v10182 = vpop.f32.mrb[0].mxu0
  %10183 = vmatprep.mubr.bf16.mxu0 %v9995
  %10184 = vmatmul.mubr.bf16.gmra.mrb[0].mxu0 %v9994
  %v10185 = vpop.f32.mrb[0].mxu0
  %v10186 = vadd.f32 %v10045, %v10185
  %v10187 = vpop.f32.mrb[0].mxu0
  %v10188 = vpop.f32.mrb[0].mxu0
  %v10189 = vadd.f32 %v10045, %v10188
  %v10190 = vpop.f32.mrb[0].mxu0
  %10191 = vmatprep.mubr.bf16.mxu0 %v9997
  %10192 = vmatmul.mubr.bf16.gmra.mrb[0].mxu0 %v9996
  %v10193 = vpop.f32.mrb[0].mxu0
  %v10194 = vadd.f32 %v10045, %v10193
  %v10195 = vpop.f32.mrb[0].mxu0
  %v10196 = vpop.f32.mrb[0].mxu0
  %v10197 = vadd.f32 %v10045, %v10196
  %v10198 = vpop.f32.mrb[0].mxu0
  %10199 = vmatprep.mubr.bf16.mxu0 %v9999
  %10200 = vmatmul.mubr.bf16.gmra.mrb[0].mxu0 %v9998
  %v10201 = vpop.f32.mrb[0].mxu0
  %v10202 = vadd.f32 %v10045, %v10201
  %v10203 = vpop.f32.mrb[0].mxu0
  %v10204 = vpop.f32.mrb[0].mxu0
  %v10205 = vadd.f32 %v10045, %v10204
  %v10206 = vpop.f32.mrb[0].mxu0
  %10207 = vmatprep.mubr.bf16.mxu0 %v10001
  %10208 = vmatmul.mubr.bf16.gmra.mrb[0].mxu0 %v10000
  %v10209 = vpop.f32.mrb[0].mxu0
  %v10210 = vadd.f32 %v10045, %v10209
  %v10211 = vpop.f32.mrb[0].mxu0
  %v10212 = vpop.f32.mrb[0].mxu0
  %v10213 = vadd.f32 %v10045, %v10212
  %v10214 = vpop.f32.mrb[0].mxu0
  %10215 = vmatprep.mubr.bf16.mxu0 %v10003
  %10216 = vmatmul.mubr.bf16.gmra.mrb[0].mxu0 %v10002
  %v10217 = vpop.f32.mrb[0].mxu0
  %v10218 = vadd.f32 %v10045, %v10217
  %v10219 = vpop.f32.mrb[0].mxu0
  %v10220 = vpop.f32.mrb[0].mxu0
  %v10221 = vadd.f32 %v10045, %v10220
  %v10222 = vpop.f32.mrb[0].mxu0
  %10223 = vmatprep.mubr.bf16.mxu0 %v10005
  %10224 = vmatmul.mubr.bf16.gmra.mrb[0].mxu0 %v10004
  %v10225 = vpop.f32.mrb[0].mxu0
  %v10226 = vadd.f32 %v10045, %v10225
  %v10227 = vpop.f32.mrb[0].mxu0
  %v10228 = vpop.f32.mrb[0].mxu0
  %v10229 = vadd.f32 %v10045, %v10228
  %v10230 = vpop.f32.mrb[0].mxu0
  %10231 = vmatprep.mubr.bf16.mxu0 %v10007
  %10232 = vmatmul.mubr.bf16.gmra.mrb[0].mxu0 %v10006
  %v10233 = vpop.f32.mrb[0].mxu0
  %v10234 = vadd.f32 %v10045, %v10233
  %v10235 = vpop.f32.mrb[0].mxu0
  %v10236 = vpop.f32.mrb[0].mxu0
  %v10237 = vadd.f32 %v10045, %v10236
  %v10238 = vpop.f32.mrb[0].mxu0
  %10239 = vdwg.mxu0
  %v10240 = vmax.f32 %v10178, 0.0
  %v10241 = vmax.f32 %v10181, 0.0
  %v10242 = vmax.f32 %v10186, 0.0
  %v10243 = vmax.f32 %v10189, 0.0
  %v10244 = vmax.f32 %v10194, 0.0
  %v10245 = vmax.f32 %v10197, 0.0
  %v10246 = vmax.f32 %v10202, 0.0
  %v10247 = vmax.f32 %v10205, 0.0
  %v10248 = vmax.f32 %v10210, 0.0
  %v10249 = vmax.f32 %v10213, 0.0
  %v10250 = vmax.f32 %v10218, 0.0
  %v10251 = vmax.f32 %v10221, 0.0
  %v10252 = vmax.f32 %v10226, 0.0
  %v10253 = vmax.f32 %v10229, 0.0
  %v10254 = vmax.f32 %v10234, 0.0
  %v10255 = vmax.f32 %v10237, 0.0
  %10256 = vst [vmem:[%s5] sm:$0xff] %v10240
  %10257 = vst [vmem:[%s5 + $0x8] sm:$0xff] %v10241
  %10258 = vst [vmem:[%s5 + $0x10] sm:$0xff] %v10242
  %10259 = vst [vmem:[%s5 + $0x18] sm:$0xff] %v10243
  %10260 = vst [vmem:[%s5 + $0x20] sm:$0xff] %v10244
  %10261 = vst [vmem:[%s5 + $0x28] sm:$0xff] %v10245
  %10262 = vst [vmem:[%s5 + $0x30] sm:$0xff] %v10246
  %10263 = vst [vmem:[%s5 + $0x38] sm:$0xff] %v10247
  %10264 = vst [vmem:[%s5 + $0x40] sm:$0xff] %v10248
  %10265 = vst [vmem:[%s5 + $0x48] sm:$0xff] %v10249
  %10266 = vst [vmem:[%s5 + $0x50] sm:$0xff] %v10250
  %10267 = vst [vmem:[%s5 + $0x58] sm:$0xff] %v10251
  %10268 = vst [vmem:[%s5 + $0x60] sm:$0xff] %v10252
  %10269 = vst [vmem:[%s5 + $0x68] sm:$0xff] %v10253
  %10270 = vst [vmem:[%s5 + $0x70] sm:$0xff] %v10254
  %10271 = vst [vmem:[%s5 + $0x78] sm:$0xff] %v10255
  // Predicated region
  $region22: #{downsample_forward.1} parent=0 // pred_check
    _
  $region23: #{downsample_forward.1} parent=0 // pred_check_branch
    %10273 = sbr.rel (0) target = $region25
  $region24: #{downsample_forward.1} parent=0 // pred_region
    _
  $region25: #{downsample_forward.1} parent=0 // pred_fallthru
    _
  // Predicated region
  $region26: #{downsample_forward.1} parent=0 // pred_check
    _
  $region27: #{downsample_forward.1} parent=0 // pred_check_branch
    %10275 = sbr.rel (0) target = $region29
  $region28: #{downsample_forward.1} parent=0 // pred_region
    _
  $region29: #{downsample_forward.1} parent=0 // pred_fallthru
    _

</llo_original>
